<compile_context>
chip_gen: v7x
topology: tpu7x:2x2x1
jax: 0.10.0
libtpu: 0.0.40
codegen_flags: <defaults>
</compile_context>

<pallas_src>
import jax
import jax.numpy as jnp
from jax.experimental import pallas as pl
from jax.experimental.pallas import tpu as pltpu


# ----------------------------------------------------------------------------
# Fused kernel: per-sample [conv3x3 + folded-BN + ReLU] x depth  ->  pool+dense
# ----------------------------------------------------------------------------
def _cnn_fused_kernel(x_ref, w_ref, s_ref, b_ref, wd_ref, bd_ref, o_ref,
                      buf_a, buf_b):
    # x_ref : (1, H, W, C)        input sample, channels zero-padded 3 -> C
    # w_ref : (depth, 9*C, C)     stacked im2col conv weights (bf16)
    # s_ref : (depth, 1, C)       folded BN scale  = gamma / sqrt(var + eps)
    # b_ref : (depth, 1, C)       folded BN bias   = beta - mean * scale
    # wd_ref: (C, 10)             dense weight (pre-transposed)
    # bd_ref: (1, 10)             dense bias
    # o_ref : (1, 1, 10)          logits for this sample
    # buf_a, buf_b : (H+2, W+2, C) f32 VMEM scratch (padded activations)
    depth = w_ref.shape[0]
    Hp, Wp, C = buf_a.shape
    H, W = Hp - 2, Wp - 2

    # Zero both padded buffers (borders remain zero for every layer -> this is
    # the in-kernel padding=1). Must be unconditional: scratch persists across
    # grid steps and cores.
    buf_a[...] = jnp.zeros_like(buf_a)
    buf_b[...] = jnp.zeros_like(buf_b)
    # Place the input in the interior of buffer A.
    buf_a[1:H + 1, 1:W + 1, :] = x_ref[0]

    bufs = (buf_a, buf_b)
    for layer in range(depth):                 # static unroll; acts stay in VMEM
        src = bufs[layer % 2]
        dst = bufs[(layer + 1) % 2]
        # im2col: gather the 9 shifted windows once, contract K = 9*C in a
        # single MXU matmul (instead of 9 tiny K=C matmuls).
        patches = jnp.concatenate(
            [src[dy:dy + H, dx:dx + W, :].reshape(H * W, C)
             for dy in range(3) for dx in range(3)],
            axis=-1,
        ).astype(jnp.bfloat16)                                  # (H*W, 9C) bf16
        acc = jnp.dot(patches, w_ref[layer],
                      preferred_element_type=jnp.float32)       # (H*W, C) f32
        y = jnp.maximum(acc * s_ref[layer] + b_ref[layer], 0.0) # BN + ReLU, f32
        dst[1:H + 1, 1:W + 1, :] = y.reshape(H, W, C)

    # AdaptiveAvgPool2d((1,1)) + flatten + Linear(C, 10), fused.
    final = bufs[depth % 2]
    feat = final[1:H + 1, 1:W + 1, :].reshape(H * W, C)
    pooled = jnp.sum(feat, axis=0, keepdims=True) * (1.0 / (H * W))   # (1, C)
    logits = jnp.dot(pooled, wd_ref[...],
                     preferred_element_type=jnp.float32) + bd_ref[...]  # (1, 10)
    o_ref[...] = logits.reshape(1, 1, 10)


def _cnn_fused_call(x_nhwc, w_all, s_all, b_all, wd, bd):
    N, H, W, C = x_nhwc.shape
    depth = w_all.shape[0]
    grid_spec = pltpu.PrefetchScalarGridSpec(
        num_scalar_prefetch=0,
        grid=(N,),                                   # one sample per grid step
        in_specs=[
            pl.BlockSpec((1, H, W, C), lambda n: (n, 0, 0, 0)),
            pl.BlockSpec((depth, 9 * C, C), lambda n: (0, 0, 0)),
            pl.BlockSpec((depth, 1, C), lambda n: (0, 0, 0)),
            pl.BlockSpec((depth, 1, C), lambda n: (0, 0, 0)),
            pl.BlockSpec((C, 10), lambda n: (0, 0)),
            pl.BlockSpec((1, 10), lambda n: (0, 0)),
        ],
        out_specs=pl.BlockSpec((1, 1, 10), lambda n: (n, 0, 0)),
        scratch_shapes=[
            pltpu.VMEM((H + 2, W + 2, C), jnp.float32),
            pltpu.VMEM((H + 2, W + 2, C), jnp.float32),
        ],
    )
    out = pl.pallas_call(
        _cnn_fused_kernel,
        out_shape=jax.ShapeDtypeStruct((N, 1, 10), jnp.float32),
        grid_spec=grid_spec,
        compiler_params=pltpu.CompilerParams(
            dimension_semantics=("parallel",),       # batch split across TCs (v7x)
            vmem_limit_bytes=32 * 1024 * 1024,       # safe on v5e/v6e/v7x
        ),
    )(x_nhwc, w_all, s_all, b_all, wd, bd)
    return out.reshape(N, 10)


@jax.jit
def cnn_forward(x_nchw, w_all, s_all, b_all, wd, bd):
    C = w_all.shape[-1]
    x = jnp.transpose(x_nchw, (0, 2, 3, 1))                       # NCHW -> NHWC
    # Zero-pad input channels 3 -> C once (matching zero-padded layer-1 weight),
    # so every layer in the fused kernel uses the same (9C, C) weight shape.
    x = jnp.pad(x, ((0, 0), (0, 0), (0, 0), (0, C - x.shape[-1])))
    return _cnn_fused_call(x, w_all, s_all, b_all, wd, bd)


# ----------------------------------------------------------------------------
# Parameter construction (deterministic, synthetic), with BN folded (inference)
# ----------------------------------------------------------------------------
def init_params(key, channel, depth, eps=1e-5):
    ws, scales, biases = [], [], []
    in_c = 3
    for _ in range(depth):
        key, kw, kg, kb, km, kv = jax.random.split(key, 6)
        w = jax.random.normal(kw, (3, 3, in_c, channel), jnp.float32) * 0.1
        gamma = 1.0 + 0.1 * jax.random.normal(kg, (channel,), jnp.float32)
        beta = 0.1 * jax.random.normal(kb, (channel,), jnp.float32)
        run_mean = 0.1 * jax.random.normal(km, (channel,), jnp.float32)
        run_var = 1.0 + 0.1 * jax.random.uniform(kv, (channel,), jnp.float32)
        # Fold inference-mode BatchNorm into per-channel scale / bias.
        scale = gamma / jnp.sqrt(run_var + eps)
        bias = beta - run_mean * scale
        if in_c < channel:   # first layer: zero-extend Cin 3 -> C for stacking
            w = jnp.pad(w, ((0, 0), (0, 0), (0, channel - in_c), (0, 0)))
        ws.append(w.reshape(9 * channel, channel))     # im2col (dy,dx,ci) -> row
        scales.append(scale.reshape(1, channel))
        biases.append(bias.reshape(1, channel))
        in_c = channel
    w_all = jnp.stack(ws).astype(jnp.bfloat16)          # (depth, 9C, C) bf16
    s_all = jnp.stack(scales)                           # (depth, 1, C)  f32
    b_all = jnp.stack(biases)                           # (depth, 1, C)  f32

    key, kd, kdb = jax.random.split(key, 3)
    w_dense = jax.random.normal(kd, (10, channel), jnp.float32) * 0.1
    b_dense = 0.1 * jax.random.normal(kdb, (10,), jnp.float32)
    wd = w_dense.T                                      # (C, 10) pre-transposed
    bd = b_dense.reshape(1, 10)
    return w_all, s_all, b_all, wd, bd


if __name__ == "__main__":
    CHANNEL = 8
    DEPTH = 4          # small depth for the synthetic test (module default is 10)
    N, H, W = 2, 16, 16

    key = jax.random.PRNGKey(0)
    kx, kp = jax.random.split(key)
    x = jax.random.normal(kx, (N, 3, H, W), jnp.float32)   # NCHW, like PyTorch

    w_all, s_all, b_all, wd, bd = init_params(kp, CHANNEL, DEPTH)

    out = cnn_forward(x, w_all, s_all, b_all, wd, bd)
    out = jax.block_until_ready(out)
    assert out.shape == (N, 10)
    print("KERNEL_OK")
</pallas_src>

<mosaic_0001>
module attributes {stable_mosaic.version = 11 : i64} {
  func.func @_cnn_fused_kernel(%arg0: i32, %arg1: memref<1x16x16x8xf32, #tpu.memory_space<vmem>>, %arg2: memref<4x72x8xbf16, #tpu.memory_space<vmem>>, %arg3: memref<4x1x8xf32, #tpu.memory_space<vmem>>, %arg4: memref<4x1x8xf32, #tpu.memory_space<vmem>>, %arg5: memref<8x10xf32, #tpu.memory_space<vmem>>, %arg6: memref<1x10xf32, #tpu.memory_space<vmem>>, %arg7: memref<1x1x10xf32, #tpu.memory_space<vmem>>, %arg8: memref<18x18x8xf32, #tpu.memory_space<vmem>>, %arg9: memref<18x18x8xf32, #tpu.memory_space<vmem>>) attributes {dimension_semantics = [#tpu.dimension_semantics<parallel>], iteration_bounds = array<i64: 2>, scalar_prefetch = 0 : i64, scratch_operands = 2 : i64, tpu.core_type = #tpu.core_type<tc>, window_params = [{transform_indices = @transform_0, window_bounds = array<i64: 1, 16, 16, 8>}, {pipeline_mode = #tpu.pipeline_mode<synchronous>, transform_indices = @transform_1, window_bounds = array<i64: 4, 72, 8>}, {pipeline_mode = #tpu.pipeline_mode<synchronous>, transform_indices = @transform_2, window_bounds = array<i64: 4, 1, 8>}, {pipeline_mode = #tpu.pipeline_mode<synchronous>, transform_indices = @transform_3, window_bounds = array<i64: 4, 1, 8>}, {pipeline_mode = #tpu.pipeline_mode<synchronous>, transform_indices = @transform_4, window_bounds = array<i64: 8, 10>}, {pipeline_mode = #tpu.pipeline_mode<synchronous>, transform_indices = @transform_5, window_bounds = array<i64: 1, 10>}, {transform_indices = @transform_6, window_bounds = array<i64: 1, 1, 10>}]} {
    %cst = arith.constant 0.000000e+00 : f32
    %0 = vector.broadcast %cst : f32 to vector<18x18x8xf32>
    %c0 = arith.constant 0 : index
    %c0_0 = arith.constant 0 : index
    %c0_1 = arith.constant 0 : index
    %1 = vector.load %arg8[%c0, %c0_0, %c0_1] : memref<18x18x8xf32, #tpu.memory_space<vmem>>, vector<18x18x8xf32>
    tpu.vector_store %arg8[%c0, %c0_0, %c0_1], %0 {strides = array<i32>} : memref<18x18x8xf32, #tpu.memory_space<vmem>>, vector<18x18x8xf32>,
    %cst_2 = arith.constant 0.000000e+00 : f32
    %2 = vector.broadcast %cst_2 : f32 to vector<18x18x8xf32>
    %c0_3 = arith.constant 0 : index
    %c0_4 = arith.constant 0 : index
    %c0_5 = arith.constant 0 : index
    %3 = vector.load %arg9[%c0_3, %c0_4, %c0_5] : memref<18x18x8xf32, #tpu.memory_space<vmem>>, vector<18x18x8xf32>
    tpu.vector_store %arg9[%c0_3, %c0_4, %c0_5], %2 {strides = array<i32>} : memref<18x18x8xf32, #tpu.memory_space<vmem>>, vector<18x18x8xf32>,
    %c0_6 = arith.constant 0 : index
    %c0_7 = arith.constant 0 : index
    %c0_8 = arith.constant 0 : index
    %c0_9 = arith.constant 0 : index
    %4 = vector.load %arg1[%c0_6, %c0_7, %c0_8, %c0_9] : memref<1x16x16x8xf32, #tpu.memory_space<vmem>>, vector<1x16x16x8xf32>
    %5 = vector.shape_cast %4 : vector<1x16x16x8xf32> to vector<16x16x8xf32>
    %c1 = arith.constant 1 : index
    %c1_10 = arith.constant 1 : index
    %c0_11 = arith.constant 0 : index
    %6 = vector.load %arg8[%c1, %c1_10, %c0_11] : memref<18x18x8xf32, #tpu.memory_space<vmem>>, vector<16x16x8xf32>
    tpu.vector_store %arg8[%c1, %c1_10, %c0_11], %5 {strides = array<i32>} : memref<18x18x8xf32, #tpu.memory_space<vmem>>, vector<16x16x8xf32>,
    %c0_12 = arith.constant 0 : index
    %c0_13 = arith.constant 0 : index
    %c0_14 = arith.constant 0 : index
    %7 = vector.load %arg8[%c0_12, %c0_13, %c0_14] : memref<18x18x8xf32, #tpu.memory_space<vmem>>, vector<16x16x8xf32>
    %8 = vector.shape_cast %7 : vector<16x16x8xf32> to vector<256x8xf32>
    %c0_15 = arith.constant 0 : index
    %c1_16 = arith.constant 1 : index
    %c0_17 = arith.constant 0 : index
    %9 = vector.load %arg8[%c0_15, %c1_16, %c0_17] : memref<18x18x8xf32, #tpu.memory_space<vmem>>, vector<16x16x8xf32>
    %10 = vector.shape_cast %9 : vector<16x16x8xf32> to vector<256x8xf32>
    %c0_18 = arith.constant 0 : index
    %c2 = arith.constant 2 : index
    %c0_19 = arith.constant 0 : index
    %11 = vector.load %arg8[%c0_18, %c2, %c0_19] : memref<18x18x8xf32, #tpu.memory_space<vmem>>, vector<16x16x8xf32>
    %12 = vector.shape_cast %11 : vector<16x16x8xf32> to vector<256x8xf32>
    %c1_20 = arith.constant 1 : index
    %c0_21 = arith.constant 0 : index
    %c0_22 = arith.constant 0 : index
    %13 = vector.load %arg8[%c1_20, %c0_21, %c0_22] : memref<18x18x8xf32, #tpu.memory_space<vmem>>, vector<16x16x8xf32>
    %14 = vector.shape_cast %13 : vector<16x16x8xf32> to vector<256x8xf32>
    %c1_23 = arith.constant 1 : index
    %c1_24 = arith.constant 1 : index
    %c0_25 = arith.constant 0 : index
    %15 = vector.load %arg8[%c1_23, %c1_24, %c0_25] : memref<18x18x8xf32, #tpu.memory_space<vmem>>, vector<16x16x8xf32>
    %16 = vector.shape_cast %15 : vector<16x16x8xf32> to vector<256x8xf32>
    %c1_26 = arith.constant 1 : index
    %c2_27 = arith.constant 2 : index
    %c0_28 = arith.constant 0 : index
    %17 = vector.load %arg8[%c1_26, %c2_27, %c0_28] : memref<18x18x8xf32, #tpu.memory_space<vmem>>, vector<16x16x8xf32>
    %18 = vector.shape_cast %17 : vector<16x16x8xf32> to vector<256x8xf32>
    %c2_29 = arith.constant 2 : index
    %c0_30 = arith.constant 0 : index
    %c0_31 = arith.constant 0 : index
    %19 = vector.load %arg8[%c2_29, %c0_30, %c0_31] : memref<18x18x8xf32, #tpu.memory_space<vmem>>, vector<16x16x8xf32>
    %20 = vector.shape_cast %19 : vector<16x16x8xf32> to vector<256x8xf32>
    %c2_32 = arith.constant 2 : index
    %c1_33 = arith.constant 1 : index
    %c0_34 = arith.constant 0 : index
    %21 = vector.load %arg8[%c2_32, %c1_33, %c0_34] : memref<18x18x8xf32, #tpu.memory_space<vmem>>, vector<16x16x8xf32>
    %22 = vector.shape_cast %21 : vector<16x16x8xf32> to vector<256x8xf32>
    %c2_35 = arith.constant 2 : index
    %c2_36 = arith.constant 2 : index
    %c0_37 = arith.constant 0 : index
    %23 = vector.load %arg8[%c2_35, %c2_36, %c0_37] : memref<18x18x8xf32, #tpu.memory_space<vmem>>, vector<16x16x8xf32>
    %24 = vector.shape_cast %23 : vector<16x16x8xf32> to vector<256x8xf32>
    %25 = tpu.concatenate %8, %10, %12, %14, %16, %18, %20, %22, %24 in 1 : vector<256x8xf32>, vector<256x8xf32>, vector<256x8xf32>, vector<256x8xf32>, vector<256x8xf32>, vector<256x8xf32>, vector<256x8xf32>, vector<256x8xf32>, vector<256x8xf32> -> vector<256x72xf32>
    %26 = arith.truncf %25 : vector<256x72xf32> to vector<256x72xbf16>
    %c0_38 = arith.constant 0 : index
    %c0_39 = arith.constant 0 : index
    %c0_40 = arith.constant 0 : index
    %27 = vector.load %arg2[%c0_38, %c0_39, %c0_40] : memref<4x72x8xbf16, #tpu.memory_space<vmem>>, vector<1x72x8xbf16>
    %28 = vector.shape_cast %27 : vector<1x72x8xbf16> to vector<72x8xbf16>
    %cst_41 = arith.constant dense<0.000000e+00> : vector<256x8xf32>
    %29 = tpu.matmul %26, %28, %cst_41 {dimension_numbers = #tpu.dot_dimension_numbers<[1], [0], [0], [1], [0, 0, 1, 1], [], []>} : vector<256x72xbf16>, vector<72x8xbf16>, vector<256x8xf32> -> vector<256x8xf32>
    %c0_42 = arith.constant 0 : index
    %c0_43 = arith.constant 0 : index
    %c0_44 = arith.constant 0 : index
    %30 = vector.load %arg3[%c0_42, %c0_43, %c0_44] : memref<4x1x8xf32, #tpu.memory_space<vmem>>, vector<1x1x8xf32>
    %31 = vector.shape_cast %30 : vector<1x1x8xf32> to vector<1x8xf32>
    %32 = vector.broadcast %31 : vector<1x8xf32> to vector<256x8xf32>
    %33 = arith.mulf %29, %32 : vector<256x8xf32>
    %c0_45 = arith.constant 0 : index
    %c0_46 = arith.constant 0 : index
    %c0_47 = arith.constant 0 : index
    %34 = vector.load %arg4[%c0_45, %c0_46, %c0_47] : memref<4x1x8xf32, #tpu.memory_space<vmem>>, vector<1x1x8xf32>
    %35 = vector.shape_cast %34 : vector<1x1x8xf32> to vector<1x8xf32>
    %36 = vector.broadcast %35 : vector<1x8xf32> to vector<256x8xf32>
    %37 = arith.addf %33, %36 : vector<256x8xf32>
    %cst_48 = arith.constant 0.000000e+00 : f32
    %38 = vector.broadcast %cst_48 : f32 to vector<256x8xf32>
    %39 = arith.maximumf %37, %38 : vector<256x8xf32>
    %40 = vector.shape_cast %39 : vector<256x8xf32> to vector<16x16x8xf32>
    %c1_49 = arith.constant 1 : index
    %c1_50 = arith.constant 1 : index
    %c0_51 = arith.constant 0 : index
    %41 = vector.load %arg9[%c1_49, %c1_50, %c0_51] : memref<18x18x8xf32, #tpu.memory_space<vmem>>, vector<16x16x8xf32>
    tpu.vector_store %arg9[%c1_49, %c1_50, %c0_51], %40 {strides = array<i32>} : memref<18x18x8xf32, #tpu.memory_space<vmem>>, vector<16x16x8xf32>,
    %c0_52 = arith.constant 0 : index
    %c0_53 = arith.constant 0 : index
    %c0_54 = arith.constant 0 : index
    %42 = vector.load %arg9[%c0_52, %c0_53, %c0_54] : memref<18x18x8xf32, #tpu.memory_space<vmem>>, vector<16x16x8xf32>
    %43 = vector.shape_cast %42 : vector<16x16x8xf32> to vector<256x8xf32>
    %c0_55 = arith.constant 0 : index
    %c1_56 = arith.constant 1 : index
    %c0_57 = arith.constant 0 : index
    %44 = vector.load %arg9[%c0_55, %c1_56, %c0_57] : memref<18x18x8xf32, #tpu.memory_space<vmem>>, vector<16x16x8xf32>
    %45 = vector.shape_cast %44 : vector<16x16x8xf32> to vector<256x8xf32>
    %c0_58 = arith.constant 0 : index
    %c2_59 = arith.constant 2 : index
    %c0_60 = arith.constant 0 : index
    %46 = vector.load %arg9[%c0_58, %c2_59, %c0_60] : memref<18x18x8xf32, #tpu.memory_space<vmem>>, vector<16x16x8xf32>
    %47 = vector.shape_cast %46 : vector<16x16x8xf32> to vector<256x8xf32>
    %c1_61 = arith.constant 1 : index
    %c0_62 = arith.constant 0 : index
    %c0_63 = arith.constant 0 : index
    %48 = vector.load %arg9[%c1_61, %c0_62, %c0_63] : memref<18x18x8xf32, #tpu.memory_space<vmem>>, vector<16x16x8xf32>
    %49 = vector.shape_cast %48 : vector<16x16x8xf32> to vector<256x8xf32>
    %c1_64 = arith.constant 1 : index
    %c1_65 = arith.constant 1 : index
    %c0_66 = arith.constant 0 : index
    %50 = vector.load %arg9[%c1_64, %c1_65, %c0_66] : memref<18x18x8xf32, #tpu.memory_space<vmem>>, vector<16x16x8xf32>
    %51 = vector.shape_cast %50 : vector<16x16x8xf32> to vector<256x8xf32>
    %c1_67 = arith.constant 1 : index
    %c2_68 = arith.constant 2 : index
    %c0_69 = arith.constant 0 : index
    %52 = vector.load %arg9[%c1_67, %c2_68, %c0_69] : memref<18x18x8xf32, #tpu.memory_space<vmem>>, vector<16x16x8xf32>
    %53 = vector.shape_cast %52 : vector<16x16x8xf32> to vector<256x8xf32>
    %c2_70 = arith.constant 2 : index
    %c0_71 = arith.constant 0 : index
    %c0_72 = arith.constant 0 : index
    %54 = vector.load %arg9[%c2_70, %c0_71, %c0_72] : memref<18x18x8xf32, #tpu.memory_space<vmem>>, vector<16x16x8xf32>
    %55 = vector.shape_cast %54 : vector<16x16x8xf32> to vector<256x8xf32>
    %c2_73 = arith.constant 2 : index
    %c1_74 = arith.constant 1 : index
    %c0_75 = arith.constant 0 : index
    %56 = vector.load %arg9[%c2_73, %c1_74, %c0_75] : memref<18x18x8xf32, #tpu.memory_space<vmem>>, vector<16x16x8xf32>
    %57 = vector.shape_cast %56 : vector<16x16x8xf32> to vector<256x8xf32>
    %c2_76 = arith.constant 2 : index
    %c2_77 = arith.constant 2 : index
    %c0_78 = arith.constant 0 : index
    %58 = vector.load %arg9[%c2_76, %c2_77, %c0_78] : memref<18x18x8xf32, #tpu.memory_space<vmem>>, vector<16x16x8xf32>
    %59 = vector.shape_cast %58 : vector<16x16x8xf32> to vector<256x8xf32>
    %60 = tpu.concatenate %43, %45, %47, %49, %51, %53, %55, %57, %59 in 1 : vector<256x8xf32>, vector<256x8xf32>, vector<256x8xf32>, vector<256x8xf32>, vector<256x8xf32>, vector<256x8xf32>, vector<256x8xf32>, vector<256x8xf32>, vector<256x8xf32> -> vector<256x72xf32>
    %61 = arith.truncf %60 : vector<256x72xf32> to vector<256x72xbf16>
    %c1_79 = arith.constant 1 : index
    %c0_80 = arith.constant 0 : index
    %c0_81 = arith.constant 0 : index
    %62 = vector.load %arg2[%c1_79, %c0_80, %c0_81] : memref<4x72x8xbf16, #tpu.memory_space<vmem>>, vector<1x72x8xbf16>
    %63 = vector.shape_cast %62 : vector<1x72x8xbf16> to vector<72x8xbf16>
    %cst_82 = arith.constant dense<0.000000e+00> : vector<256x8xf32>
    %64 = tpu.matmul %61, %63, %cst_82 {dimension_numbers = #tpu.dot_dimension_numbers<[1], [0], [0], [1], [0, 0, 1, 1], [], []>} : vector<256x72xbf16>, vector<72x8xbf16>, vector<256x8xf32> -> vector<256x8xf32>
    %c1_83 = arith.constant 1 : index
    %c0_84 = arith.constant 0 : index
    %c0_85 = arith.constant 0 : index
    %65 = vector.load %arg3[%c1_83, %c0_84, %c0_85] : memref<4x1x8xf32, #tpu.memory_space<vmem>>, vector<1x1x8xf32>
    %66 = vector.shape_cast %65 : vector<1x1x8xf32> to vector<1x8xf32>
    %67 = vector.broadcast %66 : vector<1x8xf32> to vector<256x8xf32>
    %68 = arith.mulf %64, %67 : vector<256x8xf32>
    %c1_86 = arith.constant 1 : index
    %c0_87 = arith.constant 0 : index
    %c0_88 = arith.constant 0 : index
    %69 = vector.load %arg4[%c1_86, %c0_87, %c0_88] : memref<4x1x8xf32, #tpu.memory_space<vmem>>, vector<1x1x8xf32>
    %70 = vector.shape_cast %69 : vector<1x1x8xf32> to vector<1x8xf32>
    %71 = vector.broadcast %70 : vector<1x8xf32> to vector<256x8xf32>
    %72 = arith.addf %68, %71 : vector<256x8xf32>
    %cst_89 = arith.constant 0.000000e+00 : f32
    %73 = vector.broadcast %cst_89 : f32 to vector<256x8xf32>
    %74 = arith.maximumf %72, %73 : vector<256x8xf32>
    %75 = vector.shape_cast %74 : vector<256x8xf32> to vector<16x16x8xf32>
    %c1_90 = arith.constant 1 : index
    %c1_91 = arith.constant 1 : index
    %c0_92 = arith.constant 0 : index
    %76 = vector.load %arg8[%c1_90, %c1_91, %c0_92] : memref<18x18x8xf32, #tpu.memory_space<vmem>>, vector<16x16x8xf32>
    tpu.vector_store %arg8[%c1_90, %c1_91, %c0_92], %75 {strides = array<i32>} : memref<18x18x8xf32, #tpu.memory_space<vmem>>, vector<16x16x8xf32>,
    %c0_93 = arith.constant 0 : index
    %c0_94 = arith.constant 0 : index
    %c0_95 = arith.constant 0 : index
    %77 = vector.load %arg8[%c0_93, %c0_94, %c0_95] : memref<18x18x8xf32, #tpu.memory_space<vmem>>, vector<16x16x8xf32>
    %78 = vector.shape_cast %77 : vector<16x16x8xf32> to vector<256x8xf32>
    %c0_96 = arith.constant 0 : index
    %c1_97 = arith.constant 1 : index
    %c0_98 = arith.constant 0 : index
    %79 = vector.load %arg8[%c0_96, %c1_97, %c0_98] : memref<18x18x8xf32, #tpu.memory_space<vmem>>, vector<16x16x8xf32>
    %80 = vector.shape_cast %79 : vector<16x16x8xf32> to vector<256x8xf32>
    %c0_99 = arith.constant 0 : index
    %c2_100 = arith.constant 2 : index
    %c0_101 = arith.constant 0 : index
    %81 = vector.load %arg8[%c0_99, %c2_100, %c0_101] : memref<18x18x8xf32, #tpu.memory_space<vmem>>, vector<16x16x8xf32>
    %82 = vector.shape_cast %81 : vector<16x16x8xf32> to vector<256x8xf32>
    %c1_102 = arith.constant 1 : index
    %c0_103 = arith.constant 0 : index
    %c0_104 = arith.constant 0 : index
    %83 = vector.load %arg8[%c1_102, %c0_103, %c0_104] : memref<18x18x8xf32, #tpu.memory_space<vmem>>, vector<16x16x8xf32>
    %84 = vector.shape_cast %83 : vector<16x16x8xf32> to vector<256x8xf32>
    %c1_105 = arith.constant 1 : index
    %c1_106 = arith.constant 1 : index
    %c0_107 = arith.constant 0 : index
    %85 = vector.load %arg8[%c1_105, %c1_106, %c0_107] : memref<18x18x8xf32, #tpu.memory_space<vmem>>, vector<16x16x8xf32>
    %86 = vector.shape_cast %85 : vector<16x16x8xf32> to vector<256x8xf32>
    %c1_108 = arith.constant 1 : index
    %c2_109 = arith.constant 2 : index
    %c0_110 = arith.constant 0 : index
    %87 = vector.load %arg8[%c1_108, %c2_109, %c0_110] : memref<18x18x8xf32, #tpu.memory_space<vmem>>, vector<16x16x8xf32>
    %88 = vector.shape_cast %87 : vector<16x16x8xf32> to vector<256x8xf32>
    %c2_111 = arith.constant 2 : index
    %c0_112 = arith.constant 0 : index
    %c0_113 = arith.constant 0 : index
    %89 = vector.load %arg8[%c2_111, %c0_112, %c0_113] : memref<18x18x8xf32, #tpu.memory_space<vmem>>, vector<16x16x8xf32>
    %90 = vector.shape_cast %89 : vector<16x16x8xf32> to vector<256x8xf32>
    %c2_114 = arith.constant 2 : index
    %c1_115 = arith.constant 1 : index
    %c0_116 = arith.constant 0 : index
    %91 = vector.load %arg8[%c2_114, %c1_115, %c0_116] : memref<18x18x8xf32, #tpu.memory_space<vmem>>, vector<16x16x8xf32>
    %92 = vector.shape_cast %91 : vector<16x16x8xf32> to vector<256x8xf32>
    %c2_117 = arith.constant 2 : index
    %c2_118 = arith.constant 2 : index
    %c0_119 = arith.constant 0 : index
    %93 = vector.load %arg8[%c2_117, %c2_118, %c0_119] : memref<18x18x8xf32, #tpu.memory_space<vmem>>, vector<16x16x8xf32>
    %94 = vector.shape_cast %93 : vector<16x16x8xf32> to vector<256x8xf32>
    %95 = tpu.concatenate %78, %80, %82, %84, %86, %88, %90, %92, %94 in 1 : vector<256x8xf32>, vector<256x8xf32>, vector<256x8xf32>, vector<256x8xf32>, vector<256x8xf32>, vector<256x8xf32>, vector<256x8xf32>, vector<256x8xf32>, vector<256x8xf32> -> vector<256x72xf32>
    %96 = arith.truncf %95 : vector<256x72xf32> to vector<256x72xbf16>
    %c2_120 = arith.constant 2 : index
    %c0_121 = arith.constant 0 : index
    %c0_122 = arith.constant 0 : index
    %97 = vector.load %arg2[%c2_120, %c0_121, %c0_122] : memref<4x72x8xbf16, #tpu.memory_space<vmem>>, vector<1x72x8xbf16>
    %98 = vector.shape_cast %97 : vector<1x72x8xbf16> to vector<72x8xbf16>
    %cst_123 = arith.constant dense<0.000000e+00> : vector<256x8xf32>
    %99 = tpu.matmul %96, %98, %cst_123 {dimension_numbers = #tpu.dot_dimension_numbers<[1], [0], [0], [1], [0, 0, 1, 1], [], []>} : vector<256x72xbf16>, vector<72x8xbf16>, vector<256x8xf32> -> vector<256x8xf32>
    %c2_124 = arith.constant 2 : index
    %c0_125 = arith.constant 0 : index
    %c0_126 = arith.constant 0 : index
    %100 = vector.load %arg3[%c2_124, %c0_125, %c0_126] : memref<4x1x8xf32, #tpu.memory_space<vmem>>, vector<1x1x8xf32>
    %101 = vector.shape_cast %100 : vector<1x1x8xf32> to vector<1x8xf32>
    %102 = vector.broadcast %101 : vector<1x8xf32> to vector<256x8xf32>
    %103 = arith.mulf %99, %102 : vector<256x8xf32>
    %c2_127 = arith.constant 2 : index
    %c0_128 = arith.constant 0 : index
    %c0_129 = arith.constant 0 : index
    %104 = vector.load %arg4[%c2_127, %c0_128, %c0_129] : memref<4x1x8xf32, #tpu.memory_space<vmem>>, vector<1x1x8xf32>
    %105 = vector.shape_cast %104 : vector<1x1x8xf32> to vector<1x8xf32>
    %106 = vector.broadcast %105 : vector<1x8xf32> to vector<256x8xf32>
    %107 = arith.addf %103, %106 : vector<256x8xf32>
    %cst_130 = arith.constant 0.000000e+00 : f32
    %108 = vector.broadcast %cst_130 : f32 to vector<256x8xf32>
    %109 = arith.maximumf %107, %108 : vector<256x8xf32>
    %110 = vector.shape_cast %109 : vector<256x8xf32> to vector<16x16x8xf32>
    %c1_131 = arith.constant 1 : index
    %c1_132 = arith.constant 1 : index
    %c0_133 = arith.constant 0 : index
    %111 = vector.load %arg9[%c1_131, %c1_132, %c0_133] : memref<18x18x8xf32, #tpu.memory_space<vmem>>, vector<16x16x8xf32>
    tpu.vector_store %arg9[%c1_131, %c1_132, %c0_133], %110 {strides = array<i32>} : memref<18x18x8xf32, #tpu.memory_space<vmem>>, vector<16x16x8xf32>,
    %c0_134 = arith.constant 0 : index
    %c0_135 = arith.constant 0 : index
    %c0_136 = arith.constant 0 : index
    %112 = vector.load %arg9[%c0_134, %c0_135, %c0_136] : memref<18x18x8xf32, #tpu.memory_space<vmem>>, vector<16x16x8xf32>
    %113 = vector.shape_cast %112 : vector<16x16x8xf32> to vector<256x8xf32>
    %c0_137 = arith.constant 0 : index
    %c1_138 = arith.constant 1 : index
    %c0_139 = arith.constant 0 : index
    %114 = vector.load %arg9[%c0_137, %c1_138, %c0_139] : memref<18x18x8xf32, #tpu.memory_space<vmem>>, vector<16x16x8xf32>
    %115 = vector.shape_cast %114 : vector<16x16x8xf32> to vector<256x8xf32>
    %c0_140 = arith.constant 0 : index
    %c2_141 = arith.constant 2 : index
    %c0_142 = arith.constant 0 : index
    %116 = vector.load %arg9[%c0_140, %c2_141, %c0_142] : memref<18x18x8xf32, #tpu.memory_space<vmem>>, vector<16x16x8xf32>
    %117 = vector.shape_cast %116 : vector<16x16x8xf32> to vector<256x8xf32>
    %c1_143 = arith.constant 1 : index
    %c0_144 = arith.constant 0 : index
    %c0_145 = arith.constant 0 : index
    %118 = vector.load %arg9[%c1_143, %c0_144, %c0_145] : memref<18x18x8xf32, #tpu.memory_space<vmem>>, vector<16x16x8xf32>
    %119 = vector.shape_cast %118 : vector<16x16x8xf32> to vector<256x8xf32>
    %c1_146 = arith.constant 1 : index
    %c1_147 = arith.constant 1 : index
    %c0_148 = arith.constant 0 : index
    %120 = vector.load %arg9[%c1_146, %c1_147, %c0_148] : memref<18x18x8xf32, #tpu.memory_space<vmem>>, vector<16x16x8xf32>
    %121 = vector.shape_cast %120 : vector<16x16x8xf32> to vector<256x8xf32>
    %c1_149 = arith.constant 1 : index
    %c2_150 = arith.constant 2 : index
    %c0_151 = arith.constant 0 : index
    %122 = vector.load %arg9[%c1_149, %c2_150, %c0_151] : memref<18x18x8xf32, #tpu.memory_space<vmem>>, vector<16x16x8xf32>
    %123 = vector.shape_cast %122 : vector<16x16x8xf32> to vector<256x8xf32>
    %c2_152 = arith.constant 2 : index
    %c0_153 = arith.constant 0 : index
    %c0_154 = arith.constant 0 : index
    %124 = vector.load %arg9[%c2_152, %c0_153, %c0_154] : memref<18x18x8xf32, #tpu.memory_space<vmem>>, vector<16x16x8xf32>
    %125 = vector.shape_cast %124 : vector<16x16x8xf32> to vector<256x8xf32>
    %c2_155 = arith.constant 2 : index
    %c1_156 = arith.constant 1 : index
    %c0_157 = arith.constant 0 : index
    %126 = vector.load %arg9[%c2_155, %c1_156, %c0_157] : memref<18x18x8xf32, #tpu.memory_space<vmem>>, vector<16x16x8xf32>
    %127 = vector.shape_cast %126 : vector<16x16x8xf32> to vector<256x8xf32>
    %c2_158 = arith.constant 2 : index
    %c2_159 = arith.constant 2 : index
    %c0_160 = arith.constant 0 : index
    %128 = vector.load %arg9[%c2_158, %c2_159, %c0_160] : memref<18x18x8xf32, #tpu.memory_space<vmem>>, vector<16x16x8xf32>
    %129 = vector.shape_cast %128 : vector<16x16x8xf32> to vector<256x8xf32>
    %130 = tpu.concatenate %113, %115, %117, %119, %121, %123, %125, %127, %129 in 1 : vector<256x8xf32>, vector<256x8xf32>, vector<256x8xf32>, vector<256x8xf32>, vector<256x8xf32>, vector<256x8xf32>, vector<256x8xf32>, vector<256x8xf32>, vector<256x8xf32> -> vector<256x72xf32>
    %131 = arith.truncf %130 : vector<256x72xf32> to vector<256x72xbf16>
    %c3 = arith.constant 3 : index
    %c0_161 = arith.constant 0 : index
    %c0_162 = arith.constant 0 : index
    %132 = vector.load %arg2[%c3, %c0_161, %c0_162] : memref<4x72x8xbf16, #tpu.memory_space<vmem>>, vector<1x72x8xbf16>
    %133 = vector.shape_cast %132 : vector<1x72x8xbf16> to vector<72x8xbf16>
    %cst_163 = arith.constant dense<0.000000e+00> : vector<256x8xf32>
    %134 = tpu.matmul %131, %133, %cst_163 {dimension_numbers = #tpu.dot_dimension_numbers<[1], [0], [0], [1], [0, 0, 1, 1], [], []>} : vector<256x72xbf16>, vector<72x8xbf16>, vector<256x8xf32> -> vector<256x8xf32>
    %c3_164 = arith.constant 3 : index
    %c0_165 = arith.constant 0 : index
    %c0_166 = arith.constant 0 : index
    %135 = vector.load %arg3[%c3_164, %c0_165, %c0_166] : memref<4x1x8xf32, #tpu.memory_space<vmem>>, vector<1x1x8xf32>
    %136 = vector.shape_cast %135 : vector<1x1x8xf32> to vector<1x8xf32>
    %137 = vector.broadcast %136 : vector<1x8xf32> to vector<256x8xf32>
    %138 = arith.mulf %134, %137 : vector<256x8xf32>
    %c3_167 = arith.constant 3 : index
    %c0_168 = arith.constant 0 : index
    %c0_169 = arith.constant 0 : index
    %139 = vector.load %arg4[%c3_167, %c0_168, %c0_169] : memref<4x1x8xf32, #tpu.memory_space<vmem>>, vector<1x1x8xf32>
    %140 = vector.shape_cast %139 : vector<1x1x8xf32> to vector<1x8xf32>
    %141 = vector.broadcast %140 : vector<1x8xf32> to vector<256x8xf32>
    %142 = arith.addf %138, %141 : vector<256x8xf32>
    %cst_170 = arith.constant 0.000000e+00 : f32
    %143 = vector.broadcast %cst_170 : f32 to vector<256x8xf32>
    %144 = arith.maximumf %142, %143 : vector<256x8xf32>
    %145 = vector.shape_cast %144 : vector<256x8xf32> to vector<16x16x8xf32>
    %c1_171 = arith.constant 1 : index
    %c1_172 = arith.constant 1 : index
    %c0_173 = arith.constant 0 : index
    %146 = vector.load %arg8[%c1_171, %c1_172, %c0_173] : memref<18x18x8xf32, #tpu.memory_space<vmem>>, vector<16x16x8xf32>
    tpu.vector_store %arg8[%c1_171, %c1_172, %c0_173], %145 {strides = array<i32>} : memref<18x18x8xf32, #tpu.memory_space<vmem>>, vector<16x16x8xf32>,
    %c1_174 = arith.constant 1 : index
    %c1_175 = arith.constant 1 : index
    %c0_176 = arith.constant 0 : index
    %147 = vector.load %arg8[%c1_174, %c1_175, %c0_176] : memref<18x18x8xf32, #tpu.memory_space<vmem>>, vector<16x16x8xf32>
    %148 = vector.shape_cast %147 : vector<16x16x8xf32> to vector<256x8xf32>
    %cst_177 = arith.constant dense<0.000000e+00> : vector<8xf32>
    %149 = vector.multi_reduction <add>, %148, %cst_177 [0] : vector<256x8xf32> to vector<8xf32>
    %150 = vector.shape_cast %149 : vector<8xf32> to vector<1x8xf32>
    %cst_178 = arith.constant 3.906250e-03 : f32
    %151 = vector.broadcast %cst_178 : f32 to vector<1x8xf32>
    %152 = arith.mulf %150, %151 : vector<1x8xf32>
    %c0_179 = arith.constant 0 : index
    %c0_180 = arith.constant 0 : index
    %153 = vector.load %arg5[%c0_179, %c0_180] : memref<8x10xf32, #tpu.memory_space<vmem>>, vector<8x10xf32>
    %cst_181 = arith.constant dense<0.000000e+00> : vector<1x10xf32>
    %154 = tpu.matmul %152, %153, %cst_181 {dimension_numbers = #tpu.dot_dimension_numbers<[1], [0], [0], [1], [0, 0, 1, 1], [], []>} : vector<1x8xf32>, vector<8x10xf32>, vector<1x10xf32> -> vector<1x10xf32>
    %c0_182 = arith.constant 0 : index
    %c0_183 = arith.constant 0 : index
    %155 = vector.load %arg6[%c0_182, %c0_183] : memref<1x10xf32, #tpu.memory_space<vmem>>, vector<1x10xf32>
    %156 = arith.addf %154, %155 : vector<1x10xf32>
    %157 = vector.shape_cast %156 : vector<1x10xf32> to vector<1x1x10xf32>
    %c0_184 = arith.constant 0 : index
    %c0_185 = arith.constant 0 : index
    %c0_186 = arith.constant 0 : index
    %158 = vector.load %arg7[%c0_184, %c0_185, %c0_186] : memref<1x1x10xf32, #tpu.memory_space<vmem>>, vector<1x1x10xf32>
    tpu.vector_store %arg7[%c0_184, %c0_185, %c0_186], %157 {strides = array<i32>} : memref<1x1x10xf32, #tpu.memory_space<vmem>>, vector<1x1x10xf32>,
    return
  }
  func.func @transform_0(%arg0: i32) -> (i32, i32, i32, i32) {
    %c0_i32 = arith.constant 0 : i32
    %c0_i32_0 = arith.constant 0 : i32
    %c0_i32_1 = arith.constant 0 : i32
    %c0_i32_2 = arith.constant 0 : i32
    return %arg0, %c0_i32, %c0_i32_0, %c0_i32_1 : i32, i32, i32, i32
  }
  func.func @transform_1(%arg0: i32) -> (i32, i32, i32) {
    %c0_i32 = arith.constant 0 : i32
    %c0_i32_0 = arith.constant 0 : i32
    %c0_i32_1 = arith.constant 0 : i32
    %c0_i32_2 = arith.constant 0 : i32
    return %c0_i32, %c0_i32_0, %c0_i32_1 : i32, i32, i32
  }
  func.func @transform_2(%arg0: i32) -> (i32, i32, i32) {
    %c0_i32 = arith.constant 0 : i32
    %c0_i32_0 = arith.constant 0 : i32
    %c0_i32_1 = arith.constant 0 : i32
    %c0_i32_2 = arith.constant 0 : i32
    return %c0_i32, %c0_i32_0, %c0_i32_1 : i32, i32, i32
  }
  func.func @transform_3(%arg0: i32) -> (i32, i32, i32) {
    %c0_i32 = arith.constant 0 : i32
    %c0_i32_0 = arith.constant 0 : i32
    %c0_i32_1 = arith.constant 0 : i32
    %c0_i32_2 = arith.constant 0 : i32
    return %c0_i32, %c0_i32_0, %c0_i32_1 : i32, i32, i32
  }
  func.func @transform_4(%arg0: i32) -> (i32, i32) {
    %c0_i32 = arith.constant 0 : i32
    %c0_i32_0 = arith.constant 0 : i32
    %c0_i32_1 = arith.constant 0 : i32
    return %c0_i32, %c0_i32_0 : i32, i32
  }
  func.func @transform_5(%arg0: i32) -> (i32, i32) {
    %c0_i32 = arith.constant 0 : i32
    %c0_i32_0 = arith.constant 0 : i32
    %c0_i32_1 = arith.constant 0 : i32
    return %c0_i32, %c0_i32_0 : i32, i32
  }
  func.func @transform_6(%arg0: i32) -> (i32, i32, i32) {
    %c0_i32 = arith.constant 0 : i32
    %c0_i32_0 = arith.constant 0 : i32
    %c0_i32_1 = arith.constant 0 : i32
    return %arg0, %c0_i32, %c0_i32_0 : i32, i32, i32
  }
}

</mosaic_0001>

<llo_original>
// kernel: cnn_forward.1
$region0: #{cnn_forward.1}
  #allocation0 [shape = 'u32[]', space=smem, size = 0x4, offset = 0x4, fixed_abs, tag = 'smem constant byte address 0x4 - core index']
  #allocation1 [shape = 'u32[144,128]{1,0:T(1,128)}', space=vmem, size = 0x12000, scoped, tag = 'internal scratch']
  #allocation2 [shape = 'f32[18,18,8]{2,1,0:T(8,128)}', space=vmem, size = 0x36000, scoped, tag = 'scratch operand']
  #allocation3 [shape = 'f32[18,18,8]{2,1,0:T(8,128)}', space=vmem, size = 0x36000, scoped, tag = 'scratch operand']
  %s0 = inlined_call_operand.vmem [shape: f32[2,16,16,8], index: 0, kind: input, shape index: {}]
  %s1 = inlined_call_operand.vmem [shape: bf16[4,72,8], index: 1, kind: input, shape index: {}]
  %s2 = inlined_call_operand.vmem [shape: f32[4,1,8], index: 2, kind: input, shape index: {}]
  %s3 = inlined_call_operand.vmem [shape: f32[4,1,8], index: 3, kind: input, shape index: {}]
  %s4 = inlined_call_operand.vmem [shape: f32[8,10], index: 4, kind: input, shape index: {}]
  %s5 = inlined_call_operand.vmem [shape: f32[1,10], index: 5, kind: input, shape index: {}]
  %s6 = inlined_call_operand.hbm [shape: f32[2,1,10], index: 6, kind: output, shape index: {}]
  %s7 = sld [smem:[#allocation0]]
  $region57: #{cnn_forward.1} parent=0
    _
  %s9 = ssub.s32 1, %s7
  %s10 = scalar_select 0, %s9, %s7
  $region1: #{cnn_forward.1} parent=0
    #allocation4 [shape = 'u8[1024]{0}', space=vmem, size = 0x400, scoped, tag = 'output window, operand 0']
    #allocation5 [shape = 's32[2]{0}', space=sflag, size = 0x8, scoped, tag = 'scoped memory for cnn_forward.1']
    %11 = vsyncpa [#allocation5], 0
    %s12 = scalar_lea.sflag [#allocation5], 1
    %13 = vsyncpa %s12, 0
    loop: start=0, step=1, limit=4
    $region2: #{cnn_forward.1} parent=1 // loop_pre_header
      _
    $region3: #{cnn_forward.1} parent=1 // loop_header
      %s15 = sphi 0, %s19
      %p16 = scmp.ge.s32.totalorder %s15, 4
      %s25 = sphi 0, %s27
      %s28 = sphi 0, %s25
      %s29 = sphi 0, %s28
      %s45 = sphi 0, %s29
      %s49 = sphi 0, %s49
      %s51 = sphi 0, %s49
      %s52 = sphi 0, %s51
      %s66 = sphi 0, %s52
      %s70 = sphi 0, %s70
      %s72 = sphi 0, %s70
      %s73 = sphi 0, %s72
      %s87 = sphi 0, %s73
      %s91 = sphi 0, %s91
      %s93 = sphi 0, %s91
      %s94 = sphi 0, %s93
      %s108 = sphi 0, %s94
      %s112 = sphi 0, %s112
      %s114 = sphi 0, %s112
      %s115 = sphi 0, %s114
      %s129 = sphi 0, %s115
      %s133 = sphi 0, %s133
      %s135 = sphi 0, %s133
      %s136 = sphi 0, %s135
      %s150 = sphi 0, %s136
      %s156 = sphi 0, %s158
      %s159 = sphi 0, %s156
      %s160 = sphi 0, %s159
      %s176 = sphi 0, %s160
    $region4: #{cnn_forward.1} parent=1 // loop_header_branch
      %18 = sbr.rel (%p16) target = $region8
    $region5: #{cnn_forward.1} parent=1 // loop_body
      %s20 = ssub.s32 %s15, 1
      %s21 = ssub.s32 %s15, 2
      %s22 = sadd.s32 %s15, 1
      %s23 = ssub.s32 %s15, %s22
      %p24 = scmp.eq.s32.totalorder %s23, 0
      %s26 = sadd.s32 %s25, 1
      %s27 = scalar_select %p24, %s25, %s26
      %p30 = pneg %p24
      %p31 = scmp.eq.s32.totalorder %s15, 1
      %p32 = por %p30, %p31
      %p33 = scmp.ne.s32.totalorder %s25, %s28
      %p34 = scmp.eq.s32.totalorder %s15, 0
      %p35 = por %p33, %p34
      %p36 = scmp.ne.s32.totalorder %s25, %s28
      %p37 = scmp.eq.s32.totalorder %s20, 1
      %p38 = por %p36, %p37
      %p39 = scmp.ne.s32.totalorder %s28, %s29
      %p40 = scmp.eq.s32.totalorder %s20, 0
      %p41 = por %p39, %p40
      %p42 = scmp.ne.s32.totalorder %s28, %s29
      %p43 = scmp.eq.s32.totalorder %s21, 1
      %p44 = por %p42, %p43
      %p46 = scmp.ne.s32.totalorder %s29, %s45
      %p47 = scmp.eq.s32.totalorder %s21, 0
      %p48 = por %p46, %p47
      %s50 = sadd.s32 %s49, 1
      %p53 = scmp.eq.s32.totalorder %s15, 1
      %p54 = scmp.ne.s32.totalorder %s49, %s51
      %p55 = scmp.eq.s32.totalorder %s15, 0
      %p56 = por %p54, %p55
      %p57 = scmp.ne.s32.totalorder %s49, %s51
      %p58 = scmp.eq.s32.totalorder %s20, 1
      %p59 = por %p57, %p58
      %p60 = scmp.ne.s32.totalorder %s51, %s52
      %p61 = scmp.eq.s32.totalorder %s20, 0
      %p62 = por %p60, %p61
      %p63 = scmp.ne.s32.totalorder %s51, %s52
      %p64 = scmp.eq.s32.totalorder %s21, 1
      %p65 = por %p63, %p64
      %p67 = scmp.ne.s32.totalorder %s52, %s66
      %p68 = scmp.eq.s32.totalorder %s21, 0
      %p69 = por %p67, %p68
      %s71 = sadd.s32 %s70, 1
      %p74 = scmp.eq.s32.totalorder %s15, 1
      %p75 = scmp.ne.s32.totalorder %s70, %s72
      %p76 = scmp.eq.s32.totalorder %s15, 0
      %p77 = por %p75, %p76
      %p78 = scmp.ne.s32.totalorder %s70, %s72
      %p79 = scmp.eq.s32.totalorder %s20, 1
      %p80 = por %p78, %p79
      %p81 = scmp.ne.s32.totalorder %s72, %s73
      %p82 = scmp.eq.s32.totalorder %s20, 0
      %p83 = por %p81, %p82
      %p84 = scmp.ne.s32.totalorder %s72, %s73
      %p85 = scmp.eq.s32.totalorder %s21, 1
      %p86 = por %p84, %p85
      %p88 = scmp.ne.s32.totalorder %s73, %s87
      %p89 = scmp.eq.s32.totalorder %s21, 0
      %p90 = por %p88, %p89
      %s92 = sadd.s32 %s91, 1
      %p95 = scmp.eq.s32.totalorder %s15, 1
      %p96 = scmp.ne.s32.totalorder %s91, %s93
      %p97 = scmp.eq.s32.totalorder %s15, 0
      %p98 = por %p96, %p97
      %p99 = scmp.ne.s32.totalorder %s91, %s93
      %p100 = scmp.eq.s32.totalorder %s20, 1
      %p101 = por %p99, %p100
      %p102 = scmp.ne.s32.totalorder %s93, %s94
      %p103 = scmp.eq.s32.totalorder %s20, 0
      %p104 = por %p102, %p103
      %p105 = scmp.ne.s32.totalorder %s93, %s94
      %p106 = scmp.eq.s32.totalorder %s21, 1
      %p107 = por %p105, %p106
      %p109 = scmp.ne.s32.totalorder %s94, %s108
      %p110 = scmp.eq.s32.totalorder %s21, 0
      %p111 = por %p109, %p110
      %s113 = sadd.s32 %s112, 1
      %p116 = scmp.eq.s32.totalorder %s15, 1
      %p117 = scmp.ne.s32.totalorder %s112, %s114
      %p118 = scmp.eq.s32.totalorder %s15, 0
      %p119 = por %p117, %p118
      %p120 = scmp.ne.s32.totalorder %s112, %s114
      %p121 = scmp.eq.s32.totalorder %s20, 1
      %p122 = por %p120, %p121
      %p123 = scmp.ne.s32.totalorder %s114, %s115
      %p124 = scmp.eq.s32.totalorder %s20, 0
      %p125 = por %p123, %p124
      %p126 = scmp.ne.s32.totalorder %s114, %s115
      %p127 = scmp.eq.s32.totalorder %s21, 1
      %p128 = por %p126, %p127
      %p130 = scmp.ne.s32.totalorder %s115, %s129
      %p131 = scmp.eq.s32.totalorder %s21, 0
      %p132 = por %p130, %p131
      %s134 = sadd.s32 %s133, 1
      %p137 = scmp.eq.s32.totalorder %s15, 1
      %p138 = scmp.ne.s32.totalorder %s133, %s135
      %p139 = scmp.eq.s32.totalorder %s15, 0
      %p140 = por %p138, %p139
      %p141 = scmp.ne.s32.totalorder %s133, %s135
      %p142 = scmp.eq.s32.totalorder %s20, 1
      %p143 = por %p141, %p142
      %p144 = scmp.ne.s32.totalorder %s135, %s136
      %p145 = scmp.eq.s32.totalorder %s20, 0
      %p146 = por %p144, %p145
      %p147 = scmp.ne.s32.totalorder %s135, %s136
      %p148 = scmp.eq.s32.totalorder %s21, 1
      %p149 = por %p147, %p148
      %p151 = scmp.ne.s32.totalorder %s136, %s150
      %p152 = scmp.eq.s32.totalorder %s21, 0
      %p153 = por %p151, %p152
      %s154 = ssub.s32 %s15, %s22
      %p155 = scmp.eq.s32.totalorder %s154, 0
      %s157 = sadd.s32 %s156, 1
      %s158 = scalar_select %p155, %s156, %s157
      %p161 = pneg %p155
      %p162 = scmp.eq.s32.totalorder %s15, 1
      %p163 = por %p161, %p162
      %p164 = scmp.ne.s32.totalorder %s156, %s159
      %p165 = scmp.eq.s32.totalorder %s15, 0
      %p166 = por %p164, %p165
      %p167 = scmp.ne.s32.totalorder %s156, %s159
      %p168 = scmp.eq.s32.totalorder %s20, 1
      %p169 = por %p167, %p168
      %p170 = scmp.ne.s32.totalorder %s159, %s160
      %p171 = scmp.eq.s32.totalorder %s20, 0
      %p172 = por %p170, %p171
      %p173 = scmp.ne.s32.totalorder %s159, %s160
      %p174 = scmp.eq.s32.totalorder %s21, 1
      %p175 = por %p173, %p174
      %p177 = scmp.ne.s32.totalorder %s160, %s176
      %p178 = scmp.eq.s32.totalorder %s21, 0
      %p179 = por %p177, %p178
      %p180 = scmp.le.s32.totalorder 1, %s15
      %p181 = scmp.lt.s32.totalorder %s15, 3
      %p182 = pnand %p180, %p181
      %p183 = pneg %p182
      // Predicated region
      $region9: #{cnn_forward.1} parent=5 // pred_check
        _
      $region10: #{cnn_forward.1} parent=5 // pred_check_branch
        %185 = sbr.rel (%p182) target = $region12
      $region11: #{cnn_forward.1} parent=5 // pred_region
        %s186 = ssub.s32 %s15, 1
        // Predicated region
        $region13: #{cnn_forward.1} parent=11 // pred_check
          %p187 = pneg %p62
        $region14: #{cnn_forward.1} parent=11 // pred_check_branch
          %189 = sbr.rel (%p187) target = $region16
        $region15: #{cnn_forward.1} parent=11 // pred_region
          _
        $region16: #{cnn_forward.1} parent=11 // pred_fallthru
          _
        // Predicated region
        $region17: #{cnn_forward.1} parent=11 // pred_check
          %p190 = pneg %p83
        $region18: #{cnn_forward.1} parent=11 // pred_check_branch
          %192 = sbr.rel (%p190) target = $region20
        $region19: #{cnn_forward.1} parent=11 // pred_region
          _
        $region20: #{cnn_forward.1} parent=11 // pred_fallthru
          _
        // Predicated region
        $region21: #{cnn_forward.1} parent=11 // pred_check
          %p193 = pneg %p104
        $region22: #{cnn_forward.1} parent=11 // pred_check_branch
          %195 = sbr.rel (%p193) target = $region24
        $region23: #{cnn_forward.1} parent=11 // pred_region
          _
        $region24: #{cnn_forward.1} parent=11 // pred_fallthru
          _
        // Predicated region
        $region25: #{cnn_forward.1} parent=11 // pred_check
          %p196 = pneg %p125
        $region26: #{cnn_forward.1} parent=11 // pred_check_branch
          %198 = sbr.rel (%p196) target = $region28
        $region27: #{cnn_forward.1} parent=11 // pred_region
          _
        $region28: #{cnn_forward.1} parent=11 // pred_fallthru
          _
        // Predicated region
        $region29: #{cnn_forward.1} parent=11 // pred_check
          %p199 = pneg %p146
        $region30: #{cnn_forward.1} parent=11 // pred_check_branch
          %201 = sbr.rel (%p199) target = $region32
        $region31: #{cnn_forward.1} parent=11 // pred_region
          _
        $region32: #{cnn_forward.1} parent=11 // pred_fallthru
          _
      $region12: #{cnn_forward.1} parent=5 // pred_fallthru
        _
      %p202 = scmp.lt.s32.totalorder %s15, 2
      // Predicated region
      $region33: #{cnn_forward.1} parent=5 // pred_check
        %p203 = pneg %p202
      $region34: #{cnn_forward.1} parent=5 // pred_check_branch
        %205 = sbr.rel (%p203) target = $region36
      $region35: #{cnn_forward.1} parent=5 // pred_region
        // Predicated region
        $region37: #{cnn_forward.1} parent=35 // pred_check
          %p206 = pneg %p35
        $region38: #{cnn_forward.1} parent=35 // pred_check_branch
          %208 = sbr.rel (%p206) target = $region40
        $region39: #{cnn_forward.1} parent=35 // pred_region
          %p209 = scmp.lt.s32.totalorder %s15, 1
          %s210 = scalar_select %p209, %s15, 1
          %s211 = smul.addr %s210, 32
          %s212 = smul.addr %s211, 8
          %s213 = scalar_lea.vmem %s0, %s212
        $region40: #{cnn_forward.1} parent=35 // pred_fallthru
          _
      $region36: #{cnn_forward.1} parent=5 // pred_fallthru
        _
      %p214 = scmp.le.s32.totalorder 1, %s15
      %p215 = scmp.lt.s32.totalorder %s15, 3
      %p216 = pnand %p214, %p215
      %p217 = pneg %p216
      // Predicated region
      $region41: #{cnn_forward.1} parent=5 // pred_check
        _
      $region42: #{cnn_forward.1} parent=5 // pred_check_branch
        %219 = sbr.rel (%p216) target = $region44
      $region43: #{cnn_forward.1} parent=5 // pred_region
        %s220 = ssub.s32 %s15, 1
        %p221 = scmp.lt.s32.totalorder %s20, 1
        %s222 = scalar_select %p221, %s20, 1
        %s223 = smul.addr %s222, 32
        %s224 = smul.addr %s223, 8
        %s225 = scalar_lea.vmem %s0, %s224
        %p226 = pneg %p41
        %p227 = pneg %p38
        %p228 = pneg %p62
        %p229 = pneg %p59
        %p230 = pneg %p83
        %p231 = pneg %p80
        %p232 = pneg %p104
        %p233 = pneg %p101
        %p234 = pneg %p125
        %p235 = pneg %p122
        %p236 = pneg %p146
        %p237 = pneg %p143
        %p238 = pneg %p172
        %p239 = pneg %p169
        %s240 = sand.u32 %s159, 1
        %s241 = scalar_lea.sflag [#allocation5], %s240
        %s242 = sand.u32 %s159, 1
        %s243 = scalar_lea.vmem [#allocation4], %s242
        %p244 = scmp.lt.s32.totalorder %s20, 1
        %s245 = scalar_select %p244, %s20, 1
        %s246 = smul.addr %s245, 32
        %s247 = smul.addr %s246, 8
        %s248 = scalar_lea.vmem %s0, %s247
        %vm250 = vcmask 64512
        %251 = vst.msk [vmem:[#allocation2] sm:$0xff] %vm250, 0.0
        %252 = vst.msk [vmem:[#allocation2 + $0x8] sm:$0xff] %vm250, 0.0
        %vm253 = vcmask 58368
        %254 = vst.msk [vmem:[#allocation2 + $0x10] sm:$0x3] %vm253, 0.0
        %255 = vst.msk [vmem:[#allocation2 + $0x18] sm:$0xff] %vm250, 0.0
        %256 = vst.msk [vmem:[#allocation2 + $0x20] sm:$0xff] %vm250, 0.0
        %257 = vst.msk [vmem:[#allocation2 + $0x28] sm:$0x3] %vm253, 0.0
        %258 = vst.msk [vmem:[#allocation2 + $0x30] sm:$0xff] %vm250, 0.0
        %259 = vst.msk [vmem:[#allocation2 + $0x38] sm:$0xff] %vm250, 0.0
        %260 = vst.msk [vmem:[#allocation2 + $0x40] sm:$0x3] %vm253, 0.0
        %261 = vst.msk [vmem:[#allocation2 + $0x48] sm:$0xff] %vm250, 0.0
        %262 = vst.msk [vmem:[#allocation2 + $0x50] sm:$0xff] %vm250, 0.0
        %263 = vst.msk [vmem:[#allocation2 + $0x58] sm:$0x3] %vm253, 0.0
        %264 = vst.msk [vmem:[#allocation2 + $0x60] sm:$0xff] %vm250, 0.0
        %265 = vst.msk [vmem:[#allocation2 + $0x68] sm:$0xff] %vm250, 0.0
        %266 = vst.msk [vmem:[#allocation2 + $0x70] sm:$0x3] %vm253, 0.0
        %267 = vst.msk [vmem:[#allocation2 + $0x78] sm:$0xff] %vm250, 0.0
        %268 = vst.msk [vmem:[#allocation2 + $0x80] sm:$0xff] %vm250, 0.0
        %269 = vst.msk [vmem:[#allocation2 + $0x88] sm:$0x3] %vm253, 0.0
        %270 = vst.msk [vmem:[#allocation2 + $0x90] sm:$0xff] %vm250, 0.0
        %271 = vst.msk [vmem:[#allocation2 + $0x98] sm:$0xff] %vm250, 0.0
        %272 = vst.msk [vmem:[#allocation2 + $0xa0] sm:$0x3] %vm253, 0.0
        %273 = vst.msk [vmem:[#allocation2 + $0xa8] sm:$0xff] %vm250, 0.0
        %274 = vst.msk [vmem:[#allocation2 + $0xb0] sm:$0xff] %vm250, 0.0
        %275 = vst.msk [vmem:[#allocation2 + $0xb8] sm:$0x3] %vm253, 0.0
        %276 = vst.msk [vmem:[#allocation2 + $0xc0] sm:$0xff] %vm250, 0.0
        %277 = vst.msk [vmem:[#allocation2 + $0xc8] sm:$0xff] %vm250, 0.0
        %278 = vst.msk [vmem:[#allocation2 + $0xd0] sm:$0x3] %vm253, 0.0
        %279 = vst.msk [vmem:[#allocation2 + $0xd8] sm:$0xff] %vm250, 0.0
        %280 = vst.msk [vmem:[#allocation2 + $0xe0] sm:$0xff] %vm250, 0.0
        %281 = vst.msk [vmem:[#allocation2 + $0xe8] sm:$0x3] %vm253, 0.0
        %282 = vst.msk [vmem:[#allocation2 + $0xf0] sm:$0xff] %vm250, 0.0
        %283 = vst.msk [vmem:[#allocation2 + $0xf8] sm:$0xff] %vm250, 0.0
        %284 = vst.msk [vmem:[#allocation2 + $0x100] sm:$0x3] %vm253, 0.0
        %285 = vst.msk [vmem:[#allocation2 + $0x108] sm:$0xff] %vm250, 0.0
        %286 = vst.msk [vmem:[#allocation2 + $0x110] sm:$0xff] %vm250, 0.0
        %287 = vst.msk [vmem:[#allocation2 + $0x118] sm:$0x3] %vm253, 0.0
        %288 = vst.msk [vmem:[#allocation2 + $0x120] sm:$0xff] %vm250, 0.0
        %289 = vst.msk [vmem:[#allocation2 + $0x128] sm:$0xff] %vm250, 0.0
        %290 = vst.msk [vmem:[#allocation2 + $0x130] sm:$0x3] %vm253, 0.0
        %291 = vst.msk [vmem:[#allocation2 + $0x138] sm:$0xff] %vm250, 0.0
        %292 = vst.msk [vmem:[#allocation2 + $0x140] sm:$0xff] %vm250, 0.0
        %293 = vst.msk [vmem:[#allocation2 + $0x148] sm:$0x3] %vm253, 0.0
        %294 = vst.msk [vmem:[#allocation2 + $0x150] sm:$0xff] %vm250, 0.0
        %295 = vst.msk [vmem:[#allocation2 + $0x158] sm:$0xff] %vm250, 0.0
        %296 = vst.msk [vmem:[#allocation2 + $0x160] sm:$0x3] %vm253, 0.0
        %297 = vst.msk [vmem:[#allocation2 + $0x168] sm:$0xff] %vm250, 0.0
        %298 = vst.msk [vmem:[#allocation2 + $0x170] sm:$0xff] %vm250, 0.0
        %299 = vst.msk [vmem:[#allocation2 + $0x178] sm:$0x3] %vm253, 0.0
        %300 = vst.msk [vmem:[#allocation2 + $0x180] sm:$0xff] %vm250, 0.0
        %301 = vst.msk [vmem:[#allocation2 + $0x188] sm:$0xff] %vm250, 0.0
        %302 = vst.msk [vmem:[#allocation2 + $0x190] sm:$0x3] %vm253, 0.0
        %303 = vst.msk [vmem:[#allocation2 + $0x198] sm:$0xff] %vm250, 0.0
        %304 = vst.msk [vmem:[#allocation2 + $0x1a0] sm:$0xff] %vm250, 0.0
        %305 = vst.msk [vmem:[#allocation2 + $0x1a8] sm:$0x3] %vm253, 0.0
        %306 = vst.msk [vmem:[#allocation3] sm:$0xff] %vm250, 0.0
        %307 = vst.msk [vmem:[#allocation3 + $0x8] sm:$0xff] %vm250, 0.0
        %308 = vst.msk [vmem:[#allocation3 + $0x10] sm:$0x3] %vm253, 0.0
        %309 = vst.msk [vmem:[#allocation3 + $0x18] sm:$0xff] %vm250, 0.0
        %310 = vst.msk [vmem:[#allocation3 + $0x20] sm:$0xff] %vm250, 0.0
        %311 = vst.msk [vmem:[#allocation3 + $0x28] sm:$0x3] %vm253, 0.0
        %312 = vst.msk [vmem:[#allocation3 + $0x30] sm:$0xff] %vm250, 0.0
        %313 = vst.msk [vmem:[#allocation3 + $0x38] sm:$0xff] %vm250, 0.0
        %314 = vst.msk [vmem:[#allocation3 + $0x40] sm:$0x3] %vm253, 0.0
        %315 = vst.msk [vmem:[#allocation3 + $0x48] sm:$0xff] %vm250, 0.0
        %316 = vst.msk [vmem:[#allocation3 + $0x50] sm:$0xff] %vm250, 0.0
        %317 = vst.msk [vmem:[#allocation3 + $0x58] sm:$0x3] %vm253, 0.0
        %318 = vst.msk [vmem:[#allocation3 + $0x60] sm:$0xff] %vm250, 0.0
        %319 = vst.msk [vmem:[#allocation3 + $0x68] sm:$0xff] %vm250, 0.0
        %320 = vst.msk [vmem:[#allocation3 + $0x70] sm:$0x3] %vm253, 0.0
        %321 = vst.msk [vmem:[#allocation3 + $0x78] sm:$0xff] %vm250, 0.0
        %322 = vst.msk [vmem:[#allocation3 + $0x80] sm:$0xff] %vm250, 0.0
        %323 = vst.msk [vmem:[#allocation3 + $0x88] sm:$0x3] %vm253, 0.0
        %324 = vst.msk [vmem:[#allocation3 + $0x90] sm:$0xff] %vm250, 0.0
        %325 = vst.msk [vmem:[#allocation3 + $0x98] sm:$0xff] %vm250, 0.0
        %326 = vst.msk [vmem:[#allocation3 + $0xa0] sm:$0x3] %vm253, 0.0
        %327 = vst.msk [vmem:[#allocation3 + $0xa8] sm:$0xff] %vm250, 0.0
        %328 = vst.msk [vmem:[#allocation3 + $0xb0] sm:$0xff] %vm250, 0.0
        %329 = vst.msk [vmem:[#allocation3 + $0xb8] sm:$0x3] %vm253, 0.0
        %330 = vst.msk [vmem:[#allocation3 + $0xc0] sm:$0xff] %vm250, 0.0
        %331 = vst.msk [vmem:[#allocation3 + $0xc8] sm:$0xff] %vm250, 0.0
        %332 = vst.msk [vmem:[#allocation3 + $0xd0] sm:$0x3] %vm253, 0.0
        %333 = vst.msk [vmem:[#allocation3 + $0xd8] sm:$0xff] %vm250, 0.0
        %334 = vst.msk [vmem:[#allocation3 + $0xe0] sm:$0xff] %vm250, 0.0
        %335 = vst.msk [vmem:[#allocation3 + $0xe8] sm:$0x3] %vm253, 0.0
        %336 = vst.msk [vmem:[#allocation3 + $0xf0] sm:$0xff] %vm250, 0.0
        %337 = vst.msk [vmem:[#allocation3 + $0xf8] sm:$0xff] %vm250, 0.0
        %338 = vst.msk [vmem:[#allocation3 + $0x100] sm:$0x3] %vm253, 0.0
        %339 = vst.msk [vmem:[#allocation3 + $0x108] sm:$0xff] %vm250, 0.0
        %340 = vst.msk [vmem:[#allocation3 + $0x110] sm:$0xff] %vm250, 0.0
        %341 = vst.msk [vmem:[#allocation3 + $0x118] sm:$0x3] %vm253, 0.0
        %342 = vst.msk [vmem:[#allocation3 + $0x120] sm:$0xff] %vm250, 0.0
        %343 = vst.msk [vmem:[#allocation3 + $0x128] sm:$0xff] %vm250, 0.0
        %344 = vst.msk [vmem:[#allocation3 + $0x130] sm:$0x3] %vm253, 0.0
        %345 = vst.msk [vmem:[#allocation3 + $0x138] sm:$0xff] %vm250, 0.0
        %346 = vst.msk [vmem:[#allocation3 + $0x140] sm:$0xff] %vm250, 0.0
        %347 = vst.msk [vmem:[#allocation3 + $0x148] sm:$0x3] %vm253, 0.0
        %348 = vst.msk [vmem:[#allocation3 + $0x150] sm:$0xff] %vm250, 0.0
        %349 = vst.msk [vmem:[#allocation3 + $0x158] sm:$0xff] %vm250, 0.0
        %350 = vst.msk [vmem:[#allocation3 + $0x160] sm:$0x3] %vm253, 0.0
        %351 = vst.msk [vmem:[#allocation3 + $0x168] sm:$0xff] %vm250, 0.0
        %352 = vst.msk [vmem:[#allocation3 + $0x170] sm:$0xff] %vm250, 0.0
        %353 = vst.msk [vmem:[#allocation3 + $0x178] sm:$0x3] %vm253, 0.0
        %354 = vst.msk [vmem:[#allocation3 + $0x180] sm:$0xff] %vm250, 0.0
        %355 = vst.msk [vmem:[#allocation3 + $0x188] sm:$0xff] %vm250, 0.0
        %356 = vst.msk [vmem:[#allocation3 + $0x190] sm:$0x3] %vm253, 0.0
        %357 = vst.msk [vmem:[#allocation3 + $0x198] sm:$0xff] %vm250, 0.0
        %358 = vst.msk [vmem:[#allocation3 + $0x1a0] sm:$0xff] %vm250, 0.0
        %359 = vst.msk [vmem:[#allocation3 + $0x1a8] sm:$0x3] %vm253, 0.0
        %v360 = vld [vmem:[%s248] sm:$0xff]
        %v361 = vld [vmem:[%s248 + $0x8] sm:$0xff]
        %v362 = vld [vmem:[%s248 + $0x10] sm:$0xff]
        %v363 = vld [vmem:[%s248 + $0x18] sm:$0xff]
        %v364 = vld [vmem:[%s248 + $0x20] sm:$0xff]
        %v365 = vld [vmem:[%s248 + $0x28] sm:$0xff]
        %v366 = vld [vmem:[%s248 + $0x30] sm:$0xff]
        %v367 = vld [vmem:[%s248 + $0x38] sm:$0xff]
        %v368 = vld [vmem:[%s248 + $0x40] sm:$0xff]
        %v369 = vld [vmem:[%s248 + $0x48] sm:$0xff]
        %v370 = vld [vmem:[%s248 + $0x50] sm:$0xff]
        %v371 = vld [vmem:[%s248 + $0x58] sm:$0xff]
        %v372 = vld [vmem:[%s248 + $0x60] sm:$0xff]
        %v373 = vld [vmem:[%s248 + $0x68] sm:$0xff]
        %v374 = vld [vmem:[%s248 + $0x70] sm:$0xff]
        %v375 = vld [vmem:[%s248 + $0x78] sm:$0xff]
        %v376 = vld [vmem:[%s248 + $0x80] sm:$0xff]
        %v377 = vld [vmem:[%s248 + $0x88] sm:$0xff]
        %v378 = vld [vmem:[%s248 + $0x90] sm:$0xff]
        %v379 = vld [vmem:[%s248 + $0x98] sm:$0xff]
        %v380 = vld [vmem:[%s248 + $0xa0] sm:$0xff]
        %v381 = vld [vmem:[%s248 + $0xa8] sm:$0xff]
        %v382 = vld [vmem:[%s248 + $0xb0] sm:$0xff]
        %v383 = vld [vmem:[%s248 + $0xb8] sm:$0xff]
        %v384 = vld [vmem:[%s248 + $0xc0] sm:$0xff]
        %v385 = vld [vmem:[%s248 + $0xc8] sm:$0xff]
        %v386 = vld [vmem:[%s248 + $0xd0] sm:$0xff]
        %v387 = vld [vmem:[%s248 + $0xd8] sm:$0xff]
        %v388 = vld [vmem:[%s248 + $0xe0] sm:$0xff]
        %v389 = vld [vmem:[%s248 + $0xe8] sm:$0xff]
        %v390 = vld [vmem:[%s248 + $0xf0] sm:$0xff]
        %v391 = vld [vmem:[%s248 + $0xf8] sm:$0xff]
        %s392 = scalar_lea.vmem [#allocation2], 24
        %393 = vst.msk [vmem:[%s392 + $0x1] sm:$0xff] %vm250, %v360
        %394 = vst.msk [vmem:[%s392 + $0x9] sm:$0xff] %vm250, %v361
        %395 = vst.msk [vmem:[%s392 + $0x19] sm:$0xff] %vm250, %v362
        %396 = vst.msk [vmem:[%s392 + $0x21] sm:$0xff] %vm250, %v363
        %397 = vst.msk [vmem:[%s392 + $0x31] sm:$0xff] %vm250, %v364
        %398 = vst.msk [vmem:[%s392 + $0x39] sm:$0xff] %vm250, %v365
        %399 = vst.msk [vmem:[%s392 + $0x49] sm:$0xff] %vm250, %v366
        %400 = vst.msk [vmem:[%s392 + $0x51] sm:$0xff] %vm250, %v367
        %401 = vst.msk [vmem:[%s392 + $0x61] sm:$0xff] %vm250, %v368
        %402 = vst.msk [vmem:[%s392 + $0x69] sm:$0xff] %vm250, %v369
        %403 = vst.msk [vmem:[%s392 + $0x79] sm:$0xff] %vm250, %v370
        %404 = vst.msk [vmem:[%s392 + $0x81] sm:$0xff] %vm250, %v371
        %405 = vst.msk [vmem:[%s392 + $0x91] sm:$0xff] %vm250, %v372
        %406 = vst.msk [vmem:[%s392 + $0x99] sm:$0xff] %vm250, %v373
        %407 = vst.msk [vmem:[%s392 + $0xa9] sm:$0xff] %vm250, %v374
        %408 = vst.msk [vmem:[%s392 + $0xb1] sm:$0xff] %vm250, %v375
        %409 = vst.msk [vmem:[%s392 + $0xc1] sm:$0xff] %vm250, %v376
        %410 = vst.msk [vmem:[%s392 + $0xc9] sm:$0xff] %vm250, %v377
        %411 = vst.msk [vmem:[%s392 + $0xd9] sm:$0xff] %vm250, %v378
        %412 = vst.msk [vmem:[%s392 + $0xe1] sm:$0xff] %vm250, %v379
        %413 = vst.msk [vmem:[%s392 + $0xf1] sm:$0xff] %vm250, %v380
        %414 = vst.msk [vmem:[%s392 + $0xf9] sm:$0xff] %vm250, %v381
        %415 = vst.msk [vmem:[%s392 + $0x109] sm:$0xff] %vm250, %v382
        %416 = vst.msk [vmem:[%s392 + $0x111] sm:$0xff] %vm250, %v383
        %417 = vst.msk [vmem:[%s392 + $0x121] sm:$0xff] %vm250, %v384
        %418 = vst.msk [vmem:[%s392 + $0x129] sm:$0xff] %vm250, %v385
        %419 = vst.msk [vmem:[%s392 + $0x139] sm:$0xff] %vm250, %v386
        %420 = vst.msk [vmem:[%s392 + $0x141] sm:$0xff] %vm250, %v387
        %421 = vst.msk [vmem:[%s392 + $0x151] sm:$0xff] %vm250, %v388
        %422 = vst.msk [vmem:[%s392 + $0x159] sm:$0xff] %vm250, %v389
        %423 = vst.msk [vmem:[%s392 + $0x169] sm:$0xff] %vm250, %v390
        %424 = vst.msk [vmem:[%s392 + $0x171] sm:$0xff] %vm250, %v391
        %v425 = vld [vmem:[#allocation2] sm:$0xff]
        %v426 = vld [vmem:[#allocation2 + $0x8] sm:$0xff]
        %v427 = vld [vmem:[#allocation2 + $0x18] sm:$0xff]
        %v428 = vld [vmem:[#allocation2 + $0x20] sm:$0xff]
        %v429 = vld [vmem:[#allocation2 + $0x30] sm:$0xff]
        %v430 = vld [vmem:[#allocation2 + $0x38] sm:$0xff]
        %v431 = vld [vmem:[#allocation2 + $0x48] sm:$0xff]
        %v432 = vld [vmem:[#allocation2 + $0x50] sm:$0xff]
        %v433 = vld [vmem:[#allocation2 + $0x60] sm:$0xff]
        %v434 = vld [vmem:[#allocation2 + $0x68] sm:$0xff]
        %v435 = vld [vmem:[#allocation2 + $0x78] sm:$0xff]
        %v436 = vld [vmem:[#allocation2 + $0x80] sm:$0xff]
        %v437 = vld [vmem:[#allocation2 + $0x90] sm:$0xff]
        %v438 = vld [vmem:[#allocation2 + $0x98] sm:$0xff]
        %v439 = vld [vmem:[#allocation2 + $0xa8] sm:$0xff]
        %v440 = vld [vmem:[#allocation2 + $0xb0] sm:$0xff]
        %v441 = vld [vmem:[#allocation2 + $0xc0] sm:$0xff]
        %v442 = vld [vmem:[#allocation2 + $0xc8] sm:$0xff]
        %v443 = vld [vmem:[#allocation2 + $0xd8] sm:$0xff]
        %v444 = vld [vmem:[#allocation2 + $0xe0] sm:$0xff]
        %v445 = vld [vmem:[#allocation2 + $0xf0] sm:$0xff]
        %v446 = vld [vmem:[#allocation2 + $0xf8] sm:$0xff]
        %v447 = vld [vmem:[#allocation2 + $0x108] sm:$0xff]
        %v448 = vld [vmem:[#allocation2 + $0x110] sm:$0xff]
        %v449 = vld [vmem:[#allocation2 + $0x120] sm:$0xff]
        %v450 = vld [vmem:[#allocation2 + $0x128] sm:$0xff]
        %v451 = vld [vmem:[#allocation2 + $0x138] sm:$0xff]
        %v452 = vld [vmem:[#allocation2 + $0x140] sm:$0xff]
        %v453 = vld [vmem:[#allocation2 + $0x150] sm:$0xff]
        %v454 = vld [vmem:[#allocation2 + $0x158] sm:$0xff]
        %v455 = vld [vmem:[#allocation2 + $0x168] sm:$0xff]
        %v456 = vld [vmem:[#allocation2 + $0x170] sm:$0xff]
        %v457 = vld [vmem:[#allocation2 + $0x1] sm:$0xff]
        %v458 = vld [vmem:[#allocation2 + $0x9] sm:$0xff]
        %v459 = vld [vmem:[#allocation2 + $0x19] sm:$0xff]
        %v460 = vld [vmem:[#allocation2 + $0x21] sm:$0xff]
        %v461 = vld [vmem:[#allocation2 + $0x31] sm:$0xff]
        %v462 = vld [vmem:[#allocation2 + $0x39] sm:$0xff]
        %v463 = vld [vmem:[#allocation2 + $0x49] sm:$0xff]
        %v464 = vld [vmem:[#allocation2 + $0x51] sm:$0xff]
        %v465 = vld [vmem:[#allocation2 + $0x61] sm:$0xff]
        %v466 = vld [vmem:[#allocation2 + $0x69] sm:$0xff]
        %v467 = vld [vmem:[#allocation2 + $0x79] sm:$0xff]
        %v468 = vld [vmem:[#allocation2 + $0x81] sm:$0xff]
        %v469 = vld [vmem:[#allocation2 + $0x91] sm:$0xff]
        %v470 = vld [vmem:[#allocation2 + $0x99] sm:$0xff]
        %v471 = vld [vmem:[#allocation2 + $0xa9] sm:$0xff]
        %v472 = vld [vmem:[#allocation2 + $0xb1] sm:$0xff]
        %v473 = vld [vmem:[#allocation2 + $0xc1] sm:$0xff]
        %v474 = vld [vmem:[#allocation2 + $0xc9] sm:$0xff]
        %v475 = vld [vmem:[#allocation2 + $0xd9] sm:$0xff]
        %v476 = vld [vmem:[#allocation2 + $0xe1] sm:$0xff]
        %v477 = vld [vmem:[#allocation2 + $0xf1] sm:$0xff]
        %v478 = vld [vmem:[#allocation2 + $0xf9] sm:$0xff]
        %v479 = vld [vmem:[#allocation2 + $0x109] sm:$0xff]
        %v480 = vld [vmem:[#allocation2 + $0x111] sm:$0xff]
        %v481 = vld [vmem:[#allocation2 + $0x121] sm:$0xff]
        %v482 = vld [vmem:[#allocation2 + $0x129] sm:$0xff]
        %v483 = vld [vmem:[#allocation2 + $0x139] sm:$0xff]
        %v484 = vld [vmem:[#allocation2 + $0x141] sm:$0xff]
        %v485 = vld [vmem:[#allocation2 + $0x151] sm:$0xff]
        %v486 = vld [vmem:[#allocation2 + $0x159] sm:$0xff]
        %v487 = vld [vmem:[#allocation2 + $0x169] sm:$0xff]
        %v488 = vld [vmem:[#allocation2 + $0x171] sm:$0xff]
        %v489 = vld [vmem:[#allocation2 + $0x2] sm:$0xff]
        %v490 = vld [vmem:[#allocation2 + $0xa] sm:$0xff]
        %v491 = vld [vmem:[#allocation2 + $0x1a] sm:$0xff]
        %v492 = vld [vmem:[#allocation2 + $0x22] sm:$0xff]
        %v493 = vld [vmem:[#allocation2 + $0x32] sm:$0xff]
        %v494 = vld [vmem:[#allocation2 + $0x3a] sm:$0xff]
        %v495 = vld [vmem:[#allocation2 + $0x4a] sm:$0xff]
        %v496 = vld [vmem:[#allocation2 + $0x52] sm:$0xff]
        %v497 = vld [vmem:[#allocation2 + $0x62] sm:$0xff]
        %v498 = vld [vmem:[#allocation2 + $0x6a] sm:$0xff]
        %v499 = vld [vmem:[#allocation2 + $0x7a] sm:$0xff]
        %v500 = vld [vmem:[#allocation2 + $0x82] sm:$0xff]
        %v501 = vld [vmem:[#allocation2 + $0x92] sm:$0xff]
        %v502 = vld [vmem:[#allocation2 + $0x9a] sm:$0xff]
        %v503 = vld [vmem:[#allocation2 + $0xaa] sm:$0xff]
        %v504 = vld [vmem:[#allocation2 + $0xb2] sm:$0xff]
        %v505 = vld [vmem:[#allocation2 + $0xc2] sm:$0xff]
        %v506 = vld [vmem:[#allocation2 + $0xca] sm:$0xff]
        %v507 = vld [vmem:[#allocation2 + $0xda] sm:$0xff]
        %v508 = vld [vmem:[#allocation2 + $0xe2] sm:$0xff]
        %v509 = vld [vmem:[#allocation2 + $0xf2] sm:$0xff]
        %v510 = vld [vmem:[#allocation2 + $0xfa] sm:$0xff]
        %v511 = vld [vmem:[#allocation2 + $0x10a] sm:$0xff]
        %v512 = vld [vmem:[#allocation2 + $0x112] sm:$0xff]
        %v513 = vld [vmem:[#allocation2 + $0x122] sm:$0xff]
        %v514 = vld [vmem:[#allocation2 + $0x12a] sm:$0xff]
        %v515 = vld [vmem:[#allocation2 + $0x13a] sm:$0xff]
        %v516 = vld [vmem:[#allocation2 + $0x142] sm:$0xff]
        %v517 = vld [vmem:[#allocation2 + $0x152] sm:$0xff]
        %v518 = vld [vmem:[#allocation2 + $0x15a] sm:$0xff]
        %v519 = vld [vmem:[#allocation2 + $0x16a] sm:$0xff]
        %v520 = vld [vmem:[#allocation2 + $0x172] sm:$0xff]
        %v521 = vld [vmem:[%s392] sm:$0xff]
        %v522 = vld [vmem:[%s392 + $0x8] sm:$0xff]
        %v523 = vld [vmem:[%s392 + $0x18] sm:$0xff]
        %v524 = vld [vmem:[%s392 + $0x20] sm:$0xff]
        %v525 = vld [vmem:[%s392 + $0x30] sm:$0xff]
        %v526 = vld [vmem:[%s392 + $0x38] sm:$0xff]
        %v527 = vld [vmem:[%s392 + $0x48] sm:$0xff]
        %v528 = vld [vmem:[%s392 + $0x50] sm:$0xff]
        %v529 = vld [vmem:[%s392 + $0x60] sm:$0xff]
        %v530 = vld [vmem:[%s392 + $0x68] sm:$0xff]
        %v531 = vld [vmem:[%s392 + $0x78] sm:$0xff]
        %v532 = vld [vmem:[%s392 + $0x80] sm:$0xff]
        %v533 = vld [vmem:[%s392 + $0x90] sm:$0xff]
        %v534 = vld [vmem:[%s392 + $0x98] sm:$0xff]
        %v535 = vld [vmem:[%s392 + $0xa8] sm:$0xff]
        %v536 = vld [vmem:[%s392 + $0xb0] sm:$0xff]
        %v537 = vld [vmem:[%s392 + $0xc0] sm:$0xff]
        %v538 = vld [vmem:[%s392 + $0xc8] sm:$0xff]
        %v539 = vld [vmem:[%s392 + $0xd8] sm:$0xff]
        %v540 = vld [vmem:[%s392 + $0xe0] sm:$0xff]
        %v541 = vld [vmem:[%s392 + $0xf0] sm:$0xff]
        %v542 = vld [vmem:[%s392 + $0xf8] sm:$0xff]
        %v543 = vld [vmem:[%s392 + $0x108] sm:$0xff]
        %v544 = vld [vmem:[%s392 + $0x110] sm:$0xff]
        %v545 = vld [vmem:[%s392 + $0x120] sm:$0xff]
        %v546 = vld [vmem:[%s392 + $0x128] sm:$0xff]
        %v547 = vld [vmem:[%s392 + $0x138] sm:$0xff]
        %v548 = vld [vmem:[%s392 + $0x140] sm:$0xff]
        %v549 = vld [vmem:[%s392 + $0x150] sm:$0xff]
        %v550 = vld [vmem:[%s392 + $0x158] sm:$0xff]
        %v551 = vld [vmem:[%s392 + $0x168] sm:$0xff]
        %v552 = vld [vmem:[%s392 + $0x170] sm:$0xff]
        %v553 = vld [vmem:[%s392 + $0x1] sm:$0xff]
        %v554 = vld [vmem:[%s392 + $0x9] sm:$0xff]
        %v555 = vld [vmem:[%s392 + $0x19] sm:$0xff]
        %v556 = vld [vmem:[%s392 + $0x21] sm:$0xff]
        %v557 = vld [vmem:[%s392 + $0x31] sm:$0xff]
        %v558 = vld [vmem:[%s392 + $0x39] sm:$0xff]
        %v559 = vld [vmem:[%s392 + $0x49] sm:$0xff]
        %v560 = vld [vmem:[%s392 + $0x51] sm:$0xff]
        %v561 = vld [vmem:[%s392 + $0x61] sm:$0xff]
        %v562 = vld [vmem:[%s392 + $0x69] sm:$0xff]
        %v563 = vld [vmem:[%s392 + $0x79] sm:$0xff]
        %v564 = vld [vmem:[%s392 + $0x81] sm:$0xff]
        %v565 = vld [vmem:[%s392 + $0x91] sm:$0xff]
        %v566 = vld [vmem:[%s392 + $0x99] sm:$0xff]
        %v567 = vld [vmem:[%s392 + $0xa9] sm:$0xff]
        %v568 = vld [vmem:[%s392 + $0xb1] sm:$0xff]
        %v569 = vld [vmem:[%s392 + $0xc1] sm:$0xff]
        %v570 = vld [vmem:[%s392 + $0xc9] sm:$0xff]
        %v571 = vld [vmem:[%s392 + $0xd9] sm:$0xff]
        %v572 = vld [vmem:[%s392 + $0xe1] sm:$0xff]
        %v573 = vld [vmem:[%s392 + $0xf1] sm:$0xff]
        %v574 = vld [vmem:[%s392 + $0xf9] sm:$0xff]
        %v575 = vld [vmem:[%s392 + $0x109] sm:$0xff]
        %v576 = vld [vmem:[%s392 + $0x111] sm:$0xff]
        %v577 = vld [vmem:[%s392 + $0x121] sm:$0xff]
        %v578 = vld [vmem:[%s392 + $0x129] sm:$0xff]
        %v579 = vld [vmem:[%s392 + $0x139] sm:$0xff]
        %v580 = vld [vmem:[%s392 + $0x141] sm:$0xff]
        %v581 = vld [vmem:[%s392 + $0x151] sm:$0xff]
        %v582 = vld [vmem:[%s392 + $0x159] sm:$0xff]
        %v583 = vld [vmem:[%s392 + $0x169] sm:$0xff]
        %v584 = vld [vmem:[%s392 + $0x171] sm:$0xff]
        %v585 = vld [vmem:[%s392 + $0x2] sm:$0xff]
        %v586 = vld [vmem:[%s392 + $0xa] sm:$0xff]
        %v587 = vld [vmem:[%s392 + $0x1a] sm:$0xff]
        %v588 = vld [vmem:[%s392 + $0x22] sm:$0xff]
        %v589 = vld [vmem:[%s392 + $0x32] sm:$0xff]
        %v590 = vld [vmem:[%s392 + $0x3a] sm:$0xff]
        %v591 = vld [vmem:[%s392 + $0x4a] sm:$0xff]
        %v592 = vld [vmem:[%s392 + $0x52] sm:$0xff]
        %v593 = vld [vmem:[%s392 + $0x62] sm:$0xff]
        %v594 = vld [vmem:[%s392 + $0x6a] sm:$0xff]
        %v595 = vld [vmem:[%s392 + $0x7a] sm:$0xff]
        %v596 = vld [vmem:[%s392 + $0x82] sm:$0xff]
        %v597 = vld [vmem:[%s392 + $0x92] sm:$0xff]
        %v598 = vld [vmem:[%s392 + $0x9a] sm:$0xff]
        %v599 = vld [vmem:[%s392 + $0xaa] sm:$0xff]
        %v600 = vld [vmem:[%s392 + $0xb2] sm:$0xff]
        %v601 = vld [vmem:[%s392 + $0xc2] sm:$0xff]
        %v602 = vld [vmem:[%s392 + $0xca] sm:$0xff]
        %v603 = vld [vmem:[%s392 + $0xda] sm:$0xff]
        %v604 = vld [vmem:[%s392 + $0xe2] sm:$0xff]
        %v605 = vld [vmem:[%s392 + $0xf2] sm:$0xff]
        %v606 = vld [vmem:[%s392 + $0xfa] sm:$0xff]
        %v607 = vld [vmem:[%s392 + $0x10a] sm:$0xff]
        %v608 = vld [vmem:[%s392 + $0x112] sm:$0xff]
        %v609 = vld [vmem:[%s392 + $0x122] sm:$0xff]
        %v610 = vld [vmem:[%s392 + $0x12a] sm:$0xff]
        %v611 = vld [vmem:[%s392 + $0x13a] sm:$0xff]
        %v612 = vld [vmem:[%s392 + $0x142] sm:$0xff]
        %v613 = vld [vmem:[%s392 + $0x152] sm:$0xff]
        %v614 = vld [vmem:[%s392 + $0x15a] sm:$0xff]
        %v615 = vld [vmem:[%s392 + $0x16a] sm:$0xff]
        %v616 = vld [vmem:[%s392 + $0x172] sm:$0xff]
        %s617 = scalar_lea.vmem [#allocation2], 48
        %v618 = vld [vmem:[%s617] sm:$0xff]
        %v619 = vld [vmem:[%s617 + $0x8] sm:$0xff]
        %v620 = vld [vmem:[%s617 + $0x18] sm:$0xff]
        %v621 = vld [vmem:[%s617 + $0x20] sm:$0xff]
        %v622 = vld [vmem:[%s617 + $0x30] sm:$0xff]
        %v623 = vld [vmem:[%s617 + $0x38] sm:$0xff]
        %v624 = vld [vmem:[%s617 + $0x48] sm:$0xff]
        %v625 = vld [vmem:[%s617 + $0x50] sm:$0xff]
        %v626 = vld [vmem:[%s617 + $0x60] sm:$0xff]
        %v627 = vld [vmem:[%s617 + $0x68] sm:$0xff]
        %v628 = vld [vmem:[%s617 + $0x78] sm:$0xff]
        %v629 = vld [vmem:[%s617 + $0x80] sm:$0xff]
        %v630 = vld [vmem:[%s617 + $0x90] sm:$0xff]
        %v631 = vld [vmem:[%s617 + $0x98] sm:$0xff]
        %v632 = vld [vmem:[%s617 + $0xa8] sm:$0xff]
        %v633 = vld [vmem:[%s617 + $0xb0] sm:$0xff]
        %v634 = vld [vmem:[%s617 + $0xc0] sm:$0xff]
        %v635 = vld [vmem:[%s617 + $0xc8] sm:$0xff]
        %v636 = vld [vmem:[%s617 + $0xd8] sm:$0xff]
        %v637 = vld [vmem:[%s617 + $0xe0] sm:$0xff]
        %v638 = vld [vmem:[%s617 + $0xf0] sm:$0xff]
        %v639 = vld [vmem:[%s617 + $0xf8] sm:$0xff]
        %v640 = vld [vmem:[%s617 + $0x108] sm:$0xff]
        %v641 = vld [vmem:[%s617 + $0x110] sm:$0xff]
        %v642 = vld [vmem:[%s617 + $0x120] sm:$0xff]
        %v643 = vld [vmem:[%s617 + $0x128] sm:$0xff]
        %v644 = vld [vmem:[%s617 + $0x138] sm:$0xff]
        %v645 = vld [vmem:[%s617 + $0x140] sm:$0xff]
        %v646 = vld [vmem:[%s617 + $0x150] sm:$0xff]
        %v647 = vld [vmem:[%s617 + $0x158] sm:$0xff]
        %v648 = vld [vmem:[%s617 + $0x168] sm:$0xff]
        %v649 = vld [vmem:[%s617 + $0x170] sm:$0xff]
        %v650 = vld [vmem:[%s617 + $0x1] sm:$0xff]
        %v651 = vld [vmem:[%s617 + $0x9] sm:$0xff]
        %v652 = vld [vmem:[%s617 + $0x19] sm:$0xff]
        %v653 = vld [vmem:[%s617 + $0x21] sm:$0xff]
        %v654 = vld [vmem:[%s617 + $0x31] sm:$0xff]
        %v655 = vld [vmem:[%s617 + $0x39] sm:$0xff]
        %v656 = vld [vmem:[%s617 + $0x49] sm:$0xff]
        %v657 = vld [vmem:[%s617 + $0x51] sm:$0xff]
        %v658 = vld [vmem:[%s617 + $0x61] sm:$0xff]
        %v659 = vld [vmem:[%s617 + $0x69] sm:$0xff]
        %v660 = vld [vmem:[%s617 + $0x79] sm:$0xff]
        %v661 = vld [vmem:[%s617 + $0x81] sm:$0xff]
        %v662 = vld [vmem:[%s617 + $0x91] sm:$0xff]
        %v663 = vld [vmem:[%s617 + $0x99] sm:$0xff]
        %v664 = vld [vmem:[%s617 + $0xa9] sm:$0xff]
        %v665 = vld [vmem:[%s617 + $0xb1] sm:$0xff]
        %v666 = vld [vmem:[%s617 + $0xc1] sm:$0xff]
        %v667 = vld [vmem:[%s617 + $0xc9] sm:$0xff]
        %v668 = vld [vmem:[%s617 + $0xd9] sm:$0xff]
        %v669 = vld [vmem:[%s617 + $0xe1] sm:$0xff]
        %v670 = vld [vmem:[%s617 + $0xf1] sm:$0xff]
        %v671 = vld [vmem:[%s617 + $0xf9] sm:$0xff]
        %v672 = vld [vmem:[%s617 + $0x109] sm:$0xff]
        %v673 = vld [vmem:[%s617 + $0x111] sm:$0xff]
        %v674 = vld [vmem:[%s617 + $0x121] sm:$0xff]
        %v675 = vld [vmem:[%s617 + $0x129] sm:$0xff]
        %v676 = vld [vmem:[%s617 + $0x139] sm:$0xff]
        %v677 = vld [vmem:[%s617 + $0x141] sm:$0xff]
        %v678 = vld [vmem:[%s617 + $0x151] sm:$0xff]
        %v679 = vld [vmem:[%s617 + $0x159] sm:$0xff]
        %v680 = vld [vmem:[%s617 + $0x169] sm:$0xff]
        %v681 = vld [vmem:[%s617 + $0x171] sm:$0xff]
        %v682 = vld [vmem:[%s617 + $0x2] sm:$0xff]
        %v683 = vld [vmem:[%s617 + $0xa] sm:$0xff]
        %v684 = vld [vmem:[%s617 + $0x1a] sm:$0xff]
        %v685 = vld [vmem:[%s617 + $0x22] sm:$0xff]
        %v686 = vld [vmem:[%s617 + $0x32] sm:$0xff]
        %v687 = vld [vmem:[%s617 + $0x3a] sm:$0xff]
        %v688 = vld [vmem:[%s617 + $0x4a] sm:$0xff]
        %v689 = vld [vmem:[%s617 + $0x52] sm:$0xff]
        %v690 = vld [vmem:[%s617 + $0x62] sm:$0xff]
        %v691 = vld [vmem:[%s617 + $0x6a] sm:$0xff]
        %v692 = vld [vmem:[%s617 + $0x7a] sm:$0xff]
        %v693 = vld [vmem:[%s617 + $0x82] sm:$0xff]
        %v694 = vld [vmem:[%s617 + $0x92] sm:$0xff]
        %v695 = vld [vmem:[%s617 + $0x9a] sm:$0xff]
        %v696 = vld [vmem:[%s617 + $0xaa] sm:$0xff]
        %v697 = vld [vmem:[%s617 + $0xb2] sm:$0xff]
        %v698 = vld [vmem:[%s617 + $0xc2] sm:$0xff]
        %v699 = vld [vmem:[%s617 + $0xca] sm:$0xff]
        %v700 = vld [vmem:[%s617 + $0xda] sm:$0xff]
        %v701 = vld [vmem:[%s617 + $0xe2] sm:$0xff]
        %v702 = vld [vmem:[%s617 + $0xf2] sm:$0xff]
        %v703 = vld [vmem:[%s617 + $0xfa] sm:$0xff]
        %v704 = vld [vmem:[%s617 + $0x10a] sm:$0xff]
        %v705 = vld [vmem:[%s617 + $0x112] sm:$0xff]
        %v706 = vld [vmem:[%s617 + $0x122] sm:$0xff]
        %v707 = vld [vmem:[%s617 + $0x12a] sm:$0xff]
        %v708 = vld [vmem:[%s617 + $0x13a] sm:$0xff]
        %v709 = vld [vmem:[%s617 + $0x142] sm:$0xff]
        %v710 = vld [vmem:[%s617 + $0x152] sm:$0xff]
        %v711 = vld [vmem:[%s617 + $0x15a] sm:$0xff]
        %v712 = vld [vmem:[%s617 + $0x16a] sm:$0xff]
        %v713 = vld [vmem:[%s617 + $0x172] sm:$0xff]
        %746 = vrot.lane.b32.xlu0 %v457, 8
        %v747 = vpop.permute.xlu0 %746
        %748 = vrot.lane.b32.xlu0 %v458, 8
        %v749 = vpop.permute.xlu0 %748
        %750 = vrot.lane.b32.xlu0 %v459, 8
        %v751 = vpop.permute.xlu0 %750
        %752 = vrot.lane.b32.xlu0 %v460, 8
        %v753 = vpop.permute.xlu0 %752
        %754 = vrot.lane.b32.xlu0 %v461, 8
        %v755 = vpop.permute.xlu0 %754
        %756 = vrot.lane.b32.xlu0 %v462, 8
        %v757 = vpop.permute.xlu0 %756
        %758 = vrot.lane.b32.xlu0 %v463, 8
        %v759 = vpop.permute.xlu0 %758
        %760 = vrot.lane.b32.xlu0 %v464, 8
        %v761 = vpop.permute.xlu0 %760
        %762 = vrot.lane.b32.xlu0 %v465, 8
        %v763 = vpop.permute.xlu0 %762
        %764 = vrot.lane.b32.xlu0 %v466, 8
        %v765 = vpop.permute.xlu0 %764
        %766 = vrot.lane.b32.xlu0 %v467, 8
        %v767 = vpop.permute.xlu0 %766
        %768 = vrot.lane.b32.xlu0 %v468, 8
        %v769 = vpop.permute.xlu0 %768
        %770 = vrot.lane.b32.xlu0 %v469, 8
        %v771 = vpop.permute.xlu0 %770
        %772 = vrot.lane.b32.xlu0 %v470, 8
        %v773 = vpop.permute.xlu0 %772
        %774 = vrot.lane.b32.xlu0 %v471, 8
        %v775 = vpop.permute.xlu0 %774
        %776 = vrot.lane.b32.xlu0 %v472, 8
        %v777 = vpop.permute.xlu0 %776
        %778 = vrot.lane.b32.xlu0 %v473, 8
        %v779 = vpop.permute.xlu0 %778
        %780 = vrot.lane.b32.xlu0 %v474, 8
        %v781 = vpop.permute.xlu0 %780
        %782 = vrot.lane.b32.xlu0 %v475, 8
        %v783 = vpop.permute.xlu0 %782
        %784 = vrot.lane.b32.xlu0 %v476, 8
        %v785 = vpop.permute.xlu0 %784
        %786 = vrot.lane.b32.xlu0 %v477, 8
        %v787 = vpop.permute.xlu0 %786
        %788 = vrot.lane.b32.xlu0 %v478, 8
        %v789 = vpop.permute.xlu0 %788
        %790 = vrot.lane.b32.xlu0 %v479, 8
        %v791 = vpop.permute.xlu0 %790
        %792 = vrot.lane.b32.xlu0 %v480, 8
        %v793 = vpop.permute.xlu0 %792
        %794 = vrot.lane.b32.xlu0 %v481, 8
        %v795 = vpop.permute.xlu0 %794
        %796 = vrot.lane.b32.xlu0 %v482, 8
        %v797 = vpop.permute.xlu0 %796
        %798 = vrot.lane.b32.xlu0 %v483, 8
        %v799 = vpop.permute.xlu0 %798
        %800 = vrot.lane.b32.xlu0 %v484, 8
        %v801 = vpop.permute.xlu0 %800
        %802 = vrot.lane.b32.xlu0 %v485, 8
        %v803 = vpop.permute.xlu0 %802
        %804 = vrot.lane.b32.xlu0 %v486, 8
        %v805 = vpop.permute.xlu0 %804
        %806 = vrot.lane.b32.xlu0 %v487, 8
        %v807 = vpop.permute.xlu0 %806
        %808 = vrot.lane.b32.xlu0 %v488, 8
        %v809 = vpop.permute.xlu0 %808
        %874 = vrot.lane.b32.xlu0 %v489, 16
        %v875 = vpop.permute.xlu0 %874
        %876 = vrot.lane.b32.xlu0 %v490, 16
        %v877 = vpop.permute.xlu0 %876
        %878 = vrot.lane.b32.xlu0 %v491, 16
        %v879 = vpop.permute.xlu0 %878
        %880 = vrot.lane.b32.xlu0 %v492, 16
        %v881 = vpop.permute.xlu0 %880
        %882 = vrot.lane.b32.xlu0 %v493, 16
        %v883 = vpop.permute.xlu0 %882
        %884 = vrot.lane.b32.xlu0 %v494, 16
        %v885 = vpop.permute.xlu0 %884
        %886 = vrot.lane.b32.xlu0 %v495, 16
        %v887 = vpop.permute.xlu0 %886
        %888 = vrot.lane.b32.xlu0 %v496, 16
        %v889 = vpop.permute.xlu0 %888
        %890 = vrot.lane.b32.xlu0 %v497, 16
        %v891 = vpop.permute.xlu0 %890
        %892 = vrot.lane.b32.xlu0 %v498, 16
        %v893 = vpop.permute.xlu0 %892
        %894 = vrot.lane.b32.xlu0 %v499, 16
        %v895 = vpop.permute.xlu0 %894
        %896 = vrot.lane.b32.xlu0 %v500, 16
        %v897 = vpop.permute.xlu0 %896
        %898 = vrot.lane.b32.xlu0 %v501, 16
        %v899 = vpop.permute.xlu0 %898
        %900 = vrot.lane.b32.xlu0 %v502, 16
        %v901 = vpop.permute.xlu0 %900
        %902 = vrot.lane.b32.xlu0 %v503, 16
        %v903 = vpop.permute.xlu0 %902
        %904 = vrot.lane.b32.xlu0 %v504, 16
        %v905 = vpop.permute.xlu0 %904
        %906 = vrot.lane.b32.xlu0 %v505, 16
        %v907 = vpop.permute.xlu0 %906
        %908 = vrot.lane.b32.xlu0 %v506, 16
        %v909 = vpop.permute.xlu0 %908
        %910 = vrot.lane.b32.xlu0 %v507, 16
        %v911 = vpop.permute.xlu0 %910
        %912 = vrot.lane.b32.xlu0 %v508, 16
        %v913 = vpop.permute.xlu0 %912
        %914 = vrot.lane.b32.xlu0 %v509, 16
        %v915 = vpop.permute.xlu0 %914
        %916 = vrot.lane.b32.xlu0 %v510, 16
        %v917 = vpop.permute.xlu0 %916
        %918 = vrot.lane.b32.xlu0 %v511, 16
        %v919 = vpop.permute.xlu0 %918
        %920 = vrot.lane.b32.xlu0 %v512, 16
        %v921 = vpop.permute.xlu0 %920
        %922 = vrot.lane.b32.xlu0 %v513, 16
        %v923 = vpop.permute.xlu0 %922
        %924 = vrot.lane.b32.xlu0 %v514, 16
        %v925 = vpop.permute.xlu0 %924
        %926 = vrot.lane.b32.xlu0 %v515, 16
        %v927 = vpop.permute.xlu0 %926
        %928 = vrot.lane.b32.xlu0 %v516, 16
        %v929 = vpop.permute.xlu0 %928
        %930 = vrot.lane.b32.xlu0 %v517, 16
        %v931 = vpop.permute.xlu0 %930
        %932 = vrot.lane.b32.xlu0 %v518, 16
        %v933 = vpop.permute.xlu0 %932
        %934 = vrot.lane.b32.xlu0 %v519, 16
        %v935 = vpop.permute.xlu0 %934
        %936 = vrot.lane.b32.xlu0 %v520, 16
        %v937 = vpop.permute.xlu0 %936
        %1002 = vrot.lane.b32.xlu0 %v521, 24
        %v1003 = vpop.permute.xlu0 %1002
        %1004 = vrot.lane.b32.xlu0 %v522, 24
        %v1005 = vpop.permute.xlu0 %1004
        %1006 = vrot.lane.b32.xlu0 %v523, 24
        %v1007 = vpop.permute.xlu0 %1006
        %1008 = vrot.lane.b32.xlu0 %v524, 24
        %v1009 = vpop.permute.xlu0 %1008
        %1010 = vrot.lane.b32.xlu0 %v525, 24
        %v1011 = vpop.permute.xlu0 %1010
        %1012 = vrot.lane.b32.xlu0 %v526, 24
        %v1013 = vpop.permute.xlu0 %1012
        %1014 = vrot.lane.b32.xlu0 %v527, 24
        %v1015 = vpop.permute.xlu0 %1014
        %1016 = vrot.lane.b32.xlu0 %v528, 24
        %v1017 = vpop.permute.xlu0 %1016
        %1018 = vrot.lane.b32.xlu0 %v529, 24
        %v1019 = vpop.permute.xlu0 %1018
        %1020 = vrot.lane.b32.xlu0 %v530, 24
        %v1021 = vpop.permute.xlu0 %1020
        %1022 = vrot.lane.b32.xlu0 %v531, 24
        %v1023 = vpop.permute.xlu0 %1022
        %1024 = vrot.lane.b32.xlu0 %v532, 24
        %v1025 = vpop.permute.xlu0 %1024
        %1026 = vrot.lane.b32.xlu0 %v533, 24
        %v1027 = vpop.permute.xlu0 %1026
        %1028 = vrot.lane.b32.xlu0 %v534, 24
        %v1029 = vpop.permute.xlu0 %1028
        %1030 = vrot.lane.b32.xlu0 %v535, 24
        %v1031 = vpop.permute.xlu0 %1030
        %1032 = vrot.lane.b32.xlu0 %v536, 24
        %v1033 = vpop.permute.xlu0 %1032
        %1034 = vrot.lane.b32.xlu0 %v537, 24
        %v1035 = vpop.permute.xlu0 %1034
        %1036 = vrot.lane.b32.xlu0 %v538, 24
        %v1037 = vpop.permute.xlu0 %1036
        %1038 = vrot.lane.b32.xlu0 %v539, 24
        %v1039 = vpop.permute.xlu0 %1038
        %1040 = vrot.lane.b32.xlu0 %v540, 24
        %v1041 = vpop.permute.xlu0 %1040
        %1042 = vrot.lane.b32.xlu0 %v541, 24
        %v1043 = vpop.permute.xlu0 %1042
        %1044 = vrot.lane.b32.xlu0 %v542, 24
        %v1045 = vpop.permute.xlu0 %1044
        %1046 = vrot.lane.b32.xlu0 %v543, 24
        %v1047 = vpop.permute.xlu0 %1046
        %1048 = vrot.lane.b32.xlu0 %v544, 24
        %v1049 = vpop.permute.xlu0 %1048
        %1050 = vrot.lane.b32.xlu0 %v545, 24
        %v1051 = vpop.permute.xlu0 %1050
        %1052 = vrot.lane.b32.xlu0 %v546, 24
        %v1053 = vpop.permute.xlu0 %1052
        %1054 = vrot.lane.b32.xlu0 %v547, 24
        %v1055 = vpop.permute.xlu0 %1054
        %1056 = vrot.lane.b32.xlu0 %v548, 24
        %v1057 = vpop.permute.xlu0 %1056
        %1058 = vrot.lane.b32.xlu0 %v549, 24
        %v1059 = vpop.permute.xlu0 %1058
        %1060 = vrot.lane.b32.xlu0 %v550, 24
        %v1061 = vpop.permute.xlu0 %1060
        %1062 = vrot.lane.b32.xlu0 %v551, 24
        %v1063 = vpop.permute.xlu0 %1062
        %1064 = vrot.lane.b32.xlu0 %v552, 24
        %v1065 = vpop.permute.xlu0 %1064
        %1130 = vrot.lane.b32.xlu0 %v553, 32
        %v1131 = vpop.permute.xlu0 %1130
        %1132 = vrot.lane.b32.xlu0 %v554, 32
        %v1133 = vpop.permute.xlu0 %1132
        %1134 = vrot.lane.b32.xlu0 %v555, 32
        %v1135 = vpop.permute.xlu0 %1134
        %1136 = vrot.lane.b32.xlu0 %v556, 32
        %v1137 = vpop.permute.xlu0 %1136
        %1138 = vrot.lane.b32.xlu0 %v557, 32
        %v1139 = vpop.permute.xlu0 %1138
        %1140 = vrot.lane.b32.xlu0 %v558, 32
        %v1141 = vpop.permute.xlu0 %1140
        %1142 = vrot.lane.b32.xlu0 %v559, 32
        %v1143 = vpop.permute.xlu0 %1142
        %1144 = vrot.lane.b32.xlu0 %v560, 32
        %v1145 = vpop.permute.xlu0 %1144
        %1146 = vrot.lane.b32.xlu0 %v561, 32
        %v1147 = vpop.permute.xlu0 %1146
        %1148 = vrot.lane.b32.xlu0 %v562, 32
        %v1149 = vpop.permute.xlu0 %1148
        %1150 = vrot.lane.b32.xlu0 %v563, 32
        %v1151 = vpop.permute.xlu0 %1150
        %1152 = vrot.lane.b32.xlu0 %v564, 32
        %v1153 = vpop.permute.xlu0 %1152
        %1154 = vrot.lane.b32.xlu0 %v565, 32
        %v1155 = vpop.permute.xlu0 %1154
        %1156 = vrot.lane.b32.xlu0 %v566, 32
        %v1157 = vpop.permute.xlu0 %1156
        %1158 = vrot.lane.b32.xlu0 %v567, 32
        %v1159 = vpop.permute.xlu0 %1158
        %1160 = vrot.lane.b32.xlu0 %v568, 32
        %v1161 = vpop.permute.xlu0 %1160
        %1162 = vrot.lane.b32.xlu0 %v569, 32
        %v1163 = vpop.permute.xlu0 %1162
        %1164 = vrot.lane.b32.xlu0 %v570, 32
        %v1165 = vpop.permute.xlu0 %1164
        %1166 = vrot.lane.b32.xlu0 %v571, 32
        %v1167 = vpop.permute.xlu0 %1166
        %1168 = vrot.lane.b32.xlu0 %v572, 32
        %v1169 = vpop.permute.xlu0 %1168
        %1170 = vrot.lane.b32.xlu0 %v573, 32
        %v1171 = vpop.permute.xlu0 %1170
        %1172 = vrot.lane.b32.xlu0 %v574, 32
        %v1173 = vpop.permute.xlu0 %1172
        %1174 = vrot.lane.b32.xlu0 %v575, 32
        %v1175 = vpop.permute.xlu0 %1174
        %1176 = vrot.lane.b32.xlu0 %v576, 32
        %v1177 = vpop.permute.xlu0 %1176
        %1178 = vrot.lane.b32.xlu0 %v577, 32
        %v1179 = vpop.permute.xlu0 %1178
        %1180 = vrot.lane.b32.xlu0 %v578, 32
        %v1181 = vpop.permute.xlu0 %1180
        %1182 = vrot.lane.b32.xlu0 %v579, 32
        %v1183 = vpop.permute.xlu0 %1182
        %1184 = vrot.lane.b32.xlu0 %v580, 32
        %v1185 = vpop.permute.xlu0 %1184
        %1186 = vrot.lane.b32.xlu0 %v581, 32
        %v1187 = vpop.permute.xlu0 %1186
        %1188 = vrot.lane.b32.xlu0 %v582, 32
        %v1189 = vpop.permute.xlu0 %1188
        %1190 = vrot.lane.b32.xlu0 %v583, 32
        %v1191 = vpop.permute.xlu0 %1190
        %1192 = vrot.lane.b32.xlu0 %v584, 32
        %v1193 = vpop.permute.xlu0 %1192
        %1258 = vrot.lane.b32.xlu0 %v585, 40
        %v1259 = vpop.permute.xlu0 %1258
        %1260 = vrot.lane.b32.xlu0 %v586, 40
        %v1261 = vpop.permute.xlu0 %1260
        %1262 = vrot.lane.b32.xlu0 %v587, 40
        %v1263 = vpop.permute.xlu0 %1262
        %1264 = vrot.lane.b32.xlu0 %v588, 40
        %v1265 = vpop.permute.xlu0 %1264
        %1266 = vrot.lane.b32.xlu0 %v589, 40
        %v1267 = vpop.permute.xlu0 %1266
        %1268 = vrot.lane.b32.xlu0 %v590, 40
        %v1269 = vpop.permute.xlu0 %1268
        %1270 = vrot.lane.b32.xlu0 %v591, 40
        %v1271 = vpop.permute.xlu0 %1270
        %1272 = vrot.lane.b32.xlu0 %v592, 40
        %v1273 = vpop.permute.xlu0 %1272
        %1274 = vrot.lane.b32.xlu0 %v593, 40
        %v1275 = vpop.permute.xlu0 %1274
        %1276 = vrot.lane.b32.xlu0 %v594, 40
        %v1277 = vpop.permute.xlu0 %1276
        %1278 = vrot.lane.b32.xlu0 %v595, 40
        %v1279 = vpop.permute.xlu0 %1278
        %1280 = vrot.lane.b32.xlu0 %v596, 40
        %v1281 = vpop.permute.xlu0 %1280
        %1282 = vrot.lane.b32.xlu0 %v597, 40
        %v1283 = vpop.permute.xlu0 %1282
        %1284 = vrot.lane.b32.xlu0 %v598, 40
        %v1285 = vpop.permute.xlu0 %1284
        %1286 = vrot.lane.b32.xlu0 %v599, 40
        %v1287 = vpop.permute.xlu0 %1286
        %1288 = vrot.lane.b32.xlu0 %v600, 40
        %v1289 = vpop.permute.xlu0 %1288
        %1290 = vrot.lane.b32.xlu0 %v601, 40
        %v1291 = vpop.permute.xlu0 %1290
        %1292 = vrot.lane.b32.xlu0 %v602, 40
        %v1293 = vpop.permute.xlu0 %1292
        %1294 = vrot.lane.b32.xlu0 %v603, 40
        %v1295 = vpop.permute.xlu0 %1294
        %1296 = vrot.lane.b32.xlu0 %v604, 40
        %v1297 = vpop.permute.xlu0 %1296
        %1298 = vrot.lane.b32.xlu0 %v605, 40
        %v1299 = vpop.permute.xlu0 %1298
        %1300 = vrot.lane.b32.xlu0 %v606, 40
        %v1301 = vpop.permute.xlu0 %1300
        %1302 = vrot.lane.b32.xlu0 %v607, 40
        %v1303 = vpop.permute.xlu0 %1302
        %1304 = vrot.lane.b32.xlu0 %v608, 40
        %v1305 = vpop.permute.xlu0 %1304
        %1306 = vrot.lane.b32.xlu0 %v609, 40
        %v1307 = vpop.permute.xlu0 %1306
        %1308 = vrot.lane.b32.xlu0 %v610, 40
        %v1309 = vpop.permute.xlu0 %1308
        %1310 = vrot.lane.b32.xlu0 %v611, 40
        %v1311 = vpop.permute.xlu0 %1310
        %1312 = vrot.lane.b32.xlu0 %v612, 40
        %v1313 = vpop.permute.xlu0 %1312
        %1314 = vrot.lane.b32.xlu0 %v613, 40
        %v1315 = vpop.permute.xlu0 %1314
        %1316 = vrot.lane.b32.xlu0 %v614, 40
        %v1317 = vpop.permute.xlu0 %1316
        %1318 = vrot.lane.b32.xlu0 %v615, 40
        %v1319 = vpop.permute.xlu0 %1318
        %1320 = vrot.lane.b32.xlu0 %v616, 40
        %v1321 = vpop.permute.xlu0 %1320
        %1386 = vrot.lane.b32.xlu0 %v618, 48
        %v1387 = vpop.permute.xlu0 %1386
        %1388 = vrot.lane.b32.xlu0 %v619, 48
        %v1389 = vpop.permute.xlu0 %1388
        %1390 = vrot.lane.b32.xlu0 %v620, 48
        %v1391 = vpop.permute.xlu0 %1390
        %1392 = vrot.lane.b32.xlu0 %v621, 48
        %v1393 = vpop.permute.xlu0 %1392
        %1394 = vrot.lane.b32.xlu0 %v622, 48
        %v1395 = vpop.permute.xlu0 %1394
        %1396 = vrot.lane.b32.xlu0 %v623, 48
        %v1397 = vpop.permute.xlu0 %1396
        %1398 = vrot.lane.b32.xlu0 %v624, 48
        %v1399 = vpop.permute.xlu0 %1398
        %1400 = vrot.lane.b32.xlu0 %v625, 48
        %v1401 = vpop.permute.xlu0 %1400
        %1402 = vrot.lane.b32.xlu0 %v626, 48
        %v1403 = vpop.permute.xlu0 %1402
        %1404 = vrot.lane.b32.xlu0 %v627, 48
        %v1405 = vpop.permute.xlu0 %1404
        %1406 = vrot.lane.b32.xlu0 %v628, 48
        %v1407 = vpop.permute.xlu0 %1406
        %1408 = vrot.lane.b32.xlu0 %v629, 48
        %v1409 = vpop.permute.xlu0 %1408
        %1410 = vrot.lane.b32.xlu0 %v630, 48
        %v1411 = vpop.permute.xlu0 %1410
        %1412 = vrot.lane.b32.xlu0 %v631, 48
        %v1413 = vpop.permute.xlu0 %1412
        %1414 = vrot.lane.b32.xlu0 %v632, 48
        %v1415 = vpop.permute.xlu0 %1414
        %1416 = vrot.lane.b32.xlu0 %v633, 48
        %v1417 = vpop.permute.xlu0 %1416
        %1418 = vrot.lane.b32.xlu0 %v634, 48
        %v1419 = vpop.permute.xlu0 %1418
        %1420 = vrot.lane.b32.xlu0 %v635, 48
        %v1421 = vpop.permute.xlu0 %1420
        %1422 = vrot.lane.b32.xlu0 %v636, 48
        %v1423 = vpop.permute.xlu0 %1422
        %1424 = vrot.lane.b32.xlu0 %v637, 48
        %v1425 = vpop.permute.xlu0 %1424
        %1426 = vrot.lane.b32.xlu0 %v638, 48
        %v1427 = vpop.permute.xlu0 %1426
        %1428 = vrot.lane.b32.xlu0 %v639, 48
        %v1429 = vpop.permute.xlu0 %1428
        %1430 = vrot.lane.b32.xlu0 %v640, 48
        %v1431 = vpop.permute.xlu0 %1430
        %1432 = vrot.lane.b32.xlu0 %v641, 48
        %v1433 = vpop.permute.xlu0 %1432
        %1434 = vrot.lane.b32.xlu0 %v642, 48
        %v1435 = vpop.permute.xlu0 %1434
        %1436 = vrot.lane.b32.xlu0 %v643, 48
        %v1437 = vpop.permute.xlu0 %1436
        %1438 = vrot.lane.b32.xlu0 %v644, 48
        %v1439 = vpop.permute.xlu0 %1438
        %1440 = vrot.lane.b32.xlu0 %v645, 48
        %v1441 = vpop.permute.xlu0 %1440
        %1442 = vrot.lane.b32.xlu0 %v646, 48
        %v1443 = vpop.permute.xlu0 %1442
        %1444 = vrot.lane.b32.xlu0 %v647, 48
        %v1445 = vpop.permute.xlu0 %1444
        %1446 = vrot.lane.b32.xlu0 %v648, 48
        %v1447 = vpop.permute.xlu0 %1446
        %1448 = vrot.lane.b32.xlu0 %v649, 48
        %v1449 = vpop.permute.xlu0 %1448
        %1514 = vrot.lane.b32.xlu0 %v650, 56
        %v1515 = vpop.permute.xlu0 %1514
        %1516 = vrot.lane.b32.xlu0 %v651, 56
        %v1517 = vpop.permute.xlu0 %1516
        %1518 = vrot.lane.b32.xlu0 %v652, 56
        %v1519 = vpop.permute.xlu0 %1518
        %1520 = vrot.lane.b32.xlu0 %v653, 56
        %v1521 = vpop.permute.xlu0 %1520
        %1522 = vrot.lane.b32.xlu0 %v654, 56
        %v1523 = vpop.permute.xlu0 %1522
        %1524 = vrot.lane.b32.xlu0 %v655, 56
        %v1525 = vpop.permute.xlu0 %1524
        %1526 = vrot.lane.b32.xlu0 %v656, 56
        %v1527 = vpop.permute.xlu0 %1526
        %1528 = vrot.lane.b32.xlu0 %v657, 56
        %v1529 = vpop.permute.xlu0 %1528
        %1530 = vrot.lane.b32.xlu0 %v658, 56
        %v1531 = vpop.permute.xlu0 %1530
        %1532 = vrot.lane.b32.xlu0 %v659, 56
        %v1533 = vpop.permute.xlu0 %1532
        %1534 = vrot.lane.b32.xlu0 %v660, 56
        %v1535 = vpop.permute.xlu0 %1534
        %1536 = vrot.lane.b32.xlu0 %v661, 56
        %v1537 = vpop.permute.xlu0 %1536
        %1538 = vrot.lane.b32.xlu0 %v662, 56
        %v1539 = vpop.permute.xlu0 %1538
        %1540 = vrot.lane.b32.xlu0 %v663, 56
        %v1541 = vpop.permute.xlu0 %1540
        %1542 = vrot.lane.b32.xlu0 %v664, 56
        %v1543 = vpop.permute.xlu0 %1542
        %1544 = vrot.lane.b32.xlu0 %v665, 56
        %v1545 = vpop.permute.xlu0 %1544
        %1546 = vrot.lane.b32.xlu0 %v666, 56
        %v1547 = vpop.permute.xlu0 %1546
        %1548 = vrot.lane.b32.xlu0 %v667, 56
        %v1549 = vpop.permute.xlu0 %1548
        %1550 = vrot.lane.b32.xlu0 %v668, 56
        %v1551 = vpop.permute.xlu0 %1550
        %1552 = vrot.lane.b32.xlu0 %v669, 56
        %v1553 = vpop.permute.xlu0 %1552
        %1554 = vrot.lane.b32.xlu0 %v670, 56
        %v1555 = vpop.permute.xlu0 %1554
        %1556 = vrot.lane.b32.xlu0 %v671, 56
        %v1557 = vpop.permute.xlu0 %1556
        %1558 = vrot.lane.b32.xlu0 %v672, 56
        %v1559 = vpop.permute.xlu0 %1558
        %1560 = vrot.lane.b32.xlu0 %v673, 56
        %v1561 = vpop.permute.xlu0 %1560
        %1562 = vrot.lane.b32.xlu0 %v674, 56
        %v1563 = vpop.permute.xlu0 %1562
        %1564 = vrot.lane.b32.xlu0 %v675, 56
        %v1565 = vpop.permute.xlu0 %1564
        %1566 = vrot.lane.b32.xlu0 %v676, 56
        %v1567 = vpop.permute.xlu0 %1566
        %1568 = vrot.lane.b32.xlu0 %v677, 56
        %v1569 = vpop.permute.xlu0 %1568
        %1570 = vrot.lane.b32.xlu0 %v678, 56
        %v1571 = vpop.permute.xlu0 %1570
        %1572 = vrot.lane.b32.xlu0 %v679, 56
        %v1573 = vpop.permute.xlu0 %1572
        %1574 = vrot.lane.b32.xlu0 %v680, 56
        %v1575 = vpop.permute.xlu0 %1574
        %1576 = vrot.lane.b32.xlu0 %v681, 56
        %v1577 = vpop.permute.xlu0 %1576
        %1642 = vrot.lane.b32.xlu0 %v682, 64
        %v1643 = vpop.permute.xlu0 %1642
        %1644 = vrot.lane.b32.xlu0 %v683, 64
        %v1645 = vpop.permute.xlu0 %1644
        %1646 = vrot.lane.b32.xlu0 %v684, 64
        %v1647 = vpop.permute.xlu0 %1646
        %1648 = vrot.lane.b32.xlu0 %v685, 64
        %v1649 = vpop.permute.xlu0 %1648
        %1650 = vrot.lane.b32.xlu0 %v686, 64
        %v1651 = vpop.permute.xlu0 %1650
        %1652 = vrot.lane.b32.xlu0 %v687, 64
        %v1653 = vpop.permute.xlu0 %1652
        %1654 = vrot.lane.b32.xlu0 %v688, 64
        %v1655 = vpop.permute.xlu0 %1654
        %1656 = vrot.lane.b32.xlu0 %v689, 64
        %v1657 = vpop.permute.xlu0 %1656
        %1658 = vrot.lane.b32.xlu0 %v690, 64
        %v1659 = vpop.permute.xlu0 %1658
        %1660 = vrot.lane.b32.xlu0 %v691, 64
        %v1661 = vpop.permute.xlu0 %1660
        %1662 = vrot.lane.b32.xlu0 %v692, 64
        %v1663 = vpop.permute.xlu0 %1662
        %1664 = vrot.lane.b32.xlu0 %v693, 64
        %v1665 = vpop.permute.xlu0 %1664
        %1666 = vrot.lane.b32.xlu0 %v694, 64
        %v1667 = vpop.permute.xlu0 %1666
        %1668 = vrot.lane.b32.xlu0 %v695, 64
        %v1669 = vpop.permute.xlu0 %1668
        %1670 = vrot.lane.b32.xlu0 %v696, 64
        %v1671 = vpop.permute.xlu0 %1670
        %1672 = vrot.lane.b32.xlu0 %v697, 64
        %v1673 = vpop.permute.xlu0 %1672
        %1674 = vrot.lane.b32.xlu0 %v698, 64
        %v1675 = vpop.permute.xlu0 %1674
        %1676 = vrot.lane.b32.xlu0 %v699, 64
        %v1677 = vpop.permute.xlu0 %1676
        %1678 = vrot.lane.b32.xlu0 %v700, 64
        %v1679 = vpop.permute.xlu0 %1678
        %1680 = vrot.lane.b32.xlu0 %v701, 64
        %v1681 = vpop.permute.xlu0 %1680
        %1682 = vrot.lane.b32.xlu0 %v702, 64
        %v1683 = vpop.permute.xlu0 %1682
        %1684 = vrot.lane.b32.xlu0 %v703, 64
        %v1685 = vpop.permute.xlu0 %1684
        %1686 = vrot.lane.b32.xlu0 %v704, 64
        %v1687 = vpop.permute.xlu0 %1686
        %1688 = vrot.lane.b32.xlu0 %v705, 64
        %v1689 = vpop.permute.xlu0 %1688
        %1690 = vrot.lane.b32.xlu0 %v706, 64
        %v1691 = vpop.permute.xlu0 %1690
        %1692 = vrot.lane.b32.xlu0 %v707, 64
        %v1693 = vpop.permute.xlu0 %1692
        %1694 = vrot.lane.b32.xlu0 %v708, 64
        %v1695 = vpop.permute.xlu0 %1694
        %1696 = vrot.lane.b32.xlu0 %v709, 64
        %v1697 = vpop.permute.xlu0 %1696
        %1698 = vrot.lane.b32.xlu0 %v710, 64
        %v1699 = vpop.permute.xlu0 %1698
        %1700 = vrot.lane.b32.xlu0 %v711, 64
        %v1701 = vpop.permute.xlu0 %1700
        %1702 = vrot.lane.b32.xlu0 %v712, 64
        %v1703 = vpop.permute.xlu0 %1702
        %1704 = vrot.lane.b32.xlu0 %v713, 64
        %v1705 = vpop.permute.xlu0 %1704
        %v1738 = vsel %vm250, %v425, %v747
        %v1739 = vsel %vm250, %v426, %v749
        %v1740 = vsel %vm250, %v427, %v751
        %v1741 = vsel %vm250, %v428, %v753
        %v1742 = vsel %vm250, %v429, %v755
        %v1743 = vsel %vm250, %v430, %v757
        %v1744 = vsel %vm250, %v431, %v759
        %v1745 = vsel %vm250, %v432, %v761
        %v1746 = vsel %vm250, %v433, %v763
        %v1747 = vsel %vm250, %v434, %v765
        %v1748 = vsel %vm250, %v435, %v767
        %v1749 = vsel %vm250, %v436, %v769
        %v1750 = vsel %vm250, %v437, %v771
        %v1751 = vsel %vm250, %v438, %v773
        %v1752 = vsel %vm250, %v439, %v775
        %v1753 = vsel %vm250, %v440, %v777
        %v1754 = vsel %vm250, %v441, %v779
        %v1755 = vsel %vm250, %v442, %v781
        %v1756 = vsel %vm250, %v443, %v783
        %v1757 = vsel %vm250, %v444, %v785
        %v1758 = vsel %vm250, %v445, %v787
        %v1759 = vsel %vm250, %v446, %v789
        %v1760 = vsel %vm250, %v447, %v791
        %v1761 = vsel %vm250, %v448, %v793
        %v1762 = vsel %vm250, %v449, %v795
        %v1763 = vsel %vm250, %v450, %v797
        %v1764 = vsel %vm250, %v451, %v799
        %v1765 = vsel %vm250, %v452, %v801
        %v1766 = vsel %vm250, %v453, %v803
        %v1767 = vsel %vm250, %v454, %v805
        %v1768 = vsel %vm250, %v455, %v807
        %v1769 = vsel %vm250, %v456, %v809
        %vm1770 = vcmask 130048
        %v1771 = vsel %vm1770, %v1738, %v875
        %v1772 = vsel %vm1770, %v1739, %v877
        %v1773 = vsel %vm1770, %v1740, %v879
        %v1774 = vsel %vm1770, %v1741, %v881
        %v1775 = vsel %vm1770, %v1742, %v883
        %v1776 = vsel %vm1770, %v1743, %v885
        %v1777 = vsel %vm1770, %v1744, %v887
        %v1778 = vsel %vm1770, %v1745, %v889
        %v1779 = vsel %vm1770, %v1746, %v891
        %v1780 = vsel %vm1770, %v1747, %v893
        %v1781 = vsel %vm1770, %v1748, %v895
        %v1782 = vsel %vm1770, %v1749, %v897
        %v1783 = vsel %vm1770, %v1750, %v899
        %v1784 = vsel %vm1770, %v1751, %v901
        %v1785 = vsel %vm1770, %v1752, %v903
        %v1786 = vsel %vm1770, %v1753, %v905
        %v1787 = vsel %vm1770, %v1754, %v907
        %v1788 = vsel %vm1770, %v1755, %v909
        %v1789 = vsel %vm1770, %v1756, %v911
        %v1790 = vsel %vm1770, %v1757, %v913
        %v1791 = vsel %vm1770, %v1758, %v915
        %v1792 = vsel %vm1770, %v1759, %v917
        %v1793 = vsel %vm1770, %v1760, %v919
        %v1794 = vsel %vm1770, %v1761, %v921
        %v1795 = vsel %vm1770, %v1762, %v923
        %v1796 = vsel %vm1770, %v1763, %v925
        %v1797 = vsel %vm1770, %v1764, %v927
        %v1798 = vsel %vm1770, %v1765, %v929
        %v1799 = vsel %vm1770, %v1766, %v931
        %v1800 = vsel %vm1770, %v1767, %v933
        %v1801 = vsel %vm1770, %v1768, %v935
        %v1802 = vsel %vm1770, %v1769, %v937
        %vm1803 = vcmask 195584
        %v1804 = vsel %vm1803, %v1771, %v1003
        %v1805 = vsel %vm1803, %v1772, %v1005
        %v1806 = vsel %vm1803, %v1773, %v1007
        %v1807 = vsel %vm1803, %v1774, %v1009
        %v1808 = vsel %vm1803, %v1775, %v1011
        %v1809 = vsel %vm1803, %v1776, %v1013
        %v1810 = vsel %vm1803, %v1777, %v1015
        %v1811 = vsel %vm1803, %v1778, %v1017
        %v1812 = vsel %vm1803, %v1779, %v1019
        %v1813 = vsel %vm1803, %v1780, %v1021
        %v1814 = vsel %vm1803, %v1781, %v1023
        %v1815 = vsel %vm1803, %v1782, %v1025
        %v1816 = vsel %vm1803, %v1783, %v1027
        %v1817 = vsel %vm1803, %v1784, %v1029
        %v1818 = vsel %vm1803, %v1785, %v1031
        %v1819 = vsel %vm1803, %v1786, %v1033
        %v1820 = vsel %vm1803, %v1787, %v1035
        %v1821 = vsel %vm1803, %v1788, %v1037
        %v1822 = vsel %vm1803, %v1789, %v1039
        %v1823 = vsel %vm1803, %v1790, %v1041
        %v1824 = vsel %vm1803, %v1791, %v1043
        %v1825 = vsel %vm1803, %v1792, %v1045
        %v1826 = vsel %vm1803, %v1793, %v1047
        %v1827 = vsel %vm1803, %v1794, %v1049
        %v1828 = vsel %vm1803, %v1795, %v1051
        %v1829 = vsel %vm1803, %v1796, %v1053
        %v1830 = vsel %vm1803, %v1797, %v1055
        %v1831 = vsel %vm1803, %v1798, %v1057
        %v1832 = vsel %vm1803, %v1799, %v1059
        %v1833 = vsel %vm1803, %v1800, %v1061
        %v1834 = vsel %vm1803, %v1801, %v1063
        %v1835 = vsel %vm1803, %v1802, %v1065
        %vm1836 = vcmask 261120
        %v1837 = vsel %vm1836, %v1804, %v1131
        %v1838 = vsel %vm1836, %v1805, %v1133
        %v1839 = vsel %vm1836, %v1806, %v1135
        %v1840 = vsel %vm1836, %v1807, %v1137
        %v1841 = vsel %vm1836, %v1808, %v1139
        %v1842 = vsel %vm1836, %v1809, %v1141
        %v1843 = vsel %vm1836, %v1810, %v1143
        %v1844 = vsel %vm1836, %v1811, %v1145
        %v1845 = vsel %vm1836, %v1812, %v1147
        %v1846 = vsel %vm1836, %v1813, %v1149
        %v1847 = vsel %vm1836, %v1814, %v1151
        %v1848 = vsel %vm1836, %v1815, %v1153
        %v1849 = vsel %vm1836, %v1816, %v1155
        %v1850 = vsel %vm1836, %v1817, %v1157
        %v1851 = vsel %vm1836, %v1818, %v1159
        %v1852 = vsel %vm1836, %v1819, %v1161
        %v1853 = vsel %vm1836, %v1820, %v1163
        %v1854 = vsel %vm1836, %v1821, %v1165
        %v1855 = vsel %vm1836, %v1822, %v1167
        %v1856 = vsel %vm1836, %v1823, %v1169
        %v1857 = vsel %vm1836, %v1824, %v1171
        %v1858 = vsel %vm1836, %v1825, %v1173
        %v1859 = vsel %vm1836, %v1826, %v1175
        %v1860 = vsel %vm1836, %v1827, %v1177
        %v1861 = vsel %vm1836, %v1828, %v1179
        %v1862 = vsel %vm1836, %v1829, %v1181
        %v1863 = vsel %vm1836, %v1830, %v1183
        %v1864 = vsel %vm1836, %v1831, %v1185
        %v1865 = vsel %vm1836, %v1832, %v1187
        %v1866 = vsel %vm1836, %v1833, %v1189
        %v1867 = vsel %vm1836, %v1834, %v1191
        %v1868 = vsel %vm1836, %v1835, %v1193
        %vm1869 = vcmask 326656
        %v1870 = vsel %vm1869, %v1837, %v1259
        %v1871 = vsel %vm1869, %v1838, %v1261
        %v1872 = vsel %vm1869, %v1839, %v1263
        %v1873 = vsel %vm1869, %v1840, %v1265
        %v1874 = vsel %vm1869, %v1841, %v1267
        %v1875 = vsel %vm1869, %v1842, %v1269
        %v1876 = vsel %vm1869, %v1843, %v1271
        %v1877 = vsel %vm1869, %v1844, %v1273
        %v1878 = vsel %vm1869, %v1845, %v1275
        %v1879 = vsel %vm1869, %v1846, %v1277
        %v1880 = vsel %vm1869, %v1847, %v1279
        %v1881 = vsel %vm1869, %v1848, %v1281
        %v1882 = vsel %vm1869, %v1849, %v1283
        %v1883 = vsel %vm1869, %v1850, %v1285
        %v1884 = vsel %vm1869, %v1851, %v1287
        %v1885 = vsel %vm1869, %v1852, %v1289
        %v1886 = vsel %vm1869, %v1853, %v1291
        %v1887 = vsel %vm1869, %v1854, %v1293
        %v1888 = vsel %vm1869, %v1855, %v1295
        %v1889 = vsel %vm1869, %v1856, %v1297
        %v1890 = vsel %vm1869, %v1857, %v1299
        %v1891 = vsel %vm1869, %v1858, %v1301
        %v1892 = vsel %vm1869, %v1859, %v1303
        %v1893 = vsel %vm1869, %v1860, %v1305
        %v1894 = vsel %vm1869, %v1861, %v1307
        %v1895 = vsel %vm1869, %v1862, %v1309
        %v1896 = vsel %vm1869, %v1863, %v1311
        %v1897 = vsel %vm1869, %v1864, %v1313
        %v1898 = vsel %vm1869, %v1865, %v1315
        %v1899 = vsel %vm1869, %v1866, %v1317
        %v1900 = vsel %vm1869, %v1867, %v1319
        %v1901 = vsel %vm1869, %v1868, %v1321
        %vm1902 = vcmask 392192
        %v1903 = vsel %vm1902, %v1870, %v1387
        %v1904 = vsel %vm1902, %v1871, %v1389
        %v1905 = vsel %vm1902, %v1872, %v1391
        %v1906 = vsel %vm1902, %v1873, %v1393
        %v1907 = vsel %vm1902, %v1874, %v1395
        %v1908 = vsel %vm1902, %v1875, %v1397
        %v1909 = vsel %vm1902, %v1876, %v1399
        %v1910 = vsel %vm1902, %v1877, %v1401
        %v1911 = vsel %vm1902, %v1878, %v1403
        %v1912 = vsel %vm1902, %v1879, %v1405
        %v1913 = vsel %vm1902, %v1880, %v1407
        %v1914 = vsel %vm1902, %v1881, %v1409
        %v1915 = vsel %vm1902, %v1882, %v1411
        %v1916 = vsel %vm1902, %v1883, %v1413
        %v1917 = vsel %vm1902, %v1884, %v1415
        %v1918 = vsel %vm1902, %v1885, %v1417
        %v1919 = vsel %vm1902, %v1886, %v1419
        %v1920 = vsel %vm1902, %v1887, %v1421
        %v1921 = vsel %vm1902, %v1888, %v1423
        %v1922 = vsel %vm1902, %v1889, %v1425
        %v1923 = vsel %vm1902, %v1890, %v1427
        %v1924 = vsel %vm1902, %v1891, %v1429
        %v1925 = vsel %vm1902, %v1892, %v1431
        %v1926 = vsel %vm1902, %v1893, %v1433
        %v1927 = vsel %vm1902, %v1894, %v1435
        %v1928 = vsel %vm1902, %v1895, %v1437
        %v1929 = vsel %vm1902, %v1896, %v1439
        %v1930 = vsel %vm1902, %v1897, %v1441
        %v1931 = vsel %vm1902, %v1898, %v1443
        %v1932 = vsel %vm1902, %v1899, %v1445
        %v1933 = vsel %vm1902, %v1900, %v1447
        %v1934 = vsel %vm1902, %v1901, %v1449
        %vm1935 = vcmask 457728
        %v1936 = vsel %vm1935, %v1903, %v1515
        %v1937 = vsel %vm1935, %v1904, %v1517
        %v1938 = vsel %vm1935, %v1905, %v1519
        %v1939 = vsel %vm1935, %v1906, %v1521
        %v1940 = vsel %vm1935, %v1907, %v1523
        %v1941 = vsel %vm1935, %v1908, %v1525
        %v1942 = vsel %vm1935, %v1909, %v1527
        %v1943 = vsel %vm1935, %v1910, %v1529
        %v1944 = vsel %vm1935, %v1911, %v1531
        %v1945 = vsel %vm1935, %v1912, %v1533
        %v1946 = vsel %vm1935, %v1913, %v1535
        %v1947 = vsel %vm1935, %v1914, %v1537
        %v1948 = vsel %vm1935, %v1915, %v1539
        %v1949 = vsel %vm1935, %v1916, %v1541
        %v1950 = vsel %vm1935, %v1917, %v1543
        %v1951 = vsel %vm1935, %v1918, %v1545
        %v1952 = vsel %vm1935, %v1919, %v1547
        %v1953 = vsel %vm1935, %v1920, %v1549
        %v1954 = vsel %vm1935, %v1921, %v1551
        %v1955 = vsel %vm1935, %v1922, %v1553
        %v1956 = vsel %vm1935, %v1923, %v1555
        %v1957 = vsel %vm1935, %v1924, %v1557
        %v1958 = vsel %vm1935, %v1925, %v1559
        %v1959 = vsel %vm1935, %v1926, %v1561
        %v1960 = vsel %vm1935, %v1927, %v1563
        %v1961 = vsel %vm1935, %v1928, %v1565
        %v1962 = vsel %vm1935, %v1929, %v1567
        %v1963 = vsel %vm1935, %v1930, %v1569
        %v1964 = vsel %vm1935, %v1931, %v1571
        %v1965 = vsel %vm1935, %v1932, %v1573
        %v1966 = vsel %vm1935, %v1933, %v1575
        %v1967 = vsel %vm1935, %v1934, %v1577
        %vm1968 = vcmask 523264
        %v1969 = vsel %vm1968, %v1936, %v1643
        %v1970 = vsel %vm1968, %v1937, %v1645
        %v1971 = vsel %vm1968, %v1938, %v1647
        %v1972 = vsel %vm1968, %v1939, %v1649
        %v1973 = vsel %vm1968, %v1940, %v1651
        %v1974 = vsel %vm1968, %v1941, %v1653
        %v1975 = vsel %vm1968, %v1942, %v1655
        %v1976 = vsel %vm1968, %v1943, %v1657
        %v1977 = vsel %vm1968, %v1944, %v1659
        %v1978 = vsel %vm1968, %v1945, %v1661
        %v1979 = vsel %vm1968, %v1946, %v1663
        %v1980 = vsel %vm1968, %v1947, %v1665
        %v1981 = vsel %vm1968, %v1948, %v1667
        %v1982 = vsel %vm1968, %v1949, %v1669
        %v1983 = vsel %vm1968, %v1950, %v1671
        %v1984 = vsel %vm1968, %v1951, %v1673
        %v1985 = vsel %vm1968, %v1952, %v1675
        %v1986 = vsel %vm1968, %v1953, %v1677
        %v1987 = vsel %vm1968, %v1954, %v1679
        %v1988 = vsel %vm1968, %v1955, %v1681
        %v1989 = vsel %vm1968, %v1956, %v1683
        %v1990 = vsel %vm1968, %v1957, %v1685
        %v1991 = vsel %vm1968, %v1958, %v1687
        %v1992 = vsel %vm1968, %v1959, %v1689
        %v1993 = vsel %vm1968, %v1960, %v1691
        %v1994 = vsel %vm1968, %v1961, %v1693
        %v1995 = vsel %vm1968, %v1962, %v1695
        %v1996 = vsel %vm1968, %v1963, %v1697
        %v1997 = vsel %vm1968, %v1964, %v1699
        %v1998 = vsel %vm1968, %v1965, %v1701
        %v1999 = vsel %vm1968, %v1966, %v1703
        %v2000 = vsel %vm1968, %v1967, %v1705
        %v2001 = vpack.c.bf16 %v1970, %v1969
        %v2002 = vpack.c.bf16 %v1972, %v1971
        %v2003 = vpack.c.bf16 %v1974, %v1973
        %v2004 = vpack.c.bf16 %v1976, %v1975
        %v2005 = vpack.c.bf16 %v1978, %v1977
        %v2006 = vpack.c.bf16 %v1980, %v1979
        %v2007 = vpack.c.bf16 %v1982, %v1981
        %v2008 = vpack.c.bf16 %v1984, %v1983
        %v2009 = vpack.c.bf16 %v1986, %v1985
        %v2010 = vpack.c.bf16 %v1988, %v1987
        %v2011 = vpack.c.bf16 %v1990, %v1989
        %v2012 = vpack.c.bf16 %v1992, %v1991
        %v2013 = vpack.c.bf16 %v1994, %v1993
        %v2014 = vpack.c.bf16 %v1996, %v1995
        %v2015 = vpack.c.bf16 %v1998, %v1997
        %v2016 = vpack.c.bf16 %v2000, %v1999
        %v2017 = vld [vmem:[%s1] sm:$0xf]
        %v2018 = vld [vmem:[%s1 + $0x4] sm:$0xf]
        %v2019 = vld [vmem:[%s1 + $0x8] sm:$0xf]
        %v2020 = vld [vmem:[%s1 + $0xc] sm:$0xf]
        %v2021 = vld [vmem:[%s1 + $0x10] sm:$0xf]
        %v2022 = vld [vmem:[%s1 + $0x14] sm:$0xf]
        %v2023 = vld [vmem:[%s1 + $0x18] sm:$0xf]
        %v2024 = vld [vmem:[%s1 + $0x1c] sm:$0xf]
        %v2025 = vld [vmem:[%s1 + $0x20] sm:$0xf]
        %v2035 = vunpack.c.l.b16 %v2017
        %v2036 = vunpack.c.l.b16 %v2018
        %v2037 = vunpack.c.l.b16 %v2019
        %v2038 = vunpack.c.l.b16 %v2020
        %v2039 = vunpack.c.l.b16 %v2021
        %v2040 = vunpack.c.l.b16 %v2022
        %v2041 = vunpack.c.l.b16 %v2023
        %v2042 = vunpack.c.l.b16 %v2024
        %v2043 = vunpack.c.l.b16 %v2025
        %v2044 = vpack.c.b16 %v2036, %v2035
        %v2045 = vpack.c.b16 %v2038, %v2037
        %v2046 = vpack.c.b16 %v2040, %v2039
        %v2047 = vpack.c.b16 %v2042, %v2041
        %v2048 = vpack.c.b16 %v2043, %v2043
        %vm2053 = vcmask 588800
        %v2055 = vsel %vm2053, %v2001, 0
        %v2058 = vsel %vm2053, %v2002, 0
        %v2061 = vsel %vm2053, %v2003, 0
        %v2064 = vsel %vm2053, %v2004, 0
        %v2067 = vsel %vm2053, %v2005, 0
        %v2070 = vsel %vm2053, %v2006, 0
        %v2073 = vsel %vm2053, %v2007, 0
        %v2076 = vsel %vm2053, %v2008, 0
        %v2079 = vsel %vm2053, %v2009, 0
        %v2082 = vsel %vm2053, %v2010, 0
        %v2085 = vsel %vm2053, %v2011, 0
        %v2088 = vsel %vm2053, %v2012, 0
        %v2091 = vsel %vm2053, %v2013, 0
        %v2094 = vsel %vm2053, %v2014, 0
        %v2097 = vsel %vm2053, %v2015, 0
        %v2100 = vsel %vm2053, %v2016, 0
        %vm2102 = vcmask 1043456
        %v2104 = vsel %vm2102, %v2048, 0
        %2106 = vmatprep.subr.bf16.mxu0 0
        %2107 = vmatpush1.bf16.msra.mxu0 %v2044
        %2108 = vmatprep.subr.bf16.mxu0 0
        %2109 = vmatpush1.bf16.msra.mxu0 %v2045
        %2110 = vmatprep.subr.bf16.mxu0 0
        %2111 = vmatpush1.bf16.msra.mxu0 %v2046
        %2112 = vmatprep.subr.bf16.mxu0 0
        %2113 = vmatpush1.bf16.msra.mxu0 %v2047
        %2114 = vmatprep.subr.bf16.mxu0 0
        %2115 = vmatpush1.bf16.msra.mxu0 %v2104
        %2116 = vmatprep.subr.bf16.mxu0 0
        %2117 = vmatpush1.bf16.msra.mxu0 0
        %2118 = vmatprep.subr.bf16.mxu0 0
        %2119 = vmatpush1.bf16.msra.mxu0 0
        %2120 = vmatprep.subr.bf16.mxu0 0
        %2121 = vmatpush1.bf16.msra.mxu0 0
        %2122 = vmatprep.subr.bf16.mxu0 0
        %2123 = vmatpush1.bf16.msra.mxu0 0
        %2124 = vmatprep.subr.bf16.mxu0 0
        %2125 = vmatpush1.bf16.msra.mxu0 0
        %2126 = vmatprep.subr.bf16.mxu0 0
        %2127 = vmatpush1.bf16.msra.mxu0 0
        %2128 = vmatprep.subr.bf16.mxu0 0
        %2129 = vmatpush1.bf16.msra.mxu0 0
        %2130 = vmatprep.subr.bf16.mxu0 0
        %2131 = vmatpush1.bf16.msra.mxu0 0
        %2132 = vmatprep.subr.bf16.mxu0 0
        %2133 = vmatpush1.bf16.msra.mxu0 0
        %2134 = vmatprep.subr.bf16.mxu0 0
        %2135 = vmatpush1.bf16.msra.mxu0 0
        %2136 = vmatprep.subr.bf16.mxu0 0
        %2137 = vmatpush1.bf16.msra.mxu0 0
        %2138 = vmatprep.mubr.bf16.mxu0 0
        %2139 = vmatmul.mubr.bf16.gmra.mrb[0].mxu0 %v2055
        %v2140 = vpop.f32.mrb[0].mxu0
        %v2141 = vadd.f32 0.0, %v2140
        %v2142 = vpop.f32.mrb[0].mxu0
        %v2143 = vpop.f32.mrb[0].mxu0
        %v2144 = vadd.f32 0.0, %v2143
        %v2145 = vpop.f32.mrb[0].mxu0
        %2146 = vmatprep.mubr.bf16.mxu0 0
        %2147 = vmatmul.mubr.bf16.gmra.mrb[0].mxu0 %v2058
        %v2148 = vpop.f32.mrb[0].mxu0
        %v2149 = vadd.f32 0.0, %v2148
        %v2150 = vpop.f32.mrb[0].mxu0
        %v2151 = vpop.f32.mrb[0].mxu0
        %v2152 = vadd.f32 0.0, %v2151
        %v2153 = vpop.f32.mrb[0].mxu0
        %2154 = vmatprep.mubr.bf16.mxu0 0
        %2155 = vmatmul.mubr.bf16.gmra.mrb[0].mxu0 %v2061
        %v2156 = vpop.f32.mrb[0].mxu0
        %v2157 = vadd.f32 0.0, %v2156
        %v2158 = vpop.f32.mrb[0].mxu0
        %v2159 = vpop.f32.mrb[0].mxu0
        %v2160 = vadd.f32 0.0, %v2159
        %v2161 = vpop.f32.mrb[0].mxu0
        %2162 = vmatprep.mubr.bf16.mxu0 0
        %2163 = vmatmul.mubr.bf16.gmra.mrb[0].mxu0 %v2064
        %v2164 = vpop.f32.mrb[0].mxu0
        %v2165 = vadd.f32 0.0, %v2164
        %v2166 = vpop.f32.mrb[0].mxu0
        %v2167 = vpop.f32.mrb[0].mxu0
        %v2168 = vadd.f32 0.0, %v2167
        %v2169 = vpop.f32.mrb[0].mxu0
        %2170 = vmatprep.mubr.bf16.mxu0 0
        %2171 = vmatmul.mubr.bf16.gmra.mrb[0].mxu0 %v2067
        %v2172 = vpop.f32.mrb[0].mxu0
        %v2173 = vadd.f32 0.0, %v2172
        %v2174 = vpop.f32.mrb[0].mxu0
        %v2175 = vpop.f32.mrb[0].mxu0
        %v2176 = vadd.f32 0.0, %v2175
        %v2177 = vpop.f32.mrb[0].mxu0
        %2178 = vmatprep.mubr.bf16.mxu0 0
        %2179 = vmatmul.mubr.bf16.gmra.mrb[0].mxu0 %v2070
        %v2180 = vpop.f32.mrb[0].mxu0
        %v2181 = vadd.f32 0.0, %v2180
        %v2182 = vpop.f32.mrb[0].mxu0
        %v2183 = vpop.f32.mrb[0].mxu0
        %v2184 = vadd.f32 0.0, %v2183
        %v2185 = vpop.f32.mrb[0].mxu0
        %2186 = vmatprep.mubr.bf16.mxu0 0
        %2187 = vmatmul.mubr.bf16.gmra.mrb[0].mxu0 %v2073
        %v2188 = vpop.f32.mrb[0].mxu0
        %v2189 = vadd.f32 0.0, %v2188
        %v2190 = vpop.f32.mrb[0].mxu0
        %v2191 = vpop.f32.mrb[0].mxu0
        %v2192 = vadd.f32 0.0, %v2191
        %v2193 = vpop.f32.mrb[0].mxu0
        %2194 = vmatprep.mubr.bf16.mxu0 0
        %2195 = vmatmul.mubr.bf16.gmra.mrb[0].mxu0 %v2076
        %v2196 = vpop.f32.mrb[0].mxu0
        %v2197 = vadd.f32 0.0, %v2196
        %v2198 = vpop.f32.mrb[0].mxu0
        %v2199 = vpop.f32.mrb[0].mxu0
        %v2200 = vadd.f32 0.0, %v2199
        %v2201 = vpop.f32.mrb[0].mxu0
        %2202 = vmatprep.mubr.bf16.mxu0 0
        %2203 = vmatmul.mubr.bf16.gmra.mrb[0].mxu0 %v2079
        %v2204 = vpop.f32.mrb[0].mxu0
        %v2205 = vadd.f32 0.0, %v2204
        %v2206 = vpop.f32.mrb[0].mxu0
        %v2207 = vpop.f32.mrb[0].mxu0
        %v2208 = vadd.f32 0.0, %v2207
        %v2209 = vpop.f32.mrb[0].mxu0
        %2210 = vmatprep.mubr.bf16.mxu0 0
        %2211 = vmatmul.mubr.bf16.gmra.mrb[0].mxu0 %v2082
        %v2212 = vpop.f32.mrb[0].mxu0
        %v2213 = vadd.f32 0.0, %v2212
        %v2214 = vpop.f32.mrb[0].mxu0
        %v2215 = vpop.f32.mrb[0].mxu0
        %v2216 = vadd.f32 0.0, %v2215
        %v2217 = vpop.f32.mrb[0].mxu0
        %2218 = vmatprep.mubr.bf16.mxu0 0
        %2219 = vmatmul.mubr.bf16.gmra.mrb[0].mxu0 %v2085
        %v2220 = vpop.f32.mrb[0].mxu0
        %v2221 = vadd.f32 0.0, %v2220
        %v2222 = vpop.f32.mrb[0].mxu0
        %v2223 = vpop.f32.mrb[0].mxu0
        %v2224 = vadd.f32 0.0, %v2223
        %v2225 = vpop.f32.mrb[0].mxu0
        %2226 = vmatprep.mubr.bf16.mxu0 0
        %2227 = vmatmul.mubr.bf16.gmra.mrb[0].mxu0 %v2088
        %v2228 = vpop.f32.mrb[0].mxu0
        %v2229 = vadd.f32 0.0, %v2228
        %v2230 = vpop.f32.mrb[0].mxu0
        %v2231 = vpop.f32.mrb[0].mxu0
        %v2232 = vadd.f32 0.0, %v2231
        %v2233 = vpop.f32.mrb[0].mxu0
        %2234 = vmatprep.mubr.bf16.mxu0 0
        %2235 = vmatmul.mubr.bf16.gmra.mrb[0].mxu0 %v2091
        %v2236 = vpop.f32.mrb[0].mxu0
        %v2237 = vadd.f32 0.0, %v2236
        %v2238 = vpop.f32.mrb[0].mxu0
        %v2239 = vpop.f32.mrb[0].mxu0
        %v2240 = vadd.f32 0.0, %v2239
        %v2241 = vpop.f32.mrb[0].mxu0
        %2242 = vmatprep.mubr.bf16.mxu0 0
        %2243 = vmatmul.mubr.bf16.gmra.mrb[0].mxu0 %v2094
        %v2244 = vpop.f32.mrb[0].mxu0
        %v2245 = vadd.f32 0.0, %v2244
        %v2246 = vpop.f32.mrb[0].mxu0
        %v2247 = vpop.f32.mrb[0].mxu0
        %v2248 = vadd.f32 0.0, %v2247
        %v2249 = vpop.f32.mrb[0].mxu0
        %2250 = vmatprep.mubr.bf16.mxu0 0
        %2251 = vmatmul.mubr.bf16.gmra.mrb[0].mxu0 %v2097
        %v2252 = vpop.f32.mrb[0].mxu0
        %v2253 = vadd.f32 0.0, %v2252
        %v2254 = vpop.f32.mrb[0].mxu0
        %v2255 = vpop.f32.mrb[0].mxu0
        %v2256 = vadd.f32 0.0, %v2255
        %v2257 = vpop.f32.mrb[0].mxu0
        %2258 = vmatprep.mubr.bf16.mxu0 0
        %2259 = vmatmul.mubr.bf16.gmra.mrb[0].mxu0 %v2100
        %v2260 = vpop.f32.mrb[0].mxu0
        %v2261 = vadd.f32 0.0, %v2260
        %v2262 = vpop.f32.mrb[0].mxu0
        %v2263 = vpop.f32.mrb[0].mxu0
        %v2264 = vadd.f32 0.0, %v2263
        %v2265 = vpop.f32.mrb[0].mxu0
        %2266 = vdwg.mxu0
        %v2267 = vld [vmem:[%s2] sm:$0x1]
        %v2269 = vlaneseq
        %v2270 = vshrl.u32 %v2269, 7
        %v2271 = vsub.s32 0, %v2270
        %v2272 = vrot.slane %v2267, %v2271
        %v2274 = vmul.f32 %v2141, %v2272
        %v2275 = vmul.f32 %v2144, %v2272
        %v2276 = vmul.f32 %v2149, %v2272
        %v2277 = vmul.f32 %v2152, %v2272
        %v2278 = vmul.f32 %v2157, %v2272
        %v2279 = vmul.f32 %v2160, %v2272
        %v2280 = vmul.f32 %v2165, %v2272
        %v2281 = vmul.f32 %v2168, %v2272
        %v2282 = vmul.f32 %v2173, %v2272
        %v2283 = vmul.f32 %v2176, %v2272
        %v2284 = vmul.f32 %v2181, %v2272
        %v2285 = vmul.f32 %v2184, %v2272
        %v2286 = vmul.f32 %v2189, %v2272
        %v2287 = vmul.f32 %v2192, %v2272
        %v2288 = vmul.f32 %v2197, %v2272
        %v2289 = vmul.f32 %v2200, %v2272
        %v2290 = vmul.f32 %v2205, %v2272
        %v2291 = vmul.f32 %v2208, %v2272
        %v2292 = vmul.f32 %v2213, %v2272
        %v2293 = vmul.f32 %v2216, %v2272
        %v2294 = vmul.f32 %v2221, %v2272
        %v2295 = vmul.f32 %v2224, %v2272
        %v2296 = vmul.f32 %v2229, %v2272
        %v2297 = vmul.f32 %v2232, %v2272
        %v2298 = vmul.f32 %v2237, %v2272
        %v2299 = vmul.f32 %v2240, %v2272
        %v2300 = vmul.f32 %v2245, %v2272
        %v2301 = vmul.f32 %v2248, %v2272
        %v2302 = vmul.f32 %v2253, %v2272
        %v2303 = vmul.f32 %v2256, %v2272
        %v2304 = vmul.f32 %v2261, %v2272
        %v2305 = vmul.f32 %v2264, %v2272
        %v2306 = vld [vmem:[%s3] sm:$0x1]
        %v2308 = vlaneseq
        %v2309 = vshrl.u32 %v2308, 7
        %v2310 = vsub.s32 0, %v2309
        %v2311 = vrot.slane %v2306, %v2310
        %v2313 = vadd.f32 %v2274, %v2311
        %v2314 = vadd.f32 %v2275, %v2311
        %v2315 = vadd.f32 %v2276, %v2311
        %v2316 = vadd.f32 %v2277, %v2311
        %v2317 = vadd.f32 %v2278, %v2311
        %v2318 = vadd.f32 %v2279, %v2311
        %v2319 = vadd.f32 %v2280, %v2311
        %v2320 = vadd.f32 %v2281, %v2311
        %v2321 = vadd.f32 %v2282, %v2311
        %v2322 = vadd.f32 %v2283, %v2311
        %v2323 = vadd.f32 %v2284, %v2311
        %v2324 = vadd.f32 %v2285, %v2311
        %v2325 = vadd.f32 %v2286, %v2311
        %v2326 = vadd.f32 %v2287, %v2311
        %v2327 = vadd.f32 %v2288, %v2311
        %v2328 = vadd.f32 %v2289, %v2311
        %v2329 = vadd.f32 %v2290, %v2311
        %v2330 = vadd.f32 %v2291, %v2311
        %v2331 = vadd.f32 %v2292, %v2311
        %v2332 = vadd.f32 %v2293, %v2311
        %v2333 = vadd.f32 %v2294, %v2311
        %v2334 = vadd.f32 %v2295, %v2311
        %v2335 = vadd.f32 %v2296, %v2311
        %v2336 = vadd.f32 %v2297, %v2311
        %v2337 = vadd.f32 %v2298, %v2311
        %v2338 = vadd.f32 %v2299, %v2311
        %v2339 = vadd.f32 %v2300, %v2311
        %v2340 = vadd.f32 %v2301, %v2311
        %v2341 = vadd.f32 %v2302, %v2311
        %v2342 = vadd.f32 %v2303, %v2311
        %v2343 = vadd.f32 %v2304, %v2311
        %v2344 = vadd.f32 %v2305, %v2311
        %v2345 = vmax.f32 %v2313, 0.0
        %v2346 = vmax.f32 %v2314, 0.0
        %v2347 = vmax.f32 %v2315, 0.0
        %v2348 = vmax.f32 %v2316, 0.0
        %v2349 = vmax.f32 %v2317, 0.0
        %v2350 = vmax.f32 %v2318, 0.0
        %v2351 = vmax.f32 %v2319, 0.0
        %v2352 = vmax.f32 %v2320, 0.0
        %v2353 = vmax.f32 %v2321, 0.0
        %v2354 = vmax.f32 %v2322, 0.0
        %v2355 = vmax.f32 %v2323, 0.0
        %v2356 = vmax.f32 %v2324, 0.0
        %v2357 = vmax.f32 %v2325, 0.0
        %v2358 = vmax.f32 %v2326, 0.0
        %v2359 = vmax.f32 %v2327, 0.0
        %v2360 = vmax.f32 %v2328, 0.0
        %v2361 = vmax.f32 %v2329, 0.0
        %v2362 = vmax.f32 %v2330, 0.0
        %v2363 = vmax.f32 %v2331, 0.0
        %v2364 = vmax.f32 %v2332, 0.0
        %v2365 = vmax.f32 %v2333, 0.0
        %v2366 = vmax.f32 %v2334, 0.0
        %v2367 = vmax.f32 %v2335, 0.0
        %v2368 = vmax.f32 %v2336, 0.0
        %v2369 = vmax.f32 %v2337, 0.0
        %v2370 = vmax.f32 %v2338, 0.0
        %v2371 = vmax.f32 %v2339, 0.0
        %v2372 = vmax.f32 %v2340, 0.0
        %v2373 = vmax.f32 %v2341, 0.0
        %v2374 = vmax.f32 %v2342, 0.0
        %v2375 = vmax.f32 %v2343, 0.0
        %v2376 = vmax.f32 %v2344, 0.0
        %s2377 = scalar_lea.vmem [#allocation3], 24
        %2378 = vst.msk [vmem:[%s2377 + $0x1] sm:$0xff] %vm250, %v2345
        %2379 = vst.msk [vmem:[%s2377 + $0x9] sm:$0xff] %vm250, %v2346
        %2380 = vst.msk [vmem:[%s2377 + $0x19] sm:$0xff] %vm250, %v2347
        %2381 = vst.msk [vmem:[%s2377 + $0x21] sm:$0xff] %vm250, %v2348
        %2382 = vst.msk [vmem:[%s2377 + $0x31] sm:$0xff] %vm250, %v2349
        %2383 = vst.msk [vmem:[%s2377 + $0x39] sm:$0xff] %vm250, %v2350
        %2384 = vst.msk [vmem:[%s2377 + $0x49] sm:$0xff] %vm250, %v2351
        %2385 = vst.msk [vmem:[%s2377 + $0x51] sm:$0xff] %vm250, %v2352
        %2386 = vst.msk [vmem:[%s2377 + $0x61] sm:$0xff] %vm250, %v2353
        %2387 = vst.msk [vmem:[%s2377 + $0x69] sm:$0xff] %vm250, %v2354
        %2388 = vst.msk [vmem:[%s2377 + $0x79] sm:$0xff] %vm250, %v2355
        %2389 = vst.msk [vmem:[%s2377 + $0x81] sm:$0xff] %vm250, %v2356
        %2390 = vst.msk [vmem:[%s2377 + $0x91] sm:$0xff] %vm250, %v2357
        %2391 = vst.msk [vmem:[%s2377 + $0x99] sm:$0xff] %vm250, %v2358
        %2392 = vst.msk [vmem:[%s2377 + $0xa9] sm:$0xff] %vm250, %v2359
        %2393 = vst.msk [vmem:[%s2377 + $0xb1] sm:$0xff] %vm250, %v2360
        %2394 = vst.msk [vmem:[%s2377 + $0xc1] sm:$0xff] %vm250, %v2361
        %2395 = vst.msk [vmem:[%s2377 + $0xc9] sm:$0xff] %vm250, %v2362
        %2396 = vst.msk [vmem:[%s2377 + $0xd9] sm:$0xff] %vm250, %v2363
        %2397 = vst.msk [vmem:[%s2377 + $0xe1] sm:$0xff] %vm250, %v2364
        %2398 = vst.msk [vmem:[%s2377 + $0xf1] sm:$0xff] %vm250, %v2365
        %2399 = vst.msk [vmem:[%s2377 + $0xf9] sm:$0xff] %vm250, %v2366
        %2400 = vst.msk [vmem:[%s2377 + $0x109] sm:$0xff] %vm250, %v2367
        %2401 = vst.msk [vmem:[%s2377 + $0x111] sm:$0xff] %vm250, %v2368
        %2402 = vst.msk [vmem:[%s2377 + $0x121] sm:$0xff] %vm250, %v2369
        %2403 = vst.msk [vmem:[%s2377 + $0x129] sm:$0xff] %vm250, %v2370
        %2404 = vst.msk [vmem:[%s2377 + $0x139] sm:$0xff] %vm250, %v2371
        %2405 = vst.msk [vmem:[%s2377 + $0x141] sm:$0xff] %vm250, %v2372
        %2406 = vst.msk [vmem:[%s2377 + $0x151] sm:$0xff] %vm250, %v2373
        %2407 = vst.msk [vmem:[%s2377 + $0x159] sm:$0xff] %vm250, %v2374
        %2408 = vst.msk [vmem:[%s2377 + $0x169] sm:$0xff] %vm250, %v2375
        %2409 = vst.msk [vmem:[%s2377 + $0x171] sm:$0xff] %vm250, %v2376
        %v2410 = vld [vmem:[#allocation3] sm:$0xff]
        %v2411 = vld [vmem:[#allocation3 + $0x8] sm:$0xff]
        %v2412 = vld [vmem:[#allocation3 + $0x18] sm:$0xff]
        %v2413 = vld [vmem:[#allocation3 + $0x20] sm:$0xff]
        %v2414 = vld [vmem:[#allocation3 + $0x30] sm:$0xff]
        %v2415 = vld [vmem:[#allocation3 + $0x38] sm:$0xff]
        %v2416 = vld [vmem:[#allocation3 + $0x48] sm:$0xff]
        %v2417 = vld [vmem:[#allocation3 + $0x50] sm:$0xff]
        %v2418 = vld [vmem:[#allocation3 + $0x60] sm:$0xff]
        %v2419 = vld [vmem:[#allocation3 + $0x68] sm:$0xff]
        %v2420 = vld [vmem:[#allocation3 + $0x78] sm:$0xff]
        %v2421 = vld [vmem:[#allocation3 + $0x80] sm:$0xff]
        %v2422 = vld [vmem:[#allocation3 + $0x90] sm:$0xff]
        %v2423 = vld [vmem:[#allocation3 + $0x98] sm:$0xff]
        %v2424 = vld [vmem:[#allocation3 + $0xa8] sm:$0xff]
        %v2425 = vld [vmem:[#allocation3 + $0xb0] sm:$0xff]
        %v2426 = vld [vmem:[#allocation3 + $0xc0] sm:$0xff]
        %v2427 = vld [vmem:[#allocation3 + $0xc8] sm:$0xff]
        %v2428 = vld [vmem:[#allocation3 + $0xd8] sm:$0xff]
        %v2429 = vld [vmem:[#allocation3 + $0xe0] sm:$0xff]
        %v2430 = vld [vmem:[#allocation3 + $0xf0] sm:$0xff]
        %v2431 = vld [vmem:[#allocation3 + $0xf8] sm:$0xff]
        %v2432 = vld [vmem:[#allocation3 + $0x108] sm:$0xff]
        %v2433 = vld [vmem:[#allocation3 + $0x110] sm:$0xff]
        %v2434 = vld [vmem:[#allocation3 + $0x120] sm:$0xff]
        %v2435 = vld [vmem:[#allocation3 + $0x128] sm:$0xff]
        %v2436 = vld [vmem:[#allocation3 + $0x138] sm:$0xff]
        %v2437 = vld [vmem:[#allocation3 + $0x140] sm:$0xff]
        %v2438 = vld [vmem:[#allocation3 + $0x150] sm:$0xff]
        %v2439 = vld [vmem:[#allocation3 + $0x158] sm:$0xff]
        %v2440 = vld [vmem:[#allocation3 + $0x168] sm:$0xff]
        %v2441 = vld [vmem:[#allocation3 + $0x170] sm:$0xff]
        %v2442 = vld [vmem:[#allocation3 + $0x1] sm:$0xff]
        %v2443 = vld [vmem:[#allocation3 + $0x9] sm:$0xff]
        %v2444 = vld [vmem:[#allocation3 + $0x19] sm:$0xff]
        %v2445 = vld [vmem:[#allocation3 + $0x21] sm:$0xff]
        %v2446 = vld [vmem:[#allocation3 + $0x31] sm:$0xff]
        %v2447 = vld [vmem:[#allocation3 + $0x39] sm:$0xff]
        %v2448 = vld [vmem:[#allocation3 + $0x49] sm:$0xff]
        %v2449 = vld [vmem:[#allocation3 + $0x51] sm:$0xff]
        %v2450 = vld [vmem:[#allocation3 + $0x61] sm:$0xff]
        %v2451 = vld [vmem:[#allocation3 + $0x69] sm:$0xff]
        %v2452 = vld [vmem:[#allocation3 + $0x79] sm:$0xff]
        %v2453 = vld [vmem:[#allocation3 + $0x81] sm:$0xff]
        %v2454 = vld [vmem:[#allocation3 + $0x91] sm:$0xff]
        %v2455 = vld [vmem:[#allocation3 + $0x99] sm:$0xff]
        %v2456 = vld [vmem:[#allocation3 + $0xa9] sm:$0xff]
        %v2457 = vld [vmem:[#allocation3 + $0xb1] sm:$0xff]
        %v2458 = vld [vmem:[#allocation3 + $0xc1] sm:$0xff]
        %v2459 = vld [vmem:[#allocation3 + $0xc9] sm:$0xff]
        %v2460 = vld [vmem:[#allocation3 + $0xd9] sm:$0xff]
        %v2461 = vld [vmem:[#allocation3 + $0xe1] sm:$0xff]
        %v2462 = vld [vmem:[#allocation3 + $0xf1] sm:$0xff]
        %v2463 = vld [vmem:[#allocation3 + $0xf9] sm:$0xff]
        %v2464 = vld [vmem:[#allocation3 + $0x109] sm:$0xff]
        %v2465 = vld [vmem:[#allocation3 + $0x111] sm:$0xff]
        %v2466 = vld [vmem:[#allocation3 + $0x121] sm:$0xff]
        %v2467 = vld [vmem:[#allocation3 + $0x129] sm:$0xff]
        %v2468 = vld [vmem:[#allocation3 + $0x139] sm:$0xff]
        %v2469 = vld [vmem:[#allocation3 + $0x141] sm:$0xff]
        %v2470 = vld [vmem:[#allocation3 + $0x151] sm:$0xff]
        %v2471 = vld [vmem:[#allocation3 + $0x159] sm:$0xff]
        %v2472 = vld [vmem:[#allocation3 + $0x169] sm:$0xff]
        %v2473 = vld [vmem:[#allocation3 + $0x171] sm:$0xff]
        %v2474 = vld [vmem:[#allocation3 + $0x2] sm:$0xff]
        %v2475 = vld [vmem:[#allocation3 + $0xa] sm:$0xff]
        %v2476 = vld [vmem:[#allocation3 + $0x1a] sm:$0xff]
        %v2477 = vld [vmem:[#allocation3 + $0x22] sm:$0xff]
        %v2478 = vld [vmem:[#allocation3 + $0x32] sm:$0xff]
        %v2479 = vld [vmem:[#allocation3 + $0x3a] sm:$0xff]
        %v2480 = vld [vmem:[#allocation3 + $0x4a] sm:$0xff]
        %v2481 = vld [vmem:[#allocation3 + $0x52] sm:$0xff]
        %v2482 = vld [vmem:[#allocation3 + $0x62] sm:$0xff]
        %v2483 = vld [vmem:[#allocation3 + $0x6a] sm:$0xff]
        %v2484 = vld [vmem:[#allocation3 + $0x7a] sm:$0xff]
        %v2485 = vld [vmem:[#allocation3 + $0x82] sm:$0xff]
        %v2486 = vld [vmem:[#allocation3 + $0x92] sm:$0xff]
        %v2487 = vld [vmem:[#allocation3 + $0x9a] sm:$0xff]
        %v2488 = vld [vmem:[#allocation3 + $0xaa] sm:$0xff]
        %v2489 = vld [vmem:[#allocation3 + $0xb2] sm:$0xff]
        %v2490 = vld [vmem:[#allocation3 + $0xc2] sm:$0xff]
        %v2491 = vld [vmem:[#allocation3 + $0xca] sm:$0xff]
        %v2492 = vld [vmem:[#allocation3 + $0xda] sm:$0xff]
        %v2493 = vld [vmem:[#allocation3 + $0xe2] sm:$0xff]
        %v2494 = vld [vmem:[#allocation3 + $0xf2] sm:$0xff]
        %v2495 = vld [vmem:[#allocation3 + $0xfa] sm:$0xff]
        %v2496 = vld [vmem:[#allocation3 + $0x10a] sm:$0xff]
        %v2497 = vld [vmem:[#allocation3 + $0x112] sm:$0xff]
        %v2498 = vld [vmem:[#allocation3 + $0x122] sm:$0xff]
        %v2499 = vld [vmem:[#allocation3 + $0x12a] sm:$0xff]
        %v2500 = vld [vmem:[#allocation3 + $0x13a] sm:$0xff]
        %v2501 = vld [vmem:[#allocation3 + $0x142] sm:$0xff]
        %v2502 = vld [vmem:[#allocation3 + $0x152] sm:$0xff]
        %v2503 = vld [vmem:[#allocation3 + $0x15a] sm:$0xff]
        %v2504 = vld [vmem:[#allocation3 + $0x16a] sm:$0xff]
        %v2505 = vld [vmem:[#allocation3 + $0x172] sm:$0xff]
        %v2506 = vld [vmem:[%s2377] sm:$0xff]
        %v2507 = vld [vmem:[%s2377 + $0x8] sm:$0xff]
        %v2508 = vld [vmem:[%s2377 + $0x18] sm:$0xff]
        %v2509 = vld [vmem:[%s2377 + $0x20] sm:$0xff]
        %v2510 = vld [vmem:[%s2377 + $0x30] sm:$0xff]
        %v2511 = vld [vmem:[%s2377 + $0x38] sm:$0xff]
        %v2512 = vld [vmem:[%s2377 + $0x48] sm:$0xff]
        %v2513 = vld [vmem:[%s2377 + $0x50] sm:$0xff]
        %v2514 = vld [vmem:[%s2377 + $0x60] sm:$0xff]
        %v2515 = vld [vmem:[%s2377 + $0x68] sm:$0xff]
        %v2516 = vld [vmem:[%s2377 + $0x78] sm:$0xff]
        %v2517 = vld [vmem:[%s2377 + $0x80] sm:$0xff]
        %v2518 = vld [vmem:[%s2377 + $0x90] sm:$0xff]
        %v2519 = vld [vmem:[%s2377 + $0x98] sm:$0xff]
        %v2520 = vld [vmem:[%s2377 + $0xa8] sm:$0xff]
        %v2521 = vld [vmem:[%s2377 + $0xb0] sm:$0xff]
        %v2522 = vld [vmem:[%s2377 + $0xc0] sm:$0xff]
        %v2523 = vld [vmem:[%s2377 + $0xc8] sm:$0xff]
        %v2524 = vld [vmem:[%s2377 + $0xd8] sm:$0xff]
        %v2525 = vld [vmem:[%s2377 + $0xe0] sm:$0xff]
        %v2526 = vld [vmem:[%s2377 + $0xf0] sm:$0xff]
        %v2527 = vld [vmem:[%s2377 + $0xf8] sm:$0xff]
        %v2528 = vld [vmem:[%s2377 + $0x108] sm:$0xff]
        %v2529 = vld [vmem:[%s2377 + $0x110] sm:$0xff]
        %v2530 = vld [vmem:[%s2377 + $0x120] sm:$0xff]
        %v2531 = vld [vmem:[%s2377 + $0x128] sm:$0xff]
        %v2532 = vld [vmem:[%s2377 + $0x138] sm:$0xff]
        %v2533 = vld [vmem:[%s2377 + $0x140] sm:$0xff]
        %v2534 = vld [vmem:[%s2377 + $0x150] sm:$0xff]
        %v2535 = vld [vmem:[%s2377 + $0x158] sm:$0xff]
        %v2536 = vld [vmem:[%s2377 + $0x168] sm:$0xff]
        %v2537 = vld [vmem:[%s2377 + $0x170] sm:$0xff]
        %v2538 = vld [vmem:[%s2377 + $0x1] sm:$0xff]
        %v2539 = vld [vmem:[%s2377 + $0x9] sm:$0xff]
        %v2540 = vld [vmem:[%s2377 + $0x19] sm:$0xff]
        %v2541 = vld [vmem:[%s2377 + $0x21] sm:$0xff]
        %v2542 = vld [vmem:[%s2377 + $0x31] sm:$0xff]
        %v2543 = vld [vmem:[%s2377 + $0x39] sm:$0xff]
        %v2544 = vld [vmem:[%s2377 + $0x49] sm:$0xff]
        %v2545 = vld [vmem:[%s2377 + $0x51] sm:$0xff]
        %v2546 = vld [vmem:[%s2377 + $0x61] sm:$0xff]
        %v2547 = vld [vmem:[%s2377 + $0x69] sm:$0xff]
        %v2548 = vld [vmem:[%s2377 + $0x79] sm:$0xff]
        %v2549 = vld [vmem:[%s2377 + $0x81] sm:$0xff]
        %v2550 = vld [vmem:[%s2377 + $0x91] sm:$0xff]
        %v2551 = vld [vmem:[%s2377 + $0x99] sm:$0xff]
        %v2552 = vld [vmem:[%s2377 + $0xa9] sm:$0xff]
        %v2553 = vld [vmem:[%s2377 + $0xb1] sm:$0xff]
        %v2554 = vld [vmem:[%s2377 + $0xc1] sm:$0xff]
        %v2555 = vld [vmem:[%s2377 + $0xc9] sm:$0xff]
        %v2556 = vld [vmem:[%s2377 + $0xd9] sm:$0xff]
        %v2557 = vld [vmem:[%s2377 + $0xe1] sm:$0xff]
        %v2558 = vld [vmem:[%s2377 + $0xf1] sm:$0xff]
        %v2559 = vld [vmem:[%s2377 + $0xf9] sm:$0xff]
        %v2560 = vld [vmem:[%s2377 + $0x109] sm:$0xff]
        %v2561 = vld [vmem:[%s2377 + $0x111] sm:$0xff]
        %v2562 = vld [vmem:[%s2377 + $0x121] sm:$0xff]
        %v2563 = vld [vmem:[%s2377 + $0x129] sm:$0xff]
        %v2564 = vld [vmem:[%s2377 + $0x139] sm:$0xff]
        %v2565 = vld [vmem:[%s2377 + $0x141] sm:$0xff]
        %v2566 = vld [vmem:[%s2377 + $0x151] sm:$0xff]
        %v2567 = vld [vmem:[%s2377 + $0x159] sm:$0xff]
        %v2568 = vld [vmem:[%s2377 + $0x169] sm:$0xff]
        %v2569 = vld [vmem:[%s2377 + $0x171] sm:$0xff]
        %v2570 = vld [vmem:[%s2377 + $0x2] sm:$0xff]
        %v2571 = vld [vmem:[%s2377 + $0xa] sm:$0xff]
        %v2572 = vld [vmem:[%s2377 + $0x1a] sm:$0xff]
        %v2573 = vld [vmem:[%s2377 + $0x22] sm:$0xff]
        %v2574 = vld [vmem:[%s2377 + $0x32] sm:$0xff]
        %v2575 = vld [vmem:[%s2377 + $0x3a] sm:$0xff]
        %v2576 = vld [vmem:[%s2377 + $0x4a] sm:$0xff]
        %v2577 = vld [vmem:[%s2377 + $0x52] sm:$0xff]
        %v2578 = vld [vmem:[%s2377 + $0x62] sm:$0xff]
        %v2579 = vld [vmem:[%s2377 + $0x6a] sm:$0xff]
        %v2580 = vld [vmem:[%s2377 + $0x7a] sm:$0xff]
        %v2581 = vld [vmem:[%s2377 + $0x82] sm:$0xff]
        %v2582 = vld [vmem:[%s2377 + $0x92] sm:$0xff]
        %v2583 = vld [vmem:[%s2377 + $0x9a] sm:$0xff]
        %v2584 = vld [vmem:[%s2377 + $0xaa] sm:$0xff]
        %v2585 = vld [vmem:[%s2377 + $0xb2] sm:$0xff]
        %v2586 = vld [vmem:[%s2377 + $0xc2] sm:$0xff]
        %v2587 = vld [vmem:[%s2377 + $0xca] sm:$0xff]
        %v2588 = vld [vmem:[%s2377 + $0xda] sm:$0xff]
        %v2589 = vld [vmem:[%s2377 + $0xe2] sm:$0xff]
        %v2590 = vld [vmem:[%s2377 + $0xf2] sm:$0xff]
        %v2591 = vld [vmem:[%s2377 + $0xfa] sm:$0xff]
        %v2592 = vld [vmem:[%s2377 + $0x10a] sm:$0xff]
        %v2593 = vld [vmem:[%s2377 + $0x112] sm:$0xff]
        %v2594 = vld [vmem:[%s2377 + $0x122] sm:$0xff]
        %v2595 = vld [vmem:[%s2377 + $0x12a] sm:$0xff]
        %v2596 = vld [vmem:[%s2377 + $0x13a] sm:$0xff]
        %v2597 = vld [vmem:[%s2377 + $0x142] sm:$0xff]
        %v2598 = vld [vmem:[%s2377 + $0x152] sm:$0xff]
        %v2599 = vld [vmem:[%s2377 + $0x15a] sm:$0xff]
        %v2600 = vld [vmem:[%s2377 + $0x16a] sm:$0xff]
        %v2601 = vld [vmem:[%s2377 + $0x172] sm:$0xff]
        %s2602 = scalar_lea.vmem [#allocation3], 48
        %v2603 = vld [vmem:[%s2602] sm:$0xff]
        %v2604 = vld [vmem:[%s2602 + $0x8] sm:$0xff]
        %v2605 = vld [vmem:[%s2602 + $0x18] sm:$0xff]
        %v2606 = vld [vmem:[%s2602 + $0x20] sm:$0xff]
        %v2607 = vld [vmem:[%s2602 + $0x30] sm:$0xff]
        %v2608 = vld [vmem:[%s2602 + $0x38] sm:$0xff]
        %v2609 = vld [vmem:[%s2602 + $0x48] sm:$0xff]
        %v2610 = vld [vmem:[%s2602 + $0x50] sm:$0xff]
        %v2611 = vld [vmem:[%s2602 + $0x60] sm:$0xff]
        %v2612 = vld [vmem:[%s2602 + $0x68] sm:$0xff]
        %v2613 = vld [vmem:[%s2602 + $0x78] sm:$0xff]
        %v2614 = vld [vmem:[%s2602 + $0x80] sm:$0xff]
        %v2615 = vld [vmem:[%s2602 + $0x90] sm:$0xff]
        %v2616 = vld [vmem:[%s2602 + $0x98] sm:$0xff]
        %v2617 = vld [vmem:[%s2602 + $0xa8] sm:$0xff]
        %v2618 = vld [vmem:[%s2602 + $0xb0] sm:$0xff]
        %v2619 = vld [vmem:[%s2602 + $0xc0] sm:$0xff]
        %v2620 = vld [vmem:[%s2602 + $0xc8] sm:$0xff]
        %v2621 = vld [vmem:[%s2602 + $0xd8] sm:$0xff]
        %v2622 = vld [vmem:[%s2602 + $0xe0] sm:$0xff]
        %v2623 = vld [vmem:[%s2602 + $0xf0] sm:$0xff]
        %v2624 = vld [vmem:[%s2602 + $0xf8] sm:$0xff]
        %v2625 = vld [vmem:[%s2602 + $0x108] sm:$0xff]
        %v2626 = vld [vmem:[%s2602 + $0x110] sm:$0xff]
        %v2627 = vld [vmem:[%s2602 + $0x120] sm:$0xff]
        %v2628 = vld [vmem:[%s2602 + $0x128] sm:$0xff]
        %v2629 = vld [vmem:[%s2602 + $0x138] sm:$0xff]
        %v2630 = vld [vmem:[%s2602 + $0x140] sm:$0xff]
        %v2631 = vld [vmem:[%s2602 + $0x150] sm:$0xff]
        %v2632 = vld [vmem:[%s2602 + $0x158] sm:$0xff]
        %v2633 = vld [vmem:[%s2602 + $0x168] sm:$0xff]
        %v2634 = vld [vmem:[%s2602 + $0x170] sm:$0xff]
        %v2635 = vld [vmem:[%s2602 + $0x1] sm:$0xff]
        %v2636 = vld [vmem:[%s2602 + $0x9] sm:$0xff]
        %v2637 = vld [vmem:[%s2602 + $0x19] sm:$0xff]
        %v2638 = vld [vmem:[%s2602 + $0x21] sm:$0xff]
        %v2639 = vld [vmem:[%s2602 + $0x31] sm:$0xff]
        %v2640 = vld [vmem:[%s2602 + $0x39] sm:$0xff]
        %v2641 = vld [vmem:[%s2602 + $0x49] sm:$0xff]
        %v2642 = vld [vmem:[%s2602 + $0x51] sm:$0xff]
        %v2643 = vld [vmem:[%s2602 + $0x61] sm:$0xff]
        %v2644 = vld [vmem:[%s2602 + $0x69] sm:$0xff]
        %v2645 = vld [vmem:[%s2602 + $0x79] sm:$0xff]
        %v2646 = vld [vmem:[%s2602 + $0x81] sm:$0xff]
        %v2647 = vld [vmem:[%s2602 + $0x91] sm:$0xff]
        %v2648 = vld [vmem:[%s2602 + $0x99] sm:$0xff]
        %v2649 = vld [vmem:[%s2602 + $0xa9] sm:$0xff]
        %v2650 = vld [vmem:[%s2602 + $0xb1] sm:$0xff]
        %v2651 = vld [vmem:[%s2602 + $0xc1] sm:$0xff]
        %v2652 = vld [vmem:[%s2602 + $0xc9] sm:$0xff]
        %v2653 = vld [vmem:[%s2602 + $0xd9] sm:$0xff]
        %v2654 = vld [vmem:[%s2602 + $0xe1] sm:$0xff]
        %v2655 = vld [vmem:[%s2602 + $0xf1] sm:$0xff]
        %v2656 = vld [vmem:[%s2602 + $0xf9] sm:$0xff]
        %v2657 = vld [vmem:[%s2602 + $0x109] sm:$0xff]
        %v2658 = vld [vmem:[%s2602 + $0x111] sm:$0xff]
        %v2659 = vld [vmem:[%s2602 + $0x121] sm:$0xff]
        %v2660 = vld [vmem:[%s2602 + $0x129] sm:$0xff]
        %v2661 = vld [vmem:[%s2602 + $0x139] sm:$0xff]
        %v2662 = vld [vmem:[%s2602 + $0x141] sm:$0xff]
        %v2663 = vld [vmem:[%s2602 + $0x151] sm:$0xff]
        %v2664 = vld [vmem:[%s2602 + $0x159] sm:$0xff]
        %v2665 = vld [vmem:[%s2602 + $0x169] sm:$0xff]
        %v2666 = vld [vmem:[%s2602 + $0x171] sm:$0xff]
        %v2667 = vld [vmem:[%s2602 + $0x2] sm:$0xff]
        %v2668 = vld [vmem:[%s2602 + $0xa] sm:$0xff]
        %v2669 = vld [vmem:[%s2602 + $0x1a] sm:$0xff]
        %v2670 = vld [vmem:[%s2602 + $0x22] sm:$0xff]
        %v2671 = vld [vmem:[%s2602 + $0x32] sm:$0xff]
        %v2672 = vld [vmem:[%s2602 + $0x3a] sm:$0xff]
        %v2673 = vld [vmem:[%s2602 + $0x4a] sm:$0xff]
        %v2674 = vld [vmem:[%s2602 + $0x52] sm:$0xff]
        %v2675 = vld [vmem:[%s2602 + $0x62] sm:$0xff]
        %v2676 = vld [vmem:[%s2602 + $0x6a] sm:$0xff]
        %v2677 = vld [vmem:[%s2602 + $0x7a] sm:$0xff]
        %v2678 = vld [vmem:[%s2602 + $0x82] sm:$0xff]
        %v2679 = vld [vmem:[%s2602 + $0x92] sm:$0xff]
        %v2680 = vld [vmem:[%s2602 + $0x9a] sm:$0xff]
        %v2681 = vld [vmem:[%s2602 + $0xaa] sm:$0xff]
        %v2682 = vld [vmem:[%s2602 + $0xb2] sm:$0xff]
        %v2683 = vld [vmem:[%s2602 + $0xc2] sm:$0xff]
        %v2684 = vld [vmem:[%s2602 + $0xca] sm:$0xff]
        %v2685 = vld [vmem:[%s2602 + $0xda] sm:$0xff]
        %v2686 = vld [vmem:[%s2602 + $0xe2] sm:$0xff]
        %v2687 = vld [vmem:[%s2602 + $0xf2] sm:$0xff]
        %v2688 = vld [vmem:[%s2602 + $0xfa] sm:$0xff]
        %v2689 = vld [vmem:[%s2602 + $0x10a] sm:$0xff]
        %v2690 = vld [vmem:[%s2602 + $0x112] sm:$0xff]
        %v2691 = vld [vmem:[%s2602 + $0x122] sm:$0xff]
        %v2692 = vld [vmem:[%s2602 + $0x12a] sm:$0xff]
        %v2693 = vld [vmem:[%s2602 + $0x13a] sm:$0xff]
        %v2694 = vld [vmem:[%s2602 + $0x142] sm:$0xff]
        %v2695 = vld [vmem:[%s2602 + $0x152] sm:$0xff]
        %v2696 = vld [vmem:[%s2602 + $0x15a] sm:$0xff]
        %v2697 = vld [vmem:[%s2602 + $0x16a] sm:$0xff]
        %v2698 = vld [vmem:[%s2602 + $0x172] sm:$0xff]
        %2731 = vrot.lane.b32.xlu0 %v2442, 8
        %v2732 = vpop.permute.xlu0 %2731
        %2733 = vrot.lane.b32.xlu0 %v2443, 8
        %v2734 = vpop.permute.xlu0 %2733
        %2735 = vrot.lane.b32.xlu0 %v2444, 8
        %v2736 = vpop.permute.xlu0 %2735
        %2737 = vrot.lane.b32.xlu0 %v2445, 8
        %v2738 = vpop.permute.xlu0 %2737
        %2739 = vrot.lane.b32.xlu0 %v2446, 8
        %v2740 = vpop.permute.xlu0 %2739
        %2741 = vrot.lane.b32.xlu0 %v2447, 8
        %v2742 = vpop.permute.xlu0 %2741
        %2743 = vrot.lane.b32.xlu0 %v2448, 8
        %v2744 = vpop.permute.xlu0 %2743
        %2745 = vrot.lane.b32.xlu0 %v2449, 8
        %v2746 = vpop.permute.xlu0 %2745
        %2747 = vrot.lane.b32.xlu0 %v2450, 8
        %v2748 = vpop.permute.xlu0 %2747
        %2749 = vrot.lane.b32.xlu0 %v2451, 8
        %v2750 = vpop.permute.xlu0 %2749
        %2751 = vrot.lane.b32.xlu0 %v2452, 8
        %v2752 = vpop.permute.xlu0 %2751
        %2753 = vrot.lane.b32.xlu0 %v2453, 8
        %v2754 = vpop.permute.xlu0 %2753
        %2755 = vrot.lane.b32.xlu0 %v2454, 8
        %v2756 = vpop.permute.xlu0 %2755
        %2757 = vrot.lane.b32.xlu0 %v2455, 8
        %v2758 = vpop.permute.xlu0 %2757
        %2759 = vrot.lane.b32.xlu0 %v2456, 8
        %v2760 = vpop.permute.xlu0 %2759
        %2761 = vrot.lane.b32.xlu0 %v2457, 8
        %v2762 = vpop.permute.xlu0 %2761
        %2763 = vrot.lane.b32.xlu0 %v2458, 8
        %v2764 = vpop.permute.xlu0 %2763
        %2765 = vrot.lane.b32.xlu0 %v2459, 8
        %v2766 = vpop.permute.xlu0 %2765
        %2767 = vrot.lane.b32.xlu0 %v2460, 8
        %v2768 = vpop.permute.xlu0 %2767
        %2769 = vrot.lane.b32.xlu0 %v2461, 8
        %v2770 = vpop.permute.xlu0 %2769
        %2771 = vrot.lane.b32.xlu0 %v2462, 8
        %v2772 = vpop.permute.xlu0 %2771
        %2773 = vrot.lane.b32.xlu0 %v2463, 8
        %v2774 = vpop.permute.xlu0 %2773
        %2775 = vrot.lane.b32.xlu0 %v2464, 8
        %v2776 = vpop.permute.xlu0 %2775
        %2777 = vrot.lane.b32.xlu0 %v2465, 8
        %v2778 = vpop.permute.xlu0 %2777
        %2779 = vrot.lane.b32.xlu0 %v2466, 8
        %v2780 = vpop.permute.xlu0 %2779
        %2781 = vrot.lane.b32.xlu0 %v2467, 8
        %v2782 = vpop.permute.xlu0 %2781
        %2783 = vrot.lane.b32.xlu0 %v2468, 8
        %v2784 = vpop.permute.xlu0 %2783
        %2785 = vrot.lane.b32.xlu0 %v2469, 8
        %v2786 = vpop.permute.xlu0 %2785
        %2787 = vrot.lane.b32.xlu0 %v2470, 8
        %v2788 = vpop.permute.xlu0 %2787
        %2789 = vrot.lane.b32.xlu0 %v2471, 8
        %v2790 = vpop.permute.xlu0 %2789
        %2791 = vrot.lane.b32.xlu0 %v2472, 8
        %v2792 = vpop.permute.xlu0 %2791
        %2793 = vrot.lane.b32.xlu0 %v2473, 8
        %v2794 = vpop.permute.xlu0 %2793
        %2859 = vrot.lane.b32.xlu0 %v2474, 16
        %v2860 = vpop.permute.xlu0 %2859
        %2861 = vrot.lane.b32.xlu0 %v2475, 16
        %v2862 = vpop.permute.xlu0 %2861
        %2863 = vrot.lane.b32.xlu0 %v2476, 16
        %v2864 = vpop.permute.xlu0 %2863
        %2865 = vrot.lane.b32.xlu0 %v2477, 16
        %v2866 = vpop.permute.xlu0 %2865
        %2867 = vrot.lane.b32.xlu0 %v2478, 16
        %v2868 = vpop.permute.xlu0 %2867
        %2869 = vrot.lane.b32.xlu0 %v2479, 16
        %v2870 = vpop.permute.xlu0 %2869
        %2871 = vrot.lane.b32.xlu0 %v2480, 16
        %v2872 = vpop.permute.xlu0 %2871
        %2873 = vrot.lane.b32.xlu0 %v2481, 16
        %v2874 = vpop.permute.xlu0 %2873
        %2875 = vrot.lane.b32.xlu0 %v2482, 16
        %v2876 = vpop.permute.xlu0 %2875
        %2877 = vrot.lane.b32.xlu0 %v2483, 16
        %v2878 = vpop.permute.xlu0 %2877
        %2879 = vrot.lane.b32.xlu0 %v2484, 16
        %v2880 = vpop.permute.xlu0 %2879
        %2881 = vrot.lane.b32.xlu0 %v2485, 16
        %v2882 = vpop.permute.xlu0 %2881
        %2883 = vrot.lane.b32.xlu0 %v2486, 16
        %v2884 = vpop.permute.xlu0 %2883
        %2885 = vrot.lane.b32.xlu0 %v2487, 16
        %v2886 = vpop.permute.xlu0 %2885
        %2887 = vrot.lane.b32.xlu0 %v2488, 16
        %v2888 = vpop.permute.xlu0 %2887
        %2889 = vrot.lane.b32.xlu0 %v2489, 16
        %v2890 = vpop.permute.xlu0 %2889
        %2891 = vrot.lane.b32.xlu0 %v2490, 16
        %v2892 = vpop.permute.xlu0 %2891
        %2893 = vrot.lane.b32.xlu0 %v2491, 16
        %v2894 = vpop.permute.xlu0 %2893
        %2895 = vrot.lane.b32.xlu0 %v2492, 16
        %v2896 = vpop.permute.xlu0 %2895
        %2897 = vrot.lane.b32.xlu0 %v2493, 16
        %v2898 = vpop.permute.xlu0 %2897
        %2899 = vrot.lane.b32.xlu0 %v2494, 16
        %v2900 = vpop.permute.xlu0 %2899
        %2901 = vrot.lane.b32.xlu0 %v2495, 16
        %v2902 = vpop.permute.xlu0 %2901
        %2903 = vrot.lane.b32.xlu0 %v2496, 16
        %v2904 = vpop.permute.xlu0 %2903
        %2905 = vrot.lane.b32.xlu0 %v2497, 16
        %v2906 = vpop.permute.xlu0 %2905
        %2907 = vrot.lane.b32.xlu0 %v2498, 16
        %v2908 = vpop.permute.xlu0 %2907
        %2909 = vrot.lane.b32.xlu0 %v2499, 16
        %v2910 = vpop.permute.xlu0 %2909
        %2911 = vrot.lane.b32.xlu0 %v2500, 16
        %v2912 = vpop.permute.xlu0 %2911
        %2913 = vrot.lane.b32.xlu0 %v2501, 16
        %v2914 = vpop.permute.xlu0 %2913
        %2915 = vrot.lane.b32.xlu0 %v2502, 16
        %v2916 = vpop.permute.xlu0 %2915
        %2917 = vrot.lane.b32.xlu0 %v2503, 16
        %v2918 = vpop.permute.xlu0 %2917
        %2919 = vrot.lane.b32.xlu0 %v2504, 16
        %v2920 = vpop.permute.xlu0 %2919
        %2921 = vrot.lane.b32.xlu0 %v2505, 16
        %v2922 = vpop.permute.xlu0 %2921
        %2987 = vrot.lane.b32.xlu0 %v2506, 24
        %v2988 = vpop.permute.xlu0 %2987
        %2989 = vrot.lane.b32.xlu0 %v2507, 24
        %v2990 = vpop.permute.xlu0 %2989
        %2991 = vrot.lane.b32.xlu0 %v2508, 24
        %v2992 = vpop.permute.xlu0 %2991
        %2993 = vrot.lane.b32.xlu0 %v2509, 24
        %v2994 = vpop.permute.xlu0 %2993
        %2995 = vrot.lane.b32.xlu0 %v2510, 24
        %v2996 = vpop.permute.xlu0 %2995
        %2997 = vrot.lane.b32.xlu0 %v2511, 24
        %v2998 = vpop.permute.xlu0 %2997
        %2999 = vrot.lane.b32.xlu0 %v2512, 24
        %v3000 = vpop.permute.xlu0 %2999
        %3001 = vrot.lane.b32.xlu0 %v2513, 24
        %v3002 = vpop.permute.xlu0 %3001
        %3003 = vrot.lane.b32.xlu0 %v2514, 24
        %v3004 = vpop.permute.xlu0 %3003
        %3005 = vrot.lane.b32.xlu0 %v2515, 24
        %v3006 = vpop.permute.xlu0 %3005
        %3007 = vrot.lane.b32.xlu0 %v2516, 24
        %v3008 = vpop.permute.xlu0 %3007
        %3009 = vrot.lane.b32.xlu0 %v2517, 24
        %v3010 = vpop.permute.xlu0 %3009
        %3011 = vrot.lane.b32.xlu0 %v2518, 24
        %v3012 = vpop.permute.xlu0 %3011
        %3013 = vrot.lane.b32.xlu0 %v2519, 24
        %v3014 = vpop.permute.xlu0 %3013
        %3015 = vrot.lane.b32.xlu0 %v2520, 24
        %v3016 = vpop.permute.xlu0 %3015
        %3017 = vrot.lane.b32.xlu0 %v2521, 24
        %v3018 = vpop.permute.xlu0 %3017
        %3019 = vrot.lane.b32.xlu0 %v2522, 24
        %v3020 = vpop.permute.xlu0 %3019
        %3021 = vrot.lane.b32.xlu0 %v2523, 24
        %v3022 = vpop.permute.xlu0 %3021
        %3023 = vrot.lane.b32.xlu0 %v2524, 24
        %v3024 = vpop.permute.xlu0 %3023
        %3025 = vrot.lane.b32.xlu0 %v2525, 24
        %v3026 = vpop.permute.xlu0 %3025
        %3027 = vrot.lane.b32.xlu0 %v2526, 24
        %v3028 = vpop.permute.xlu0 %3027
        %3029 = vrot.lane.b32.xlu0 %v2527, 24
        %v3030 = vpop.permute.xlu0 %3029
        %3031 = vrot.lane.b32.xlu0 %v2528, 24
        %v3032 = vpop.permute.xlu0 %3031
        %3033 = vrot.lane.b32.xlu0 %v2529, 24
        %v3034 = vpop.permute.xlu0 %3033
        %3035 = vrot.lane.b32.xlu0 %v2530, 24
        %v3036 = vpop.permute.xlu0 %3035
        %3037 = vrot.lane.b32.xlu0 %v2531, 24
        %v3038 = vpop.permute.xlu0 %3037
        %3039 = vrot.lane.b32.xlu0 %v2532, 24
        %v3040 = vpop.permute.xlu0 %3039
        %3041 = vrot.lane.b32.xlu0 %v2533, 24
        %v3042 = vpop.permute.xlu0 %3041
        %3043 = vrot.lane.b32.xlu0 %v2534, 24
        %v3044 = vpop.permute.xlu0 %3043
        %3045 = vrot.lane.b32.xlu0 %v2535, 24
        %v3046 = vpop.permute.xlu0 %3045
        %3047 = vrot.lane.b32.xlu0 %v2536, 24
        %v3048 = vpop.permute.xlu0 %3047
        %3049 = vrot.lane.b32.xlu0 %v2537, 24
        %v3050 = vpop.permute.xlu0 %3049
        %3115 = vrot.lane.b32.xlu0 %v2538, 32
        %v3116 = vpop.permute.xlu0 %3115
        %3117 = vrot.lane.b32.xlu0 %v2539, 32
        %v3118 = vpop.permute.xlu0 %3117
        %3119 = vrot.lane.b32.xlu0 %v2540, 32
        %v3120 = vpop.permute.xlu0 %3119
        %3121 = vrot.lane.b32.xlu0 %v2541, 32
        %v3122 = vpop.permute.xlu0 %3121
        %3123 = vrot.lane.b32.xlu0 %v2542, 32
        %v3124 = vpop.permute.xlu0 %3123
        %3125 = vrot.lane.b32.xlu0 %v2543, 32
        %v3126 = vpop.permute.xlu0 %3125
        %3127 = vrot.lane.b32.xlu0 %v2544, 32
        %v3128 = vpop.permute.xlu0 %3127
        %3129 = vrot.lane.b32.xlu0 %v2545, 32
        %v3130 = vpop.permute.xlu0 %3129
        %3131 = vrot.lane.b32.xlu0 %v2546, 32
        %v3132 = vpop.permute.xlu0 %3131
        %3133 = vrot.lane.b32.xlu0 %v2547, 32
        %v3134 = vpop.permute.xlu0 %3133
        %3135 = vrot.lane.b32.xlu0 %v2548, 32
        %v3136 = vpop.permute.xlu0 %3135
        %3137 = vrot.lane.b32.xlu0 %v2549, 32
        %v3138 = vpop.permute.xlu0 %3137
        %3139 = vrot.lane.b32.xlu0 %v2550, 32
        %v3140 = vpop.permute.xlu0 %3139
        %3141 = vrot.lane.b32.xlu0 %v2551, 32
        %v3142 = vpop.permute.xlu0 %3141
        %3143 = vrot.lane.b32.xlu0 %v2552, 32
        %v3144 = vpop.permute.xlu0 %3143
        %3145 = vrot.lane.b32.xlu0 %v2553, 32
        %v3146 = vpop.permute.xlu0 %3145
        %3147 = vrot.lane.b32.xlu0 %v2554, 32
        %v3148 = vpop.permute.xlu0 %3147
        %3149 = vrot.lane.b32.xlu0 %v2555, 32
        %v3150 = vpop.permute.xlu0 %3149
        %3151 = vrot.lane.b32.xlu0 %v2556, 32
        %v3152 = vpop.permute.xlu0 %3151
        %3153 = vrot.lane.b32.xlu0 %v2557, 32
        %v3154 = vpop.permute.xlu0 %3153
        %3155 = vrot.lane.b32.xlu0 %v2558, 32
        %v3156 = vpop.permute.xlu0 %3155
        %3157 = vrot.lane.b32.xlu0 %v2559, 32
        %v3158 = vpop.permute.xlu0 %3157
        %3159 = vrot.lane.b32.xlu0 %v2560, 32
        %v3160 = vpop.permute.xlu0 %3159
        %3161 = vrot.lane.b32.xlu0 %v2561, 32
        %v3162 = vpop.permute.xlu0 %3161
        %3163 = vrot.lane.b32.xlu0 %v2562, 32
        %v3164 = vpop.permute.xlu0 %3163
        %3165 = vrot.lane.b32.xlu0 %v2563, 32
        %v3166 = vpop.permute.xlu0 %3165
        %3167 = vrot.lane.b32.xlu0 %v2564, 32
        %v3168 = vpop.permute.xlu0 %3167
        %3169 = vrot.lane.b32.xlu0 %v2565, 32
        %v3170 = vpop.permute.xlu0 %3169
        %3171 = vrot.lane.b32.xlu0 %v2566, 32
        %v3172 = vpop.permute.xlu0 %3171
        %3173 = vrot.lane.b32.xlu0 %v2567, 32
        %v3174 = vpop.permute.xlu0 %3173
        %3175 = vrot.lane.b32.xlu0 %v2568, 32
        %v3176 = vpop.permute.xlu0 %3175
        %3177 = vrot.lane.b32.xlu0 %v2569, 32
        %v3178 = vpop.permute.xlu0 %3177
        %3243 = vrot.lane.b32.xlu0 %v2570, 40
        %v3244 = vpop.permute.xlu0 %3243
        %3245 = vrot.lane.b32.xlu0 %v2571, 40
        %v3246 = vpop.permute.xlu0 %3245
        %3247 = vrot.lane.b32.xlu0 %v2572, 40
        %v3248 = vpop.permute.xlu0 %3247
        %3249 = vrot.lane.b32.xlu0 %v2573, 40
        %v3250 = vpop.permute.xlu0 %3249
        %3251 = vrot.lane.b32.xlu0 %v2574, 40
        %v3252 = vpop.permute.xlu0 %3251
        %3253 = vrot.lane.b32.xlu0 %v2575, 40
        %v3254 = vpop.permute.xlu0 %3253
        %3255 = vrot.lane.b32.xlu0 %v2576, 40
        %v3256 = vpop.permute.xlu0 %3255
        %3257 = vrot.lane.b32.xlu0 %v2577, 40
        %v3258 = vpop.permute.xlu0 %3257
        %3259 = vrot.lane.b32.xlu0 %v2578, 40
        %v3260 = vpop.permute.xlu0 %3259
        %3261 = vrot.lane.b32.xlu0 %v2579, 40
        %v3262 = vpop.permute.xlu0 %3261
        %3263 = vrot.lane.b32.xlu0 %v2580, 40
        %v3264 = vpop.permute.xlu0 %3263
        %3265 = vrot.lane.b32.xlu0 %v2581, 40
        %v3266 = vpop.permute.xlu0 %3265
        %3267 = vrot.lane.b32.xlu0 %v2582, 40
        %v3268 = vpop.permute.xlu0 %3267
        %3269 = vrot.lane.b32.xlu0 %v2583, 40
        %v3270 = vpop.permute.xlu0 %3269
        %3271 = vrot.lane.b32.xlu0 %v2584, 40
        %v3272 = vpop.permute.xlu0 %3271
        %3273 = vrot.lane.b32.xlu0 %v2585, 40
        %v3274 = vpop.permute.xlu0 %3273
        %3275 = vrot.lane.b32.xlu0 %v2586, 40
        %v3276 = vpop.permute.xlu0 %3275
        %3277 = vrot.lane.b32.xlu0 %v2587, 40
        %v3278 = vpop.permute.xlu0 %3277
        %3279 = vrot.lane.b32.xlu0 %v2588, 40
        %v3280 = vpop.permute.xlu0 %3279
        %3281 = vrot.lane.b32.xlu0 %v2589, 40
        %v3282 = vpop.permute.xlu0 %3281
        %3283 = vrot.lane.b32.xlu0 %v2590, 40
        %v3284 = vpop.permute.xlu0 %3283
        %3285 = vrot.lane.b32.xlu0 %v2591, 40
        %v3286 = vpop.permute.xlu0 %3285
        %3287 = vrot.lane.b32.xlu0 %v2592, 40
        %v3288 = vpop.permute.xlu0 %3287
        %3289 = vrot.lane.b32.xlu0 %v2593, 40
        %v3290 = vpop.permute.xlu0 %3289
        %3291 = vrot.lane.b32.xlu0 %v2594, 40
        %v3292 = vpop.permute.xlu0 %3291
        %3293 = vrot.lane.b32.xlu0 %v2595, 40
        %v3294 = vpop.permute.xlu0 %3293
        %3295 = vrot.lane.b32.xlu0 %v2596, 40
        %v3296 = vpop.permute.xlu0 %3295
        %3297 = vrot.lane.b32.xlu0 %v2597, 40
        %v3298 = vpop.permute.xlu0 %3297
        %3299 = vrot.lane.b32.xlu0 %v2598, 40
        %v3300 = vpop.permute.xlu0 %3299
        %3301 = vrot.lane.b32.xlu0 %v2599, 40
        %v3302 = vpop.permute.xlu0 %3301
        %3303 = vrot.lane.b32.xlu0 %v2600, 40
        %v3304 = vpop.permute.xlu0 %3303
        %3305 = vrot.lane.b32.xlu0 %v2601, 40
        %v3306 = vpop.permute.xlu0 %3305
        %3371 = vrot.lane.b32.xlu0 %v2603, 48
        %v3372 = vpop.permute.xlu0 %3371
        %3373 = vrot.lane.b32.xlu0 %v2604, 48
        %v3374 = vpop.permute.xlu0 %3373
        %3375 = vrot.lane.b32.xlu0 %v2605, 48
        %v3376 = vpop.permute.xlu0 %3375
        %3377 = vrot.lane.b32.xlu0 %v2606, 48
        %v3378 = vpop.permute.xlu0 %3377
        %3379 = vrot.lane.b32.xlu0 %v2607, 48
        %v3380 = vpop.permute.xlu0 %3379
        %3381 = vrot.lane.b32.xlu0 %v2608, 48
        %v3382 = vpop.permute.xlu0 %3381
        %3383 = vrot.lane.b32.xlu0 %v2609, 48
        %v3384 = vpop.permute.xlu0 %3383
        %3385 = vrot.lane.b32.xlu0 %v2610, 48
        %v3386 = vpop.permute.xlu0 %3385
        %3387 = vrot.lane.b32.xlu0 %v2611, 48
        %v3388 = vpop.permute.xlu0 %3387
        %3389 = vrot.lane.b32.xlu0 %v2612, 48
        %v3390 = vpop.permute.xlu0 %3389
        %3391 = vrot.lane.b32.xlu0 %v2613, 48
        %v3392 = vpop.permute.xlu0 %3391
        %3393 = vrot.lane.b32.xlu0 %v2614, 48
        %v3394 = vpop.permute.xlu0 %3393
        %3395 = vrot.lane.b32.xlu0 %v2615, 48
        %v3396 = vpop.permute.xlu0 %3395
        %3397 = vrot.lane.b32.xlu0 %v2616, 48
        %v3398 = vpop.permute.xlu0 %3397
        %3399 = vrot.lane.b32.xlu0 %v2617, 48
        %v3400 = vpop.permute.xlu0 %3399
        %3401 = vrot.lane.b32.xlu0 %v2618, 48
        %v3402 = vpop.permute.xlu0 %3401
        %3403 = vrot.lane.b32.xlu0 %v2619, 48
        %v3404 = vpop.permute.xlu0 %3403
        %3405 = vrot.lane.b32.xlu0 %v2620, 48
        %v3406 = vpop.permute.xlu0 %3405
        %3407 = vrot.lane.b32.xlu0 %v2621, 48
        %v3408 = vpop.permute.xlu0 %3407
        %3409 = vrot.lane.b32.xlu0 %v2622, 48
        %v3410 = vpop.permute.xlu0 %3409
        %3411 = vrot.lane.b32.xlu0 %v2623, 48
        %v3412 = vpop.permute.xlu0 %3411
        %3413 = vrot.lane.b32.xlu0 %v2624, 48
        %v3414 = vpop.permute.xlu0 %3413
        %3415 = vrot.lane.b32.xlu0 %v2625, 48
        %v3416 = vpop.permute.xlu0 %3415
        %3417 = vrot.lane.b32.xlu0 %v2626, 48
        %v3418 = vpop.permute.xlu0 %3417
        %3419 = vrot.lane.b32.xlu0 %v2627, 48
        %v3420 = vpop.permute.xlu0 %3419
        %3421 = vrot.lane.b32.xlu0 %v2628, 48
        %v3422 = vpop.permute.xlu0 %3421
        %3423 = vrot.lane.b32.xlu0 %v2629, 48
        %v3424 = vpop.permute.xlu0 %3423
        %3425 = vrot.lane.b32.xlu0 %v2630, 48
        %v3426 = vpop.permute.xlu0 %3425
        %3427 = vrot.lane.b32.xlu0 %v2631, 48
        %v3428 = vpop.permute.xlu0 %3427
        %3429 = vrot.lane.b32.xlu0 %v2632, 48
        %v3430 = vpop.permute.xlu0 %3429
        %3431 = vrot.lane.b32.xlu0 %v2633, 48
        %v3432 = vpop.permute.xlu0 %3431
        %3433 = vrot.lane.b32.xlu0 %v2634, 48
        %v3434 = vpop.permute.xlu0 %3433
        %3499 = vrot.lane.b32.xlu0 %v2635, 56
        %v3500 = vpop.permute.xlu0 %3499
        %3501 = vrot.lane.b32.xlu0 %v2636, 56
        %v3502 = vpop.permute.xlu0 %3501
        %3503 = vrot.lane.b32.xlu0 %v2637, 56
        %v3504 = vpop.permute.xlu0 %3503
        %3505 = vrot.lane.b32.xlu0 %v2638, 56
        %v3506 = vpop.permute.xlu0 %3505
        %3507 = vrot.lane.b32.xlu0 %v2639, 56
        %v3508 = vpop.permute.xlu0 %3507
        %3509 = vrot.lane.b32.xlu0 %v2640, 56
        %v3510 = vpop.permute.xlu0 %3509
        %3511 = vrot.lane.b32.xlu0 %v2641, 56
        %v3512 = vpop.permute.xlu0 %3511
        %3513 = vrot.lane.b32.xlu0 %v2642, 56
        %v3514 = vpop.permute.xlu0 %3513
        %3515 = vrot.lane.b32.xlu0 %v2643, 56
        %v3516 = vpop.permute.xlu0 %3515
        %3517 = vrot.lane.b32.xlu0 %v2644, 56
        %v3518 = vpop.permute.xlu0 %3517
        %3519 = vrot.lane.b32.xlu0 %v2645, 56
        %v3520 = vpop.permute.xlu0 %3519
        %3521 = vrot.lane.b32.xlu0 %v2646, 56
        %v3522 = vpop.permute.xlu0 %3521
        %3523 = vrot.lane.b32.xlu0 %v2647, 56
        %v3524 = vpop.permute.xlu0 %3523
        %3525 = vrot.lane.b32.xlu0 %v2648, 56
        %v3526 = vpop.permute.xlu0 %3525
        %3527 = vrot.lane.b32.xlu0 %v2649, 56
        %v3528 = vpop.permute.xlu0 %3527
        %3529 = vrot.lane.b32.xlu0 %v2650, 56
        %v3530 = vpop.permute.xlu0 %3529
        %3531 = vrot.lane.b32.xlu0 %v2651, 56
        %v3532 = vpop.permute.xlu0 %3531
        %3533 = vrot.lane.b32.xlu0 %v2652, 56
        %v3534 = vpop.permute.xlu0 %3533
        %3535 = vrot.lane.b32.xlu0 %v2653, 56
        %v3536 = vpop.permute.xlu0 %3535
        %3537 = vrot.lane.b32.xlu0 %v2654, 56
        %v3538 = vpop.permute.xlu0 %3537
        %3539 = vrot.lane.b32.xlu0 %v2655, 56
        %v3540 = vpop.permute.xlu0 %3539
        %3541 = vrot.lane.b32.xlu0 %v2656, 56
        %v3542 = vpop.permute.xlu0 %3541
        %3543 = vrot.lane.b32.xlu0 %v2657, 56
        %v3544 = vpop.permute.xlu0 %3543
        %3545 = vrot.lane.b32.xlu0 %v2658, 56
        %v3546 = vpop.permute.xlu0 %3545
        %3547 = vrot.lane.b32.xlu0 %v2659, 56
        %v3548 = vpop.permute.xlu0 %3547
        %3549 = vrot.lane.b32.xlu0 %v2660, 56
        %v3550 = vpop.permute.xlu0 %3549
        %3551 = vrot.lane.b32.xlu0 %v2661, 56
        %v3552 = vpop.permute.xlu0 %3551
        %3553 = vrot.lane.b32.xlu0 %v2662, 56
        %v3554 = vpop.permute.xlu0 %3553
        %3555 = vrot.lane.b32.xlu0 %v2663, 56
        %v3556 = vpop.permute.xlu0 %3555
        %3557 = vrot.lane.b32.xlu0 %v2664, 56
        %v3558 = vpop.permute.xlu0 %3557
        %3559 = vrot.lane.b32.xlu0 %v2665, 56
        %v3560 = vpop.permute.xlu0 %3559
        %3561 = vrot.lane.b32.xlu0 %v2666, 56
        %v3562 = vpop.permute.xlu0 %3561
        %3627 = vrot.lane.b32.xlu0 %v2667, 64
        %v3628 = vpop.permute.xlu0 %3627
        %3629 = vrot.lane.b32.xlu0 %v2668, 64
        %v3630 = vpop.permute.xlu0 %3629
        %3631 = vrot.lane.b32.xlu0 %v2669, 64
        %v3632 = vpop.permute.xlu0 %3631
        %3633 = vrot.lane.b32.xlu0 %v2670, 64
        %v3634 = vpop.permute.xlu0 %3633
        %3635 = vrot.lane.b32.xlu0 %v2671, 64
        %v3636 = vpop.permute.xlu0 %3635
        %3637 = vrot.lane.b32.xlu0 %v2672, 64
        %v3638 = vpop.permute.xlu0 %3637
        %3639 = vrot.lane.b32.xlu0 %v2673, 64
        %v3640 = vpop.permute.xlu0 %3639
        %3641 = vrot.lane.b32.xlu0 %v2674, 64
        %v3642 = vpop.permute.xlu0 %3641
        %3643 = vrot.lane.b32.xlu0 %v2675, 64
        %v3644 = vpop.permute.xlu0 %3643
        %3645 = vrot.lane.b32.xlu0 %v2676, 64
        %v3646 = vpop.permute.xlu0 %3645
        %3647 = vrot.lane.b32.xlu0 %v2677, 64
        %v3648 = vpop.permute.xlu0 %3647
        %3649 = vrot.lane.b32.xlu0 %v2678, 64
        %v3650 = vpop.permute.xlu0 %3649
        %3651 = vrot.lane.b32.xlu0 %v2679, 64
        %v3652 = vpop.permute.xlu0 %3651
        %3653 = vrot.lane.b32.xlu0 %v2680, 64
        %v3654 = vpop.permute.xlu0 %3653
        %3655 = vrot.lane.b32.xlu0 %v2681, 64
        %v3656 = vpop.permute.xlu0 %3655
        %3657 = vrot.lane.b32.xlu0 %v2682, 64
        %v3658 = vpop.permute.xlu0 %3657
        %3659 = vrot.lane.b32.xlu0 %v2683, 64
        %v3660 = vpop.permute.xlu0 %3659
        %3661 = vrot.lane.b32.xlu0 %v2684, 64
        %v3662 = vpop.permute.xlu0 %3661
        %3663 = vrot.lane.b32.xlu0 %v2685, 64
        %v3664 = vpop.permute.xlu0 %3663
        %3665 = vrot.lane.b32.xlu0 %v2686, 64
        %v3666 = vpop.permute.xlu0 %3665
        %3667 = vrot.lane.b32.xlu0 %v2687, 64
        %v3668 = vpop.permute.xlu0 %3667
        %3669 = vrot.lane.b32.xlu0 %v2688, 64
        %v3670 = vpop.permute.xlu0 %3669
        %3671 = vrot.lane.b32.xlu0 %v2689, 64
        %v3672 = vpop.permute.xlu0 %3671
        %3673 = vrot.lane.b32.xlu0 %v2690, 64
        %v3674 = vpop.permute.xlu0 %3673
        %3675 = vrot.lane.b32.xlu0 %v2691, 64
        %v3676 = vpop.permute.xlu0 %3675
        %3677 = vrot.lane.b32.xlu0 %v2692, 64
        %v3678 = vpop.permute.xlu0 %3677
        %3679 = vrot.lane.b32.xlu0 %v2693, 64
        %v3680 = vpop.permute.xlu0 %3679
        %3681 = vrot.lane.b32.xlu0 %v2694, 64
        %v3682 = vpop.permute.xlu0 %3681
        %3683 = vrot.lane.b32.xlu0 %v2695, 64
        %v3684 = vpop.permute.xlu0 %3683
        %3685 = vrot.lane.b32.xlu0 %v2696, 64
        %v3686 = vpop.permute.xlu0 %3685
        %3687 = vrot.lane.b32.xlu0 %v2697, 64
        %v3688 = vpop.permute.xlu0 %3687
        %3689 = vrot.lane.b32.xlu0 %v2698, 64
        %v3690 = vpop.permute.xlu0 %3689
        %v3723 = vsel %vm250, %v2410, %v2732
        %v3724 = vsel %vm250, %v2411, %v2734
        %v3725 = vsel %vm250, %v2412, %v2736
        %v3726 = vsel %vm250, %v2413, %v2738
        %v3727 = vsel %vm250, %v2414, %v2740
        %v3728 = vsel %vm250, %v2415, %v2742
        %v3729 = vsel %vm250, %v2416, %v2744
        %v3730 = vsel %vm250, %v2417, %v2746
        %v3731 = vsel %vm250, %v2418, %v2748
        %v3732 = vsel %vm250, %v2419, %v2750
        %v3733 = vsel %vm250, %v2420, %v2752
        %v3734 = vsel %vm250, %v2421, %v2754
        %v3735 = vsel %vm250, %v2422, %v2756
        %v3736 = vsel %vm250, %v2423, %v2758
        %v3737 = vsel %vm250, %v2424, %v2760
        %v3738 = vsel %vm250, %v2425, %v2762
        %v3739 = vsel %vm250, %v2426, %v2764
        %v3740 = vsel %vm250, %v2427, %v2766
        %v3741 = vsel %vm250, %v2428, %v2768
        %v3742 = vsel %vm250, %v2429, %v2770
        %v3743 = vsel %vm250, %v2430, %v2772
        %v3744 = vsel %vm250, %v2431, %v2774
        %v3745 = vsel %vm250, %v2432, %v2776
        %v3746 = vsel %vm250, %v2433, %v2778
        %v3747 = vsel %vm250, %v2434, %v2780
        %v3748 = vsel %vm250, %v2435, %v2782
        %v3749 = vsel %vm250, %v2436, %v2784
        %v3750 = vsel %vm250, %v2437, %v2786
        %v3751 = vsel %vm250, %v2438, %v2788
        %v3752 = vsel %vm250, %v2439, %v2790
        %v3753 = vsel %vm250, %v2440, %v2792
        %v3754 = vsel %vm250, %v2441, %v2794
        %v3755 = vsel %vm1770, %v3723, %v2860
        %v3756 = vsel %vm1770, %v3724, %v2862
        %v3757 = vsel %vm1770, %v3725, %v2864
        %v3758 = vsel %vm1770, %v3726, %v2866
        %v3759 = vsel %vm1770, %v3727, %v2868
        %v3760 = vsel %vm1770, %v3728, %v2870
        %v3761 = vsel %vm1770, %v3729, %v2872
        %v3762 = vsel %vm1770, %v3730, %v2874
        %v3763 = vsel %vm1770, %v3731, %v2876
        %v3764 = vsel %vm1770, %v3732, %v2878
        %v3765 = vsel %vm1770, %v3733, %v2880
        %v3766 = vsel %vm1770, %v3734, %v2882
        %v3767 = vsel %vm1770, %v3735, %v2884
        %v3768 = vsel %vm1770, %v3736, %v2886
        %v3769 = vsel %vm1770, %v3737, %v2888
        %v3770 = vsel %vm1770, %v3738, %v2890
        %v3771 = vsel %vm1770, %v3739, %v2892
        %v3772 = vsel %vm1770, %v3740, %v2894
        %v3773 = vsel %vm1770, %v3741, %v2896
        %v3774 = vsel %vm1770, %v3742, %v2898
        %v3775 = vsel %vm1770, %v3743, %v2900
        %v3776 = vsel %vm1770, %v3744, %v2902
        %v3777 = vsel %vm1770, %v3745, %v2904
        %v3778 = vsel %vm1770, %v3746, %v2906
        %v3779 = vsel %vm1770, %v3747, %v2908
        %v3780 = vsel %vm1770, %v3748, %v2910
        %v3781 = vsel %vm1770, %v3749, %v2912
        %v3782 = vsel %vm1770, %v3750, %v2914
        %v3783 = vsel %vm1770, %v3751, %v2916
        %v3784 = vsel %vm1770, %v3752, %v2918
        %v3785 = vsel %vm1770, %v3753, %v2920
        %v3786 = vsel %vm1770, %v3754, %v2922
        %v3787 = vsel %vm1803, %v3755, %v2988
        %v3788 = vsel %vm1803, %v3756, %v2990
        %v3789 = vsel %vm1803, %v3757, %v2992
        %v3790 = vsel %vm1803, %v3758, %v2994
        %v3791 = vsel %vm1803, %v3759, %v2996
        %v3792 = vsel %vm1803, %v3760, %v2998
        %v3793 = vsel %vm1803, %v3761, %v3000
        %v3794 = vsel %vm1803, %v3762, %v3002
        %v3795 = vsel %vm1803, %v3763, %v3004
        %v3796 = vsel %vm1803, %v3764, %v3006
        %v3797 = vsel %vm1803, %v3765, %v3008
        %v3798 = vsel %vm1803, %v3766, %v3010
        %v3799 = vsel %vm1803, %v3767, %v3012
        %v3800 = vsel %vm1803, %v3768, %v3014
        %v3801 = vsel %vm1803, %v3769, %v3016
        %v3802 = vsel %vm1803, %v3770, %v3018
        %v3803 = vsel %vm1803, %v3771, %v3020
        %v3804 = vsel %vm1803, %v3772, %v3022
        %v3805 = vsel %vm1803, %v3773, %v3024
        %v3806 = vsel %vm1803, %v3774, %v3026
        %v3807 = vsel %vm1803, %v3775, %v3028
        %v3808 = vsel %vm1803, %v3776, %v3030
        %v3809 = vsel %vm1803, %v3777, %v3032
        %v3810 = vsel %vm1803, %v3778, %v3034
        %v3811 = vsel %vm1803, %v3779, %v3036
        %v3812 = vsel %vm1803, %v3780, %v3038
        %v3813 = vsel %vm1803, %v3781, %v3040
        %v3814 = vsel %vm1803, %v3782, %v3042
        %v3815 = vsel %vm1803, %v3783, %v3044
        %v3816 = vsel %vm1803, %v3784, %v3046
        %v3817 = vsel %vm1803, %v3785, %v3048
        %v3818 = vsel %vm1803, %v3786, %v3050
        %v3819 = vsel %vm1836, %v3787, %v3116
        %v3820 = vsel %vm1836, %v3788, %v3118
        %v3821 = vsel %vm1836, %v3789, %v3120
        %v3822 = vsel %vm1836, %v3790, %v3122
        %v3823 = vsel %vm1836, %v3791, %v3124
        %v3824 = vsel %vm1836, %v3792, %v3126
        %v3825 = vsel %vm1836, %v3793, %v3128
        %v3826 = vsel %vm1836, %v3794, %v3130
        %v3827 = vsel %vm1836, %v3795, %v3132
        %v3828 = vsel %vm1836, %v3796, %v3134
        %v3829 = vsel %vm1836, %v3797, %v3136
        %v3830 = vsel %vm1836, %v3798, %v3138
        %v3831 = vsel %vm1836, %v3799, %v3140
        %v3832 = vsel %vm1836, %v3800, %v3142
        %v3833 = vsel %vm1836, %v3801, %v3144
        %v3834 = vsel %vm1836, %v3802, %v3146
        %v3835 = vsel %vm1836, %v3803, %v3148
        %v3836 = vsel %vm1836, %v3804, %v3150
        %v3837 = vsel %vm1836, %v3805, %v3152
        %v3838 = vsel %vm1836, %v3806, %v3154
        %v3839 = vsel %vm1836, %v3807, %v3156
        %v3840 = vsel %vm1836, %v3808, %v3158
        %v3841 = vsel %vm1836, %v3809, %v3160
        %v3842 = vsel %vm1836, %v3810, %v3162
        %v3843 = vsel %vm1836, %v3811, %v3164
        %v3844 = vsel %vm1836, %v3812, %v3166
        %v3845 = vsel %vm1836, %v3813, %v3168
        %v3846 = vsel %vm1836, %v3814, %v3170
        %v3847 = vsel %vm1836, %v3815, %v3172
        %v3848 = vsel %vm1836, %v3816, %v3174
        %v3849 = vsel %vm1836, %v3817, %v3176
        %v3850 = vsel %vm1836, %v3818, %v3178
        %v3851 = vsel %vm1869, %v3819, %v3244
        %v3852 = vsel %vm1869, %v3820, %v3246
        %v3853 = vsel %vm1869, %v3821, %v3248
        %v3854 = vsel %vm1869, %v3822, %v3250
        %v3855 = vsel %vm1869, %v3823, %v3252
        %v3856 = vsel %vm1869, %v3824, %v3254
        %v3857 = vsel %vm1869, %v3825, %v3256
        %v3858 = vsel %vm1869, %v3826, %v3258
        %v3859 = vsel %vm1869, %v3827, %v3260
        %v3860 = vsel %vm1869, %v3828, %v3262
        %v3861 = vsel %vm1869, %v3829, %v3264
        %v3862 = vsel %vm1869, %v3830, %v3266
        %v3863 = vsel %vm1869, %v3831, %v3268
        %v3864 = vsel %vm1869, %v3832, %v3270
        %v3865 = vsel %vm1869, %v3833, %v3272
        %v3866 = vsel %vm1869, %v3834, %v3274
        %v3867 = vsel %vm1869, %v3835, %v3276
        %v3868 = vsel %vm1869, %v3836, %v3278
        %v3869 = vsel %vm1869, %v3837, %v3280
        %v3870 = vsel %vm1869, %v3838, %v3282
        %v3871 = vsel %vm1869, %v3839, %v3284
        %v3872 = vsel %vm1869, %v3840, %v3286
        %v3873 = vsel %vm1869, %v3841, %v3288
        %v3874 = vsel %vm1869, %v3842, %v3290
        %v3875 = vsel %vm1869, %v3843, %v3292
        %v3876 = vsel %vm1869, %v3844, %v3294
        %v3877 = vsel %vm1869, %v3845, %v3296
        %v3878 = vsel %vm1869, %v3846, %v3298
        %v3879 = vsel %vm1869, %v3847, %v3300
        %v3880 = vsel %vm1869, %v3848, %v3302
        %v3881 = vsel %vm1869, %v3849, %v3304
        %v3882 = vsel %vm1869, %v3850, %v3306
        %v3883 = vsel %vm1902, %v3851, %v3372
        %v3884 = vsel %vm1902, %v3852, %v3374
        %v3885 = vsel %vm1902, %v3853, %v3376
        %v3886 = vsel %vm1902, %v3854, %v3378
        %v3887 = vsel %vm1902, %v3855, %v3380
        %v3888 = vsel %vm1902, %v3856, %v3382
        %v3889 = vsel %vm1902, %v3857, %v3384
        %v3890 = vsel %vm1902, %v3858, %v3386
        %v3891 = vsel %vm1902, %v3859, %v3388
        %v3892 = vsel %vm1902, %v3860, %v3390
        %v3893 = vsel %vm1902, %v3861, %v3392
        %v3894 = vsel %vm1902, %v3862, %v3394
        %v3895 = vsel %vm1902, %v3863, %v3396
        %v3896 = vsel %vm1902, %v3864, %v3398
        %v3897 = vsel %vm1902, %v3865, %v3400
        %v3898 = vsel %vm1902, %v3866, %v3402
        %v3899 = vsel %vm1902, %v3867, %v3404
        %v3900 = vsel %vm1902, %v3868, %v3406
        %v3901 = vsel %vm1902, %v3869, %v3408
        %v3902 = vsel %vm1902, %v3870, %v3410
        %v3903 = vsel %vm1902, %v3871, %v3412
        %v3904 = vsel %vm1902, %v3872, %v3414
        %v3905 = vsel %vm1902, %v3873, %v3416
        %v3906 = vsel %vm1902, %v3874, %v3418
        %v3907 = vsel %vm1902, %v3875, %v3420
        %v3908 = vsel %vm1902, %v3876, %v3422
        %v3909 = vsel %vm1902, %v3877, %v3424
        %v3910 = vsel %vm1902, %v3878, %v3426
        %v3911 = vsel %vm1902, %v3879, %v3428
        %v3912 = vsel %vm1902, %v3880, %v3430
        %v3913 = vsel %vm1902, %v3881, %v3432
        %v3914 = vsel %vm1902, %v3882, %v3434
        %v3915 = vsel %vm1935, %v3883, %v3500
        %v3916 = vsel %vm1935, %v3884, %v3502
        %v3917 = vsel %vm1935, %v3885, %v3504
        %v3918 = vsel %vm1935, %v3886, %v3506
        %v3919 = vsel %vm1935, %v3887, %v3508
        %v3920 = vsel %vm1935, %v3888, %v3510
        %v3921 = vsel %vm1935, %v3889, %v3512
        %v3922 = vsel %vm1935, %v3890, %v3514
        %v3923 = vsel %vm1935, %v3891, %v3516
        %v3924 = vsel %vm1935, %v3892, %v3518
        %v3925 = vsel %vm1935, %v3893, %v3520
        %v3926 = vsel %vm1935, %v3894, %v3522
        %v3927 = vsel %vm1935, %v3895, %v3524
        %v3928 = vsel %vm1935, %v3896, %v3526
        %v3929 = vsel %vm1935, %v3897, %v3528
        %v3930 = vsel %vm1935, %v3898, %v3530
        %v3931 = vsel %vm1935, %v3899, %v3532
        %v3932 = vsel %vm1935, %v3900, %v3534
        %v3933 = vsel %vm1935, %v3901, %v3536
        %v3934 = vsel %vm1935, %v3902, %v3538
        %v3935 = vsel %vm1935, %v3903, %v3540
        %v3936 = vsel %vm1935, %v3904, %v3542
        %v3937 = vsel %vm1935, %v3905, %v3544
        %v3938 = vsel %vm1935, %v3906, %v3546
        %v3939 = vsel %vm1935, %v3907, %v3548
        %v3940 = vsel %vm1935, %v3908, %v3550
        %v3941 = vsel %vm1935, %v3909, %v3552
        %v3942 = vsel %vm1935, %v3910, %v3554
        %v3943 = vsel %vm1935, %v3911, %v3556
        %v3944 = vsel %vm1935, %v3912, %v3558
        %v3945 = vsel %vm1935, %v3913, %v3560
        %v3946 = vsel %vm1935, %v3914, %v3562
        %v3947 = vsel %vm1968, %v3915, %v3628
        %v3948 = vsel %vm1968, %v3916, %v3630
        %v3949 = vsel %vm1968, %v3917, %v3632
        %v3950 = vsel %vm1968, %v3918, %v3634
        %v3951 = vsel %vm1968, %v3919, %v3636
        %v3952 = vsel %vm1968, %v3920, %v3638
        %v3953 = vsel %vm1968, %v3921, %v3640
        %v3954 = vsel %vm1968, %v3922, %v3642
        %v3955 = vsel %vm1968, %v3923, %v3644
        %v3956 = vsel %vm1968, %v3924, %v3646
        %v3957 = vsel %vm1968, %v3925, %v3648
        %v3958 = vsel %vm1968, %v3926, %v3650
        %v3959 = vsel %vm1968, %v3927, %v3652
        %v3960 = vsel %vm1968, %v3928, %v3654
        %v3961 = vsel %vm1968, %v3929, %v3656
        %v3962 = vsel %vm1968, %v3930, %v3658
        %v3963 = vsel %vm1968, %v3931, %v3660
        %v3964 = vsel %vm1968, %v3932, %v3662
        %v3965 = vsel %vm1968, %v3933, %v3664
        %v3966 = vsel %vm1968, %v3934, %v3666
        %v3967 = vsel %vm1968, %v3935, %v3668
        %v3968 = vsel %vm1968, %v3936, %v3670
        %v3969 = vsel %vm1968, %v3937, %v3672
        %v3970 = vsel %vm1968, %v3938, %v3674
        %v3971 = vsel %vm1968, %v3939, %v3676
        %v3972 = vsel %vm1968, %v3940, %v3678
        %v3973 = vsel %vm1968, %v3941, %v3680
        %v3974 = vsel %vm1968, %v3942, %v3682
        %v3975 = vsel %vm1968, %v3943, %v3684
        %v3976 = vsel %vm1968, %v3944, %v3686
        %v3977 = vsel %vm1968, %v3945, %v3688
        %v3978 = vsel %vm1968, %v3946, %v3690
        %v3979 = vpack.c.bf16 %v3948, %v3947
        %v3980 = vpack.c.bf16 %v3950, %v3949
        %v3981 = vpack.c.bf16 %v3952, %v3951
        %v3982 = vpack.c.bf16 %v3954, %v3953
        %v3983 = vpack.c.bf16 %v3956, %v3955
        %v3984 = vpack.c.bf16 %v3958, %v3957
        %v3985 = vpack.c.bf16 %v3960, %v3959
        %v3986 = vpack.c.bf16 %v3962, %v3961
        %v3987 = vpack.c.bf16 %v3964, %v3963
        %v3988 = vpack.c.bf16 %v3966, %v3965
        %v3989 = vpack.c.bf16 %v3968, %v3967
        %v3990 = vpack.c.bf16 %v3970, %v3969
        %v3991 = vpack.c.bf16 %v3972, %v3971
        %v3992 = vpack.c.bf16 %v3974, %v3973
        %v3993 = vpack.c.bf16 %v3976, %v3975
        %v3994 = vpack.c.bf16 %v3978, %v3977
        %s3995 = scalar_lea.vmem %s1, 36
        %v3996 = vld [vmem:[%s3995] sm:$0xf]
        %v3997 = vld [vmem:[%s3995 + $0x4] sm:$0xf]
        %v3998 = vld [vmem:[%s3995 + $0x8] sm:$0xf]
        %v3999 = vld [vmem:[%s3995 + $0xc] sm:$0xf]
        %v4000 = vld [vmem:[%s3995 + $0x10] sm:$0xf]
        %v4001 = vld [vmem:[%s3995 + $0x14] sm:$0xf]
        %v4002 = vld [vmem:[%s3995 + $0x18] sm:$0xf]
        %v4003 = vld [vmem:[%s3995 + $0x1c] sm:$0xf]
        %v4004 = vld [vmem:[%s3995 + $0x20] sm:$0xf]
        %v4014 = vunpack.c.l.b16 %v3996
        %v4015 = vunpack.c.l.b16 %v3997
        %v4016 = vunpack.c.l.b16 %v3998
        %v4017 = vunpack.c.l.b16 %v3999
        %v4018 = vunpack.c.l.b16 %v4000
        %v4019 = vunpack.c.l.b16 %v4001
        %v4020 = vunpack.c.l.b16 %v4002
        %v4021 = vunpack.c.l.b16 %v4003
        %v4022 = vunpack.c.l.b16 %v4004
        %v4023 = vpack.c.b16 %v4015, %v4014
        %v4024 = vpack.c.b16 %v4017, %v4016
        %v4025 = vpack.c.b16 %v4019, %v4018
        %v4026 = vpack.c.b16 %v4021, %v4020
        %v4027 = vpack.c.b16 %v4022, %v4022
        %v4033 = vsel %vm2053, %v3979, 0
        %v4036 = vsel %vm2053, %v3980, 0
        %v4039 = vsel %vm2053, %v3981, 0
        %v4042 = vsel %vm2053, %v3982, 0
        %v4045 = vsel %vm2053, %v3983, 0
        %v4048 = vsel %vm2053, %v3984, 0
        %v4051 = vsel %vm2053, %v3985, 0
        %v4054 = vsel %vm2053, %v3986, 0
        %v4057 = vsel %vm2053, %v3987, 0
        %v4060 = vsel %vm2053, %v3988, 0
        %v4063 = vsel %vm2053, %v3989, 0
        %v4066 = vsel %vm2053, %v3990, 0
        %v4069 = vsel %vm2053, %v3991, 0
        %v4072 = vsel %vm2053, %v3992, 0
        %v4075 = vsel %vm2053, %v3993, 0
        %v4078 = vsel %vm2053, %v3994, 0
        %v4081 = vsel %vm2102, %v4027, 0
        %4083 = vmatprep.subr.bf16.mxu0 0
        %4084 = vmatpush1.bf16.msra.mxu0 %v4023
        %4085 = vmatprep.subr.bf16.mxu0 0
        %4086 = vmatpush1.bf16.msra.mxu0 %v4024
        %4087 = vmatprep.subr.bf16.mxu0 0
        %4088 = vmatpush1.bf16.msra.mxu0 %v4025
        %4089 = vmatprep.subr.bf16.mxu0 0
        %4090 = vmatpush1.bf16.msra.mxu0 %v4026
        %4091 = vmatprep.subr.bf16.mxu0 0
        %4092 = vmatpush1.bf16.msra.mxu0 %v4081
        %4093 = vmatprep.subr.bf16.mxu0 0
        %4094 = vmatpush1.bf16.msra.mxu0 0
        %4095 = vmatprep.subr.bf16.mxu0 0
        %4096 = vmatpush1.bf16.msra.mxu0 0
        %4097 = vmatprep.subr.bf16.mxu0 0
        %4098 = vmatpush1.bf16.msra.mxu0 0
        %4099 = vmatprep.subr.bf16.mxu0 0
        %4100 = vmatpush1.bf16.msra.mxu0 0
        %4101 = vmatprep.subr.bf16.mxu0 0
        %4102 = vmatpush1.bf16.msra.mxu0 0
        %4103 = vmatprep.subr.bf16.mxu0 0
        %4104 = vmatpush1.bf16.msra.mxu0 0
        %4105 = vmatprep.subr.bf16.mxu0 0
        %4106 = vmatpush1.bf16.msra.mxu0 0
        %4107 = vmatprep.subr.bf16.mxu0 0
        %4108 = vmatpush1.bf16.msra.mxu0 0
        %4109 = vmatprep.subr.bf16.mxu0 0
        %4110 = vmatpush1.bf16.msra.mxu0 0
        %4111 = vmatprep.subr.bf16.mxu0 0
        %4112 = vmatpush1.bf16.msra.mxu0 0
        %4113 = vmatprep.subr.bf16.mxu0 0
        %4114 = vmatpush1.bf16.msra.mxu0 0
        %4115 = vmatprep.mubr.bf16.mxu0 0
        %4116 = vmatmul.mubr.bf16.gmra.mrb[0].mxu0 %v4033
        %v4117 = vpop.f32.mrb[0].mxu0
        %v4118 = vadd.f32 0.0, %v4117
        %v4119 = vpop.f32.mrb[0].mxu0
        %v4120 = vpop.f32.mrb[0].mxu0
        %v4121 = vadd.f32 0.0, %v4120
        %v4122 = vpop.f32.mrb[0].mxu0
        %4123 = vmatprep.mubr.bf16.mxu0 0
        %4124 = vmatmul.mubr.bf16.gmra.mrb[0].mxu0 %v4036
        %v4125 = vpop.f32.mrb[0].mxu0
        %v4126 = vadd.f32 0.0, %v4125
        %v4127 = vpop.f32.mrb[0].mxu0
        %v4128 = vpop.f32.mrb[0].mxu0
        %v4129 = vadd.f32 0.0, %v4128
        %v4130 = vpop.f32.mrb[0].mxu0
        %4131 = vmatprep.mubr.bf16.mxu0 0
        %4132 = vmatmul.mubr.bf16.gmra.mrb[0].mxu0 %v4039
        %v4133 = vpop.f32.mrb[0].mxu0
        %v4134 = vadd.f32 0.0, %v4133
        %v4135 = vpop.f32.mrb[0].mxu0
        %v4136 = vpop.f32.mrb[0].mxu0
        %v4137 = vadd.f32 0.0, %v4136
        %v4138 = vpop.f32.mrb[0].mxu0
        %4139 = vmatprep.mubr.bf16.mxu0 0
        %4140 = vmatmul.mubr.bf16.gmra.mrb[0].mxu0 %v4042
        %v4141 = vpop.f32.mrb[0].mxu0
        %v4142 = vadd.f32 0.0, %v4141
        %v4143 = vpop.f32.mrb[0].mxu0
        %v4144 = vpop.f32.mrb[0].mxu0
        %v4145 = vadd.f32 0.0, %v4144
        %v4146 = vpop.f32.mrb[0].mxu0
        %4147 = vmatprep.mubr.bf16.mxu0 0
        %4148 = vmatmul.mubr.bf16.gmra.mrb[0].mxu0 %v4045
        %v4149 = vpop.f32.mrb[0].mxu0
        %v4150 = vadd.f32 0.0, %v4149
        %v4151 = vpop.f32.mrb[0].mxu0
        %v4152 = vpop.f32.mrb[0].mxu0
        %v4153 = vadd.f32 0.0, %v4152
        %v4154 = vpop.f32.mrb[0].mxu0
        %4155 = vmatprep.mubr.bf16.mxu0 0
        %4156 = vmatmul.mubr.bf16.gmra.mrb[0].mxu0 %v4048
        %v4157 = vpop.f32.mrb[0].mxu0
        %v4158 = vadd.f32 0.0, %v4157
        %v4159 = vpop.f32.mrb[0].mxu0
        %v4160 = vpop.f32.mrb[0].mxu0
        %v4161 = vadd.f32 0.0, %v4160
        %v4162 = vpop.f32.mrb[0].mxu0
        %4163 = vmatprep.mubr.bf16.mxu0 0
        %4164 = vmatmul.mubr.bf16.gmra.mrb[0].mxu0 %v4051
        %v4165 = vpop.f32.mrb[0].mxu0
        %v4166 = vadd.f32 0.0, %v4165
        %v4167 = vpop.f32.mrb[0].mxu0
        %v4168 = vpop.f32.mrb[0].mxu0
        %v4169 = vadd.f32 0.0, %v4168
        %v4170 = vpop.f32.mrb[0].mxu0
        %4171 = vmatprep.mubr.bf16.mxu0 0
        %4172 = vmatmul.mubr.bf16.gmra.mrb[0].mxu0 %v4054
        %v4173 = vpop.f32.mrb[0].mxu0
        %v4174 = vadd.f32 0.0, %v4173
        %v4175 = vpop.f32.mrb[0].mxu0
        %v4176 = vpop.f32.mrb[0].mxu0
        %v4177 = vadd.f32 0.0, %v4176
        %v4178 = vpop.f32.mrb[0].mxu0
        %4179 = vmatprep.mubr.bf16.mxu0 0
        %4180 = vmatmul.mubr.bf16.gmra.mrb[0].mxu0 %v4057
        %v4181 = vpop.f32.mrb[0].mxu0
        %v4182 = vadd.f32 0.0, %v4181
        %v4183 = vpop.f32.mrb[0].mxu0
        %v4184 = vpop.f32.mrb[0].mxu0
        %v4185 = vadd.f32 0.0, %v4184
        %v4186 = vpop.f32.mrb[0].mxu0
        %4187 = vmatprep.mubr.bf16.mxu0 0
        %4188 = vmatmul.mubr.bf16.gmra.mrb[0].mxu0 %v4060
        %v4189 = vpop.f32.mrb[0].mxu0
        %v4190 = vadd.f32 0.0, %v4189
        %v4191 = vpop.f32.mrb[0].mxu0
        %v4192 = vpop.f32.mrb[0].mxu0
        %v4193 = vadd.f32 0.0, %v4192
        %v4194 = vpop.f32.mrb[0].mxu0
        %4195 = vmatprep.mubr.bf16.mxu0 0
        %4196 = vmatmul.mubr.bf16.gmra.mrb[0].mxu0 %v4063
        %v4197 = vpop.f32.mrb[0].mxu0
        %v4198 = vadd.f32 0.0, %v4197
        %v4199 = vpop.f32.mrb[0].mxu0
        %v4200 = vpop.f32.mrb[0].mxu0
        %v4201 = vadd.f32 0.0, %v4200
        %v4202 = vpop.f32.mrb[0].mxu0
        %4203 = vmatprep.mubr.bf16.mxu0 0
        %4204 = vmatmul.mubr.bf16.gmra.mrb[0].mxu0 %v4066
        %v4205 = vpop.f32.mrb[0].mxu0
        %v4206 = vadd.f32 0.0, %v4205
        %v4207 = vpop.f32.mrb[0].mxu0
        %v4208 = vpop.f32.mrb[0].mxu0
        %v4209 = vadd.f32 0.0, %v4208
        %v4210 = vpop.f32.mrb[0].mxu0
        %4211 = vmatprep.mubr.bf16.mxu0 0
        %4212 = vmatmul.mubr.bf16.gmra.mrb[0].mxu0 %v4069
        %v4213 = vpop.f32.mrb[0].mxu0
        %v4214 = vadd.f32 0.0, %v4213
        %v4215 = vpop.f32.mrb[0].mxu0
        %v4216 = vpop.f32.mrb[0].mxu0
        %v4217 = vadd.f32 0.0, %v4216
        %v4218 = vpop.f32.mrb[0].mxu0
        %4219 = vmatprep.mubr.bf16.mxu0 0
        %4220 = vmatmul.mubr.bf16.gmra.mrb[0].mxu0 %v4072
        %v4221 = vpop.f32.mrb[0].mxu0
        %v4222 = vadd.f32 0.0, %v4221
        %v4223 = vpop.f32.mrb[0].mxu0
        %v4224 = vpop.f32.mrb[0].mxu0
        %v4225 = vadd.f32 0.0, %v4224
        %v4226 = vpop.f32.mrb[0].mxu0
        %4227 = vmatprep.mubr.bf16.mxu0 0
        %4228 = vmatmul.mubr.bf16.gmra.mrb[0].mxu0 %v4075
        %v4229 = vpop.f32.mrb[0].mxu0
        %v4230 = vadd.f32 0.0, %v4229
        %v4231 = vpop.f32.mrb[0].mxu0
        %v4232 = vpop.f32.mrb[0].mxu0
        %v4233 = vadd.f32 0.0, %v4232
        %v4234 = vpop.f32.mrb[0].mxu0
        %4235 = vmatprep.mubr.bf16.mxu0 0
        %4236 = vmatmul.mubr.bf16.gmra.mrb[0].mxu0 %v4078
        %v4237 = vpop.f32.mrb[0].mxu0
        %v4238 = vadd.f32 0.0, %v4237
        %v4239 = vpop.f32.mrb[0].mxu0
        %v4240 = vpop.f32.mrb[0].mxu0
        %v4241 = vadd.f32 0.0, %v4240
        %v4242 = vpop.f32.mrb[0].mxu0
        %4243 = vdwg.mxu0
        %s4244 = scalar_lea.vmem %s2, 1
        %v4245 = vld [vmem:[%s4244] sm:$0x1]
        %v4247 = vlaneseq
        %v4248 = vshrl.u32 %v4247, 7
        %v4249 = vsub.s32 0, %v4248
        %v4250 = vrot.slane %v4245, %v4249
        %v4252 = vmul.f32 %v4118, %v4250
        %v4253 = vmul.f32 %v4121, %v4250
        %v4254 = vmul.f32 %v4126, %v4250
        %v4255 = vmul.f32 %v4129, %v4250
        %v4256 = vmul.f32 %v4134, %v4250
        %v4257 = vmul.f32 %v4137, %v4250
        %v4258 = vmul.f32 %v4142, %v4250
        %v4259 = vmul.f32 %v4145, %v4250
        %v4260 = vmul.f32 %v4150, %v4250
        %v4261 = vmul.f32 %v4153, %v4250
        %v4262 = vmul.f32 %v4158, %v4250
        %v4263 = vmul.f32 %v4161, %v4250
        %v4264 = vmul.f32 %v4166, %v4250
        %v4265 = vmul.f32 %v4169, %v4250
        %v4266 = vmul.f32 %v4174, %v4250
        %v4267 = vmul.f32 %v4177, %v4250
        %v4268 = vmul.f32 %v4182, %v4250
        %v4269 = vmul.f32 %v4185, %v4250
        %v4270 = vmul.f32 %v4190, %v4250
        %v4271 = vmul.f32 %v4193, %v4250
        %v4272 = vmul.f32 %v4198, %v4250
        %v4273 = vmul.f32 %v4201, %v4250
        %v4274 = vmul.f32 %v4206, %v4250
        %v4275 = vmul.f32 %v4209, %v4250
        %v4276 = vmul.f32 %v4214, %v4250
        %v4277 = vmul.f32 %v4217, %v4250
        %v4278 = vmul.f32 %v4222, %v4250
        %v4279 = vmul.f32 %v4225, %v4250
        %v4280 = vmul.f32 %v4230, %v4250
        %v4281 = vmul.f32 %v4233, %v4250
        %v4282 = vmul.f32 %v4238, %v4250
        %v4283 = vmul.f32 %v4241, %v4250
        %s4284 = scalar_lea.vmem %s3, 1
        %v4285 = vld [vmem:[%s4284] sm:$0x1]
        %v4287 = vlaneseq
        %v4288 = vshrl.u32 %v4287, 7
        %v4289 = vsub.s32 0, %v4288
        %v4290 = vrot.slane %v4285, %v4289
        %v4292 = vadd.f32 %v4252, %v4290
        %v4293 = vadd.f32 %v4253, %v4290
        %v4294 = vadd.f32 %v4254, %v4290
        %v4295 = vadd.f32 %v4255, %v4290
        %v4296 = vadd.f32 %v4256, %v4290
        %v4297 = vadd.f32 %v4257, %v4290
        %v4298 = vadd.f32 %v4258, %v4290
        %v4299 = vadd.f32 %v4259, %v4290
        %v4300 = vadd.f32 %v4260, %v4290
        %v4301 = vadd.f32 %v4261, %v4290
        %v4302 = vadd.f32 %v4262, %v4290
        %v4303 = vadd.f32 %v4263, %v4290
        %v4304 = vadd.f32 %v4264, %v4290
        %v4305 = vadd.f32 %v4265, %v4290
        %v4306 = vadd.f32 %v4266, %v4290
        %v4307 = vadd.f32 %v4267, %v4290
        %v4308 = vadd.f32 %v4268, %v4290
        %v4309 = vadd.f32 %v4269, %v4290
        %v4310 = vadd.f32 %v4270, %v4290
        %v4311 = vadd.f32 %v4271, %v4290
        %v4312 = vadd.f32 %v4272, %v4290
        %v4313 = vadd.f32 %v4273, %v4290
        %v4314 = vadd.f32 %v4274, %v4290
        %v4315 = vadd.f32 %v4275, %v4290
        %v4316 = vadd.f32 %v4276, %v4290
        %v4317 = vadd.f32 %v4277, %v4290
        %v4318 = vadd.f32 %v4278, %v4290
        %v4319 = vadd.f32 %v4279, %v4290
        %v4320 = vadd.f32 %v4280, %v4290
        %v4321 = vadd.f32 %v4281, %v4290
        %v4322 = vadd.f32 %v4282, %v4290
        %v4323 = vadd.f32 %v4283, %v4290
        %v4324 = vmax.f32 %v4292, 0.0
        %v4325 = vmax.f32 %v4293, 0.0
        %v4326 = vmax.f32 %v4294, 0.0
        %v4327 = vmax.f32 %v4295, 0.0
        %v4328 = vmax.f32 %v4296, 0.0
        %v4329 = vmax.f32 %v4297, 0.0
        %v4330 = vmax.f32 %v4298, 0.0
        %v4331 = vmax.f32 %v4299, 0.0
        %v4332 = vmax.f32 %v4300, 0.0
        %v4333 = vmax.f32 %v4301, 0.0
        %v4334 = vmax.f32 %v4302, 0.0
        %v4335 = vmax.f32 %v4303, 0.0
        %v4336 = vmax.f32 %v4304, 0.0
        %v4337 = vmax.f32 %v4305, 0.0
        %v4338 = vmax.f32 %v4306, 0.0
        %v4339 = vmax.f32 %v4307, 0.0
        %v4340 = vmax.f32 %v4308, 0.0
        %v4341 = vmax.f32 %v4309, 0.0
        %v4342 = vmax.f32 %v4310, 0.0
        %v4343 = vmax.f32 %v4311, 0.0
        %v4344 = vmax.f32 %v4312, 0.0
        %v4345 = vmax.f32 %v4313, 0.0
        %v4346 = vmax.f32 %v4314, 0.0
        %v4347 = vmax.f32 %v4315, 0.0
        %v4348 = vmax.f32 %v4316, 0.0
        %v4349 = vmax.f32 %v4317, 0.0
        %v4350 = vmax.f32 %v4318, 0.0
        %v4351 = vmax.f32 %v4319, 0.0
        %v4352 = vmax.f32 %v4320, 0.0
        %v4353 = vmax.f32 %v4321, 0.0
        %v4354 = vmax.f32 %v4322, 0.0
        %v4355 = vmax.f32 %v4323, 0.0
        %4356 = vst.msk [vmem:[%s392 + $0x1] sm:$0xff] %vm250, %v4324
        %4357 = vst.msk [vmem:[%s392 + $0x9] sm:$0xff] %vm250, %v4325
        %4358 = vst.msk [vmem:[%s392 + $0x19] sm:$0xff] %vm250, %v4326
        %4359 = vst.msk [vmem:[%s392 + $0x21] sm:$0xff] %vm250, %v4327
        %4360 = vst.msk [vmem:[%s392 + $0x31] sm:$0xff] %vm250, %v4328
        %4361 = vst.msk [vmem:[%s392 + $0x39] sm:$0xff] %vm250, %v4329
        %4362 = vst.msk [vmem:[%s392 + $0x49] sm:$0xff] %vm250, %v4330
        %4363 = vst.msk [vmem:[%s392 + $0x51] sm:$0xff] %vm250, %v4331
        %4364 = vst.msk [vmem:[%s392 + $0x61] sm:$0xff] %vm250, %v4332
        %4365 = vst.msk [vmem:[%s392 + $0x69] sm:$0xff] %vm250, %v4333
        %4366 = vst.msk [vmem:[%s392 + $0x79] sm:$0xff] %vm250, %v4334
        %4367 = vst.msk [vmem:[%s392 + $0x81] sm:$0xff] %vm250, %v4335
        %4368 = vst.msk [vmem:[%s392 + $0x91] sm:$0xff] %vm250, %v4336
        %4369 = vst.msk [vmem:[%s392 + $0x99] sm:$0xff] %vm250, %v4337
        %4370 = vst.msk [vmem:[%s392 + $0xa9] sm:$0xff] %vm250, %v4338
        %4371 = vst.msk [vmem:[%s392 + $0xb1] sm:$0xff] %vm250, %v4339
        %4372 = vst.msk [vmem:[%s392 + $0xc1] sm:$0xff] %vm250, %v4340
        %4373 = vst.msk [vmem:[%s392 + $0xc9] sm:$0xff] %vm250, %v4341
        %4374 = vst.msk [vmem:[%s392 + $0xd9] sm:$0xff] %vm250, %v4342
        %4375 = vst.msk [vmem:[%s392 + $0xe1] sm:$0xff] %vm250, %v4343
        %4376 = vst.msk [vmem:[%s392 + $0xf1] sm:$0xff] %vm250, %v4344
        %4377 = vst.msk [vmem:[%s392 + $0xf9] sm:$0xff] %vm250, %v4345
        %4378 = vst.msk [vmem:[%s392 + $0x109] sm:$0xff] %vm250, %v4346
        %4379 = vst.msk [vmem:[%s392 + $0x111] sm:$0xff] %vm250, %v4347
        %4380 = vst.msk [vmem:[%s392 + $0x121] sm:$0xff] %vm250, %v4348
        %4381 = vst.msk [vmem:[%s392 + $0x129] sm:$0xff] %vm250, %v4349
        %4382 = vst.msk [vmem:[%s392 + $0x139] sm:$0xff] %vm250, %v4350
        %4383 = vst.msk [vmem:[%s392 + $0x141] sm:$0xff] %vm250, %v4351
        %4384 = vst.msk [vmem:[%s392 + $0x151] sm:$0xff] %vm250, %v4352
        %4385 = vst.msk [vmem:[%s392 + $0x159] sm:$0xff] %vm250, %v4353
        %4386 = vst.msk [vmem:[%s392 + $0x169] sm:$0xff] %vm250, %v4354
        %4387 = vst.msk [vmem:[%s392 + $0x171] sm:$0xff] %vm250, %v4355
        %v4388 = vld [vmem:[#allocation2] sm:$0xff]
        %v4389 = vld [vmem:[#allocation2 + $0x8] sm:$0xff]
        %v4390 = vld [vmem:[#allocation2 + $0x18] sm:$0xff]
        %v4391 = vld [vmem:[#allocation2 + $0x20] sm:$0xff]
        %v4392 = vld [vmem:[#allocation2 + $0x30] sm:$0xff]
        %v4393 = vld [vmem:[#allocation2 + $0x38] sm:$0xff]
        %v4394 = vld [vmem:[#allocation2 + $0x48] sm:$0xff]
        %v4395 = vld [vmem:[#allocation2 + $0x50] sm:$0xff]
        %v4396 = vld [vmem:[#allocation2 + $0x60] sm:$0xff]
        %v4397 = vld [vmem:[#allocation2 + $0x68] sm:$0xff]
        %v4398 = vld [vmem:[#allocation2 + $0x78] sm:$0xff]
        %v4399 = vld [vmem:[#allocation2 + $0x80] sm:$0xff]
        %v4400 = vld [vmem:[#allocation2 + $0x90] sm:$0xff]
        %v4401 = vld [vmem:[#allocation2 + $0x98] sm:$0xff]
        %v4402 = vld [vmem:[#allocation2 + $0xa8] sm:$0xff]
        %v4403 = vld [vmem:[#allocation2 + $0xb0] sm:$0xff]
        %v4404 = vld [vmem:[#allocation2 + $0xc0] sm:$0xff]
        %v4405 = vld [vmem:[#allocation2 + $0xc8] sm:$0xff]
        %v4406 = vld [vmem:[#allocation2 + $0xd8] sm:$0xff]
        %v4407 = vld [vmem:[#allocation2 + $0xe0] sm:$0xff]
        %v4408 = vld [vmem:[#allocation2 + $0xf0] sm:$0xff]
        %v4409 = vld [vmem:[#allocation2 + $0xf8] sm:$0xff]
        %v4410 = vld [vmem:[#allocation2 + $0x108] sm:$0xff]
        %v4411 = vld [vmem:[#allocation2 + $0x110] sm:$0xff]
        %v4412 = vld [vmem:[#allocation2 + $0x120] sm:$0xff]
        %v4413 = vld [vmem:[#allocation2 + $0x128] sm:$0xff]
        %v4414 = vld [vmem:[#allocation2 + $0x138] sm:$0xff]
        %v4415 = vld [vmem:[#allocation2 + $0x140] sm:$0xff]
        %v4416 = vld [vmem:[#allocation2 + $0x150] sm:$0xff]
        %v4417 = vld [vmem:[#allocation2 + $0x158] sm:$0xff]
        %v4418 = vld [vmem:[#allocation2 + $0x168] sm:$0xff]
        %v4419 = vld [vmem:[#allocation2 + $0x170] sm:$0xff]
        %v4420 = vld [vmem:[#allocation2 + $0x1] sm:$0xff]
        %v4421 = vld [vmem:[#allocation2 + $0x9] sm:$0xff]
        %v4422 = vld [vmem:[#allocation2 + $0x19] sm:$0xff]
        %v4423 = vld [vmem:[#allocation2 + $0x21] sm:$0xff]
        %v4424 = vld [vmem:[#allocation2 + $0x31] sm:$0xff]
        %v4425 = vld [vmem:[#allocation2 + $0x39] sm:$0xff]
        %v4426 = vld [vmem:[#allocation2 + $0x49] sm:$0xff]
        %v4427 = vld [vmem:[#allocation2 + $0x51] sm:$0xff]
        %v4428 = vld [vmem:[#allocation2 + $0x61] sm:$0xff]
        %v4429 = vld [vmem:[#allocation2 + $0x69] sm:$0xff]
        %v4430 = vld [vmem:[#allocation2 + $0x79] sm:$0xff]
        %v4431 = vld [vmem:[#allocation2 + $0x81] sm:$0xff]
        %v4432 = vld [vmem:[#allocation2 + $0x91] sm:$0xff]
        %v4433 = vld [vmem:[#allocation2 + $0x99] sm:$0xff]
        %v4434 = vld [vmem:[#allocation2 + $0xa9] sm:$0xff]
        %v4435 = vld [vmem:[#allocation2 + $0xb1] sm:$0xff]
        %v4436 = vld [vmem:[#allocation2 + $0xc1] sm:$0xff]
        %v4437 = vld [vmem:[#allocation2 + $0xc9] sm:$0xff]
        %v4438 = vld [vmem:[#allocation2 + $0xd9] sm:$0xff]
        %v4439 = vld [vmem:[#allocation2 + $0xe1] sm:$0xff]
        %v4440 = vld [vmem:[#allocation2 + $0xf1] sm:$0xff]
        %v4441 = vld [vmem:[#allocation2 + $0xf9] sm:$0xff]
        %v4442 = vld [vmem:[#allocation2 + $0x109] sm:$0xff]
        %v4443 = vld [vmem:[#allocation2 + $0x111] sm:$0xff]
        %v4444 = vld [vmem:[#allocation2 + $0x121] sm:$0xff]
        %v4445 = vld [vmem:[#allocation2 + $0x129] sm:$0xff]
        %v4446 = vld [vmem:[#allocation2 + $0x139] sm:$0xff]
        %v4447 = vld [vmem:[#allocation2 + $0x141] sm:$0xff]
        %v4448 = vld [vmem:[#allocation2 + $0x151] sm:$0xff]
        %v4449 = vld [vmem:[#allocation2 + $0x159] sm:$0xff]
        %v4450 = vld [vmem:[#allocation2 + $0x169] sm:$0xff]
        %v4451 = vld [vmem:[#allocation2 + $0x171] sm:$0xff]
        %v4452 = vld [vmem:[#allocation2 + $0x2] sm:$0xff]
        %v4453 = vld [vmem:[#allocation2 + $0xa] sm:$0xff]
        %v4454 = vld [vmem:[#allocation2 + $0x1a] sm:$0xff]
        %v4455 = vld [vmem:[#allocation2 + $0x22] sm:$0xff]
        %v4456 = vld [vmem:[#allocation2 + $0x32] sm:$0xff]
        %v4457 = vld [vmem:[#allocation2 + $0x3a] sm:$0xff]
        %v4458 = vld [vmem:[#allocation2 + $0x4a] sm:$0xff]
        %v4459 = vld [vmem:[#allocation2 + $0x52] sm:$0xff]
        %v4460 = vld [vmem:[#allocation2 + $0x62] sm:$0xff]
        %v4461 = vld [vmem:[#allocation2 + $0x6a] sm:$0xff]
        %v4462 = vld [vmem:[#allocation2 + $0x7a] sm:$0xff]
        %v4463 = vld [vmem:[#allocation2 + $0x82] sm:$0xff]
        %v4464 = vld [vmem:[#allocation2 + $0x92] sm:$0xff]
        %v4465 = vld [vmem:[#allocation2 + $0x9a] sm:$0xff]
        %v4466 = vld [vmem:[#allocation2 + $0xaa] sm:$0xff]
        %v4467 = vld [vmem:[#allocation2 + $0xb2] sm:$0xff]
        %v4468 = vld [vmem:[#allocation2 + $0xc2] sm:$0xff]
        %v4469 = vld [vmem:[#allocation2 + $0xca] sm:$0xff]
        %v4470 = vld [vmem:[#allocation2 + $0xda] sm:$0xff]
        %v4471 = vld [vmem:[#allocation2 + $0xe2] sm:$0xff]
        %v4472 = vld [vmem:[#allocation2 + $0xf2] sm:$0xff]
        %v4473 = vld [vmem:[#allocation2 + $0xfa] sm:$0xff]
        %v4474 = vld [vmem:[#allocation2 + $0x10a] sm:$0xff]
        %v4475 = vld [vmem:[#allocation2 + $0x112] sm:$0xff]
        %v4476 = vld [vmem:[#allocation2 + $0x122] sm:$0xff]
        %v4477 = vld [vmem:[#allocation2 + $0x12a] sm:$0xff]
        %v4478 = vld [vmem:[#allocation2 + $0x13a] sm:$0xff]
        %v4479 = vld [vmem:[#allocation2 + $0x142] sm:$0xff]
        %v4480 = vld [vmem:[#allocation2 + $0x152] sm:$0xff]
        %v4481 = vld [vmem:[#allocation2 + $0x15a] sm:$0xff]
        %v4482 = vld [vmem:[#allocation2 + $0x16a] sm:$0xff]
        %v4483 = vld [vmem:[#allocation2 + $0x172] sm:$0xff]
        %v4484 = vld [vmem:[%s392] sm:$0xff]
        %v4485 = vld [vmem:[%s392 + $0x8] sm:$0xff]
        %v4486 = vld [vmem:[%s392 + $0x18] sm:$0xff]
        %v4487 = vld [vmem:[%s392 + $0x20] sm:$0xff]
        %v4488 = vld [vmem:[%s392 + $0x30] sm:$0xff]
        %v4489 = vld [vmem:[%s392 + $0x38] sm:$0xff]
        %v4490 = vld [vmem:[%s392 + $0x48] sm:$0xff]
        %v4491 = vld [vmem:[%s392 + $0x50] sm:$0xff]
        %v4492 = vld [vmem:[%s392 + $0x60] sm:$0xff]
        %v4493 = vld [vmem:[%s392 + $0x68] sm:$0xff]
        %v4494 = vld [vmem:[%s392 + $0x78] sm:$0xff]
        %v4495 = vld [vmem:[%s392 + $0x80] sm:$0xff]
        %v4496 = vld [vmem:[%s392 + $0x90] sm:$0xff]
        %v4497 = vld [vmem:[%s392 + $0x98] sm:$0xff]
        %v4498 = vld [vmem:[%s392 + $0xa8] sm:$0xff]
        %v4499 = vld [vmem:[%s392 + $0xb0] sm:$0xff]
        %v4500 = vld [vmem:[%s392 + $0xc0] sm:$0xff]
        %v4501 = vld [vmem:[%s392 + $0xc8] sm:$0xff]
        %v4502 = vld [vmem:[%s392 + $0xd8] sm:$0xff]
        %v4503 = vld [vmem:[%s392 + $0xe0] sm:$0xff]
        %v4504 = vld [vmem:[%s392 + $0xf0] sm:$0xff]
        %v4505 = vld [vmem:[%s392 + $0xf8] sm:$0xff]
        %v4506 = vld [vmem:[%s392 + $0x108] sm:$0xff]
        %v4507 = vld [vmem:[%s392 + $0x110] sm:$0xff]
        %v4508 = vld [vmem:[%s392 + $0x120] sm:$0xff]
        %v4509 = vld [vmem:[%s392 + $0x128] sm:$0xff]
        %v4510 = vld [vmem:[%s392 + $0x138] sm:$0xff]
        %v4511 = vld [vmem:[%s392 + $0x140] sm:$0xff]
        %v4512 = vld [vmem:[%s392 + $0x150] sm:$0xff]
        %v4513 = vld [vmem:[%s392 + $0x158] sm:$0xff]
        %v4514 = vld [vmem:[%s392 + $0x168] sm:$0xff]
        %v4515 = vld [vmem:[%s392 + $0x170] sm:$0xff]
        %v4516 = vld [vmem:[%s392 + $0x1] sm:$0xff]
        %v4517 = vld [vmem:[%s392 + $0x9] sm:$0xff]
        %v4518 = vld [vmem:[%s392 + $0x19] sm:$0xff]
        %v4519 = vld [vmem:[%s392 + $0x21] sm:$0xff]
        %v4520 = vld [vmem:[%s392 + $0x31] sm:$0xff]
        %v4521 = vld [vmem:[%s392 + $0x39] sm:$0xff]
        %v4522 = vld [vmem:[%s392 + $0x49] sm:$0xff]
        %v4523 = vld [vmem:[%s392 + $0x51] sm:$0xff]
        %v4524 = vld [vmem:[%s392 + $0x61] sm:$0xff]
        %v4525 = vld [vmem:[%s392 + $0x69] sm:$0xff]
        %v4526 = vld [vmem:[%s392 + $0x79] sm:$0xff]
        %v4527 = vld [vmem:[%s392 + $0x81] sm:$0xff]
        %v4528 = vld [vmem:[%s392 + $0x91] sm:$0xff]
        %v4529 = vld [vmem:[%s392 + $0x99] sm:$0xff]
        %v4530 = vld [vmem:[%s392 + $0xa9] sm:$0xff]
        %v4531 = vld [vmem:[%s392 + $0xb1] sm:$0xff]
        %v4532 = vld [vmem:[%s392 + $0xc1] sm:$0xff]
        %v4533 = vld [vmem:[%s392 + $0xc9] sm:$0xff]
        %v4534 = vld [vmem:[%s392 + $0xd9] sm:$0xff]
        %v4535 = vld [vmem:[%s392 + $0xe1] sm:$0xff]
        %v4536 = vld [vmem:[%s392 + $0xf1] sm:$0xff]
        %v4537 = vld [vmem:[%s392 + $0xf9] sm:$0xff]
        %v4538 = vld [vmem:[%s392 + $0x109] sm:$0xff]
        %v4539 = vld [vmem:[%s392 + $0x111] sm:$0xff]
        %v4540 = vld [vmem:[%s392 + $0x121] sm:$0xff]
        %v4541 = vld [vmem:[%s392 + $0x129] sm:$0xff]
        %v4542 = vld [vmem:[%s392 + $0x139] sm:$0xff]
        %v4543 = vld [vmem:[%s392 + $0x141] sm:$0xff]
        %v4544 = vld [vmem:[%s392 + $0x151] sm:$0xff]
        %v4545 = vld [vmem:[%s392 + $0x159] sm:$0xff]
        %v4546 = vld [vmem:[%s392 + $0x169] sm:$0xff]
        %v4547 = vld [vmem:[%s392 + $0x171] sm:$0xff]
        %v4548 = vld [vmem:[%s392 + $0x2] sm:$0xff]
        %v4549 = vld [vmem:[%s392 + $0xa] sm:$0xff]
        %v4550 = vld [vmem:[%s392 + $0x1a] sm:$0xff]
        %v4551 = vld [vmem:[%s392 + $0x22] sm:$0xff]
        %v4552 = vld [vmem:[%s392 + $0x32] sm:$0xff]
        %v4553 = vld [vmem:[%s392 + $0x3a] sm:$0xff]
        %v4554 = vld [vmem:[%s392 + $0x4a] sm:$0xff]
        %v4555 = vld [vmem:[%s392 + $0x52] sm:$0xff]
        %v4556 = vld [vmem:[%s392 + $0x62] sm:$0xff]
        %v4557 = vld [vmem:[%s392 + $0x6a] sm:$0xff]
        %v4558 = vld [vmem:[%s392 + $0x7a] sm:$0xff]
        %v4559 = vld [vmem:[%s392 + $0x82] sm:$0xff]
        %v4560 = vld [vmem:[%s392 + $0x92] sm:$0xff]
        %v4561 = vld [vmem:[%s392 + $0x9a] sm:$0xff]
        %v4562 = vld [vmem:[%s392 + $0xaa] sm:$0xff]
        %v4563 = vld [vmem:[%s392 + $0xb2] sm:$0xff]
        %v4564 = vld [vmem:[%s392 + $0xc2] sm:$0xff]
        %v4565 = vld [vmem:[%s392 + $0xca] sm:$0xff]
        %v4566 = vld [vmem:[%s392 + $0xda] sm:$0xff]
        %v4567 = vld [vmem:[%s392 + $0xe2] sm:$0xff]
        %v4568 = vld [vmem:[%s392 + $0xf2] sm:$0xff]
        %v4569 = vld [vmem:[%s392 + $0xfa] sm:$0xff]
        %v4570 = vld [vmem:[%s392 + $0x10a] sm:$0xff]
        %v4571 = vld [vmem:[%s392 + $0x112] sm:$0xff]
        %v4572 = vld [vmem:[%s392 + $0x122] sm:$0xff]
        %v4573 = vld [vmem:[%s392 + $0x12a] sm:$0xff]
        %v4574 = vld [vmem:[%s392 + $0x13a] sm:$0xff]
        %v4575 = vld [vmem:[%s392 + $0x142] sm:$0xff]
        %v4576 = vld [vmem:[%s392 + $0x152] sm:$0xff]
        %v4577 = vld [vmem:[%s392 + $0x15a] sm:$0xff]
        %v4578 = vld [vmem:[%s392 + $0x16a] sm:$0xff]
        %v4579 = vld [vmem:[%s392 + $0x172] sm:$0xff]
        %v4580 = vld [vmem:[%s617] sm:$0xff]
        %v4581 = vld [vmem:[%s617 + $0x8] sm:$0xff]
        %v4582 = vld [vmem:[%s617 + $0x18] sm:$0xff]
        %v4583 = vld [vmem:[%s617 + $0x20] sm:$0xff]
        %v4584 = vld [vmem:[%s617 + $0x30] sm:$0xff]
        %v4585 = vld [vmem:[%s617 + $0x38] sm:$0xff]
        %v4586 = vld [vmem:[%s617 + $0x48] sm:$0xff]
        %v4587 = vld [vmem:[%s617 + $0x50] sm:$0xff]
        %v4588 = vld [vmem:[%s617 + $0x60] sm:$0xff]
        %v4589 = vld [vmem:[%s617 + $0x68] sm:$0xff]
        %v4590 = vld [vmem:[%s617 + $0x78] sm:$0xff]
        %v4591 = vld [vmem:[%s617 + $0x80] sm:$0xff]
        %v4592 = vld [vmem:[%s617 + $0x90] sm:$0xff]
        %v4593 = vld [vmem:[%s617 + $0x98] sm:$0xff]
        %v4594 = vld [vmem:[%s617 + $0xa8] sm:$0xff]
        %v4595 = vld [vmem:[%s617 + $0xb0] sm:$0xff]
        %v4596 = vld [vmem:[%s617 + $0xc0] sm:$0xff]
        %v4597 = vld [vmem:[%s617 + $0xc8] sm:$0xff]
        %v4598 = vld [vmem:[%s617 + $0xd8] sm:$0xff]
        %v4599 = vld [vmem:[%s617 + $0xe0] sm:$0xff]
        %v4600 = vld [vmem:[%s617 + $0xf0] sm:$0xff]
        %v4601 = vld [vmem:[%s617 + $0xf8] sm:$0xff]
        %v4602 = vld [vmem:[%s617 + $0x108] sm:$0xff]
        %v4603 = vld [vmem:[%s617 + $0x110] sm:$0xff]
        %v4604 = vld [vmem:[%s617 + $0x120] sm:$0xff]
        %v4605 = vld [vmem:[%s617 + $0x128] sm:$0xff]
        %v4606 = vld [vmem:[%s617 + $0x138] sm:$0xff]
        %v4607 = vld [vmem:[%s617 + $0x140] sm:$0xff]
        %v4608 = vld [vmem:[%s617 + $0x150] sm:$0xff]
        %v4609 = vld [vmem:[%s617 + $0x158] sm:$0xff]
        %v4610 = vld [vmem:[%s617 + $0x168] sm:$0xff]
        %v4611 = vld [vmem:[%s617 + $0x170] sm:$0xff]
        %v4612 = vld [vmem:[%s617 + $0x1] sm:$0xff]
        %v4613 = vld [vmem:[%s617 + $0x9] sm:$0xff]
        %v4614 = vld [vmem:[%s617 + $0x19] sm:$0xff]
        %v4615 = vld [vmem:[%s617 + $0x21] sm:$0xff]
        %v4616 = vld [vmem:[%s617 + $0x31] sm:$0xff]
        %v4617 = vld [vmem:[%s617 + $0x39] sm:$0xff]
        %v4618 = vld [vmem:[%s617 + $0x49] sm:$0xff]
        %v4619 = vld [vmem:[%s617 + $0x51] sm:$0xff]
        %v4620 = vld [vmem:[%s617 + $0x61] sm:$0xff]
        %v4621 = vld [vmem:[%s617 + $0x69] sm:$0xff]
        %v4622 = vld [vmem:[%s617 + $0x79] sm:$0xff]
        %v4623 = vld [vmem:[%s617 + $0x81] sm:$0xff]
        %v4624 = vld [vmem:[%s617 + $0x91] sm:$0xff]
        %v4625 = vld [vmem:[%s617 + $0x99] sm:$0xff]
        %v4626 = vld [vmem:[%s617 + $0xa9] sm:$0xff]
        %v4627 = vld [vmem:[%s617 + $0xb1] sm:$0xff]
        %v4628 = vld [vmem:[%s617 + $0xc1] sm:$0xff]
        %v4629 = vld [vmem:[%s617 + $0xc9] sm:$0xff]
        %v4630 = vld [vmem:[%s617 + $0xd9] sm:$0xff]
        %v4631 = vld [vmem:[%s617 + $0xe1] sm:$0xff]
        %v4632 = vld [vmem:[%s617 + $0xf1] sm:$0xff]
        %v4633 = vld [vmem:[%s617 + $0xf9] sm:$0xff]
        %v4634 = vld [vmem:[%s617 + $0x109] sm:$0xff]
        %v4635 = vld [vmem:[%s617 + $0x111] sm:$0xff]
        %v4636 = vld [vmem:[%s617 + $0x121] sm:$0xff]
        %v4637 = vld [vmem:[%s617 + $0x129] sm:$0xff]
        %v4638 = vld [vmem:[%s617 + $0x139] sm:$0xff]
        %v4639 = vld [vmem:[%s617 + $0x141] sm:$0xff]
        %v4640 = vld [vmem:[%s617 + $0x151] sm:$0xff]
        %v4641 = vld [vmem:[%s617 + $0x159] sm:$0xff]
        %v4642 = vld [vmem:[%s617 + $0x169] sm:$0xff]
        %v4643 = vld [vmem:[%s617 + $0x171] sm:$0xff]
        %v4644 = vld [vmem:[%s617 + $0x2] sm:$0xff]
        %v4645 = vld [vmem:[%s617 + $0xa] sm:$0xff]
        %v4646 = vld [vmem:[%s617 + $0x1a] sm:$0xff]
        %v4647 = vld [vmem:[%s617 + $0x22] sm:$0xff]
        %v4648 = vld [vmem:[%s617 + $0x32] sm:$0xff]
        %v4649 = vld [vmem:[%s617 + $0x3a] sm:$0xff]
        %v4650 = vld [vmem:[%s617 + $0x4a] sm:$0xff]
        %v4651 = vld [vmem:[%s617 + $0x52] sm:$0xff]
        %v4652 = vld [vmem:[%s617 + $0x62] sm:$0xff]
        %v4653 = vld [vmem:[%s617 + $0x6a] sm:$0xff]
        %v4654 = vld [vmem:[%s617 + $0x7a] sm:$0xff]
        %v4655 = vld [vmem:[%s617 + $0x82] sm:$0xff]
        %v4656 = vld [vmem:[%s617 + $0x92] sm:$0xff]
        %v4657 = vld [vmem:[%s617 + $0x9a] sm:$0xff]
        %v4658 = vld [vmem:[%s617 + $0xaa] sm:$0xff]
        %v4659 = vld [vmem:[%s617 + $0xb2] sm:$0xff]
        %v4660 = vld [vmem:[%s617 + $0xc2] sm:$0xff]
        %v4661 = vld [vmem:[%s617 + $0xca] sm:$0xff]
        %v4662 = vld [vmem:[%s617 + $0xda] sm:$0xff]
        %v4663 = vld [vmem:[%s617 + $0xe2] sm:$0xff]
        %v4664 = vld [vmem:[%s617 + $0xf2] sm:$0xff]
        %v4665 = vld [vmem:[%s617 + $0xfa] sm:$0xff]
        %v4666 = vld [vmem:[%s617 + $0x10a] sm:$0xff]
        %v4667 = vld [vmem:[%s617 + $0x112] sm:$0xff]
        %v4668 = vld [vmem:[%s617 + $0x122] sm:$0xff]
        %v4669 = vld [vmem:[%s617 + $0x12a] sm:$0xff]
        %v4670 = vld [vmem:[%s617 + $0x13a] sm:$0xff]
        %v4671 = vld [vmem:[%s617 + $0x142] sm:$0xff]
        %v4672 = vld [vmem:[%s617 + $0x152] sm:$0xff]
        %v4673 = vld [vmem:[%s617 + $0x15a] sm:$0xff]
        %v4674 = vld [vmem:[%s617 + $0x16a] sm:$0xff]
        %v4675 = vld [vmem:[%s617 + $0x172] sm:$0xff]
        %4708 = vrot.lane.b32.xlu0 %v4420, 8
        %v4709 = vpop.permute.xlu0 %4708
        %4710 = vrot.lane.b32.xlu0 %v4421, 8
        %v4711 = vpop.permute.xlu0 %4710
        %4712 = vrot.lane.b32.xlu0 %v4422, 8
        %v4713 = vpop.permute.xlu0 %4712
        %4714 = vrot.lane.b32.xlu0 %v4423, 8
        %v4715 = vpop.permute.xlu0 %4714
        %4716 = vrot.lane.b32.xlu0 %v4424, 8
        %v4717 = vpop.permute.xlu0 %4716
        %4718 = vrot.lane.b32.xlu0 %v4425, 8
        %v4719 = vpop.permute.xlu0 %4718
        %4720 = vrot.lane.b32.xlu0 %v4426, 8
        %v4721 = vpop.permute.xlu0 %4720
        %4722 = vrot.lane.b32.xlu0 %v4427, 8
        %v4723 = vpop.permute.xlu0 %4722
        %4724 = vrot.lane.b32.xlu0 %v4428, 8
        %v4725 = vpop.permute.xlu0 %4724
        %4726 = vrot.lane.b32.xlu0 %v4429, 8
        %v4727 = vpop.permute.xlu0 %4726
        %4728 = vrot.lane.b32.xlu0 %v4430, 8
        %v4729 = vpop.permute.xlu0 %4728
        %4730 = vrot.lane.b32.xlu0 %v4431, 8
        %v4731 = vpop.permute.xlu0 %4730
        %4732 = vrot.lane.b32.xlu0 %v4432, 8
        %v4733 = vpop.permute.xlu0 %4732
        %4734 = vrot.lane.b32.xlu0 %v4433, 8
        %v4735 = vpop.permute.xlu0 %4734
        %4736 = vrot.lane.b32.xlu0 %v4434, 8
        %v4737 = vpop.permute.xlu0 %4736
        %4738 = vrot.lane.b32.xlu0 %v4435, 8
        %v4739 = vpop.permute.xlu0 %4738
        %4740 = vrot.lane.b32.xlu0 %v4436, 8
        %v4741 = vpop.permute.xlu0 %4740
        %4742 = vrot.lane.b32.xlu0 %v4437, 8
        %v4743 = vpop.permute.xlu0 %4742
        %4744 = vrot.lane.b32.xlu0 %v4438, 8
        %v4745 = vpop.permute.xlu0 %4744
        %4746 = vrot.lane.b32.xlu0 %v4439, 8
        %v4747 = vpop.permute.xlu0 %4746
        %4748 = vrot.lane.b32.xlu0 %v4440, 8
        %v4749 = vpop.permute.xlu0 %4748
        %4750 = vrot.lane.b32.xlu0 %v4441, 8
        %v4751 = vpop.permute.xlu0 %4750
        %4752 = vrot.lane.b32.xlu0 %v4442, 8
        %v4753 = vpop.permute.xlu0 %4752
        %4754 = vrot.lane.b32.xlu0 %v4443, 8
        %v4755 = vpop.permute.xlu0 %4754
        %4756 = vrot.lane.b32.xlu0 %v4444, 8
        %v4757 = vpop.permute.xlu0 %4756
        %4758 = vrot.lane.b32.xlu0 %v4445, 8
        %v4759 = vpop.permute.xlu0 %4758
        %4760 = vrot.lane.b32.xlu0 %v4446, 8
        %v4761 = vpop.permute.xlu0 %4760
        %4762 = vrot.lane.b32.xlu0 %v4447, 8
        %v4763 = vpop.permute.xlu0 %4762
        %4764 = vrot.lane.b32.xlu0 %v4448, 8
        %v4765 = vpop.permute.xlu0 %4764
        %4766 = vrot.lane.b32.xlu0 %v4449, 8
        %v4767 = vpop.permute.xlu0 %4766
        %4768 = vrot.lane.b32.xlu0 %v4450, 8
        %v4769 = vpop.permute.xlu0 %4768
        %4770 = vrot.lane.b32.xlu0 %v4451, 8
        %v4771 = vpop.permute.xlu0 %4770
        %4836 = vrot.lane.b32.xlu0 %v4452, 16
        %v4837 = vpop.permute.xlu0 %4836
        %4838 = vrot.lane.b32.xlu0 %v4453, 16
        %v4839 = vpop.permute.xlu0 %4838
        %4840 = vrot.lane.b32.xlu0 %v4454, 16
        %v4841 = vpop.permute.xlu0 %4840
        %4842 = vrot.lane.b32.xlu0 %v4455, 16
        %v4843 = vpop.permute.xlu0 %4842
        %4844 = vrot.lane.b32.xlu0 %v4456, 16
        %v4845 = vpop.permute.xlu0 %4844
        %4846 = vrot.lane.b32.xlu0 %v4457, 16
        %v4847 = vpop.permute.xlu0 %4846
        %4848 = vrot.lane.b32.xlu0 %v4458, 16
        %v4849 = vpop.permute.xlu0 %4848
        %4850 = vrot.lane.b32.xlu0 %v4459, 16
        %v4851 = vpop.permute.xlu0 %4850
        %4852 = vrot.lane.b32.xlu0 %v4460, 16
        %v4853 = vpop.permute.xlu0 %4852
        %4854 = vrot.lane.b32.xlu0 %v4461, 16
        %v4855 = vpop.permute.xlu0 %4854
        %4856 = vrot.lane.b32.xlu0 %v4462, 16
        %v4857 = vpop.permute.xlu0 %4856
        %4858 = vrot.lane.b32.xlu0 %v4463, 16
        %v4859 = vpop.permute.xlu0 %4858
        %4860 = vrot.lane.b32.xlu0 %v4464, 16
        %v4861 = vpop.permute.xlu0 %4860
        %4862 = vrot.lane.b32.xlu0 %v4465, 16
        %v4863 = vpop.permute.xlu0 %4862
        %4864 = vrot.lane.b32.xlu0 %v4466, 16
        %v4865 = vpop.permute.xlu0 %4864
        %4866 = vrot.lane.b32.xlu0 %v4467, 16
        %v4867 = vpop.permute.xlu0 %4866
        %4868 = vrot.lane.b32.xlu0 %v4468, 16
        %v4869 = vpop.permute.xlu0 %4868
        %4870 = vrot.lane.b32.xlu0 %v4469, 16
        %v4871 = vpop.permute.xlu0 %4870
        %4872 = vrot.lane.b32.xlu0 %v4470, 16
        %v4873 = vpop.permute.xlu0 %4872
        %4874 = vrot.lane.b32.xlu0 %v4471, 16
        %v4875 = vpop.permute.xlu0 %4874
        %4876 = vrot.lane.b32.xlu0 %v4472, 16
        %v4877 = vpop.permute.xlu0 %4876
        %4878 = vrot.lane.b32.xlu0 %v4473, 16
        %v4879 = vpop.permute.xlu0 %4878
        %4880 = vrot.lane.b32.xlu0 %v4474, 16
        %v4881 = vpop.permute.xlu0 %4880
        %4882 = vrot.lane.b32.xlu0 %v4475, 16
        %v4883 = vpop.permute.xlu0 %4882
        %4884 = vrot.lane.b32.xlu0 %v4476, 16
        %v4885 = vpop.permute.xlu0 %4884
        %4886 = vrot.lane.b32.xlu0 %v4477, 16
        %v4887 = vpop.permute.xlu0 %4886
        %4888 = vrot.lane.b32.xlu0 %v4478, 16
        %v4889 = vpop.permute.xlu0 %4888
        %4890 = vrot.lane.b32.xlu0 %v4479, 16
        %v4891 = vpop.permute.xlu0 %4890
        %4892 = vrot.lane.b32.xlu0 %v4480, 16
        %v4893 = vpop.permute.xlu0 %4892
        %4894 = vrot.lane.b32.xlu0 %v4481, 16
        %v4895 = vpop.permute.xlu0 %4894
        %4896 = vrot.lane.b32.xlu0 %v4482, 16
        %v4897 = vpop.permute.xlu0 %4896
        %4898 = vrot.lane.b32.xlu0 %v4483, 16
        %v4899 = vpop.permute.xlu0 %4898
        %4964 = vrot.lane.b32.xlu0 %v4484, 24
        %v4965 = vpop.permute.xlu0 %4964
        %4966 = vrot.lane.b32.xlu0 %v4485, 24
        %v4967 = vpop.permute.xlu0 %4966
        %4968 = vrot.lane.b32.xlu0 %v4486, 24
        %v4969 = vpop.permute.xlu0 %4968
        %4970 = vrot.lane.b32.xlu0 %v4487, 24
        %v4971 = vpop.permute.xlu0 %4970
        %4972 = vrot.lane.b32.xlu0 %v4488, 24
        %v4973 = vpop.permute.xlu0 %4972
        %4974 = vrot.lane.b32.xlu0 %v4489, 24
        %v4975 = vpop.permute.xlu0 %4974
        %4976 = vrot.lane.b32.xlu0 %v4490, 24
        %v4977 = vpop.permute.xlu0 %4976
        %4978 = vrot.lane.b32.xlu0 %v4491, 24
        %v4979 = vpop.permute.xlu0 %4978
        %4980 = vrot.lane.b32.xlu0 %v4492, 24
        %v4981 = vpop.permute.xlu0 %4980
        %4982 = vrot.lane.b32.xlu0 %v4493, 24
        %v4983 = vpop.permute.xlu0 %4982
        %4984 = vrot.lane.b32.xlu0 %v4494, 24
        %v4985 = vpop.permute.xlu0 %4984
        %4986 = vrot.lane.b32.xlu0 %v4495, 24
        %v4987 = vpop.permute.xlu0 %4986
        %4988 = vrot.lane.b32.xlu0 %v4496, 24
        %v4989 = vpop.permute.xlu0 %4988
        %4990 = vrot.lane.b32.xlu0 %v4497, 24
        %v4991 = vpop.permute.xlu0 %4990
        %4992 = vrot.lane.b32.xlu0 %v4498, 24
        %v4993 = vpop.permute.xlu0 %4992
        %4994 = vrot.lane.b32.xlu0 %v4499, 24
        %v4995 = vpop.permute.xlu0 %4994
        %4996 = vrot.lane.b32.xlu0 %v4500, 24
        %v4997 = vpop.permute.xlu0 %4996
        %4998 = vrot.lane.b32.xlu0 %v4501, 24
        %v4999 = vpop.permute.xlu0 %4998
        %5000 = vrot.lane.b32.xlu0 %v4502, 24
        %v5001 = vpop.permute.xlu0 %5000
        %5002 = vrot.lane.b32.xlu0 %v4503, 24
        %v5003 = vpop.permute.xlu0 %5002
        %5004 = vrot.lane.b32.xlu0 %v4504, 24
        %v5005 = vpop.permute.xlu0 %5004
        %5006 = vrot.lane.b32.xlu0 %v4505, 24
        %v5007 = vpop.permute.xlu0 %5006
        %5008 = vrot.lane.b32.xlu0 %v4506, 24
        %v5009 = vpop.permute.xlu0 %5008
        %5010 = vrot.lane.b32.xlu0 %v4507, 24
        %v5011 = vpop.permute.xlu0 %5010
        %5012 = vrot.lane.b32.xlu0 %v4508, 24
        %v5013 = vpop.permute.xlu0 %5012
        %5014 = vrot.lane.b32.xlu0 %v4509, 24
        %v5015 = vpop.permute.xlu0 %5014
        %5016 = vrot.lane.b32.xlu0 %v4510, 24
        %v5017 = vpop.permute.xlu0 %5016
        %5018 = vrot.lane.b32.xlu0 %v4511, 24
        %v5019 = vpop.permute.xlu0 %5018
        %5020 = vrot.lane.b32.xlu0 %v4512, 24
        %v5021 = vpop.permute.xlu0 %5020
        %5022 = vrot.lane.b32.xlu0 %v4513, 24
        %v5023 = vpop.permute.xlu0 %5022
        %5024 = vrot.lane.b32.xlu0 %v4514, 24
        %v5025 = vpop.permute.xlu0 %5024
        %5026 = vrot.lane.b32.xlu0 %v4515, 24
        %v5027 = vpop.permute.xlu0 %5026
        %5092 = vrot.lane.b32.xlu0 %v4516, 32
        %v5093 = vpop.permute.xlu0 %5092
        %5094 = vrot.lane.b32.xlu0 %v4517, 32
        %v5095 = vpop.permute.xlu0 %5094
        %5096 = vrot.lane.b32.xlu0 %v4518, 32
        %v5097 = vpop.permute.xlu0 %5096
        %5098 = vrot.lane.b32.xlu0 %v4519, 32
        %v5099 = vpop.permute.xlu0 %5098
        %5100 = vrot.lane.b32.xlu0 %v4520, 32
        %v5101 = vpop.permute.xlu0 %5100
        %5102 = vrot.lane.b32.xlu0 %v4521, 32
        %v5103 = vpop.permute.xlu0 %5102
        %5104 = vrot.lane.b32.xlu0 %v4522, 32
        %v5105 = vpop.permute.xlu0 %5104
        %5106 = vrot.lane.b32.xlu0 %v4523, 32
        %v5107 = vpop.permute.xlu0 %5106
        %5108 = vrot.lane.b32.xlu0 %v4524, 32
        %v5109 = vpop.permute.xlu0 %5108
        %5110 = vrot.lane.b32.xlu0 %v4525, 32
        %v5111 = vpop.permute.xlu0 %5110
        %5112 = vrot.lane.b32.xlu0 %v4526, 32
        %v5113 = vpop.permute.xlu0 %5112
        %5114 = vrot.lane.b32.xlu0 %v4527, 32
        %v5115 = vpop.permute.xlu0 %5114
        %5116 = vrot.lane.b32.xlu0 %v4528, 32
        %v5117 = vpop.permute.xlu0 %5116
        %5118 = vrot.lane.b32.xlu0 %v4529, 32
        %v5119 = vpop.permute.xlu0 %5118
        %5120 = vrot.lane.b32.xlu0 %v4530, 32
        %v5121 = vpop.permute.xlu0 %5120
        %5122 = vrot.lane.b32.xlu0 %v4531, 32
        %v5123 = vpop.permute.xlu0 %5122
        %5124 = vrot.lane.b32.xlu0 %v4532, 32
        %v5125 = vpop.permute.xlu0 %5124
        %5126 = vrot.lane.b32.xlu0 %v4533, 32
        %v5127 = vpop.permute.xlu0 %5126
        %5128 = vrot.lane.b32.xlu0 %v4534, 32
        %v5129 = vpop.permute.xlu0 %5128
        %5130 = vrot.lane.b32.xlu0 %v4535, 32
        %v5131 = vpop.permute.xlu0 %5130
        %5132 = vrot.lane.b32.xlu0 %v4536, 32
        %v5133 = vpop.permute.xlu0 %5132
        %5134 = vrot.lane.b32.xlu0 %v4537, 32
        %v5135 = vpop.permute.xlu0 %5134
        %5136 = vrot.lane.b32.xlu0 %v4538, 32
        %v5137 = vpop.permute.xlu0 %5136
        %5138 = vrot.lane.b32.xlu0 %v4539, 32
        %v5139 = vpop.permute.xlu0 %5138
        %5140 = vrot.lane.b32.xlu0 %v4540, 32
        %v5141 = vpop.permute.xlu0 %5140
        %5142 = vrot.lane.b32.xlu0 %v4541, 32
        %v5143 = vpop.permute.xlu0 %5142
        %5144 = vrot.lane.b32.xlu0 %v4542, 32
        %v5145 = vpop.permute.xlu0 %5144
        %5146 = vrot.lane.b32.xlu0 %v4543, 32
        %v5147 = vpop.permute.xlu0 %5146
        %5148 = vrot.lane.b32.xlu0 %v4544, 32
        %v5149 = vpop.permute.xlu0 %5148
        %5150 = vrot.lane.b32.xlu0 %v4545, 32
        %v5151 = vpop.permute.xlu0 %5150
        %5152 = vrot.lane.b32.xlu0 %v4546, 32
        %v5153 = vpop.permute.xlu0 %5152
        %5154 = vrot.lane.b32.xlu0 %v4547, 32
        %v5155 = vpop.permute.xlu0 %5154
        %5220 = vrot.lane.b32.xlu0 %v4548, 40
        %v5221 = vpop.permute.xlu0 %5220
        %5222 = vrot.lane.b32.xlu0 %v4549, 40
        %v5223 = vpop.permute.xlu0 %5222
        %5224 = vrot.lane.b32.xlu0 %v4550, 40
        %v5225 = vpop.permute.xlu0 %5224
        %5226 = vrot.lane.b32.xlu0 %v4551, 40
        %v5227 = vpop.permute.xlu0 %5226
        %5228 = vrot.lane.b32.xlu0 %v4552, 40
        %v5229 = vpop.permute.xlu0 %5228
        %5230 = vrot.lane.b32.xlu0 %v4553, 40
        %v5231 = vpop.permute.xlu0 %5230
        %5232 = vrot.lane.b32.xlu0 %v4554, 40
        %v5233 = vpop.permute.xlu0 %5232
        %5234 = vrot.lane.b32.xlu0 %v4555, 40
        %v5235 = vpop.permute.xlu0 %5234
        %5236 = vrot.lane.b32.xlu0 %v4556, 40
        %v5237 = vpop.permute.xlu0 %5236
        %5238 = vrot.lane.b32.xlu0 %v4557, 40
        %v5239 = vpop.permute.xlu0 %5238
        %5240 = vrot.lane.b32.xlu0 %v4558, 40
        %v5241 = vpop.permute.xlu0 %5240
        %5242 = vrot.lane.b32.xlu0 %v4559, 40
        %v5243 = vpop.permute.xlu0 %5242
        %5244 = vrot.lane.b32.xlu0 %v4560, 40
        %v5245 = vpop.permute.xlu0 %5244
        %5246 = vrot.lane.b32.xlu0 %v4561, 40
        %v5247 = vpop.permute.xlu0 %5246
        %5248 = vrot.lane.b32.xlu0 %v4562, 40
        %v5249 = vpop.permute.xlu0 %5248
        %5250 = vrot.lane.b32.xlu0 %v4563, 40
        %v5251 = vpop.permute.xlu0 %5250
        %5252 = vrot.lane.b32.xlu0 %v4564, 40
        %v5253 = vpop.permute.xlu0 %5252
        %5254 = vrot.lane.b32.xlu0 %v4565, 40
        %v5255 = vpop.permute.xlu0 %5254
        %5256 = vrot.lane.b32.xlu0 %v4566, 40
        %v5257 = vpop.permute.xlu0 %5256
        %5258 = vrot.lane.b32.xlu0 %v4567, 40
        %v5259 = vpop.permute.xlu0 %5258
        %5260 = vrot.lane.b32.xlu0 %v4568, 40
        %v5261 = vpop.permute.xlu0 %5260
        %5262 = vrot.lane.b32.xlu0 %v4569, 40
        %v5263 = vpop.permute.xlu0 %5262
        %5264 = vrot.lane.b32.xlu0 %v4570, 40
        %v5265 = vpop.permute.xlu0 %5264
        %5266 = vrot.lane.b32.xlu0 %v4571, 40
        %v5267 = vpop.permute.xlu0 %5266
        %5268 = vrot.lane.b32.xlu0 %v4572, 40
        %v5269 = vpop.permute.xlu0 %5268
        %5270 = vrot.lane.b32.xlu0 %v4573, 40
        %v5271 = vpop.permute.xlu0 %5270
        %5272 = vrot.lane.b32.xlu0 %v4574, 40
        %v5273 = vpop.permute.xlu0 %5272
        %5274 = vrot.lane.b32.xlu0 %v4575, 40
        %v5275 = vpop.permute.xlu0 %5274
        %5276 = vrot.lane.b32.xlu0 %v4576, 40
        %v5277 = vpop.permute.xlu0 %5276
        %5278 = vrot.lane.b32.xlu0 %v4577, 40
        %v5279 = vpop.permute.xlu0 %5278
        %5280 = vrot.lane.b32.xlu0 %v4578, 40
        %v5281 = vpop.permute.xlu0 %5280
        %5282 = vrot.lane.b32.xlu0 %v4579, 40
        %v5283 = vpop.permute.xlu0 %5282
        %5348 = vrot.lane.b32.xlu0 %v4580, 48
        %v5349 = vpop.permute.xlu0 %5348
        %5350 = vrot.lane.b32.xlu0 %v4581, 48
        %v5351 = vpop.permute.xlu0 %5350
        %5352 = vrot.lane.b32.xlu0 %v4582, 48
        %v5353 = vpop.permute.xlu0 %5352
        %5354 = vrot.lane.b32.xlu0 %v4583, 48
        %v5355 = vpop.permute.xlu0 %5354
        %5356 = vrot.lane.b32.xlu0 %v4584, 48
        %v5357 = vpop.permute.xlu0 %5356
        %5358 = vrot.lane.b32.xlu0 %v4585, 48
        %v5359 = vpop.permute.xlu0 %5358
        %5360 = vrot.lane.b32.xlu0 %v4586, 48
        %v5361 = vpop.permute.xlu0 %5360
        %5362 = vrot.lane.b32.xlu0 %v4587, 48
        %v5363 = vpop.permute.xlu0 %5362
        %5364 = vrot.lane.b32.xlu0 %v4588, 48
        %v5365 = vpop.permute.xlu0 %5364
        %5366 = vrot.lane.b32.xlu0 %v4589, 48
        %v5367 = vpop.permute.xlu0 %5366
        %5368 = vrot.lane.b32.xlu0 %v4590, 48
        %v5369 = vpop.permute.xlu0 %5368
        %5370 = vrot.lane.b32.xlu0 %v4591, 48
        %v5371 = vpop.permute.xlu0 %5370
        %5372 = vrot.lane.b32.xlu0 %v4592, 48
        %v5373 = vpop.permute.xlu0 %5372
        %5374 = vrot.lane.b32.xlu0 %v4593, 48
        %v5375 = vpop.permute.xlu0 %5374
        %5376 = vrot.lane.b32.xlu0 %v4594, 48
        %v5377 = vpop.permute.xlu0 %5376
        %5378 = vrot.lane.b32.xlu0 %v4595, 48
        %v5379 = vpop.permute.xlu0 %5378
        %5380 = vrot.lane.b32.xlu0 %v4596, 48
        %v5381 = vpop.permute.xlu0 %5380
        %5382 = vrot.lane.b32.xlu0 %v4597, 48
        %v5383 = vpop.permute.xlu0 %5382
        %5384 = vrot.lane.b32.xlu0 %v4598, 48
        %v5385 = vpop.permute.xlu0 %5384
        %5386 = vrot.lane.b32.xlu0 %v4599, 48
        %v5387 = vpop.permute.xlu0 %5386
        %5388 = vrot.lane.b32.xlu0 %v4600, 48
        %v5389 = vpop.permute.xlu0 %5388
        %5390 = vrot.lane.b32.xlu0 %v4601, 48
        %v5391 = vpop.permute.xlu0 %5390
        %5392 = vrot.lane.b32.xlu0 %v4602, 48
        %v5393 = vpop.permute.xlu0 %5392
        %5394 = vrot.lane.b32.xlu0 %v4603, 48
        %v5395 = vpop.permute.xlu0 %5394
        %5396 = vrot.lane.b32.xlu0 %v4604, 48
        %v5397 = vpop.permute.xlu0 %5396
        %5398 = vrot.lane.b32.xlu0 %v4605, 48
        %v5399 = vpop.permute.xlu0 %5398
        %5400 = vrot.lane.b32.xlu0 %v4606, 48
        %v5401 = vpop.permute.xlu0 %5400
        %5402 = vrot.lane.b32.xlu0 %v4607, 48
        %v5403 = vpop.permute.xlu0 %5402
        %5404 = vrot.lane.b32.xlu0 %v4608, 48
        %v5405 = vpop.permute.xlu0 %5404
        %5406 = vrot.lane.b32.xlu0 %v4609, 48
        %v5407 = vpop.permute.xlu0 %5406
        %5408 = vrot.lane.b32.xlu0 %v4610, 48
        %v5409 = vpop.permute.xlu0 %5408
        %5410 = vrot.lane.b32.xlu0 %v4611, 48
        %v5411 = vpop.permute.xlu0 %5410
        %5476 = vrot.lane.b32.xlu0 %v4612, 56
        %v5477 = vpop.permute.xlu0 %5476
        %5478 = vrot.lane.b32.xlu0 %v4613, 56
        %v5479 = vpop.permute.xlu0 %5478
        %5480 = vrot.lane.b32.xlu0 %v4614, 56
        %v5481 = vpop.permute.xlu0 %5480
        %5482 = vrot.lane.b32.xlu0 %v4615, 56
        %v5483 = vpop.permute.xlu0 %5482
        %5484 = vrot.lane.b32.xlu0 %v4616, 56
        %v5485 = vpop.permute.xlu0 %5484
        %5486 = vrot.lane.b32.xlu0 %v4617, 56
        %v5487 = vpop.permute.xlu0 %5486
        %5488 = vrot.lane.b32.xlu0 %v4618, 56
        %v5489 = vpop.permute.xlu0 %5488
        %5490 = vrot.lane.b32.xlu0 %v4619, 56
        %v5491 = vpop.permute.xlu0 %5490
        %5492 = vrot.lane.b32.xlu0 %v4620, 56
        %v5493 = vpop.permute.xlu0 %5492
        %5494 = vrot.lane.b32.xlu0 %v4621, 56
        %v5495 = vpop.permute.xlu0 %5494
        %5496 = vrot.lane.b32.xlu0 %v4622, 56
        %v5497 = vpop.permute.xlu0 %5496
        %5498 = vrot.lane.b32.xlu0 %v4623, 56
        %v5499 = vpop.permute.xlu0 %5498
        %5500 = vrot.lane.b32.xlu0 %v4624, 56
        %v5501 = vpop.permute.xlu0 %5500
        %5502 = vrot.lane.b32.xlu0 %v4625, 56
        %v5503 = vpop.permute.xlu0 %5502
        %5504 = vrot.lane.b32.xlu0 %v4626, 56
        %v5505 = vpop.permute.xlu0 %5504
        %5506 = vrot.lane.b32.xlu0 %v4627, 56
        %v5507 = vpop.permute.xlu0 %5506
        %5508 = vrot.lane.b32.xlu0 %v4628, 56
        %v5509 = vpop.permute.xlu0 %5508
        %5510 = vrot.lane.b32.xlu0 %v4629, 56
        %v5511 = vpop.permute.xlu0 %5510
        %5512 = vrot.lane.b32.xlu0 %v4630, 56
        %v5513 = vpop.permute.xlu0 %5512
        %5514 = vrot.lane.b32.xlu0 %v4631, 56
        %v5515 = vpop.permute.xlu0 %5514
        %5516 = vrot.lane.b32.xlu0 %v4632, 56
        %v5517 = vpop.permute.xlu0 %5516
        %5518 = vrot.lane.b32.xlu0 %v4633, 56
        %v5519 = vpop.permute.xlu0 %5518
        %5520 = vrot.lane.b32.xlu0 %v4634, 56
        %v5521 = vpop.permute.xlu0 %5520
        %5522 = vrot.lane.b32.xlu0 %v4635, 56
        %v5523 = vpop.permute.xlu0 %5522
        %5524 = vrot.lane.b32.xlu0 %v4636, 56
        %v5525 = vpop.permute.xlu0 %5524
        %5526 = vrot.lane.b32.xlu0 %v4637, 56
        %v5527 = vpop.permute.xlu0 %5526
        %5528 = vrot.lane.b32.xlu0 %v4638, 56
        %v5529 = vpop.permute.xlu0 %5528
        %5530 = vrot.lane.b32.xlu0 %v4639, 56
        %v5531 = vpop.permute.xlu0 %5530
        %5532 = vrot.lane.b32.xlu0 %v4640, 56
        %v5533 = vpop.permute.xlu0 %5532
        %5534 = vrot.lane.b32.xlu0 %v4641, 56
        %v5535 = vpop.permute.xlu0 %5534
        %5536 = vrot.lane.b32.xlu0 %v4642, 56
        %v5537 = vpop.permute.xlu0 %5536
        %5538 = vrot.lane.b32.xlu0 %v4643, 56
        %v5539 = vpop.permute.xlu0 %5538
        %5604 = vrot.lane.b32.xlu0 %v4644, 64
        %v5605 = vpop.permute.xlu0 %5604
        %5606 = vrot.lane.b32.xlu0 %v4645, 64
        %v5607 = vpop.permute.xlu0 %5606
        %5608 = vrot.lane.b32.xlu0 %v4646, 64
        %v5609 = vpop.permute.xlu0 %5608
        %5610 = vrot.lane.b32.xlu0 %v4647, 64
        %v5611 = vpop.permute.xlu0 %5610
        %5612 = vrot.lane.b32.xlu0 %v4648, 64
        %v5613 = vpop.permute.xlu0 %5612
        %5614 = vrot.lane.b32.xlu0 %v4649, 64
        %v5615 = vpop.permute.xlu0 %5614
        %5616 = vrot.lane.b32.xlu0 %v4650, 64
        %v5617 = vpop.permute.xlu0 %5616
        %5618 = vrot.lane.b32.xlu0 %v4651, 64
        %v5619 = vpop.permute.xlu0 %5618
        %5620 = vrot.lane.b32.xlu0 %v4652, 64
        %v5621 = vpop.permute.xlu0 %5620
        %5622 = vrot.lane.b32.xlu0 %v4653, 64
        %v5623 = vpop.permute.xlu0 %5622
        %5624 = vrot.lane.b32.xlu0 %v4654, 64
        %v5625 = vpop.permute.xlu0 %5624
        %5626 = vrot.lane.b32.xlu0 %v4655, 64
        %v5627 = vpop.permute.xlu0 %5626
        %5628 = vrot.lane.b32.xlu0 %v4656, 64
        %v5629 = vpop.permute.xlu0 %5628
        %5630 = vrot.lane.b32.xlu0 %v4657, 64
        %v5631 = vpop.permute.xlu0 %5630
        %5632 = vrot.lane.b32.xlu0 %v4658, 64
        %v5633 = vpop.permute.xlu0 %5632
        %5634 = vrot.lane.b32.xlu0 %v4659, 64
        %v5635 = vpop.permute.xlu0 %5634
        %5636 = vrot.lane.b32.xlu0 %v4660, 64
        %v5637 = vpop.permute.xlu0 %5636
        %5638 = vrot.lane.b32.xlu0 %v4661, 64
        %v5639 = vpop.permute.xlu0 %5638
        %5640 = vrot.lane.b32.xlu0 %v4662, 64
        %v5641 = vpop.permute.xlu0 %5640
        %5642 = vrot.lane.b32.xlu0 %v4663, 64
        %v5643 = vpop.permute.xlu0 %5642
        %5644 = vrot.lane.b32.xlu0 %v4664, 64
        %v5645 = vpop.permute.xlu0 %5644
        %5646 = vrot.lane.b32.xlu0 %v4665, 64
        %v5647 = vpop.permute.xlu0 %5646
        %5648 = vrot.lane.b32.xlu0 %v4666, 64
        %v5649 = vpop.permute.xlu0 %5648
        %5650 = vrot.lane.b32.xlu0 %v4667, 64
        %v5651 = vpop.permute.xlu0 %5650
        %5652 = vrot.lane.b32.xlu0 %v4668, 64
        %v5653 = vpop.permute.xlu0 %5652
        %5654 = vrot.lane.b32.xlu0 %v4669, 64
        %v5655 = vpop.permute.xlu0 %5654
        %5656 = vrot.lane.b32.xlu0 %v4670, 64
        %v5657 = vpop.permute.xlu0 %5656
        %5658 = vrot.lane.b32.xlu0 %v4671, 64
        %v5659 = vpop.permute.xlu0 %5658
        %5660 = vrot.lane.b32.xlu0 %v4672, 64
        %v5661 = vpop.permute.xlu0 %5660
        %5662 = vrot.lane.b32.xlu0 %v4673, 64
        %v5663 = vpop.permute.xlu0 %5662
        %5664 = vrot.lane.b32.xlu0 %v4674, 64
        %v5665 = vpop.permute.xlu0 %5664
        %5666 = vrot.lane.b32.xlu0 %v4675, 64
        %v5667 = vpop.permute.xlu0 %5666
        %v5700 = vsel %vm250, %v4388, %v4709
        %v5701 = vsel %vm250, %v4389, %v4711
        %v5702 = vsel %vm250, %v4390, %v4713
        %v5703 = vsel %vm250, %v4391, %v4715
        %v5704 = vsel %vm250, %v4392, %v4717
        %v5705 = vsel %vm250, %v4393, %v4719
        %v5706 = vsel %vm250, %v4394, %v4721
        %v5707 = vsel %vm250, %v4395, %v4723
        %v5708 = vsel %vm250, %v4396, %v4725
        %v5709 = vsel %vm250, %v4397, %v4727
        %v5710 = vsel %vm250, %v4398, %v4729
        %v5711 = vsel %vm250, %v4399, %v4731
        %v5712 = vsel %vm250, %v4400, %v4733
        %v5713 = vsel %vm250, %v4401, %v4735
        %v5714 = vsel %vm250, %v4402, %v4737
        %v5715 = vsel %vm250, %v4403, %v4739
        %v5716 = vsel %vm250, %v4404, %v4741
        %v5717 = vsel %vm250, %v4405, %v4743
        %v5718 = vsel %vm250, %v4406, %v4745
        %v5719 = vsel %vm250, %v4407, %v4747
        %v5720 = vsel %vm250, %v4408, %v4749
        %v5721 = vsel %vm250, %v4409, %v4751
        %v5722 = vsel %vm250, %v4410, %v4753
        %v5723 = vsel %vm250, %v4411, %v4755
        %v5724 = vsel %vm250, %v4412, %v4757
        %v5725 = vsel %vm250, %v4413, %v4759
        %v5726 = vsel %vm250, %v4414, %v4761
        %v5727 = vsel %vm250, %v4415, %v4763
        %v5728 = vsel %vm250, %v4416, %v4765
        %v5729 = vsel %vm250, %v4417, %v4767
        %v5730 = vsel %vm250, %v4418, %v4769
        %v5731 = vsel %vm250, %v4419, %v4771
        %v5732 = vsel %vm1770, %v5700, %v4837
        %v5733 = vsel %vm1770, %v5701, %v4839
        %v5734 = vsel %vm1770, %v5702, %v4841
        %v5735 = vsel %vm1770, %v5703, %v4843
        %v5736 = vsel %vm1770, %v5704, %v4845
        %v5737 = vsel %vm1770, %v5705, %v4847
        %v5738 = vsel %vm1770, %v5706, %v4849
        %v5739 = vsel %vm1770, %v5707, %v4851
        %v5740 = vsel %vm1770, %v5708, %v4853
        %v5741 = vsel %vm1770, %v5709, %v4855
        %v5742 = vsel %vm1770, %v5710, %v4857
        %v5743 = vsel %vm1770, %v5711, %v4859
        %v5744 = vsel %vm1770, %v5712, %v4861
        %v5745 = vsel %vm1770, %v5713, %v4863
        %v5746 = vsel %vm1770, %v5714, %v4865
        %v5747 = vsel %vm1770, %v5715, %v4867
        %v5748 = vsel %vm1770, %v5716, %v4869
        %v5749 = vsel %vm1770, %v5717, %v4871
        %v5750 = vsel %vm1770, %v5718, %v4873
        %v5751 = vsel %vm1770, %v5719, %v4875
        %v5752 = vsel %vm1770, %v5720, %v4877
        %v5753 = vsel %vm1770, %v5721, %v4879
        %v5754 = vsel %vm1770, %v5722, %v4881
        %v5755 = vsel %vm1770, %v5723, %v4883
        %v5756 = vsel %vm1770, %v5724, %v4885
        %v5757 = vsel %vm1770, %v5725, %v4887
        %v5758 = vsel %vm1770, %v5726, %v4889
        %v5759 = vsel %vm1770, %v5727, %v4891
        %v5760 = vsel %vm1770, %v5728, %v4893
        %v5761 = vsel %vm1770, %v5729, %v4895
        %v5762 = vsel %vm1770, %v5730, %v4897
        %v5763 = vsel %vm1770, %v5731, %v4899
        %v5764 = vsel %vm1803, %v5732, %v4965
        %v5765 = vsel %vm1803, %v5733, %v4967
        %v5766 = vsel %vm1803, %v5734, %v4969
        %v5767 = vsel %vm1803, %v5735, %v4971
        %v5768 = vsel %vm1803, %v5736, %v4973
        %v5769 = vsel %vm1803, %v5737, %v4975
        %v5770 = vsel %vm1803, %v5738, %v4977
        %v5771 = vsel %vm1803, %v5739, %v4979
        %v5772 = vsel %vm1803, %v5740, %v4981
        %v5773 = vsel %vm1803, %v5741, %v4983
        %v5774 = vsel %vm1803, %v5742, %v4985
        %v5775 = vsel %vm1803, %v5743, %v4987
        %v5776 = vsel %vm1803, %v5744, %v4989
        %v5777 = vsel %vm1803, %v5745, %v4991
        %v5778 = vsel %vm1803, %v5746, %v4993
        %v5779 = vsel %vm1803, %v5747, %v4995
        %v5780 = vsel %vm1803, %v5748, %v4997
        %v5781 = vsel %vm1803, %v5749, %v4999
        %v5782 = vsel %vm1803, %v5750, %v5001
        %v5783 = vsel %vm1803, %v5751, %v5003
        %v5784 = vsel %vm1803, %v5752, %v5005
        %v5785 = vsel %vm1803, %v5753, %v5007
        %v5786 = vsel %vm1803, %v5754, %v5009
        %v5787 = vsel %vm1803, %v5755, %v5011
        %v5788 = vsel %vm1803, %v5756, %v5013
        %v5789 = vsel %vm1803, %v5757, %v5015
        %v5790 = vsel %vm1803, %v5758, %v5017
        %v5791 = vsel %vm1803, %v5759, %v5019
        %v5792 = vsel %vm1803, %v5760, %v5021
        %v5793 = vsel %vm1803, %v5761, %v5023
        %v5794 = vsel %vm1803, %v5762, %v5025
        %v5795 = vsel %vm1803, %v5763, %v5027
        %v5796 = vsel %vm1836, %v5764, %v5093
        %v5797 = vsel %vm1836, %v5765, %v5095
        %v5798 = vsel %vm1836, %v5766, %v5097
        %v5799 = vsel %vm1836, %v5767, %v5099
        %v5800 = vsel %vm1836, %v5768, %v5101
        %v5801 = vsel %vm1836, %v5769, %v5103
        %v5802 = vsel %vm1836, %v5770, %v5105
        %v5803 = vsel %vm1836, %v5771, %v5107
        %v5804 = vsel %vm1836, %v5772, %v5109
        %v5805 = vsel %vm1836, %v5773, %v5111
        %v5806 = vsel %vm1836, %v5774, %v5113
        %v5807 = vsel %vm1836, %v5775, %v5115
        %v5808 = vsel %vm1836, %v5776, %v5117
        %v5809 = vsel %vm1836, %v5777, %v5119
        %v5810 = vsel %vm1836, %v5778, %v5121
        %v5811 = vsel %vm1836, %v5779, %v5123
        %v5812 = vsel %vm1836, %v5780, %v5125
        %v5813 = vsel %vm1836, %v5781, %v5127
        %v5814 = vsel %vm1836, %v5782, %v5129
        %v5815 = vsel %vm1836, %v5783, %v5131
        %v5816 = vsel %vm1836, %v5784, %v5133
        %v5817 = vsel %vm1836, %v5785, %v5135
        %v5818 = vsel %vm1836, %v5786, %v5137
        %v5819 = vsel %vm1836, %v5787, %v5139
        %v5820 = vsel %vm1836, %v5788, %v5141
        %v5821 = vsel %vm1836, %v5789, %v5143
        %v5822 = vsel %vm1836, %v5790, %v5145
        %v5823 = vsel %vm1836, %v5791, %v5147
        %v5824 = vsel %vm1836, %v5792, %v5149
        %v5825 = vsel %vm1836, %v5793, %v5151
        %v5826 = vsel %vm1836, %v5794, %v5153
        %v5827 = vsel %vm1836, %v5795, %v5155
        %v5828 = vsel %vm1869, %v5796, %v5221
        %v5829 = vsel %vm1869, %v5797, %v5223
        %v5830 = vsel %vm1869, %v5798, %v5225
        %v5831 = vsel %vm1869, %v5799, %v5227
        %v5832 = vsel %vm1869, %v5800, %v5229
        %v5833 = vsel %vm1869, %v5801, %v5231
        %v5834 = vsel %vm1869, %v5802, %v5233
        %v5835 = vsel %vm1869, %v5803, %v5235
        %v5836 = vsel %vm1869, %v5804, %v5237
        %v5837 = vsel %vm1869, %v5805, %v5239
        %v5838 = vsel %vm1869, %v5806, %v5241
        %v5839 = vsel %vm1869, %v5807, %v5243
        %v5840 = vsel %vm1869, %v5808, %v5245
        %v5841 = vsel %vm1869, %v5809, %v5247
        %v5842 = vsel %vm1869, %v5810, %v5249
        %v5843 = vsel %vm1869, %v5811, %v5251
        %v5844 = vsel %vm1869, %v5812, %v5253
        %v5845 = vsel %vm1869, %v5813, %v5255
        %v5846 = vsel %vm1869, %v5814, %v5257
        %v5847 = vsel %vm1869, %v5815, %v5259
        %v5848 = vsel %vm1869, %v5816, %v5261
        %v5849 = vsel %vm1869, %v5817, %v5263
        %v5850 = vsel %vm1869, %v5818, %v5265
        %v5851 = vsel %vm1869, %v5819, %v5267
        %v5852 = vsel %vm1869, %v5820, %v5269
        %v5853 = vsel %vm1869, %v5821, %v5271
        %v5854 = vsel %vm1869, %v5822, %v5273
        %v5855 = vsel %vm1869, %v5823, %v5275
        %v5856 = vsel %vm1869, %v5824, %v5277
        %v5857 = vsel %vm1869, %v5825, %v5279
        %v5858 = vsel %vm1869, %v5826, %v5281
        %v5859 = vsel %vm1869, %v5827, %v5283
        %v5860 = vsel %vm1902, %v5828, %v5349
        %v5861 = vsel %vm1902, %v5829, %v5351
        %v5862 = vsel %vm1902, %v5830, %v5353
        %v5863 = vsel %vm1902, %v5831, %v5355
        %v5864 = vsel %vm1902, %v5832, %v5357
        %v5865 = vsel %vm1902, %v5833, %v5359
        %v5866 = vsel %vm1902, %v5834, %v5361
        %v5867 = vsel %vm1902, %v5835, %v5363
        %v5868 = vsel %vm1902, %v5836, %v5365
        %v5869 = vsel %vm1902, %v5837, %v5367
        %v5870 = vsel %vm1902, %v5838, %v5369
        %v5871 = vsel %vm1902, %v5839, %v5371
        %v5872 = vsel %vm1902, %v5840, %v5373
        %v5873 = vsel %vm1902, %v5841, %v5375
        %v5874 = vsel %vm1902, %v5842, %v5377
        %v5875 = vsel %vm1902, %v5843, %v5379
        %v5876 = vsel %vm1902, %v5844, %v5381
        %v5877 = vsel %vm1902, %v5845, %v5383
        %v5878 = vsel %vm1902, %v5846, %v5385
        %v5879 = vsel %vm1902, %v5847, %v5387
        %v5880 = vsel %vm1902, %v5848, %v5389
        %v5881 = vsel %vm1902, %v5849, %v5391
        %v5882 = vsel %vm1902, %v5850, %v5393
        %v5883 = vsel %vm1902, %v5851, %v5395
        %v5884 = vsel %vm1902, %v5852, %v5397
        %v5885 = vsel %vm1902, %v5853, %v5399
        %v5886 = vsel %vm1902, %v5854, %v5401
        %v5887 = vsel %vm1902, %v5855, %v5403
        %v5888 = vsel %vm1902, %v5856, %v5405
        %v5889 = vsel %vm1902, %v5857, %v5407
        %v5890 = vsel %vm1902, %v5858, %v5409
        %v5891 = vsel %vm1902, %v5859, %v5411
        %v5892 = vsel %vm1935, %v5860, %v5477
        %v5893 = vsel %vm1935, %v5861, %v5479
        %v5894 = vsel %vm1935, %v5862, %v5481
        %v5895 = vsel %vm1935, %v5863, %v5483
        %v5896 = vsel %vm1935, %v5864, %v5485
        %v5897 = vsel %vm1935, %v5865, %v5487
        %v5898 = vsel %vm1935, %v5866, %v5489
        %v5899 = vsel %vm1935, %v5867, %v5491
        %v5900 = vsel %vm1935, %v5868, %v5493
        %v5901 = vsel %vm1935, %v5869, %v5495
        %v5902 = vsel %vm1935, %v5870, %v5497
        %v5903 = vsel %vm1935, %v5871, %v5499
        %v5904 = vsel %vm1935, %v5872, %v5501
        %v5905 = vsel %vm1935, %v5873, %v5503
        %v5906 = vsel %vm1935, %v5874, %v5505
        %v5907 = vsel %vm1935, %v5875, %v5507
        %v5908 = vsel %vm1935, %v5876, %v5509
        %v5909 = vsel %vm1935, %v5877, %v5511
        %v5910 = vsel %vm1935, %v5878, %v5513
        %v5911 = vsel %vm1935, %v5879, %v5515
        %v5912 = vsel %vm1935, %v5880, %v5517
        %v5913 = vsel %vm1935, %v5881, %v5519
        %v5914 = vsel %vm1935, %v5882, %v5521
        %v5915 = vsel %vm1935, %v5883, %v5523
        %v5916 = vsel %vm1935, %v5884, %v5525
        %v5917 = vsel %vm1935, %v5885, %v5527
        %v5918 = vsel %vm1935, %v5886, %v5529
        %v5919 = vsel %vm1935, %v5887, %v5531
        %v5920 = vsel %vm1935, %v5888, %v5533
        %v5921 = vsel %vm1935, %v5889, %v5535
        %v5922 = vsel %vm1935, %v5890, %v5537
        %v5923 = vsel %vm1935, %v5891, %v5539
        %v5924 = vsel %vm1968, %v5892, %v5605
        %v5925 = vsel %vm1968, %v5893, %v5607
        %v5926 = vsel %vm1968, %v5894, %v5609
        %v5927 = vsel %vm1968, %v5895, %v5611
        %v5928 = vsel %vm1968, %v5896, %v5613
        %v5929 = vsel %vm1968, %v5897, %v5615
        %v5930 = vsel %vm1968, %v5898, %v5617
        %v5931 = vsel %vm1968, %v5899, %v5619
        %v5932 = vsel %vm1968, %v5900, %v5621
        %v5933 = vsel %vm1968, %v5901, %v5623
        %v5934 = vsel %vm1968, %v5902, %v5625
        %v5935 = vsel %vm1968, %v5903, %v5627
        %v5936 = vsel %vm1968, %v5904, %v5629
        %v5937 = vsel %vm1968, %v5905, %v5631
        %v5938 = vsel %vm1968, %v5906, %v5633
        %v5939 = vsel %vm1968, %v5907, %v5635
        %v5940 = vsel %vm1968, %v5908, %v5637
        %v5941 = vsel %vm1968, %v5909, %v5639
        %v5942 = vsel %vm1968, %v5910, %v5641
        %v5943 = vsel %vm1968, %v5911, %v5643
        %v5944 = vsel %vm1968, %v5912, %v5645
        %v5945 = vsel %vm1968, %v5913, %v5647
        %v5946 = vsel %vm1968, %v5914, %v5649
        %v5947 = vsel %vm1968, %v5915, %v5651
        %v5948 = vsel %vm1968, %v5916, %v5653
        %v5949 = vsel %vm1968, %v5917, %v5655
        %v5950 = vsel %vm1968, %v5918, %v5657
        %v5951 = vsel %vm1968, %v5919, %v5659
        %v5952 = vsel %vm1968, %v5920, %v5661
        %v5953 = vsel %vm1968, %v5921, %v5663
        %v5954 = vsel %vm1968, %v5922, %v5665
        %v5955 = vsel %vm1968, %v5923, %v5667
        %v5956 = vpack.c.bf16 %v5925, %v5924
        %v5957 = vpack.c.bf16 %v5927, %v5926
        %v5958 = vpack.c.bf16 %v5929, %v5928
        %v5959 = vpack.c.bf16 %v5931, %v5930
        %v5960 = vpack.c.bf16 %v5933, %v5932
        %v5961 = vpack.c.bf16 %v5935, %v5934
        %v5962 = vpack.c.bf16 %v5937, %v5936
        %v5963 = vpack.c.bf16 %v5939, %v5938
        %v5964 = vpack.c.bf16 %v5941, %v5940
        %v5965 = vpack.c.bf16 %v5943, %v5942
        %v5966 = vpack.c.bf16 %v5945, %v5944
        %v5967 = vpack.c.bf16 %v5947, %v5946
        %v5968 = vpack.c.bf16 %v5949, %v5948
        %v5969 = vpack.c.bf16 %v5951, %v5950
        %v5970 = vpack.c.bf16 %v5953, %v5952
        %v5971 = vpack.c.bf16 %v5955, %v5954
        %s5972 = scalar_lea.vmem %s1, 72
        %v5973 = vld [vmem:[%s5972] sm:$0xf]
        %v5974 = vld [vmem:[%s5972 + $0x4] sm:$0xf]
        %v5975 = vld [vmem:[%s5972 + $0x8] sm:$0xf]
        %v5976 = vld [vmem:[%s5972 + $0xc] sm:$0xf]
        %v5977 = vld [vmem:[%s5972 + $0x10] sm:$0xf]
        %v5978 = vld [vmem:[%s5972 + $0x14] sm:$0xf]
        %v5979 = vld [vmem:[%s5972 + $0x18] sm:$0xf]
        %v5980 = vld [vmem:[%s5972 + $0x1c] sm:$0xf]
        %v5981 = vld [vmem:[%s5972 + $0x20] sm:$0xf]
        %v5991 = vunpack.c.l.b16 %v5973
        %v5992 = vunpack.c.l.b16 %v5974
        %v5993 = vunpack.c.l.b16 %v5975
        %v5994 = vunpack.c.l.b16 %v5976
        %v5995 = vunpack.c.l.b16 %v5977
        %v5996 = vunpack.c.l.b16 %v5978
        %v5997 = vunpack.c.l.b16 %v5979
        %v5998 = vunpack.c.l.b16 %v5980
        %v5999 = vunpack.c.l.b16 %v5981
        %v6000 = vpack.c.b16 %v5992, %v5991
        %v6001 = vpack.c.b16 %v5994, %v5993
        %v6002 = vpack.c.b16 %v5996, %v5995
        %v6003 = vpack.c.b16 %v5998, %v5997
        %v6004 = vpack.c.b16 %v5999, %v5999
        %v6010 = vsel %vm2053, %v5956, 0
        %v6013 = vsel %vm2053, %v5957, 0
        %v6016 = vsel %vm2053, %v5958, 0
        %v6019 = vsel %vm2053, %v5959, 0
        %v6022 = vsel %vm2053, %v5960, 0
        %v6025 = vsel %vm2053, %v5961, 0
        %v6028 = vsel %vm2053, %v5962, 0
        %v6031 = vsel %vm2053, %v5963, 0
        %v6034 = vsel %vm2053, %v5964, 0
        %v6037 = vsel %vm2053, %v5965, 0
        %v6040 = vsel %vm2053, %v5966, 0
        %v6043 = vsel %vm2053, %v5967, 0
        %v6046 = vsel %vm2053, %v5968, 0
        %v6049 = vsel %vm2053, %v5969, 0
        %v6052 = vsel %vm2053, %v5970, 0
        %v6055 = vsel %vm2053, %v5971, 0
        %v6058 = vsel %vm2102, %v6004, 0
        %6060 = vmatprep.subr.bf16.mxu0 0
        %6061 = vmatpush1.bf16.msra.mxu0 %v6000
        %6062 = vmatprep.subr.bf16.mxu0 0
        %6063 = vmatpush1.bf16.msra.mxu0 %v6001
        %6064 = vmatprep.subr.bf16.mxu0 0
        %6065 = vmatpush1.bf16.msra.mxu0 %v6002
        %6066 = vmatprep.subr.bf16.mxu0 0
        %6067 = vmatpush1.bf16.msra.mxu0 %v6003
        %6068 = vmatprep.subr.bf16.mxu0 0
        %6069 = vmatpush1.bf16.msra.mxu0 %v6058
        %6070 = vmatprep.subr.bf16.mxu0 0
        %6071 = vmatpush1.bf16.msra.mxu0 0
        %6072 = vmatprep.subr.bf16.mxu0 0
        %6073 = vmatpush1.bf16.msra.mxu0 0
        %6074 = vmatprep.subr.bf16.mxu0 0
        %6075 = vmatpush1.bf16.msra.mxu0 0
        %6076 = vmatprep.subr.bf16.mxu0 0
        %6077 = vmatpush1.bf16.msra.mxu0 0
        %6078 = vmatprep.subr.bf16.mxu0 0
        %6079 = vmatpush1.bf16.msra.mxu0 0
        %6080 = vmatprep.subr.bf16.mxu0 0
        %6081 = vmatpush1.bf16.msra.mxu0 0
        %6082 = vmatprep.subr.bf16.mxu0 0
        %6083 = vmatpush1.bf16.msra.mxu0 0
        %6084 = vmatprep.subr.bf16.mxu0 0
        %6085 = vmatpush1.bf16.msra.mxu0 0
        %6086 = vmatprep.subr.bf16.mxu0 0
        %6087 = vmatpush1.bf16.msra.mxu0 0
        %6088 = vmatprep.subr.bf16.mxu0 0
        %6089 = vmatpush1.bf16.msra.mxu0 0
        %6090 = vmatprep.subr.bf16.mxu0 0
        %6091 = vmatpush1.bf16.msra.mxu0 0
        %6092 = vmatprep.mubr.bf16.mxu0 0
        %6093 = vmatmul.mubr.bf16.gmra.mrb[0].mxu0 %v6010
        %v6094 = vpop.f32.mrb[0].mxu0
        %v6095 = vadd.f32 0.0, %v6094
        %v6096 = vpop.f32.mrb[0].mxu0
        %v6097 = vpop.f32.mrb[0].mxu0
        %v6098 = vadd.f32 0.0, %v6097
        %v6099 = vpop.f32.mrb[0].mxu0
        %6100 = vmatprep.mubr.bf16.mxu0 0
        %6101 = vmatmul.mubr.bf16.gmra.mrb[0].mxu0 %v6013
        %v6102 = vpop.f32.mrb[0].mxu0
        %v6103 = vadd.f32 0.0, %v6102
        %v6104 = vpop.f32.mrb[0].mxu0
        %v6105 = vpop.f32.mrb[0].mxu0
        %v6106 = vadd.f32 0.0, %v6105
        %v6107 = vpop.f32.mrb[0].mxu0
        %6108 = vmatprep.mubr.bf16.mxu0 0
        %6109 = vmatmul.mubr.bf16.gmra.mrb[0].mxu0 %v6016
        %v6110 = vpop.f32.mrb[0].mxu0
        %v6111 = vadd.f32 0.0, %v6110
        %v6112 = vpop.f32.mrb[0].mxu0
        %v6113 = vpop.f32.mrb[0].mxu0
        %v6114 = vadd.f32 0.0, %v6113
        %v6115 = vpop.f32.mrb[0].mxu0
        %6116 = vmatprep.mubr.bf16.mxu0 0
        %6117 = vmatmul.mubr.bf16.gmra.mrb[0].mxu0 %v6019
        %v6118 = vpop.f32.mrb[0].mxu0
        %v6119 = vadd.f32 0.0, %v6118
        %v6120 = vpop.f32.mrb[0].mxu0
        %v6121 = vpop.f32.mrb[0].mxu0
        %v6122 = vadd.f32 0.0, %v6121
        %v6123 = vpop.f32.mrb[0].mxu0
        %6124 = vmatprep.mubr.bf16.mxu0 0
        %6125 = vmatmul.mubr.bf16.gmra.mrb[0].mxu0 %v6022
        %v6126 = vpop.f32.mrb[0].mxu0
        %v6127 = vadd.f32 0.0, %v6126
        %v6128 = vpop.f32.mrb[0].mxu0
        %v6129 = vpop.f32.mrb[0].mxu0
        %v6130 = vadd.f32 0.0, %v6129
        %v6131 = vpop.f32.mrb[0].mxu0
        %6132 = vmatprep.mubr.bf16.mxu0 0
        %6133 = vmatmul.mubr.bf16.gmra.mrb[0].mxu0 %v6025
        %v6134 = vpop.f32.mrb[0].mxu0
        %v6135 = vadd.f32 0.0, %v6134
        %v6136 = vpop.f32.mrb[0].mxu0
        %v6137 = vpop.f32.mrb[0].mxu0
        %v6138 = vadd.f32 0.0, %v6137
        %v6139 = vpop.f32.mrb[0].mxu0
        %6140 = vmatprep.mubr.bf16.mxu0 0
        %6141 = vmatmul.mubr.bf16.gmra.mrb[0].mxu0 %v6028
        %v6142 = vpop.f32.mrb[0].mxu0
        %v6143 = vadd.f32 0.0, %v6142
        %v6144 = vpop.f32.mrb[0].mxu0
        %v6145 = vpop.f32.mrb[0].mxu0
        %v6146 = vadd.f32 0.0, %v6145
        %v6147 = vpop.f32.mrb[0].mxu0
        %6148 = vmatprep.mubr.bf16.mxu0 0
        %6149 = vmatmul.mubr.bf16.gmra.mrb[0].mxu0 %v6031
        %v6150 = vpop.f32.mrb[0].mxu0
        %v6151 = vadd.f32 0.0, %v6150
        %v6152 = vpop.f32.mrb[0].mxu0
        %v6153 = vpop.f32.mrb[0].mxu0
        %v6154 = vadd.f32 0.0, %v6153
        %v6155 = vpop.f32.mrb[0].mxu0
        %6156 = vmatprep.mubr.bf16.mxu0 0
        %6157 = vmatmul.mubr.bf16.gmra.mrb[0].mxu0 %v6034
        %v6158 = vpop.f32.mrb[0].mxu0
        %v6159 = vadd.f32 0.0, %v6158
        %v6160 = vpop.f32.mrb[0].mxu0
        %v6161 = vpop.f32.mrb[0].mxu0
        %v6162 = vadd.f32 0.0, %v6161
        %v6163 = vpop.f32.mrb[0].mxu0
        %6164 = vmatprep.mubr.bf16.mxu0 0
        %6165 = vmatmul.mubr.bf16.gmra.mrb[0].mxu0 %v6037
        %v6166 = vpop.f32.mrb[0].mxu0
        %v6167 = vadd.f32 0.0, %v6166
        %v6168 = vpop.f32.mrb[0].mxu0
        %v6169 = vpop.f32.mrb[0].mxu0
        %v6170 = vadd.f32 0.0, %v6169
        %v6171 = vpop.f32.mrb[0].mxu0
        %6172 = vmatprep.mubr.bf16.mxu0 0
        %6173 = vmatmul.mubr.bf16.gmra.mrb[0].mxu0 %v6040
        %v6174 = vpop.f32.mrb[0].mxu0
        %v6175 = vadd.f32 0.0, %v6174
        %v6176 = vpop.f32.mrb[0].mxu0
        %v6177 = vpop.f32.mrb[0].mxu0
        %v6178 = vadd.f32 0.0, %v6177
        %v6179 = vpop.f32.mrb[0].mxu0
        %6180 = vmatprep.mubr.bf16.mxu0 0
        %6181 = vmatmul.mubr.bf16.gmra.mrb[0].mxu0 %v6043
        %v6182 = vpop.f32.mrb[0].mxu0
        %v6183 = vadd.f32 0.0, %v6182
        %v6184 = vpop.f32.mrb[0].mxu0
        %v6185 = vpop.f32.mrb[0].mxu0
        %v6186 = vadd.f32 0.0, %v6185
        %v6187 = vpop.f32.mrb[0].mxu0
        %6188 = vmatprep.mubr.bf16.mxu0 0
        %6189 = vmatmul.mubr.bf16.gmra.mrb[0].mxu0 %v6046
        %v6190 = vpop.f32.mrb[0].mxu0
        %v6191 = vadd.f32 0.0, %v6190
        %v6192 = vpop.f32.mrb[0].mxu0
        %v6193 = vpop.f32.mrb[0].mxu0
        %v6194 = vadd.f32 0.0, %v6193
        %v6195 = vpop.f32.mrb[0].mxu0
        %6196 = vmatprep.mubr.bf16.mxu0 0
        %6197 = vmatmul.mubr.bf16.gmra.mrb[0].mxu0 %v6049
        %v6198 = vpop.f32.mrb[0].mxu0
        %v6199 = vadd.f32 0.0, %v6198
        %v6200 = vpop.f32.mrb[0].mxu0
        %v6201 = vpop.f32.mrb[0].mxu0
        %v6202 = vadd.f32 0.0, %v6201
        %v6203 = vpop.f32.mrb[0].mxu0
        %6204 = vmatprep.mubr.bf16.mxu0 0
        %6205 = vmatmul.mubr.bf16.gmra.mrb[0].mxu0 %v6052
        %v6206 = vpop.f32.mrb[0].mxu0
        %v6207 = vadd.f32 0.0, %v6206
        %v6208 = vpop.f32.mrb[0].mxu0
        %v6209 = vpop.f32.mrb[0].mxu0
        %v6210 = vadd.f32 0.0, %v6209
        %v6211 = vpop.f32.mrb[0].mxu0
        %6212 = vmatprep.mubr.bf16.mxu0 0
        %6213 = vmatmul.mubr.bf16.gmra.mrb[0].mxu0 %v6055
        %v6214 = vpop.f32.mrb[0].mxu0
        %v6215 = vadd.f32 0.0, %v6214
        %v6216 = vpop.f32.mrb[0].mxu0
        %v6217 = vpop.f32.mrb[0].mxu0
        %v6218 = vadd.f32 0.0, %v6217
        %v6219 = vpop.f32.mrb[0].mxu0
        %6220 = vdwg.mxu0
        %s6221 = scalar_lea.vmem %s2, 2
        %v6222 = vld [vmem:[%s6221] sm:$0x1]
        %v6224 = vlaneseq
        %v6225 = vshrl.u32 %v6224, 7
        %v6226 = vsub.s32 0, %v6225
        %v6227 = vrot.slane %v6222, %v6226
        %v6229 = vmul.f32 %v6095, %v6227
        %v6230 = vmul.f32 %v6098, %v6227
        %v6231 = vmul.f32 %v6103, %v6227
        %v6232 = vmul.f32 %v6106, %v6227
        %v6233 = vmul.f32 %v6111, %v6227
        %v6234 = vmul.f32 %v6114, %v6227
        %v6235 = vmul.f32 %v6119, %v6227
        %v6236 = vmul.f32 %v6122, %v6227
        %v6237 = vmul.f32 %v6127, %v6227
        %v6238 = vmul.f32 %v6130, %v6227
        %v6239 = vmul.f32 %v6135, %v6227
        %v6240 = vmul.f32 %v6138, %v6227
        %v6241 = vmul.f32 %v6143, %v6227
        %v6242 = vmul.f32 %v6146, %v6227
        %v6243 = vmul.f32 %v6151, %v6227
        %v6244 = vmul.f32 %v6154, %v6227
        %v6245 = vmul.f32 %v6159, %v6227
        %v6246 = vmul.f32 %v6162, %v6227
        %v6247 = vmul.f32 %v6167, %v6227
        %v6248 = vmul.f32 %v6170, %v6227
        %v6249 = vmul.f32 %v6175, %v6227
        %v6250 = vmul.f32 %v6178, %v6227
        %v6251 = vmul.f32 %v6183, %v6227
        %v6252 = vmul.f32 %v6186, %v6227
        %v6253 = vmul.f32 %v6191, %v6227
        %v6254 = vmul.f32 %v6194, %v6227
        %v6255 = vmul.f32 %v6199, %v6227
        %v6256 = vmul.f32 %v6202, %v6227
        %v6257 = vmul.f32 %v6207, %v6227
        %v6258 = vmul.f32 %v6210, %v6227
        %v6259 = vmul.f32 %v6215, %v6227
        %v6260 = vmul.f32 %v6218, %v6227
        %s6261 = scalar_lea.vmem %s3, 2
        %v6262 = vld [vmem:[%s6261] sm:$0x1]
        %v6264 = vlaneseq
        %v6265 = vshrl.u32 %v6264, 7
        %v6266 = vsub.s32 0, %v6265
        %v6267 = vrot.slane %v6262, %v6266
        %v6269 = vadd.f32 %v6229, %v6267
        %v6270 = vadd.f32 %v6230, %v6267
        %v6271 = vadd.f32 %v6231, %v6267
        %v6272 = vadd.f32 %v6232, %v6267
        %v6273 = vadd.f32 %v6233, %v6267
        %v6274 = vadd.f32 %v6234, %v6267
        %v6275 = vadd.f32 %v6235, %v6267
        %v6276 = vadd.f32 %v6236, %v6267
        %v6277 = vadd.f32 %v6237, %v6267
        %v6278 = vadd.f32 %v6238, %v6267
        %v6279 = vadd.f32 %v6239, %v6267
        %v6280 = vadd.f32 %v6240, %v6267
        %v6281 = vadd.f32 %v6241, %v6267
        %v6282 = vadd.f32 %v6242, %v6267
        %v6283 = vadd.f32 %v6243, %v6267
        %v6284 = vadd.f32 %v6244, %v6267
        %v6285 = vadd.f32 %v6245, %v6267
        %v6286 = vadd.f32 %v6246, %v6267
        %v6287 = vadd.f32 %v6247, %v6267
        %v6288 = vadd.f32 %v6248, %v6267
        %v6289 = vadd.f32 %v6249, %v6267
        %v6290 = vadd.f32 %v6250, %v6267
        %v6291 = vadd.f32 %v6251, %v6267
        %v6292 = vadd.f32 %v6252, %v6267
        %v6293 = vadd.f32 %v6253, %v6267
        %v6294 = vadd.f32 %v6254, %v6267
        %v6295 = vadd.f32 %v6255, %v6267
        %v6296 = vadd.f32 %v6256, %v6267
        %v6297 = vadd.f32 %v6257, %v6267
        %v6298 = vadd.f32 %v6258, %v6267
        %v6299 = vadd.f32 %v6259, %v6267
        %v6300 = vadd.f32 %v6260, %v6267
        %v6301 = vmax.f32 %v6269, 0.0
        %v6302 = vmax.f32 %v6270, 0.0
        %v6303 = vmax.f32 %v6271, 0.0
        %v6304 = vmax.f32 %v6272, 0.0
        %v6305 = vmax.f32 %v6273, 0.0
        %v6306 = vmax.f32 %v6274, 0.0
        %v6307 = vmax.f32 %v6275, 0.0
        %v6308 = vmax.f32 %v6276, 0.0
        %v6309 = vmax.f32 %v6277, 0.0
        %v6310 = vmax.f32 %v6278, 0.0
        %v6311 = vmax.f32 %v6279, 0.0
        %v6312 = vmax.f32 %v6280, 0.0
        %v6313 = vmax.f32 %v6281, 0.0
        %v6314 = vmax.f32 %v6282, 0.0
        %v6315 = vmax.f32 %v6283, 0.0
        %v6316 = vmax.f32 %v6284, 0.0
        %v6317 = vmax.f32 %v6285, 0.0
        %v6318 = vmax.f32 %v6286, 0.0
        %v6319 = vmax.f32 %v6287, 0.0
        %v6320 = vmax.f32 %v6288, 0.0
        %v6321 = vmax.f32 %v6289, 0.0
        %v6322 = vmax.f32 %v6290, 0.0
        %v6323 = vmax.f32 %v6291, 0.0
        %v6324 = vmax.f32 %v6292, 0.0
        %v6325 = vmax.f32 %v6293, 0.0
        %v6326 = vmax.f32 %v6294, 0.0
        %v6327 = vmax.f32 %v6295, 0.0
        %v6328 = vmax.f32 %v6296, 0.0
        %v6329 = vmax.f32 %v6297, 0.0
        %v6330 = vmax.f32 %v6298, 0.0
        %v6331 = vmax.f32 %v6299, 0.0
        %v6332 = vmax.f32 %v6300, 0.0
        %6333 = vst.msk [vmem:[%s2377 + $0x1] sm:$0xff] %vm250, %v6301
        %6334 = vst.msk [vmem:[%s2377 + $0x9] sm:$0xff] %vm250, %v6302
        %6335 = vst.msk [vmem:[%s2377 + $0x19] sm:$0xff] %vm250, %v6303
        %6336 = vst.msk [vmem:[%s2377 + $0x21] sm:$0xff] %vm250, %v6304
        %6337 = vst.msk [vmem:[%s2377 + $0x31] sm:$0xff] %vm250, %v6305
        %6338 = vst.msk [vmem:[%s2377 + $0x39] sm:$0xff] %vm250, %v6306
        %6339 = vst.msk [vmem:[%s2377 + $0x49] sm:$0xff] %vm250, %v6307
        %6340 = vst.msk [vmem:[%s2377 + $0x51] sm:$0xff] %vm250, %v6308
        %6341 = vst.msk [vmem:[%s2377 + $0x61] sm:$0xff] %vm250, %v6309
        %6342 = vst.msk [vmem:[%s2377 + $0x69] sm:$0xff] %vm250, %v6310
        %6343 = vst.msk [vmem:[%s2377 + $0x79] sm:$0xff] %vm250, %v6311
        %6344 = vst.msk [vmem:[%s2377 + $0x81] sm:$0xff] %vm250, %v6312
        %6345 = vst.msk [vmem:[%s2377 + $0x91] sm:$0xff] %vm250, %v6313
        %6346 = vst.msk [vmem:[%s2377 + $0x99] sm:$0xff] %vm250, %v6314
        %6347 = vst.msk [vmem:[%s2377 + $0xa9] sm:$0xff] %vm250, %v6315
        %6348 = vst.msk [vmem:[%s2377 + $0xb1] sm:$0xff] %vm250, %v6316
        %6349 = vst.msk [vmem:[%s2377 + $0xc1] sm:$0xff] %vm250, %v6317
        %6350 = vst.msk [vmem:[%s2377 + $0xc9] sm:$0xff] %vm250, %v6318
        %6351 = vst.msk [vmem:[%s2377 + $0xd9] sm:$0xff] %vm250, %v6319
        %6352 = vst.msk [vmem:[%s2377 + $0xe1] sm:$0xff] %vm250, %v6320
        %6353 = vst.msk [vmem:[%s2377 + $0xf1] sm:$0xff] %vm250, %v6321
        %6354 = vst.msk [vmem:[%s2377 + $0xf9] sm:$0xff] %vm250, %v6322
        %6355 = vst.msk [vmem:[%s2377 + $0x109] sm:$0xff] %vm250, %v6323
        %6356 = vst.msk [vmem:[%s2377 + $0x111] sm:$0xff] %vm250, %v6324
        %6357 = vst.msk [vmem:[%s2377 + $0x121] sm:$0xff] %vm250, %v6325
        %6358 = vst.msk [vmem:[%s2377 + $0x129] sm:$0xff] %vm250, %v6326
        %6359 = vst.msk [vmem:[%s2377 + $0x139] sm:$0xff] %vm250, %v6327
        %6360 = vst.msk [vmem:[%s2377 + $0x141] sm:$0xff] %vm250, %v6328
        %6361 = vst.msk [vmem:[%s2377 + $0x151] sm:$0xff] %vm250, %v6329
        %6362 = vst.msk [vmem:[%s2377 + $0x159] sm:$0xff] %vm250, %v6330
        %6363 = vst.msk [vmem:[%s2377 + $0x169] sm:$0xff] %vm250, %v6331
        %6364 = vst.msk [vmem:[%s2377 + $0x171] sm:$0xff] %vm250, %v6332
        %v6365 = vld [vmem:[#allocation3] sm:$0xff]
        %v6366 = vld [vmem:[#allocation3 + $0x8] sm:$0xff]
        %v6367 = vld [vmem:[#allocation3 + $0x18] sm:$0xff]
        %v6368 = vld [vmem:[#allocation3 + $0x20] sm:$0xff]
        %v6369 = vld [vmem:[#allocation3 + $0x30] sm:$0xff]
        %v6370 = vld [vmem:[#allocation3 + $0x38] sm:$0xff]
        %v6371 = vld [vmem:[#allocation3 + $0x48] sm:$0xff]
        %v6372 = vld [vmem:[#allocation3 + $0x50] sm:$0xff]
        %v6373 = vld [vmem:[#allocation3 + $0x60] sm:$0xff]
        %v6374 = vld [vmem:[#allocation3 + $0x68] sm:$0xff]
        %v6375 = vld [vmem:[#allocation3 + $0x78] sm:$0xff]
        %v6376 = vld [vmem:[#allocation3 + $0x80] sm:$0xff]
        %v6377 = vld [vmem:[#allocation3 + $0x90] sm:$0xff]
        %v6378 = vld [vmem:[#allocation3 + $0x98] sm:$0xff]
        %v6379 = vld [vmem:[#allocation3 + $0xa8] sm:$0xff]
        %v6380 = vld [vmem:[#allocation3 + $0xb0] sm:$0xff]
        %v6381 = vld [vmem:[#allocation3 + $0xc0] sm:$0xff]
        %v6382 = vld [vmem:[#allocation3 + $0xc8] sm:$0xff]
        %v6383 = vld [vmem:[#allocation3 + $0xd8] sm:$0xff]
        %v6384 = vld [vmem:[#allocation3 + $0xe0] sm:$0xff]
        %v6385 = vld [vmem:[#allocation3 + $0xf0] sm:$0xff]
        %v6386 = vld [vmem:[#allocation3 + $0xf8] sm:$0xff]
        %v6387 = vld [vmem:[#allocation3 + $0x108] sm:$0xff]
        %v6388 = vld [vmem:[#allocation3 + $0x110] sm:$0xff]
        %v6389 = vld [vmem:[#allocation3 + $0x120] sm:$0xff]
        %v6390 = vld [vmem:[#allocation3 + $0x128] sm:$0xff]
        %v6391 = vld [vmem:[#allocation3 + $0x138] sm:$0xff]
        %v6392 = vld [vmem:[#allocation3 + $0x140] sm:$0xff]
        %v6393 = vld [vmem:[#allocation3 + $0x150] sm:$0xff]
        %v6394 = vld [vmem:[#allocation3 + $0x158] sm:$0xff]
        %v6395 = vld [vmem:[#allocation3 + $0x168] sm:$0xff]
        %v6396 = vld [vmem:[#allocation3 + $0x170] sm:$0xff]
        %v6397 = vld [vmem:[#allocation3 + $0x1] sm:$0xff]
        %v6398 = vld [vmem:[#allocation3 + $0x9] sm:$0xff]
        %v6399 = vld [vmem:[#allocation3 + $0x19] sm:$0xff]
        %v6400 = vld [vmem:[#allocation3 + $0x21] sm:$0xff]
        %v6401 = vld [vmem:[#allocation3 + $0x31] sm:$0xff]
        %v6402 = vld [vmem:[#allocation3 + $0x39] sm:$0xff]
        %v6403 = vld [vmem:[#allocation3 + $0x49] sm:$0xff]
        %v6404 = vld [vmem:[#allocation3 + $0x51] sm:$0xff]
        %v6405 = vld [vmem:[#allocation3 + $0x61] sm:$0xff]
        %v6406 = vld [vmem:[#allocation3 + $0x69] sm:$0xff]
        %v6407 = vld [vmem:[#allocation3 + $0x79] sm:$0xff]
        %v6408 = vld [vmem:[#allocation3 + $0x81] sm:$0xff]
        %v6409 = vld [vmem:[#allocation3 + $0x91] sm:$0xff]
        %v6410 = vld [vmem:[#allocation3 + $0x99] sm:$0xff]
        %v6411 = vld [vmem:[#allocation3 + $0xa9] sm:$0xff]
        %v6412 = vld [vmem:[#allocation3 + $0xb1] sm:$0xff]
        %v6413 = vld [vmem:[#allocation3 + $0xc1] sm:$0xff]
        %v6414 = vld [vmem:[#allocation3 + $0xc9] sm:$0xff]
        %v6415 = vld [vmem:[#allocation3 + $0xd9] sm:$0xff]
        %v6416 = vld [vmem:[#allocation3 + $0xe1] sm:$0xff]
        %v6417 = vld [vmem:[#allocation3 + $0xf1] sm:$0xff]
        %v6418 = vld [vmem:[#allocation3 + $0xf9] sm:$0xff]
        %v6419 = vld [vmem:[#allocation3 + $0x109] sm:$0xff]
        %v6420 = vld [vmem:[#allocation3 + $0x111] sm:$0xff]
        %v6421 = vld [vmem:[#allocation3 + $0x121] sm:$0xff]
        %v6422 = vld [vmem:[#allocation3 + $0x129] sm:$0xff]
        %v6423 = vld [vmem:[#allocation3 + $0x139] sm:$0xff]
        %v6424 = vld [vmem:[#allocation3 + $0x141] sm:$0xff]
        %v6425 = vld [vmem:[#allocation3 + $0x151] sm:$0xff]
        %v6426 = vld [vmem:[#allocation3 + $0x159] sm:$0xff]
        %v6427 = vld [vmem:[#allocation3 + $0x169] sm:$0xff]
        %v6428 = vld [vmem:[#allocation3 + $0x171] sm:$0xff]
        %v6429 = vld [vmem:[#allocation3 + $0x2] sm:$0xff]
        %v6430 = vld [vmem:[#allocation3 + $0xa] sm:$0xff]
        %v6431 = vld [vmem:[#allocation3 + $0x1a] sm:$0xff]
        %v6432 = vld [vmem:[#allocation3 + $0x22] sm:$0xff]
        %v6433 = vld [vmem:[#allocation3 + $0x32] sm:$0xff]
        %v6434 = vld [vmem:[#allocation3 + $0x3a] sm:$0xff]
        %v6435 = vld [vmem:[#allocation3 + $0x4a] sm:$0xff]
        %v6436 = vld [vmem:[#allocation3 + $0x52] sm:$0xff]
        %v6437 = vld [vmem:[#allocation3 + $0x62] sm:$0xff]
        %v6438 = vld [vmem:[#allocation3 + $0x6a] sm:$0xff]
        %v6439 = vld [vmem:[#allocation3 + $0x7a] sm:$0xff]
        %v6440 = vld [vmem:[#allocation3 + $0x82] sm:$0xff]
        %v6441 = vld [vmem:[#allocation3 + $0x92] sm:$0xff]
        %v6442 = vld [vmem:[#allocation3 + $0x9a] sm:$0xff]
        %v6443 = vld [vmem:[#allocation3 + $0xaa] sm:$0xff]
        %v6444 = vld [vmem:[#allocation3 + $0xb2] sm:$0xff]
        %v6445 = vld [vmem:[#allocation3 + $0xc2] sm:$0xff]
        %v6446 = vld [vmem:[#allocation3 + $0xca] sm:$0xff]
        %v6447 = vld [vmem:[#allocation3 + $0xda] sm:$0xff]
        %v6448 = vld [vmem:[#allocation3 + $0xe2] sm:$0xff]
        %v6449 = vld [vmem:[#allocation3 + $0xf2] sm:$0xff]
        %v6450 = vld [vmem:[#allocation3 + $0xfa] sm:$0xff]
        %v6451 = vld [vmem:[#allocation3 + $0x10a] sm:$0xff]
        %v6452 = vld [vmem:[#allocation3 + $0x112] sm:$0xff]
        %v6453 = vld [vmem:[#allocation3 + $0x122] sm:$0xff]
        %v6454 = vld [vmem:[#allocation3 + $0x12a] sm:$0xff]
        %v6455 = vld [vmem:[#allocation3 + $0x13a] sm:$0xff]
        %v6456 = vld [vmem:[#allocation3 + $0x142] sm:$0xff]
        %v6457 = vld [vmem:[#allocation3 + $0x152] sm:$0xff]
        %v6458 = vld [vmem:[#allocation3 + $0x15a] sm:$0xff]
        %v6459 = vld [vmem:[#allocation3 + $0x16a] sm:$0xff]
        %v6460 = vld [vmem:[#allocation3 + $0x172] sm:$0xff]
        %v6461 = vld [vmem:[%s2377] sm:$0xff]
        %v6462 = vld [vmem:[%s2377 + $0x8] sm:$0xff]
        %v6463 = vld [vmem:[%s2377 + $0x18] sm:$0xff]
        %v6464 = vld [vmem:[%s2377 + $0x20] sm:$0xff]
        %v6465 = vld [vmem:[%s2377 + $0x30] sm:$0xff]
        %v6466 = vld [vmem:[%s2377 + $0x38] sm:$0xff]
        %v6467 = vld [vmem:[%s2377 + $0x48] sm:$0xff]
        %v6468 = vld [vmem:[%s2377 + $0x50] sm:$0xff]
        %v6469 = vld [vmem:[%s2377 + $0x60] sm:$0xff]
        %v6470 = vld [vmem:[%s2377 + $0x68] sm:$0xff]
        %v6471 = vld [vmem:[%s2377 + $0x78] sm:$0xff]
        %v6472 = vld [vmem:[%s2377 + $0x80] sm:$0xff]
        %v6473 = vld [vmem:[%s2377 + $0x90] sm:$0xff]
        %v6474 = vld [vmem:[%s2377 + $0x98] sm:$0xff]
        %v6475 = vld [vmem:[%s2377 + $0xa8] sm:$0xff]
        %v6476 = vld [vmem:[%s2377 + $0xb0] sm:$0xff]
        %v6477 = vld [vmem:[%s2377 + $0xc0] sm:$0xff]
        %v6478 = vld [vmem:[%s2377 + $0xc8] sm:$0xff]
        %v6479 = vld [vmem:[%s2377 + $0xd8] sm:$0xff]
        %v6480 = vld [vmem:[%s2377 + $0xe0] sm:$0xff]
        %v6481 = vld [vmem:[%s2377 + $0xf0] sm:$0xff]
        %v6482 = vld [vmem:[%s2377 + $0xf8] sm:$0xff]
        %v6483 = vld [vmem:[%s2377 + $0x108] sm:$0xff]
        %v6484 = vld [vmem:[%s2377 + $0x110] sm:$0xff]
        %v6485 = vld [vmem:[%s2377 + $0x120] sm:$0xff]
        %v6486 = vld [vmem:[%s2377 + $0x128] sm:$0xff]
        %v6487 = vld [vmem:[%s2377 + $0x138] sm:$0xff]
        %v6488 = vld [vmem:[%s2377 + $0x140] sm:$0xff]
        %v6489 = vld [vmem:[%s2377 + $0x150] sm:$0xff]
        %v6490 = vld [vmem:[%s2377 + $0x158] sm:$0xff]
        %v6491 = vld [vmem:[%s2377 + $0x168] sm:$0xff]
        %v6492 = vld [vmem:[%s2377 + $0x170] sm:$0xff]
        %v6493 = vld [vmem:[%s2377 + $0x1] sm:$0xff]
        %v6494 = vld [vmem:[%s2377 + $0x9] sm:$0xff]
        %v6495 = vld [vmem:[%s2377 + $0x19] sm:$0xff]
        %v6496 = vld [vmem:[%s2377 + $0x21] sm:$0xff]
        %v6497 = vld [vmem:[%s2377 + $0x31] sm:$0xff]
        %v6498 = vld [vmem:[%s2377 + $0x39] sm:$0xff]
        %v6499 = vld [vmem:[%s2377 + $0x49] sm:$0xff]
        %v6500 = vld [vmem:[%s2377 + $0x51] sm:$0xff]
        %v6501 = vld [vmem:[%s2377 + $0x61] sm:$0xff]
        %v6502 = vld [vmem:[%s2377 + $0x69] sm:$0xff]
        %v6503 = vld [vmem:[%s2377 + $0x79] sm:$0xff]
        %v6504 = vld [vmem:[%s2377 + $0x81] sm:$0xff]
        %v6505 = vld [vmem:[%s2377 + $0x91] sm:$0xff]
        %v6506 = vld [vmem:[%s2377 + $0x99] sm:$0xff]
        %v6507 = vld [vmem:[%s2377 + $0xa9] sm:$0xff]
        %v6508 = vld [vmem:[%s2377 + $0xb1] sm:$0xff]
        %v6509 = vld [vmem:[%s2377 + $0xc1] sm:$0xff]
        %v6510 = vld [vmem:[%s2377 + $0xc9] sm:$0xff]
        %v6511 = vld [vmem:[%s2377 + $0xd9] sm:$0xff]
        %v6512 = vld [vmem:[%s2377 + $0xe1] sm:$0xff]
        %v6513 = vld [vmem:[%s2377 + $0xf1] sm:$0xff]
        %v6514 = vld [vmem:[%s2377 + $0xf9] sm:$0xff]
        %v6515 = vld [vmem:[%s2377 + $0x109] sm:$0xff]
        %v6516 = vld [vmem:[%s2377 + $0x111] sm:$0xff]
        %v6517 = vld [vmem:[%s2377 + $0x121] sm:$0xff]
        %v6518 = vld [vmem:[%s2377 + $0x129] sm:$0xff]
        %v6519 = vld [vmem:[%s2377 + $0x139] sm:$0xff]
        %v6520 = vld [vmem:[%s2377 + $0x141] sm:$0xff]
        %v6521 = vld [vmem:[%s2377 + $0x151] sm:$0xff]
        %v6522 = vld [vmem:[%s2377 + $0x159] sm:$0xff]
        %v6523 = vld [vmem:[%s2377 + $0x169] sm:$0xff]
        %v6524 = vld [vmem:[%s2377 + $0x171] sm:$0xff]
        %v6525 = vld [vmem:[%s2377 + $0x2] sm:$0xff]
        %v6526 = vld [vmem:[%s2377 + $0xa] sm:$0xff]
        %v6527 = vld [vmem:[%s2377 + $0x1a] sm:$0xff]
        %v6528 = vld [vmem:[%s2377 + $0x22] sm:$0xff]
        %v6529 = vld [vmem:[%s2377 + $0x32] sm:$0xff]
        %v6530 = vld [vmem:[%s2377 + $0x3a] sm:$0xff]
        %v6531 = vld [vmem:[%s2377 + $0x4a] sm:$0xff]
        %v6532 = vld [vmem:[%s2377 + $0x52] sm:$0xff]
        %v6533 = vld [vmem:[%s2377 + $0x62] sm:$0xff]
        %v6534 = vld [vmem:[%s2377 + $0x6a] sm:$0xff]
        %v6535 = vld [vmem:[%s2377 + $0x7a] sm:$0xff]
        %v6536 = vld [vmem:[%s2377 + $0x82] sm:$0xff]
        %v6537 = vld [vmem:[%s2377 + $0x92] sm:$0xff]
        %v6538 = vld [vmem:[%s2377 + $0x9a] sm:$0xff]
        %v6539 = vld [vmem:[%s2377 + $0xaa] sm:$0xff]
        %v6540 = vld [vmem:[%s2377 + $0xb2] sm:$0xff]
        %v6541 = vld [vmem:[%s2377 + $0xc2] sm:$0xff]
        %v6542 = vld [vmem:[%s2377 + $0xca] sm:$0xff]
        %v6543 = vld [vmem:[%s2377 + $0xda] sm:$0xff]
        %v6544 = vld [vmem:[%s2377 + $0xe2] sm:$0xff]
        %v6545 = vld [vmem:[%s2377 + $0xf2] sm:$0xff]
        %v6546 = vld [vmem:[%s2377 + $0xfa] sm:$0xff]
        %v6547 = vld [vmem:[%s2377 + $0x10a] sm:$0xff]
        %v6548 = vld [vmem:[%s2377 + $0x112] sm:$0xff]
        %v6549 = vld [vmem:[%s2377 + $0x122] sm:$0xff]
        %v6550 = vld [vmem:[%s2377 + $0x12a] sm:$0xff]
        %v6551 = vld [vmem:[%s2377 + $0x13a] sm:$0xff]
        %v6552 = vld [vmem:[%s2377 + $0x142] sm:$0xff]
        %v6553 = vld [vmem:[%s2377 + $0x152] sm:$0xff]
        %v6554 = vld [vmem:[%s2377 + $0x15a] sm:$0xff]
        %v6555 = vld [vmem:[%s2377 + $0x16a] sm:$0xff]
        %v6556 = vld [vmem:[%s2377 + $0x172] sm:$0xff]
        %v6557 = vld [vmem:[%s2602] sm:$0xff]
        %v6558 = vld [vmem:[%s2602 + $0x8] sm:$0xff]
        %v6559 = vld [vmem:[%s2602 + $0x18] sm:$0xff]
        %v6560 = vld [vmem:[%s2602 + $0x20] sm:$0xff]
        %v6561 = vld [vmem:[%s2602 + $0x30] sm:$0xff]
        %v6562 = vld [vmem:[%s2602 + $0x38] sm:$0xff]
        %v6563 = vld [vmem:[%s2602 + $0x48] sm:$0xff]
        %v6564 = vld [vmem:[%s2602 + $0x50] sm:$0xff]
        %v6565 = vld [vmem:[%s2602 + $0x60] sm:$0xff]
        %v6566 = vld [vmem:[%s2602 + $0x68] sm:$0xff]
        %v6567 = vld [vmem:[%s2602 + $0x78] sm:$0xff]
        %v6568 = vld [vmem:[%s2602 + $0x80] sm:$0xff]
        %v6569 = vld [vmem:[%s2602 + $0x90] sm:$0xff]
        %v6570 = vld [vmem:[%s2602 + $0x98] sm:$0xff]
        %v6571 = vld [vmem:[%s2602 + $0xa8] sm:$0xff]
        %v6572 = vld [vmem:[%s2602 + $0xb0] sm:$0xff]
        %v6573 = vld [vmem:[%s2602 + $0xc0] sm:$0xff]
        %v6574 = vld [vmem:[%s2602 + $0xc8] sm:$0xff]
        %v6575 = vld [vmem:[%s2602 + $0xd8] sm:$0xff]
        %v6576 = vld [vmem:[%s2602 + $0xe0] sm:$0xff]
        %v6577 = vld [vmem:[%s2602 + $0xf0] sm:$0xff]
        %v6578 = vld [vmem:[%s2602 + $0xf8] sm:$0xff]
        %v6579 = vld [vmem:[%s2602 + $0x108] sm:$0xff]
        %v6580 = vld [vmem:[%s2602 + $0x110] sm:$0xff]
        %v6581 = vld [vmem:[%s2602 + $0x120] sm:$0xff]
        %v6582 = vld [vmem:[%s2602 + $0x128] sm:$0xff]
        %v6583 = vld [vmem:[%s2602 + $0x138] sm:$0xff]
        %v6584 = vld [vmem:[%s2602 + $0x140] sm:$0xff]
        %v6585 = vld [vmem:[%s2602 + $0x150] sm:$0xff]
        %v6586 = vld [vmem:[%s2602 + $0x158] sm:$0xff]
        %v6587 = vld [vmem:[%s2602 + $0x168] sm:$0xff]
        %v6588 = vld [vmem:[%s2602 + $0x170] sm:$0xff]
        %v6589 = vld [vmem:[%s2602 + $0x1] sm:$0xff]
        %v6590 = vld [vmem:[%s2602 + $0x9] sm:$0xff]
        %v6591 = vld [vmem:[%s2602 + $0x19] sm:$0xff]
        %v6592 = vld [vmem:[%s2602 + $0x21] sm:$0xff]
        %v6593 = vld [vmem:[%s2602 + $0x31] sm:$0xff]
        %v6594 = vld [vmem:[%s2602 + $0x39] sm:$0xff]
        %v6595 = vld [vmem:[%s2602 + $0x49] sm:$0xff]
        %v6596 = vld [vmem:[%s2602 + $0x51] sm:$0xff]
        %v6597 = vld [vmem:[%s2602 + $0x61] sm:$0xff]
        %v6598 = vld [vmem:[%s2602 + $0x69] sm:$0xff]
        %v6599 = vld [vmem:[%s2602 + $0x79] sm:$0xff]
        %v6600 = vld [vmem:[%s2602 + $0x81] sm:$0xff]
        %v6601 = vld [vmem:[%s2602 + $0x91] sm:$0xff]
        %v6602 = vld [vmem:[%s2602 + $0x99] sm:$0xff]
        %v6603 = vld [vmem:[%s2602 + $0xa9] sm:$0xff]
        %v6604 = vld [vmem:[%s2602 + $0xb1] sm:$0xff]
        %v6605 = vld [vmem:[%s2602 + $0xc1] sm:$0xff]
        %v6606 = vld [vmem:[%s2602 + $0xc9] sm:$0xff]
        %v6607 = vld [vmem:[%s2602 + $0xd9] sm:$0xff]
        %v6608 = vld [vmem:[%s2602 + $0xe1] sm:$0xff]
        %v6609 = vld [vmem:[%s2602 + $0xf1] sm:$0xff]
        %v6610 = vld [vmem:[%s2602 + $0xf9] sm:$0xff]
        %v6611 = vld [vmem:[%s2602 + $0x109] sm:$0xff]
        %v6612 = vld [vmem:[%s2602 + $0x111] sm:$0xff]
        %v6613 = vld [vmem:[%s2602 + $0x121] sm:$0xff]
        %v6614 = vld [vmem:[%s2602 + $0x129] sm:$0xff]
        %v6615 = vld [vmem:[%s2602 + $0x139] sm:$0xff]
        %v6616 = vld [vmem:[%s2602 + $0x141] sm:$0xff]
        %v6617 = vld [vmem:[%s2602 + $0x151] sm:$0xff]
        %v6618 = vld [vmem:[%s2602 + $0x159] sm:$0xff]
        %v6619 = vld [vmem:[%s2602 + $0x169] sm:$0xff]
        %v6620 = vld [vmem:[%s2602 + $0x171] sm:$0xff]
        %v6621 = vld [vmem:[%s2602 + $0x2] sm:$0xff]
        %v6622 = vld [vmem:[%s2602 + $0xa] sm:$0xff]
        %v6623 = vld [vmem:[%s2602 + $0x1a] sm:$0xff]
        %v6624 = vld [vmem:[%s2602 + $0x22] sm:$0xff]
        %v6625 = vld [vmem:[%s2602 + $0x32] sm:$0xff]
        %v6626 = vld [vmem:[%s2602 + $0x3a] sm:$0xff]
        %v6627 = vld [vmem:[%s2602 + $0x4a] sm:$0xff]
        %v6628 = vld [vmem:[%s2602 + $0x52] sm:$0xff]
        %v6629 = vld [vmem:[%s2602 + $0x62] sm:$0xff]
        %v6630 = vld [vmem:[%s2602 + $0x6a] sm:$0xff]
        %v6631 = vld [vmem:[%s2602 + $0x7a] sm:$0xff]
        %v6632 = vld [vmem:[%s2602 + $0x82] sm:$0xff]
        %v6633 = vld [vmem:[%s2602 + $0x92] sm:$0xff]
        %v6634 = vld [vmem:[%s2602 + $0x9a] sm:$0xff]
        %v6635 = vld [vmem:[%s2602 + $0xaa] sm:$0xff]
        %v6636 = vld [vmem:[%s2602 + $0xb2] sm:$0xff]
        %v6637 = vld [vmem:[%s2602 + $0xc2] sm:$0xff]
        %v6638 = vld [vmem:[%s2602 + $0xca] sm:$0xff]
        %v6639 = vld [vmem:[%s2602 + $0xda] sm:$0xff]
        %v6640 = vld [vmem:[%s2602 + $0xe2] sm:$0xff]
        %v6641 = vld [vmem:[%s2602 + $0xf2] sm:$0xff]
        %v6642 = vld [vmem:[%s2602 + $0xfa] sm:$0xff]
        %v6643 = vld [vmem:[%s2602 + $0x10a] sm:$0xff]
        %v6644 = vld [vmem:[%s2602 + $0x112] sm:$0xff]
        %v6645 = vld [vmem:[%s2602 + $0x122] sm:$0xff]
        %v6646 = vld [vmem:[%s2602 + $0x12a] sm:$0xff]
        %v6647 = vld [vmem:[%s2602 + $0x13a] sm:$0xff]
        %v6648 = vld [vmem:[%s2602 + $0x142] sm:$0xff]
        %v6649 = vld [vmem:[%s2602 + $0x152] sm:$0xff]
        %v6650 = vld [vmem:[%s2602 + $0x15a] sm:$0xff]
        %v6651 = vld [vmem:[%s2602 + $0x16a] sm:$0xff]
        %v6652 = vld [vmem:[%s2602 + $0x172] sm:$0xff]
        %6685 = vrot.lane.b32.xlu0 %v6397, 8
        %v6686 = vpop.permute.xlu0 %6685
        %6687 = vrot.lane.b32.xlu0 %v6398, 8
        %v6688 = vpop.permute.xlu0 %6687
        %6689 = vrot.lane.b32.xlu0 %v6399, 8
        %v6690 = vpop.permute.xlu0 %6689
        %6691 = vrot.lane.b32.xlu0 %v6400, 8
        %v6692 = vpop.permute.xlu0 %6691
        %6693 = vrot.lane.b32.xlu0 %v6401, 8
        %v6694 = vpop.permute.xlu0 %6693
        %6695 = vrot.lane.b32.xlu0 %v6402, 8
        %v6696 = vpop.permute.xlu0 %6695
        %6697 = vrot.lane.b32.xlu0 %v6403, 8
        %v6698 = vpop.permute.xlu0 %6697
        %6699 = vrot.lane.b32.xlu0 %v6404, 8
        %v6700 = vpop.permute.xlu0 %6699
        %6701 = vrot.lane.b32.xlu0 %v6405, 8
        %v6702 = vpop.permute.xlu0 %6701
        %6703 = vrot.lane.b32.xlu0 %v6406, 8
        %v6704 = vpop.permute.xlu0 %6703
        %6705 = vrot.lane.b32.xlu0 %v6407, 8
        %v6706 = vpop.permute.xlu0 %6705
        %6707 = vrot.lane.b32.xlu0 %v6408, 8
        %v6708 = vpop.permute.xlu0 %6707
        %6709 = vrot.lane.b32.xlu0 %v6409, 8
        %v6710 = vpop.permute.xlu0 %6709
        %6711 = vrot.lane.b32.xlu0 %v6410, 8
        %v6712 = vpop.permute.xlu0 %6711
        %6713 = vrot.lane.b32.xlu0 %v6411, 8
        %v6714 = vpop.permute.xlu0 %6713
        %6715 = vrot.lane.b32.xlu0 %v6412, 8
        %v6716 = vpop.permute.xlu0 %6715
        %6717 = vrot.lane.b32.xlu0 %v6413, 8
        %v6718 = vpop.permute.xlu0 %6717
        %6719 = vrot.lane.b32.xlu0 %v6414, 8
        %v6720 = vpop.permute.xlu0 %6719
        %6721 = vrot.lane.b32.xlu0 %v6415, 8
        %v6722 = vpop.permute.xlu0 %6721
        %6723 = vrot.lane.b32.xlu0 %v6416, 8
        %v6724 = vpop.permute.xlu0 %6723
        %6725 = vrot.lane.b32.xlu0 %v6417, 8
        %v6726 = vpop.permute.xlu0 %6725
        %6727 = vrot.lane.b32.xlu0 %v6418, 8
        %v6728 = vpop.permute.xlu0 %6727
        %6729 = vrot.lane.b32.xlu0 %v6419, 8
        %v6730 = vpop.permute.xlu0 %6729
        %6731 = vrot.lane.b32.xlu0 %v6420, 8
        %v6732 = vpop.permute.xlu0 %6731
        %6733 = vrot.lane.b32.xlu0 %v6421, 8
        %v6734 = vpop.permute.xlu0 %6733
        %6735 = vrot.lane.b32.xlu0 %v6422, 8
        %v6736 = vpop.permute.xlu0 %6735
        %6737 = vrot.lane.b32.xlu0 %v6423, 8
        %v6738 = vpop.permute.xlu0 %6737
        %6739 = vrot.lane.b32.xlu0 %v6424, 8
        %v6740 = vpop.permute.xlu0 %6739
        %6741 = vrot.lane.b32.xlu0 %v6425, 8
        %v6742 = vpop.permute.xlu0 %6741
        %6743 = vrot.lane.b32.xlu0 %v6426, 8
        %v6744 = vpop.permute.xlu0 %6743
        %6745 = vrot.lane.b32.xlu0 %v6427, 8
        %v6746 = vpop.permute.xlu0 %6745
        %6747 = vrot.lane.b32.xlu0 %v6428, 8
        %v6748 = vpop.permute.xlu0 %6747
        %6813 = vrot.lane.b32.xlu0 %v6429, 16
        %v6814 = vpop.permute.xlu0 %6813
        %6815 = vrot.lane.b32.xlu0 %v6430, 16
        %v6816 = vpop.permute.xlu0 %6815
        %6817 = vrot.lane.b32.xlu0 %v6431, 16
        %v6818 = vpop.permute.xlu0 %6817
        %6819 = vrot.lane.b32.xlu0 %v6432, 16
        %v6820 = vpop.permute.xlu0 %6819
        %6821 = vrot.lane.b32.xlu0 %v6433, 16
        %v6822 = vpop.permute.xlu0 %6821
        %6823 = vrot.lane.b32.xlu0 %v6434, 16
        %v6824 = vpop.permute.xlu0 %6823
        %6825 = vrot.lane.b32.xlu0 %v6435, 16
        %v6826 = vpop.permute.xlu0 %6825
        %6827 = vrot.lane.b32.xlu0 %v6436, 16
        %v6828 = vpop.permute.xlu0 %6827
        %6829 = vrot.lane.b32.xlu0 %v6437, 16
        %v6830 = vpop.permute.xlu0 %6829
        %6831 = vrot.lane.b32.xlu0 %v6438, 16
        %v6832 = vpop.permute.xlu0 %6831
        %6833 = vrot.lane.b32.xlu0 %v6439, 16
        %v6834 = vpop.permute.xlu0 %6833
        %6835 = vrot.lane.b32.xlu0 %v6440, 16
        %v6836 = vpop.permute.xlu0 %6835
        %6837 = vrot.lane.b32.xlu0 %v6441, 16
        %v6838 = vpop.permute.xlu0 %6837
        %6839 = vrot.lane.b32.xlu0 %v6442, 16
        %v6840 = vpop.permute.xlu0 %6839
        %6841 = vrot.lane.b32.xlu0 %v6443, 16
        %v6842 = vpop.permute.xlu0 %6841
        %6843 = vrot.lane.b32.xlu0 %v6444, 16
        %v6844 = vpop.permute.xlu0 %6843
        %6845 = vrot.lane.b32.xlu0 %v6445, 16
        %v6846 = vpop.permute.xlu0 %6845
        %6847 = vrot.lane.b32.xlu0 %v6446, 16
        %v6848 = vpop.permute.xlu0 %6847
        %6849 = vrot.lane.b32.xlu0 %v6447, 16
        %v6850 = vpop.permute.xlu0 %6849
        %6851 = vrot.lane.b32.xlu0 %v6448, 16
        %v6852 = vpop.permute.xlu0 %6851
        %6853 = vrot.lane.b32.xlu0 %v6449, 16
        %v6854 = vpop.permute.xlu0 %6853
        %6855 = vrot.lane.b32.xlu0 %v6450, 16
        %v6856 = vpop.permute.xlu0 %6855
        %6857 = vrot.lane.b32.xlu0 %v6451, 16
        %v6858 = vpop.permute.xlu0 %6857
        %6859 = vrot.lane.b32.xlu0 %v6452, 16
        %v6860 = vpop.permute.xlu0 %6859
        %6861 = vrot.lane.b32.xlu0 %v6453, 16
        %v6862 = vpop.permute.xlu0 %6861
        %6863 = vrot.lane.b32.xlu0 %v6454, 16
        %v6864 = vpop.permute.xlu0 %6863
        %6865 = vrot.lane.b32.xlu0 %v6455, 16
        %v6866 = vpop.permute.xlu0 %6865
        %6867 = vrot.lane.b32.xlu0 %v6456, 16
        %v6868 = vpop.permute.xlu0 %6867
        %6869 = vrot.lane.b32.xlu0 %v6457, 16
        %v6870 = vpop.permute.xlu0 %6869
        %6871 = vrot.lane.b32.xlu0 %v6458, 16
        %v6872 = vpop.permute.xlu0 %6871
        %6873 = vrot.lane.b32.xlu0 %v6459, 16
        %v6874 = vpop.permute.xlu0 %6873
        %6875 = vrot.lane.b32.xlu0 %v6460, 16
        %v6876 = vpop.permute.xlu0 %6875
        %6941 = vrot.lane.b32.xlu0 %v6461, 24
        %v6942 = vpop.permute.xlu0 %6941
        %6943 = vrot.lane.b32.xlu0 %v6462, 24
        %v6944 = vpop.permute.xlu0 %6943
        %6945 = vrot.lane.b32.xlu0 %v6463, 24
        %v6946 = vpop.permute.xlu0 %6945
        %6947 = vrot.lane.b32.xlu0 %v6464, 24
        %v6948 = vpop.permute.xlu0 %6947
        %6949 = vrot.lane.b32.xlu0 %v6465, 24
        %v6950 = vpop.permute.xlu0 %6949
        %6951 = vrot.lane.b32.xlu0 %v6466, 24
        %v6952 = vpop.permute.xlu0 %6951
        %6953 = vrot.lane.b32.xlu0 %v6467, 24
        %v6954 = vpop.permute.xlu0 %6953
        %6955 = vrot.lane.b32.xlu0 %v6468, 24
        %v6956 = vpop.permute.xlu0 %6955
        %6957 = vrot.lane.b32.xlu0 %v6469, 24
        %v6958 = vpop.permute.xlu0 %6957
        %6959 = vrot.lane.b32.xlu0 %v6470, 24
        %v6960 = vpop.permute.xlu0 %6959
        %6961 = vrot.lane.b32.xlu0 %v6471, 24
        %v6962 = vpop.permute.xlu0 %6961
        %6963 = vrot.lane.b32.xlu0 %v6472, 24
        %v6964 = vpop.permute.xlu0 %6963
        %6965 = vrot.lane.b32.xlu0 %v6473, 24
        %v6966 = vpop.permute.xlu0 %6965
        %6967 = vrot.lane.b32.xlu0 %v6474, 24
        %v6968 = vpop.permute.xlu0 %6967
        %6969 = vrot.lane.b32.xlu0 %v6475, 24
        %v6970 = vpop.permute.xlu0 %6969
        %6971 = vrot.lane.b32.xlu0 %v6476, 24
        %v6972 = vpop.permute.xlu0 %6971
        %6973 = vrot.lane.b32.xlu0 %v6477, 24
        %v6974 = vpop.permute.xlu0 %6973
        %6975 = vrot.lane.b32.xlu0 %v6478, 24
        %v6976 = vpop.permute.xlu0 %6975
        %6977 = vrot.lane.b32.xlu0 %v6479, 24
        %v6978 = vpop.permute.xlu0 %6977
        %6979 = vrot.lane.b32.xlu0 %v6480, 24
        %v6980 = vpop.permute.xlu0 %6979
        %6981 = vrot.lane.b32.xlu0 %v6481, 24
        %v6982 = vpop.permute.xlu0 %6981
        %6983 = vrot.lane.b32.xlu0 %v6482, 24
        %v6984 = vpop.permute.xlu0 %6983
        %6985 = vrot.lane.b32.xlu0 %v6483, 24
        %v6986 = vpop.permute.xlu0 %6985
        %6987 = vrot.lane.b32.xlu0 %v6484, 24
        %v6988 = vpop.permute.xlu0 %6987
        %6989 = vrot.lane.b32.xlu0 %v6485, 24
        %v6990 = vpop.permute.xlu0 %6989
        %6991 = vrot.lane.b32.xlu0 %v6486, 24
        %v6992 = vpop.permute.xlu0 %6991
        %6993 = vrot.lane.b32.xlu0 %v6487, 24
        %v6994 = vpop.permute.xlu0 %6993
        %6995 = vrot.lane.b32.xlu0 %v6488, 24
        %v6996 = vpop.permute.xlu0 %6995
        %6997 = vrot.lane.b32.xlu0 %v6489, 24
        %v6998 = vpop.permute.xlu0 %6997
        %6999 = vrot.lane.b32.xlu0 %v6490, 24
        %v7000 = vpop.permute.xlu0 %6999
        %7001 = vrot.lane.b32.xlu0 %v6491, 24
        %v7002 = vpop.permute.xlu0 %7001
        %7003 = vrot.lane.b32.xlu0 %v6492, 24
        %v7004 = vpop.permute.xlu0 %7003
        %7069 = vrot.lane.b32.xlu0 %v6493, 32
        %v7070 = vpop.permute.xlu0 %7069
        %7071 = vrot.lane.b32.xlu0 %v6494, 32
        %v7072 = vpop.permute.xlu0 %7071
        %7073 = vrot.lane.b32.xlu0 %v6495, 32
        %v7074 = vpop.permute.xlu0 %7073
        %7075 = vrot.lane.b32.xlu0 %v6496, 32
        %v7076 = vpop.permute.xlu0 %7075
        %7077 = vrot.lane.b32.xlu0 %v6497, 32
        %v7078 = vpop.permute.xlu0 %7077
        %7079 = vrot.lane.b32.xlu0 %v6498, 32
        %v7080 = vpop.permute.xlu0 %7079
        %7081 = vrot.lane.b32.xlu0 %v6499, 32
        %v7082 = vpop.permute.xlu0 %7081
        %7083 = vrot.lane.b32.xlu0 %v6500, 32
        %v7084 = vpop.permute.xlu0 %7083
        %7085 = vrot.lane.b32.xlu0 %v6501, 32
        %v7086 = vpop.permute.xlu0 %7085
        %7087 = vrot.lane.b32.xlu0 %v6502, 32
        %v7088 = vpop.permute.xlu0 %7087
        %7089 = vrot.lane.b32.xlu0 %v6503, 32
        %v7090 = vpop.permute.xlu0 %7089
        %7091 = vrot.lane.b32.xlu0 %v6504, 32
        %v7092 = vpop.permute.xlu0 %7091
        %7093 = vrot.lane.b32.xlu0 %v6505, 32
        %v7094 = vpop.permute.xlu0 %7093
        %7095 = vrot.lane.b32.xlu0 %v6506, 32
        %v7096 = vpop.permute.xlu0 %7095
        %7097 = vrot.lane.b32.xlu0 %v6507, 32
        %v7098 = vpop.permute.xlu0 %7097
        %7099 = vrot.lane.b32.xlu0 %v6508, 32
        %v7100 = vpop.permute.xlu0 %7099
        %7101 = vrot.lane.b32.xlu0 %v6509, 32
        %v7102 = vpop.permute.xlu0 %7101
        %7103 = vrot.lane.b32.xlu0 %v6510, 32
        %v7104 = vpop.permute.xlu0 %7103
        %7105 = vrot.lane.b32.xlu0 %v6511, 32
        %v7106 = vpop.permute.xlu0 %7105
        %7107 = vrot.lane.b32.xlu0 %v6512, 32
        %v7108 = vpop.permute.xlu0 %7107
        %7109 = vrot.lane.b32.xlu0 %v6513, 32
        %v7110 = vpop.permute.xlu0 %7109
        %7111 = vrot.lane.b32.xlu0 %v6514, 32
        %v7112 = vpop.permute.xlu0 %7111
        %7113 = vrot.lane.b32.xlu0 %v6515, 32
        %v7114 = vpop.permute.xlu0 %7113
        %7115 = vrot.lane.b32.xlu0 %v6516, 32
        %v7116 = vpop.permute.xlu0 %7115
        %7117 = vrot.lane.b32.xlu0 %v6517, 32
        %v7118 = vpop.permute.xlu0 %7117
        %7119 = vrot.lane.b32.xlu0 %v6518, 32
        %v7120 = vpop.permute.xlu0 %7119
        %7121 = vrot.lane.b32.xlu0 %v6519, 32
        %v7122 = vpop.permute.xlu0 %7121
        %7123 = vrot.lane.b32.xlu0 %v6520, 32
        %v7124 = vpop.permute.xlu0 %7123
        %7125 = vrot.lane.b32.xlu0 %v6521, 32
        %v7126 = vpop.permute.xlu0 %7125
        %7127 = vrot.lane.b32.xlu0 %v6522, 32
        %v7128 = vpop.permute.xlu0 %7127
        %7129 = vrot.lane.b32.xlu0 %v6523, 32
        %v7130 = vpop.permute.xlu0 %7129
        %7131 = vrot.lane.b32.xlu0 %v6524, 32
        %v7132 = vpop.permute.xlu0 %7131
        %7197 = vrot.lane.b32.xlu0 %v6525, 40
        %v7198 = vpop.permute.xlu0 %7197
        %7199 = vrot.lane.b32.xlu0 %v6526, 40
        %v7200 = vpop.permute.xlu0 %7199
        %7201 = vrot.lane.b32.xlu0 %v6527, 40
        %v7202 = vpop.permute.xlu0 %7201
        %7203 = vrot.lane.b32.xlu0 %v6528, 40
        %v7204 = vpop.permute.xlu0 %7203
        %7205 = vrot.lane.b32.xlu0 %v6529, 40
        %v7206 = vpop.permute.xlu0 %7205
        %7207 = vrot.lane.b32.xlu0 %v6530, 40
        %v7208 = vpop.permute.xlu0 %7207
        %7209 = vrot.lane.b32.xlu0 %v6531, 40
        %v7210 = vpop.permute.xlu0 %7209
        %7211 = vrot.lane.b32.xlu0 %v6532, 40
        %v7212 = vpop.permute.xlu0 %7211
        %7213 = vrot.lane.b32.xlu0 %v6533, 40
        %v7214 = vpop.permute.xlu0 %7213
        %7215 = vrot.lane.b32.xlu0 %v6534, 40
        %v7216 = vpop.permute.xlu0 %7215
        %7217 = vrot.lane.b32.xlu0 %v6535, 40
        %v7218 = vpop.permute.xlu0 %7217
        %7219 = vrot.lane.b32.xlu0 %v6536, 40
        %v7220 = vpop.permute.xlu0 %7219
        %7221 = vrot.lane.b32.xlu0 %v6537, 40
        %v7222 = vpop.permute.xlu0 %7221
        %7223 = vrot.lane.b32.xlu0 %v6538, 40
        %v7224 = vpop.permute.xlu0 %7223
        %7225 = vrot.lane.b32.xlu0 %v6539, 40
        %v7226 = vpop.permute.xlu0 %7225
        %7227 = vrot.lane.b32.xlu0 %v6540, 40
        %v7228 = vpop.permute.xlu0 %7227
        %7229 = vrot.lane.b32.xlu0 %v6541, 40
        %v7230 = vpop.permute.xlu0 %7229
        %7231 = vrot.lane.b32.xlu0 %v6542, 40
        %v7232 = vpop.permute.xlu0 %7231
        %7233 = vrot.lane.b32.xlu0 %v6543, 40
        %v7234 = vpop.permute.xlu0 %7233
        %7235 = vrot.lane.b32.xlu0 %v6544, 40
        %v7236 = vpop.permute.xlu0 %7235
        %7237 = vrot.lane.b32.xlu0 %v6545, 40
        %v7238 = vpop.permute.xlu0 %7237
        %7239 = vrot.lane.b32.xlu0 %v6546, 40
        %v7240 = vpop.permute.xlu0 %7239
        %7241 = vrot.lane.b32.xlu0 %v6547, 40
        %v7242 = vpop.permute.xlu0 %7241
        %7243 = vrot.lane.b32.xlu0 %v6548, 40
        %v7244 = vpop.permute.xlu0 %7243
        %7245 = vrot.lane.b32.xlu0 %v6549, 40
        %v7246 = vpop.permute.xlu0 %7245
        %7247 = vrot.lane.b32.xlu0 %v6550, 40
        %v7248 = vpop.permute.xlu0 %7247
        %7249 = vrot.lane.b32.xlu0 %v6551, 40
        %v7250 = vpop.permute.xlu0 %7249
        %7251 = vrot.lane.b32.xlu0 %v6552, 40
        %v7252 = vpop.permute.xlu0 %7251
        %7253 = vrot.lane.b32.xlu0 %v6553, 40
        %v7254 = vpop.permute.xlu0 %7253
        %7255 = vrot.lane.b32.xlu0 %v6554, 40
        %v7256 = vpop.permute.xlu0 %7255
        %7257 = vrot.lane.b32.xlu0 %v6555, 40
        %v7258 = vpop.permute.xlu0 %7257
        %7259 = vrot.lane.b32.xlu0 %v6556, 40
        %v7260 = vpop.permute.xlu0 %7259
        %7325 = vrot.lane.b32.xlu0 %v6557, 48
        %v7326 = vpop.permute.xlu0 %7325
        %7327 = vrot.lane.b32.xlu0 %v6558, 48
        %v7328 = vpop.permute.xlu0 %7327
        %7329 = vrot.lane.b32.xlu0 %v6559, 48
        %v7330 = vpop.permute.xlu0 %7329
        %7331 = vrot.lane.b32.xlu0 %v6560, 48
        %v7332 = vpop.permute.xlu0 %7331
        %7333 = vrot.lane.b32.xlu0 %v6561, 48
        %v7334 = vpop.permute.xlu0 %7333
        %7335 = vrot.lane.b32.xlu0 %v6562, 48
        %v7336 = vpop.permute.xlu0 %7335
        %7337 = vrot.lane.b32.xlu0 %v6563, 48
        %v7338 = vpop.permute.xlu0 %7337
        %7339 = vrot.lane.b32.xlu0 %v6564, 48
        %v7340 = vpop.permute.xlu0 %7339
        %7341 = vrot.lane.b32.xlu0 %v6565, 48
        %v7342 = vpop.permute.xlu0 %7341
        %7343 = vrot.lane.b32.xlu0 %v6566, 48
        %v7344 = vpop.permute.xlu0 %7343
        %7345 = vrot.lane.b32.xlu0 %v6567, 48
        %v7346 = vpop.permute.xlu0 %7345
        %7347 = vrot.lane.b32.xlu0 %v6568, 48
        %v7348 = vpop.permute.xlu0 %7347
        %7349 = vrot.lane.b32.xlu0 %v6569, 48
        %v7350 = vpop.permute.xlu0 %7349
        %7351 = vrot.lane.b32.xlu0 %v6570, 48
        %v7352 = vpop.permute.xlu0 %7351
        %7353 = vrot.lane.b32.xlu0 %v6571, 48
        %v7354 = vpop.permute.xlu0 %7353
        %7355 = vrot.lane.b32.xlu0 %v6572, 48
        %v7356 = vpop.permute.xlu0 %7355
        %7357 = vrot.lane.b32.xlu0 %v6573, 48
        %v7358 = vpop.permute.xlu0 %7357
        %7359 = vrot.lane.b32.xlu0 %v6574, 48
        %v7360 = vpop.permute.xlu0 %7359
        %7361 = vrot.lane.b32.xlu0 %v6575, 48
        %v7362 = vpop.permute.xlu0 %7361
        %7363 = vrot.lane.b32.xlu0 %v6576, 48
        %v7364 = vpop.permute.xlu0 %7363
        %7365 = vrot.lane.b32.xlu0 %v6577, 48
        %v7366 = vpop.permute.xlu0 %7365
        %7367 = vrot.lane.b32.xlu0 %v6578, 48
        %v7368 = vpop.permute.xlu0 %7367
        %7369 = vrot.lane.b32.xlu0 %v6579, 48
        %v7370 = vpop.permute.xlu0 %7369
        %7371 = vrot.lane.b32.xlu0 %v6580, 48
        %v7372 = vpop.permute.xlu0 %7371
        %7373 = vrot.lane.b32.xlu0 %v6581, 48
        %v7374 = vpop.permute.xlu0 %7373
        %7375 = vrot.lane.b32.xlu0 %v6582, 48
        %v7376 = vpop.permute.xlu0 %7375
        %7377 = vrot.lane.b32.xlu0 %v6583, 48
        %v7378 = vpop.permute.xlu0 %7377
        %7379 = vrot.lane.b32.xlu0 %v6584, 48
        %v7380 = vpop.permute.xlu0 %7379
        %7381 = vrot.lane.b32.xlu0 %v6585, 48
        %v7382 = vpop.permute.xlu0 %7381
        %7383 = vrot.lane.b32.xlu0 %v6586, 48
        %v7384 = vpop.permute.xlu0 %7383
        %7385 = vrot.lane.b32.xlu0 %v6587, 48
        %v7386 = vpop.permute.xlu0 %7385
        %7387 = vrot.lane.b32.xlu0 %v6588, 48
        %v7388 = vpop.permute.xlu0 %7387
        %7453 = vrot.lane.b32.xlu0 %v6589, 56
        %v7454 = vpop.permute.xlu0 %7453
        %7455 = vrot.lane.b32.xlu0 %v6590, 56
        %v7456 = vpop.permute.xlu0 %7455
        %7457 = vrot.lane.b32.xlu0 %v6591, 56
        %v7458 = vpop.permute.xlu0 %7457
        %7459 = vrot.lane.b32.xlu0 %v6592, 56
        %v7460 = vpop.permute.xlu0 %7459
        %7461 = vrot.lane.b32.xlu0 %v6593, 56
        %v7462 = vpop.permute.xlu0 %7461
        %7463 = vrot.lane.b32.xlu0 %v6594, 56
        %v7464 = vpop.permute.xlu0 %7463
        %7465 = vrot.lane.b32.xlu0 %v6595, 56
        %v7466 = vpop.permute.xlu0 %7465
        %7467 = vrot.lane.b32.xlu0 %v6596, 56
        %v7468 = vpop.permute.xlu0 %7467
        %7469 = vrot.lane.b32.xlu0 %v6597, 56
        %v7470 = vpop.permute.xlu0 %7469
        %7471 = vrot.lane.b32.xlu0 %v6598, 56
        %v7472 = vpop.permute.xlu0 %7471
        %7473 = vrot.lane.b32.xlu0 %v6599, 56
        %v7474 = vpop.permute.xlu0 %7473
        %7475 = vrot.lane.b32.xlu0 %v6600, 56
        %v7476 = vpop.permute.xlu0 %7475
        %7477 = vrot.lane.b32.xlu0 %v6601, 56
        %v7478 = vpop.permute.xlu0 %7477
        %7479 = vrot.lane.b32.xlu0 %v6602, 56
        %v7480 = vpop.permute.xlu0 %7479
        %7481 = vrot.lane.b32.xlu0 %v6603, 56
        %v7482 = vpop.permute.xlu0 %7481
        %7483 = vrot.lane.b32.xlu0 %v6604, 56
        %v7484 = vpop.permute.xlu0 %7483
        %7485 = vrot.lane.b32.xlu0 %v6605, 56
        %v7486 = vpop.permute.xlu0 %7485
        %7487 = vrot.lane.b32.xlu0 %v6606, 56
        %v7488 = vpop.permute.xlu0 %7487
        %7489 = vrot.lane.b32.xlu0 %v6607, 56
        %v7490 = vpop.permute.xlu0 %7489
        %7491 = vrot.lane.b32.xlu0 %v6608, 56
        %v7492 = vpop.permute.xlu0 %7491
        %7493 = vrot.lane.b32.xlu0 %v6609, 56
        %v7494 = vpop.permute.xlu0 %7493
        %7495 = vrot.lane.b32.xlu0 %v6610, 56
        %v7496 = vpop.permute.xlu0 %7495
        %7497 = vrot.lane.b32.xlu0 %v6611, 56
        %v7498 = vpop.permute.xlu0 %7497
        %7499 = vrot.lane.b32.xlu0 %v6612, 56
        %v7500 = vpop.permute.xlu0 %7499
        %7501 = vrot.lane.b32.xlu0 %v6613, 56
        %v7502 = vpop.permute.xlu0 %7501
        %7503 = vrot.lane.b32.xlu0 %v6614, 56
        %v7504 = vpop.permute.xlu0 %7503
        %7505 = vrot.lane.b32.xlu0 %v6615, 56
        %v7506 = vpop.permute.xlu0 %7505
        %7507 = vrot.lane.b32.xlu0 %v6616, 56
        %v7508 = vpop.permute.xlu0 %7507
        %7509 = vrot.lane.b32.xlu0 %v6617, 56
        %v7510 = vpop.permute.xlu0 %7509
        %7511 = vrot.lane.b32.xlu0 %v6618, 56
        %v7512 = vpop.permute.xlu0 %7511
        %7513 = vrot.lane.b32.xlu0 %v6619, 56
        %v7514 = vpop.permute.xlu0 %7513
        %7515 = vrot.lane.b32.xlu0 %v6620, 56
        %v7516 = vpop.permute.xlu0 %7515
        %7581 = vrot.lane.b32.xlu0 %v6621, 64
        %v7582 = vpop.permute.xlu0 %7581
        %7583 = vrot.lane.b32.xlu0 %v6622, 64
        %v7584 = vpop.permute.xlu0 %7583
        %7585 = vrot.lane.b32.xlu0 %v6623, 64
        %v7586 = vpop.permute.xlu0 %7585
        %7587 = vrot.lane.b32.xlu0 %v6624, 64
        %v7588 = vpop.permute.xlu0 %7587
        %7589 = vrot.lane.b32.xlu0 %v6625, 64
        %v7590 = vpop.permute.xlu0 %7589
        %7591 = vrot.lane.b32.xlu0 %v6626, 64
        %v7592 = vpop.permute.xlu0 %7591
        %7593 = vrot.lane.b32.xlu0 %v6627, 64
        %v7594 = vpop.permute.xlu0 %7593
        %7595 = vrot.lane.b32.xlu0 %v6628, 64
        %v7596 = vpop.permute.xlu0 %7595
        %7597 = vrot.lane.b32.xlu0 %v6629, 64
        %v7598 = vpop.permute.xlu0 %7597
        %7599 = vrot.lane.b32.xlu0 %v6630, 64
        %v7600 = vpop.permute.xlu0 %7599
        %7601 = vrot.lane.b32.xlu0 %v6631, 64
        %v7602 = vpop.permute.xlu0 %7601
        %7603 = vrot.lane.b32.xlu0 %v6632, 64
        %v7604 = vpop.permute.xlu0 %7603
        %7605 = vrot.lane.b32.xlu0 %v6633, 64
        %v7606 = vpop.permute.xlu0 %7605
        %7607 = vrot.lane.b32.xlu0 %v6634, 64
        %v7608 = vpop.permute.xlu0 %7607
        %7609 = vrot.lane.b32.xlu0 %v6635, 64
        %v7610 = vpop.permute.xlu0 %7609
        %7611 = vrot.lane.b32.xlu0 %v6636, 64
        %v7612 = vpop.permute.xlu0 %7611
        %7613 = vrot.lane.b32.xlu0 %v6637, 64
        %v7614 = vpop.permute.xlu0 %7613
        %7615 = vrot.lane.b32.xlu0 %v6638, 64
        %v7616 = vpop.permute.xlu0 %7615
        %7617 = vrot.lane.b32.xlu0 %v6639, 64
        %v7618 = vpop.permute.xlu0 %7617
        %7619 = vrot.lane.b32.xlu0 %v6640, 64
        %v7620 = vpop.permute.xlu0 %7619
        %7621 = vrot.lane.b32.xlu0 %v6641, 64
        %v7622 = vpop.permute.xlu0 %7621
        %7623 = vrot.lane.b32.xlu0 %v6642, 64
        %v7624 = vpop.permute.xlu0 %7623
        %7625 = vrot.lane.b32.xlu0 %v6643, 64
        %v7626 = vpop.permute.xlu0 %7625
        %7627 = vrot.lane.b32.xlu0 %v6644, 64
        %v7628 = vpop.permute.xlu0 %7627
        %7629 = vrot.lane.b32.xlu0 %v6645, 64
        %v7630 = vpop.permute.xlu0 %7629
        %7631 = vrot.lane.b32.xlu0 %v6646, 64
        %v7632 = vpop.permute.xlu0 %7631
        %7633 = vrot.lane.b32.xlu0 %v6647, 64
        %v7634 = vpop.permute.xlu0 %7633
        %7635 = vrot.lane.b32.xlu0 %v6648, 64
        %v7636 = vpop.permute.xlu0 %7635
        %7637 = vrot.lane.b32.xlu0 %v6649, 64
        %v7638 = vpop.permute.xlu0 %7637
        %7639 = vrot.lane.b32.xlu0 %v6650, 64
        %v7640 = vpop.permute.xlu0 %7639
        %7641 = vrot.lane.b32.xlu0 %v6651, 64
        %v7642 = vpop.permute.xlu0 %7641
        %7643 = vrot.lane.b32.xlu0 %v6652, 64
        %v7644 = vpop.permute.xlu0 %7643
        %v7677 = vsel %vm250, %v6365, %v6686
        %v7678 = vsel %vm250, %v6366, %v6688
        %v7679 = vsel %vm250, %v6367, %v6690
        %v7680 = vsel %vm250, %v6368, %v6692
        %v7681 = vsel %vm250, %v6369, %v6694
        %v7682 = vsel %vm250, %v6370, %v6696
        %v7683 = vsel %vm250, %v6371, %v6698
        %v7684 = vsel %vm250, %v6372, %v6700
        %v7685 = vsel %vm250, %v6373, %v6702
        %v7686 = vsel %vm250, %v6374, %v6704
        %v7687 = vsel %vm250, %v6375, %v6706
        %v7688 = vsel %vm250, %v6376, %v6708
        %v7689 = vsel %vm250, %v6377, %v6710
        %v7690 = vsel %vm250, %v6378, %v6712
        %v7691 = vsel %vm250, %v6379, %v6714
        %v7692 = vsel %vm250, %v6380, %v6716
        %v7693 = vsel %vm250, %v6381, %v6718
        %v7694 = vsel %vm250, %v6382, %v6720
        %v7695 = vsel %vm250, %v6383, %v6722
        %v7696 = vsel %vm250, %v6384, %v6724
        %v7697 = vsel %vm250, %v6385, %v6726
        %v7698 = vsel %vm250, %v6386, %v6728
        %v7699 = vsel %vm250, %v6387, %v6730
        %v7700 = vsel %vm250, %v6388, %v6732
        %v7701 = vsel %vm250, %v6389, %v6734
        %v7702 = vsel %vm250, %v6390, %v6736
        %v7703 = vsel %vm250, %v6391, %v6738
        %v7704 = vsel %vm250, %v6392, %v6740
        %v7705 = vsel %vm250, %v6393, %v6742
        %v7706 = vsel %vm250, %v6394, %v6744
        %v7707 = vsel %vm250, %v6395, %v6746
        %v7708 = vsel %vm250, %v6396, %v6748
        %v7709 = vsel %vm1770, %v7677, %v6814
        %v7710 = vsel %vm1770, %v7678, %v6816
        %v7711 = vsel %vm1770, %v7679, %v6818
        %v7712 = vsel %vm1770, %v7680, %v6820
        %v7713 = vsel %vm1770, %v7681, %v6822
        %v7714 = vsel %vm1770, %v7682, %v6824
        %v7715 = vsel %vm1770, %v7683, %v6826
        %v7716 = vsel %vm1770, %v7684, %v6828
        %v7717 = vsel %vm1770, %v7685, %v6830
        %v7718 = vsel %vm1770, %v7686, %v6832
        %v7719 = vsel %vm1770, %v7687, %v6834
        %v7720 = vsel %vm1770, %v7688, %v6836
        %v7721 = vsel %vm1770, %v7689, %v6838
        %v7722 = vsel %vm1770, %v7690, %v6840
        %v7723 = vsel %vm1770, %v7691, %v6842
        %v7724 = vsel %vm1770, %v7692, %v6844
        %v7725 = vsel %vm1770, %v7693, %v6846
        %v7726 = vsel %vm1770, %v7694, %v6848
        %v7727 = vsel %vm1770, %v7695, %v6850
        %v7728 = vsel %vm1770, %v7696, %v6852
        %v7729 = vsel %vm1770, %v7697, %v6854
        %v7730 = vsel %vm1770, %v7698, %v6856
        %v7731 = vsel %vm1770, %v7699, %v6858
        %v7732 = vsel %vm1770, %v7700, %v6860
        %v7733 = vsel %vm1770, %v7701, %v6862
        %v7734 = vsel %vm1770, %v7702, %v6864
        %v7735 = vsel %vm1770, %v7703, %v6866
        %v7736 = vsel %vm1770, %v7704, %v6868
        %v7737 = vsel %vm1770, %v7705, %v6870
        %v7738 = vsel %vm1770, %v7706, %v6872
        %v7739 = vsel %vm1770, %v7707, %v6874
        %v7740 = vsel %vm1770, %v7708, %v6876
        %v7741 = vsel %vm1803, %v7709, %v6942
        %v7742 = vsel %vm1803, %v7710, %v6944
        %v7743 = vsel %vm1803, %v7711, %v6946
        %v7744 = vsel %vm1803, %v7712, %v6948
        %v7745 = vsel %vm1803, %v7713, %v6950
        %v7746 = vsel %vm1803, %v7714, %v6952
        %v7747 = vsel %vm1803, %v7715, %v6954
        %v7748 = vsel %vm1803, %v7716, %v6956
        %v7749 = vsel %vm1803, %v7717, %v6958
        %v7750 = vsel %vm1803, %v7718, %v6960
        %v7751 = vsel %vm1803, %v7719, %v6962
        %v7752 = vsel %vm1803, %v7720, %v6964
        %v7753 = vsel %vm1803, %v7721, %v6966
        %v7754 = vsel %vm1803, %v7722, %v6968
        %v7755 = vsel %vm1803, %v7723, %v6970
        %v7756 = vsel %vm1803, %v7724, %v6972
        %v7757 = vsel %vm1803, %v7725, %v6974
        %v7758 = vsel %vm1803, %v7726, %v6976
        %v7759 = vsel %vm1803, %v7727, %v6978
        %v7760 = vsel %vm1803, %v7728, %v6980
        %v7761 = vsel %vm1803, %v7729, %v6982
        %v7762 = vsel %vm1803, %v7730, %v6984
        %v7763 = vsel %vm1803, %v7731, %v6986
        %v7764 = vsel %vm1803, %v7732, %v6988
        %v7765 = vsel %vm1803, %v7733, %v6990
        %v7766 = vsel %vm1803, %v7734, %v6992
        %v7767 = vsel %vm1803, %v7735, %v6994
        %v7768 = vsel %vm1803, %v7736, %v6996
        %v7769 = vsel %vm1803, %v7737, %v6998
        %v7770 = vsel %vm1803, %v7738, %v7000
        %v7771 = vsel %vm1803, %v7739, %v7002
        %v7772 = vsel %vm1803, %v7740, %v7004
        %v7773 = vsel %vm1836, %v7741, %v7070
        %v7774 = vsel %vm1836, %v7742, %v7072
        %v7775 = vsel %vm1836, %v7743, %v7074
        %v7776 = vsel %vm1836, %v7744, %v7076
        %v7777 = vsel %vm1836, %v7745, %v7078
        %v7778 = vsel %vm1836, %v7746, %v7080
        %v7779 = vsel %vm1836, %v7747, %v7082
        %v7780 = vsel %vm1836, %v7748, %v7084
        %v7781 = vsel %vm1836, %v7749, %v7086
        %v7782 = vsel %vm1836, %v7750, %v7088
        %v7783 = vsel %vm1836, %v7751, %v7090
        %v7784 = vsel %vm1836, %v7752, %v7092
        %v7785 = vsel %vm1836, %v7753, %v7094
        %v7786 = vsel %vm1836, %v7754, %v7096
        %v7787 = vsel %vm1836, %v7755, %v7098
        %v7788 = vsel %vm1836, %v7756, %v7100
        %v7789 = vsel %vm1836, %v7757, %v7102
        %v7790 = vsel %vm1836, %v7758, %v7104
        %v7791 = vsel %vm1836, %v7759, %v7106
        %v7792 = vsel %vm1836, %v7760, %v7108
        %v7793 = vsel %vm1836, %v7761, %v7110
        %v7794 = vsel %vm1836, %v7762, %v7112
        %v7795 = vsel %vm1836, %v7763, %v7114
        %v7796 = vsel %vm1836, %v7764, %v7116
        %v7797 = vsel %vm1836, %v7765, %v7118
        %v7798 = vsel %vm1836, %v7766, %v7120
        %v7799 = vsel %vm1836, %v7767, %v7122
        %v7800 = vsel %vm1836, %v7768, %v7124
        %v7801 = vsel %vm1836, %v7769, %v7126
        %v7802 = vsel %vm1836, %v7770, %v7128
        %v7803 = vsel %vm1836, %v7771, %v7130
        %v7804 = vsel %vm1836, %v7772, %v7132
        %v7805 = vsel %vm1869, %v7773, %v7198
        %v7806 = vsel %vm1869, %v7774, %v7200
        %v7807 = vsel %vm1869, %v7775, %v7202
        %v7808 = vsel %vm1869, %v7776, %v7204
        %v7809 = vsel %vm1869, %v7777, %v7206
        %v7810 = vsel %vm1869, %v7778, %v7208
        %v7811 = vsel %vm1869, %v7779, %v7210
        %v7812 = vsel %vm1869, %v7780, %v7212
        %v7813 = vsel %vm1869, %v7781, %v7214
        %v7814 = vsel %vm1869, %v7782, %v7216
        %v7815 = vsel %vm1869, %v7783, %v7218
        %v7816 = vsel %vm1869, %v7784, %v7220
        %v7817 = vsel %vm1869, %v7785, %v7222
        %v7818 = vsel %vm1869, %v7786, %v7224
        %v7819 = vsel %vm1869, %v7787, %v7226
        %v7820 = vsel %vm1869, %v7788, %v7228
        %v7821 = vsel %vm1869, %v7789, %v7230
        %v7822 = vsel %vm1869, %v7790, %v7232
        %v7823 = vsel %vm1869, %v7791, %v7234
        %v7824 = vsel %vm1869, %v7792, %v7236
        %v7825 = vsel %vm1869, %v7793, %v7238
        %v7826 = vsel %vm1869, %v7794, %v7240
        %v7827 = vsel %vm1869, %v7795, %v7242
        %v7828 = vsel %vm1869, %v7796, %v7244
        %v7829 = vsel %vm1869, %v7797, %v7246
        %v7830 = vsel %vm1869, %v7798, %v7248
        %v7831 = vsel %vm1869, %v7799, %v7250
        %v7832 = vsel %vm1869, %v7800, %v7252
        %v7833 = vsel %vm1869, %v7801, %v7254
        %v7834 = vsel %vm1869, %v7802, %v7256
        %v7835 = vsel %vm1869, %v7803, %v7258
        %v7836 = vsel %vm1869, %v7804, %v7260
        %v7837 = vsel %vm1902, %v7805, %v7326
        %v7838 = vsel %vm1902, %v7806, %v7328
        %v7839 = vsel %vm1902, %v7807, %v7330
        %v7840 = vsel %vm1902, %v7808, %v7332
        %v7841 = vsel %vm1902, %v7809, %v7334
        %v7842 = vsel %vm1902, %v7810, %v7336
        %v7843 = vsel %vm1902, %v7811, %v7338
        %v7844 = vsel %vm1902, %v7812, %v7340
        %v7845 = vsel %vm1902, %v7813, %v7342
        %v7846 = vsel %vm1902, %v7814, %v7344
        %v7847 = vsel %vm1902, %v7815, %v7346
        %v7848 = vsel %vm1902, %v7816, %v7348
        %v7849 = vsel %vm1902, %v7817, %v7350
        %v7850 = vsel %vm1902, %v7818, %v7352
        %v7851 = vsel %vm1902, %v7819, %v7354
        %v7852 = vsel %vm1902, %v7820, %v7356
        %v7853 = vsel %vm1902, %v7821, %v7358
        %v7854 = vsel %vm1902, %v7822, %v7360
        %v7855 = vsel %vm1902, %v7823, %v7362
        %v7856 = vsel %vm1902, %v7824, %v7364
        %v7857 = vsel %vm1902, %v7825, %v7366
        %v7858 = vsel %vm1902, %v7826, %v7368
        %v7859 = vsel %vm1902, %v7827, %v7370
        %v7860 = vsel %vm1902, %v7828, %v7372
        %v7861 = vsel %vm1902, %v7829, %v7374
        %v7862 = vsel %vm1902, %v7830, %v7376
        %v7863 = vsel %vm1902, %v7831, %v7378
        %v7864 = vsel %vm1902, %v7832, %v7380
        %v7865 = vsel %vm1902, %v7833, %v7382
        %v7866 = vsel %vm1902, %v7834, %v7384
        %v7867 = vsel %vm1902, %v7835, %v7386
        %v7868 = vsel %vm1902, %v7836, %v7388
        %v7869 = vsel %vm1935, %v7837, %v7454
        %v7870 = vsel %vm1935, %v7838, %v7456
        %v7871 = vsel %vm1935, %v7839, %v7458
        %v7872 = vsel %vm1935, %v7840, %v7460
        %v7873 = vsel %vm1935, %v7841, %v7462
        %v7874 = vsel %vm1935, %v7842, %v7464
        %v7875 = vsel %vm1935, %v7843, %v7466
        %v7876 = vsel %vm1935, %v7844, %v7468
        %v7877 = vsel %vm1935, %v7845, %v7470
        %v7878 = vsel %vm1935, %v7846, %v7472
        %v7879 = vsel %vm1935, %v7847, %v7474
        %v7880 = vsel %vm1935, %v7848, %v7476
        %v7881 = vsel %vm1935, %v7849, %v7478
        %v7882 = vsel %vm1935, %v7850, %v7480
        %v7883 = vsel %vm1935, %v7851, %v7482
        %v7884 = vsel %vm1935, %v7852, %v7484
        %v7885 = vsel %vm1935, %v7853, %v7486
        %v7886 = vsel %vm1935, %v7854, %v7488
        %v7887 = vsel %vm1935, %v7855, %v7490
        %v7888 = vsel %vm1935, %v7856, %v7492
        %v7889 = vsel %vm1935, %v7857, %v7494
        %v7890 = vsel %vm1935, %v7858, %v7496
        %v7891 = vsel %vm1935, %v7859, %v7498
        %v7892 = vsel %vm1935, %v7860, %v7500
        %v7893 = vsel %vm1935, %v7861, %v7502
        %v7894 = vsel %vm1935, %v7862, %v7504
        %v7895 = vsel %vm1935, %v7863, %v7506
        %v7896 = vsel %vm1935, %v7864, %v7508
        %v7897 = vsel %vm1935, %v7865, %v7510
        %v7898 = vsel %vm1935, %v7866, %v7512
        %v7899 = vsel %vm1935, %v7867, %v7514
        %v7900 = vsel %vm1935, %v7868, %v7516
        %v7901 = vsel %vm1968, %v7869, %v7582
        %v7902 = vsel %vm1968, %v7870, %v7584
        %v7903 = vsel %vm1968, %v7871, %v7586
        %v7904 = vsel %vm1968, %v7872, %v7588
        %v7905 = vsel %vm1968, %v7873, %v7590
        %v7906 = vsel %vm1968, %v7874, %v7592
        %v7907 = vsel %vm1968, %v7875, %v7594
        %v7908 = vsel %vm1968, %v7876, %v7596
        %v7909 = vsel %vm1968, %v7877, %v7598
        %v7910 = vsel %vm1968, %v7878, %v7600
        %v7911 = vsel %vm1968, %v7879, %v7602
        %v7912 = vsel %vm1968, %v7880, %v7604
        %v7913 = vsel %vm1968, %v7881, %v7606
        %v7914 = vsel %vm1968, %v7882, %v7608
        %v7915 = vsel %vm1968, %v7883, %v7610
        %v7916 = vsel %vm1968, %v7884, %v7612
        %v7917 = vsel %vm1968, %v7885, %v7614
        %v7918 = vsel %vm1968, %v7886, %v7616
        %v7919 = vsel %vm1968, %v7887, %v7618
        %v7920 = vsel %vm1968, %v7888, %v7620
        %v7921 = vsel %vm1968, %v7889, %v7622
        %v7922 = vsel %vm1968, %v7890, %v7624
        %v7923 = vsel %vm1968, %v7891, %v7626
        %v7924 = vsel %vm1968, %v7892, %v7628
        %v7925 = vsel %vm1968, %v7893, %v7630
        %v7926 = vsel %vm1968, %v7894, %v7632
        %v7927 = vsel %vm1968, %v7895, %v7634
        %v7928 = vsel %vm1968, %v7896, %v7636
        %v7929 = vsel %vm1968, %v7897, %v7638
        %v7930 = vsel %vm1968, %v7898, %v7640
        %v7931 = vsel %vm1968, %v7899, %v7642
        %v7932 = vsel %vm1968, %v7900, %v7644
        %v7933 = vpack.c.bf16 %v7902, %v7901
        %v7934 = vpack.c.bf16 %v7904, %v7903
        %v7935 = vpack.c.bf16 %v7906, %v7905
        %v7936 = vpack.c.bf16 %v7908, %v7907
        %v7937 = vpack.c.bf16 %v7910, %v7909
        %v7938 = vpack.c.bf16 %v7912, %v7911
        %v7939 = vpack.c.bf16 %v7914, %v7913
        %v7940 = vpack.c.bf16 %v7916, %v7915
        %v7941 = vpack.c.bf16 %v7918, %v7917
        %v7942 = vpack.c.bf16 %v7920, %v7919
        %v7943 = vpack.c.bf16 %v7922, %v7921
        %v7944 = vpack.c.bf16 %v7924, %v7923
        %v7945 = vpack.c.bf16 %v7926, %v7925
        %v7946 = vpack.c.bf16 %v7928, %v7927
        %v7947 = vpack.c.bf16 %v7930, %v7929
        %v7948 = vpack.c.bf16 %v7932, %v7931
        %s7949 = scalar_lea.vmem %s1, 108
        %v7950 = vld [vmem:[%s7949] sm:$0xf]
        %v7951 = vld [vmem:[%s7949 + $0x4] sm:$0xf]
        %v7952 = vld [vmem:[%s7949 + $0x8] sm:$0xf]
        %v7953 = vld [vmem:[%s7949 + $0xc] sm:$0xf]
        %v7954 = vld [vmem:[%s7949 + $0x10] sm:$0xf]
        %v7955 = vld [vmem:[%s7949 + $0x14] sm:$0xf]
        %v7956 = vld [vmem:[%s7949 + $0x18] sm:$0xf]
        %v7957 = vld [vmem:[%s7949 + $0x1c] sm:$0xf]
        %v7958 = vld [vmem:[%s7949 + $0x20] sm:$0xf]
        %v7968 = vunpack.c.l.b16 %v7950
        %v7969 = vunpack.c.l.b16 %v7951
        %v7970 = vunpack.c.l.b16 %v7952
        %v7971 = vunpack.c.l.b16 %v7953
        %v7972 = vunpack.c.l.b16 %v7954
        %v7973 = vunpack.c.l.b16 %v7955
        %v7974 = vunpack.c.l.b16 %v7956
        %v7975 = vunpack.c.l.b16 %v7957
        %v7976 = vunpack.c.l.b16 %v7958
        %v7977 = vpack.c.b16 %v7969, %v7968
        %v7978 = vpack.c.b16 %v7971, %v7970
        %v7979 = vpack.c.b16 %v7973, %v7972
        %v7980 = vpack.c.b16 %v7975, %v7974
        %v7981 = vpack.c.b16 %v7976, %v7976
        %v7987 = vsel %vm2053, %v7933, 0
        %v7990 = vsel %vm2053, %v7934, 0
        %v7993 = vsel %vm2053, %v7935, 0
        %v7996 = vsel %vm2053, %v7936, 0
        %v7999 = vsel %vm2053, %v7937, 0
        %v8002 = vsel %vm2053, %v7938, 0
        %v8005 = vsel %vm2053, %v7939, 0
        %v8008 = vsel %vm2053, %v7940, 0
        %v8011 = vsel %vm2053, %v7941, 0
        %v8014 = vsel %vm2053, %v7942, 0
        %v8017 = vsel %vm2053, %v7943, 0
        %v8020 = vsel %vm2053, %v7944, 0
        %v8023 = vsel %vm2053, %v7945, 0
        %v8026 = vsel %vm2053, %v7946, 0
        %v8029 = vsel %vm2053, %v7947, 0
        %v8032 = vsel %vm2053, %v7948, 0
        %v8035 = vsel %vm2102, %v7981, 0
        %8037 = vmatprep.subr.bf16.mxu0 0
        %8038 = vmatpush1.bf16.msra.mxu0 %v7977
        %8039 = vmatprep.subr.bf16.mxu0 0
        %8040 = vmatpush1.bf16.msra.mxu0 %v7978
        %8041 = vmatprep.subr.bf16.mxu0 0
        %8042 = vmatpush1.bf16.msra.mxu0 %v7979
        %8043 = vmatprep.subr.bf16.mxu0 0
        %8044 = vmatpush1.bf16.msra.mxu0 %v7980
        %8045 = vmatprep.subr.bf16.mxu0 0
        %8046 = vmatpush1.bf16.msra.mxu0 %v8035
        %8047 = vmatprep.subr.bf16.mxu0 0
        %8048 = vmatpush1.bf16.msra.mxu0 0
        %8049 = vmatprep.subr.bf16.mxu0 0
        %8050 = vmatpush1.bf16.msra.mxu0 0
        %8051 = vmatprep.subr.bf16.mxu0 0
        %8052 = vmatpush1.bf16.msra.mxu0 0
        %8053 = vmatprep.subr.bf16.mxu0 0
        %8054 = vmatpush1.bf16.msra.mxu0 0
        %8055 = vmatprep.subr.bf16.mxu0 0
        %8056 = vmatpush1.bf16.msra.mxu0 0
        %8057 = vmatprep.subr.bf16.mxu0 0
        %8058 = vmatpush1.bf16.msra.mxu0 0
        %8059 = vmatprep.subr.bf16.mxu0 0
        %8060 = vmatpush1.bf16.msra.mxu0 0
        %8061 = vmatprep.subr.bf16.mxu0 0
        %8062 = vmatpush1.bf16.msra.mxu0 0
        %8063 = vmatprep.subr.bf16.mxu0 0
        %8064 = vmatpush1.bf16.msra.mxu0 0
        %8065 = vmatprep.subr.bf16.mxu0 0
        %8066 = vmatpush1.bf16.msra.mxu0 0
        %8067 = vmatprep.subr.bf16.mxu0 0
        %8068 = vmatpush1.bf16.msra.mxu0 0
        %8069 = vmatprep.mubr.bf16.mxu0 0
        %8070 = vmatmul.mubr.bf16.gmra.mrb[0].mxu0 %v7987
        %v8071 = vpop.f32.mrb[0].mxu0
        %v8072 = vadd.f32 0.0, %v8071
        %v8073 = vpop.f32.mrb[0].mxu0
        %v8074 = vpop.f32.mrb[0].mxu0
        %v8075 = vadd.f32 0.0, %v8074
        %v8076 = vpop.f32.mrb[0].mxu0
        %8077 = vmatprep.mubr.bf16.mxu0 0
        %8078 = vmatmul.mubr.bf16.gmra.mrb[0].mxu0 %v7990
        %v8079 = vpop.f32.mrb[0].mxu0
        %v8080 = vadd.f32 0.0, %v8079
        %v8081 = vpop.f32.mrb[0].mxu0
        %v8082 = vpop.f32.mrb[0].mxu0
        %v8083 = vadd.f32 0.0, %v8082
        %v8084 = vpop.f32.mrb[0].mxu0
        %8085 = vmatprep.mubr.bf16.mxu0 0
        %8086 = vmatmul.mubr.bf16.gmra.mrb[0].mxu0 %v7993
        %v8087 = vpop.f32.mrb[0].mxu0
        %v8088 = vadd.f32 0.0, %v8087
        %v8089 = vpop.f32.mrb[0].mxu0
        %v8090 = vpop.f32.mrb[0].mxu0
        %v8091 = vadd.f32 0.0, %v8090
        %v8092 = vpop.f32.mrb[0].mxu0
        %8093 = vmatprep.mubr.bf16.mxu0 0
        %8094 = vmatmul.mubr.bf16.gmra.mrb[0].mxu0 %v7996
        %v8095 = vpop.f32.mrb[0].mxu0
        %v8096 = vadd.f32 0.0, %v8095
        %v8097 = vpop.f32.mrb[0].mxu0
        %v8098 = vpop.f32.mrb[0].mxu0
        %v8099 = vadd.f32 0.0, %v8098
        %v8100 = vpop.f32.mrb[0].mxu0
        %8101 = vmatprep.mubr.bf16.mxu0 0
        %8102 = vmatmul.mubr.bf16.gmra.mrb[0].mxu0 %v7999
        %v8103 = vpop.f32.mrb[0].mxu0
        %v8104 = vadd.f32 0.0, %v8103
        %v8105 = vpop.f32.mrb[0].mxu0
        %v8106 = vpop.f32.mrb[0].mxu0
        %v8107 = vadd.f32 0.0, %v8106
        %v8108 = vpop.f32.mrb[0].mxu0
        %8109 = vmatprep.mubr.bf16.mxu0 0
        %8110 = vmatmul.mubr.bf16.gmra.mrb[0].mxu0 %v8002
        %v8111 = vpop.f32.mrb[0].mxu0
        %v8112 = vadd.f32 0.0, %v8111
        %v8113 = vpop.f32.mrb[0].mxu0
        %v8114 = vpop.f32.mrb[0].mxu0
        %v8115 = vadd.f32 0.0, %v8114
        %v8116 = vpop.f32.mrb[0].mxu0
        %8117 = vmatprep.mubr.bf16.mxu0 0
        %8118 = vmatmul.mubr.bf16.gmra.mrb[0].mxu0 %v8005
        %v8119 = vpop.f32.mrb[0].mxu0
        %v8120 = vadd.f32 0.0, %v8119
        %v8121 = vpop.f32.mrb[0].mxu0
        %v8122 = vpop.f32.mrb[0].mxu0
        %v8123 = vadd.f32 0.0, %v8122
        %v8124 = vpop.f32.mrb[0].mxu0
        %8125 = vmatprep.mubr.bf16.mxu0 0
        %8126 = vmatmul.mubr.bf16.gmra.mrb[0].mxu0 %v8008
        %v8127 = vpop.f32.mrb[0].mxu0
        %v8128 = vadd.f32 0.0, %v8127
        %v8129 = vpop.f32.mrb[0].mxu0
        %v8130 = vpop.f32.mrb[0].mxu0
        %v8131 = vadd.f32 0.0, %v8130
        %v8132 = vpop.f32.mrb[0].mxu0
        %8133 = vmatprep.mubr.bf16.mxu0 0
        %8134 = vmatmul.mubr.bf16.gmra.mrb[0].mxu0 %v8011
        %v8135 = vpop.f32.mrb[0].mxu0
        %v8136 = vadd.f32 0.0, %v8135
        %v8137 = vpop.f32.mrb[0].mxu0
        %v8138 = vpop.f32.mrb[0].mxu0
        %v8139 = vadd.f32 0.0, %v8138
        %v8140 = vpop.f32.mrb[0].mxu0
        %8141 = vmatprep.mubr.bf16.mxu0 0
        %8142 = vmatmul.mubr.bf16.gmra.mrb[0].mxu0 %v8014
        %v8143 = vpop.f32.mrb[0].mxu0
        %v8144 = vadd.f32 0.0, %v8143
        %v8145 = vpop.f32.mrb[0].mxu0
        %v8146 = vpop.f32.mrb[0].mxu0
        %v8147 = vadd.f32 0.0, %v8146
        %v8148 = vpop.f32.mrb[0].mxu0
        %8149 = vmatprep.mubr.bf16.mxu0 0
        %8150 = vmatmul.mubr.bf16.gmra.mrb[0].mxu0 %v8017
        %v8151 = vpop.f32.mrb[0].mxu0
        %v8152 = vadd.f32 0.0, %v8151
        %v8153 = vpop.f32.mrb[0].mxu0
        %v8154 = vpop.f32.mrb[0].mxu0
        %v8155 = vadd.f32 0.0, %v8154
        %v8156 = vpop.f32.mrb[0].mxu0
        %8157 = vmatprep.mubr.bf16.mxu0 0
        %8158 = vmatmul.mubr.bf16.gmra.mrb[0].mxu0 %v8020
        %v8159 = vpop.f32.mrb[0].mxu0
        %v8160 = vadd.f32 0.0, %v8159
        %v8161 = vpop.f32.mrb[0].mxu0
        %v8162 = vpop.f32.mrb[0].mxu0
        %v8163 = vadd.f32 0.0, %v8162
        %v8164 = vpop.f32.mrb[0].mxu0
        %8165 = vmatprep.mubr.bf16.mxu0 0
        %8166 = vmatmul.mubr.bf16.gmra.mrb[0].mxu0 %v8023
        %v8167 = vpop.f32.mrb[0].mxu0
        %v8168 = vadd.f32 0.0, %v8167
        %v8169 = vpop.f32.mrb[0].mxu0
        %v8170 = vpop.f32.mrb[0].mxu0
        %v8171 = vadd.f32 0.0, %v8170
        %v8172 = vpop.f32.mrb[0].mxu0
        %8173 = vmatprep.mubr.bf16.mxu0 0
        %8174 = vmatmul.mubr.bf16.gmra.mrb[0].mxu0 %v8026
        %v8175 = vpop.f32.mrb[0].mxu0
        %v8176 = vadd.f32 0.0, %v8175
        %v8177 = vpop.f32.mrb[0].mxu0
        %v8178 = vpop.f32.mrb[0].mxu0
        %v8179 = vadd.f32 0.0, %v8178
        %v8180 = vpop.f32.mrb[0].mxu0
        %8181 = vmatprep.mubr.bf16.mxu0 0
        %8182 = vmatmul.mubr.bf16.gmra.mrb[0].mxu0 %v8029
        %v8183 = vpop.f32.mrb[0].mxu0
        %v8184 = vadd.f32 0.0, %v8183
        %v8185 = vpop.f32.mrb[0].mxu0
        %v8186 = vpop.f32.mrb[0].mxu0
        %v8187 = vadd.f32 0.0, %v8186
        %v8188 = vpop.f32.mrb[0].mxu0
        %8189 = vmatprep.mubr.bf16.mxu0 0
        %8190 = vmatmul.mubr.bf16.gmra.mrb[0].mxu0 %v8032
        %v8191 = vpop.f32.mrb[0].mxu0
        %v8192 = vadd.f32 0.0, %v8191
        %v8193 = vpop.f32.mrb[0].mxu0
        %v8194 = vpop.f32.mrb[0].mxu0
        %v8195 = vadd.f32 0.0, %v8194
        %v8196 = vpop.f32.mrb[0].mxu0
        %8197 = vdwg.mxu0
        %s8198 = scalar_lea.vmem %s2, 3
        %v8199 = vld [vmem:[%s8198] sm:$0x1]
        %v8201 = vlaneseq
        %v8202 = vshrl.u32 %v8201, 7
        %v8203 = vsub.s32 0, %v8202
        %v8204 = vrot.slane %v8199, %v8203
        %v8206 = vmul.f32 %v8072, %v8204
        %v8207 = vmul.f32 %v8075, %v8204
        %v8208 = vmul.f32 %v8080, %v8204
        %v8209 = vmul.f32 %v8083, %v8204
        %v8210 = vmul.f32 %v8088, %v8204
        %v8211 = vmul.f32 %v8091, %v8204
        %v8212 = vmul.f32 %v8096, %v8204
        %v8213 = vmul.f32 %v8099, %v8204
        %v8214 = vmul.f32 %v8104, %v8204
        %v8215 = vmul.f32 %v8107, %v8204
        %v8216 = vmul.f32 %v8112, %v8204
        %v8217 = vmul.f32 %v8115, %v8204
        %v8218 = vmul.f32 %v8120, %v8204
        %v8219 = vmul.f32 %v8123, %v8204
        %v8220 = vmul.f32 %v8128, %v8204
        %v8221 = vmul.f32 %v8131, %v8204
        %v8222 = vmul.f32 %v8136, %v8204
        %v8223 = vmul.f32 %v8139, %v8204
        %v8224 = vmul.f32 %v8144, %v8204
        %v8225 = vmul.f32 %v8147, %v8204
        %v8226 = vmul.f32 %v8152, %v8204
        %v8227 = vmul.f32 %v8155, %v8204
        %v8228 = vmul.f32 %v8160, %v8204
        %v8229 = vmul.f32 %v8163, %v8204
        %v8230 = vmul.f32 %v8168, %v8204
        %v8231 = vmul.f32 %v8171, %v8204
        %v8232 = vmul.f32 %v8176, %v8204
        %v8233 = vmul.f32 %v8179, %v8204
        %v8234 = vmul.f32 %v8184, %v8204
        %v8235 = vmul.f32 %v8187, %v8204
        %v8236 = vmul.f32 %v8192, %v8204
        %v8237 = vmul.f32 %v8195, %v8204
        %s8238 = scalar_lea.vmem %s3, 3
        %v8239 = vld [vmem:[%s8238] sm:$0x1]
        %v8241 = vlaneseq
        %v8242 = vshrl.u32 %v8241, 7
        %v8243 = vsub.s32 0, %v8242
        %v8244 = vrot.slane %v8239, %v8243
        %v8246 = vadd.f32 %v8206, %v8244
        %v8247 = vadd.f32 %v8207, %v8244
        %v8248 = vadd.f32 %v8208, %v8244
        %v8249 = vadd.f32 %v8209, %v8244
        %v8250 = vadd.f32 %v8210, %v8244
        %v8251 = vadd.f32 %v8211, %v8244
        %v8252 = vadd.f32 %v8212, %v8244
        %v8253 = vadd.f32 %v8213, %v8244
        %v8254 = vadd.f32 %v8214, %v8244
        %v8255 = vadd.f32 %v8215, %v8244
        %v8256 = vadd.f32 %v8216, %v8244
        %v8257 = vadd.f32 %v8217, %v8244
        %v8258 = vadd.f32 %v8218, %v8244
        %v8259 = vadd.f32 %v8219, %v8244
        %v8260 = vadd.f32 %v8220, %v8244
        %v8261 = vadd.f32 %v8221, %v8244
        %v8262 = vadd.f32 %v8222, %v8244
        %v8263 = vadd.f32 %v8223, %v8244
        %v8264 = vadd.f32 %v8224, %v8244
        %v8265 = vadd.f32 %v8225, %v8244
        %v8266 = vadd.f32 %v8226, %v8244
        %v8267 = vadd.f32 %v8227, %v8244
        %v8268 = vadd.f32 %v8228, %v8244
        %v8269 = vadd.f32 %v8229, %v8244
        %v8270 = vadd.f32 %v8230, %v8244
        %v8271 = vadd.f32 %v8231, %v8244
        %v8272 = vadd.f32 %v8232, %v8244
        %v8273 = vadd.f32 %v8233, %v8244
        %v8274 = vadd.f32 %v8234, %v8244
        %v8275 = vadd.f32 %v8235, %v8244
        %v8276 = vadd.f32 %v8236, %v8244
        %v8277 = vadd.f32 %v8237, %v8244
        %v8278 = vmax.f32 %v8246, 0.0
        %v8279 = vmax.f32 %v8247, 0.0
        %v8280 = vmax.f32 %v8248, 0.0
        %v8281 = vmax.f32 %v8249, 0.0
        %v8282 = vmax.f32 %v8250, 0.0
        %v8283 = vmax.f32 %v8251, 0.0
        %v8284 = vmax.f32 %v8252, 0.0
        %v8285 = vmax.f32 %v8253, 0.0
        %v8286 = vmax.f32 %v8254, 0.0
        %v8287 = vmax.f32 %v8255, 0.0
        %v8288 = vmax.f32 %v8256, 0.0
        %v8289 = vmax.f32 %v8257, 0.0
        %v8290 = vmax.f32 %v8258, 0.0
        %v8291 = vmax.f32 %v8259, 0.0
        %v8292 = vmax.f32 %v8260, 0.0
        %v8293 = vmax.f32 %v8261, 0.0
        %v8294 = vmax.f32 %v8262, 0.0
        %v8295 = vmax.f32 %v8263, 0.0
        %v8296 = vmax.f32 %v8264, 0.0
        %v8297 = vmax.f32 %v8265, 0.0
        %v8298 = vmax.f32 %v8266, 0.0
        %v8299 = vmax.f32 %v8267, 0.0
        %v8300 = vmax.f32 %v8268, 0.0
        %v8301 = vmax.f32 %v8269, 0.0
        %v8302 = vmax.f32 %v8270, 0.0
        %v8303 = vmax.f32 %v8271, 0.0
        %v8304 = vmax.f32 %v8272, 0.0
        %v8305 = vmax.f32 %v8273, 0.0
        %v8306 = vmax.f32 %v8274, 0.0
        %v8307 = vmax.f32 %v8275, 0.0
        %v8308 = vmax.f32 %v8276, 0.0
        %v8309 = vmax.f32 %v8277, 0.0
        %8310 = vst.msk [vmem:[%s392 + $0x1] sm:$0xff] %vm250, %v8278
        %8311 = vst.msk [vmem:[%s392 + $0x9] sm:$0xff] %vm250, %v8279
        %8312 = vst.msk [vmem:[%s392 + $0x19] sm:$0xff] %vm250, %v8280
        %8313 = vst.msk [vmem:[%s392 + $0x21] sm:$0xff] %vm250, %v8281
        %8314 = vst.msk [vmem:[%s392 + $0x31] sm:$0xff] %vm250, %v8282
        %8315 = vst.msk [vmem:[%s392 + $0x39] sm:$0xff] %vm250, %v8283
        %8316 = vst.msk [vmem:[%s392 + $0x49] sm:$0xff] %vm250, %v8284
        %8317 = vst.msk [vmem:[%s392 + $0x51] sm:$0xff] %vm250, %v8285
        %8318 = vst.msk [vmem:[%s392 + $0x61] sm:$0xff] %vm250, %v8286
        %8319 = vst.msk [vmem:[%s392 + $0x69] sm:$0xff] %vm250, %v8287
        %8320 = vst.msk [vmem:[%s392 + $0x79] sm:$0xff] %vm250, %v8288
        %8321 = vst.msk [vmem:[%s392 + $0x81] sm:$0xff] %vm250, %v8289
        %8322 = vst.msk [vmem:[%s392 + $0x91] sm:$0xff] %vm250, %v8290
        %8323 = vst.msk [vmem:[%s392 + $0x99] sm:$0xff] %vm250, %v8291
        %8324 = vst.msk [vmem:[%s392 + $0xa9] sm:$0xff] %vm250, %v8292
        %8325 = vst.msk [vmem:[%s392 + $0xb1] sm:$0xff] %vm250, %v8293
        %8326 = vst.msk [vmem:[%s392 + $0xc1] sm:$0xff] %vm250, %v8294
        %8327 = vst.msk [vmem:[%s392 + $0xc9] sm:$0xff] %vm250, %v8295
        %8328 = vst.msk [vmem:[%s392 + $0xd9] sm:$0xff] %vm250, %v8296
        %8329 = vst.msk [vmem:[%s392 + $0xe1] sm:$0xff] %vm250, %v8297
        %8330 = vst.msk [vmem:[%s392 + $0xf1] sm:$0xff] %vm250, %v8298
        %8331 = vst.msk [vmem:[%s392 + $0xf9] sm:$0xff] %vm250, %v8299
        %8332 = vst.msk [vmem:[%s392 + $0x109] sm:$0xff] %vm250, %v8300
        %8333 = vst.msk [vmem:[%s392 + $0x111] sm:$0xff] %vm250, %v8301
        %8334 = vst.msk [vmem:[%s392 + $0x121] sm:$0xff] %vm250, %v8302
        %8335 = vst.msk [vmem:[%s392 + $0x129] sm:$0xff] %vm250, %v8303
        %8336 = vst.msk [vmem:[%s392 + $0x139] sm:$0xff] %vm250, %v8304
        %8337 = vst.msk [vmem:[%s392 + $0x141] sm:$0xff] %vm250, %v8305
        %8338 = vst.msk [vmem:[%s392 + $0x151] sm:$0xff] %vm250, %v8306
        %8339 = vst.msk [vmem:[%s392 + $0x159] sm:$0xff] %vm250, %v8307
        %8340 = vst.msk [vmem:[%s392 + $0x169] sm:$0xff] %vm250, %v8308
        %8341 = vst.msk [vmem:[%s392 + $0x171] sm:$0xff] %vm250, %v8309
        %v8342 = vld [vmem:[%s392 + $0x1] sm:$0xff]
        %v8343 = vld [vmem:[%s392 + $0x9] sm:$0xff]
        %v8344 = vld [vmem:[%s392 + $0x19] sm:$0xff]
        %v8345 = vld [vmem:[%s392 + $0x21] sm:$0xff]
        %v8346 = vld [vmem:[%s392 + $0x31] sm:$0xff]
        %v8347 = vld [vmem:[%s392 + $0x39] sm:$0xff]
        %v8348 = vld [vmem:[%s392 + $0x49] sm:$0xff]
        %v8349 = vld [vmem:[%s392 + $0x51] sm:$0xff]
        %v8350 = vld [vmem:[%s392 + $0x61] sm:$0xff]
        %v8351 = vld [vmem:[%s392 + $0x69] sm:$0xff]
        %v8352 = vld [vmem:[%s392 + $0x79] sm:$0xff]
        %v8353 = vld [vmem:[%s392 + $0x81] sm:$0xff]
        %v8354 = vld [vmem:[%s392 + $0x91] sm:$0xff]
        %v8355 = vld [vmem:[%s392 + $0x99] sm:$0xff]
        %v8356 = vld [vmem:[%s392 + $0xa9] sm:$0xff]
        %v8357 = vld [vmem:[%s392 + $0xb1] sm:$0xff]
        %v8358 = vld [vmem:[%s392 + $0xc1] sm:$0xff]
        %v8359 = vld [vmem:[%s392 + $0xc9] sm:$0xff]
        %v8360 = vld [vmem:[%s392 + $0xd9] sm:$0xff]
        %v8361 = vld [vmem:[%s392 + $0xe1] sm:$0xff]
        %v8362 = vld [vmem:[%s392 + $0xf1] sm:$0xff]
        %v8363 = vld [vmem:[%s392 + $0xf9] sm:$0xff]
        %v8364 = vld [vmem:[%s392 + $0x109] sm:$0xff]
        %v8365 = vld [vmem:[%s392 + $0x111] sm:$0xff]
        %v8366 = vld [vmem:[%s392 + $0x121] sm:$0xff]
        %v8367 = vld [vmem:[%s392 + $0x129] sm:$0xff]
        %v8368 = vld [vmem:[%s392 + $0x139] sm:$0xff]
        %v8369 = vld [vmem:[%s392 + $0x141] sm:$0xff]
        %v8370 = vld [vmem:[%s392 + $0x151] sm:$0xff]
        %v8371 = vld [vmem:[%s392 + $0x159] sm:$0xff]
        %v8372 = vld [vmem:[%s392 + $0x169] sm:$0xff]
        %v8373 = vld [vmem:[%s392 + $0x171] sm:$0xff]
        %v8374 = vsel %vm250, %v8342, 0.0
        %v8375 = vsel %vm250, %v8343, 0.0
        %v8376 = vadd.f32 %v8374, %v8375
        %v8377 = vsel %vm250, %v8344, 0.0
        %v8378 = vadd.f32 %v8376, %v8377
        %v8379 = vsel %vm250, %v8345, 0.0
        %v8380 = vadd.f32 %v8378, %v8379
        %v8381 = vsel %vm250, %v8346, 0.0
        %v8382 = vadd.f32 %v8380, %v8381
        %v8383 = vsel %vm250, %v8347, 0.0
        %v8384 = vadd.f32 %v8382, %v8383
        %v8385 = vsel %vm250, %v8348, 0.0
        %v8386 = vadd.f32 %v8384, %v8385
        %v8387 = vsel %vm250, %v8349, 0.0
        %v8388 = vadd.f32 %v8386, %v8387
        %v8389 = vsel %vm250, %v8350, 0.0
        %v8390 = vadd.f32 %v8388, %v8389
        %v8391 = vsel %vm250, %v8351, 0.0
        %v8392 = vadd.f32 %v8390, %v8391
        %v8393 = vsel %vm250, %v8352, 0.0
        %v8394 = vadd.f32 %v8392, %v8393
        %v8395 = vsel %vm250, %v8353, 0.0
        %v8396 = vadd.f32 %v8394, %v8395
        %v8397 = vsel %vm250, %v8354, 0.0
        %v8398 = vadd.f32 %v8396, %v8397
        %v8399 = vsel %vm250, %v8355, 0.0
        %v8400 = vadd.f32 %v8398, %v8399
        %v8401 = vsel %vm250, %v8356, 0.0
        %v8402 = vadd.f32 %v8400, %v8401
        %v8403 = vsel %vm250, %v8357, 0.0
        %v8404 = vadd.f32 %v8402, %v8403
        %v8405 = vsel %vm250, %v8358, 0.0
        %v8406 = vadd.f32 %v8404, %v8405
        %v8407 = vsel %vm250, %v8359, 0.0
        %v8408 = vadd.f32 %v8406, %v8407
        %v8409 = vsel %vm250, %v8360, 0.0
        %v8410 = vadd.f32 %v8408, %v8409
        %v8411 = vsel %vm250, %v8361, 0.0
        %v8412 = vadd.f32 %v8410, %v8411
        %v8413 = vsel %vm250, %v8362, 0.0
        %v8414 = vadd.f32 %v8412, %v8413
        %v8415 = vsel %vm250, %v8363, 0.0
        %v8416 = vadd.f32 %v8414, %v8415
        %v8417 = vsel %vm250, %v8364, 0.0
        %v8418 = vadd.f32 %v8416, %v8417
        %v8419 = vsel %vm250, %v8365, 0.0
        %v8420 = vadd.f32 %v8418, %v8419
        %v8421 = vsel %vm250, %v8366, 0.0
        %v8422 = vadd.f32 %v8420, %v8421
        %v8423 = vsel %vm250, %v8367, 0.0
        %v8424 = vadd.f32 %v8422, %v8423
        %v8425 = vsel %vm250, %v8368, 0.0
        %v8426 = vadd.f32 %v8424, %v8425
        %v8427 = vsel %vm250, %v8369, 0.0
        %v8428 = vadd.f32 %v8426, %v8427
        %v8429 = vsel %vm250, %v8370, 0.0
        %v8430 = vadd.f32 %v8428, %v8429
        %v8431 = vsel %vm250, %v8371, 0.0
        %v8432 = vadd.f32 %v8430, %v8431
        %v8433 = vsel %vm250, %v8372, 0.0
        %v8434 = vadd.f32 %v8432, %v8433
        %v8435 = vsel %vm250, %v8373, 0.0
        %v8436 = vadd.f32 %v8434, %v8435
        %v8437 = vrot.slane %v8436, 4
        %v8438 = vadd.f32 %v8436, %v8437
        %v8439 = vrot.slane %v8438, 2
        %v8440 = vadd.f32 %v8438, %v8439
        %v8441 = vrot.slane %v8440, 1
        %v8442 = vadd.f32 %v8440, %v8441
        %v8443 = vmul.f32 %v8442, 0.00390625
        %v8444 = vld [vmem:[%s4] sm:$0xff]
        %v8445 = vld [vmem:[%s5] sm:$0x1]
        %v8447 = vsel %vm250, %v8443, 0
        %8449 = vmatprep.subr.mxu0 0.0
        %8450 = vmatpush1.msra.mxu0 %v8444
        %8451 = vmatprep.subr.mxu0 0.0
        %8452 = vmatpush1.msra.mxu0 0.0
        %8453 = vmatprep.subr.mxu0 0.0
        %8454 = vmatpush1.msra.mxu0 0.0
        %8455 = vmatprep.subr.mxu0 0.0
        %8456 = vmatpush1.msra.mxu0 0.0
        %8457 = vmatprep.subr.mxu0 0.0
        %8458 = vmatpush1.msra.mxu0 0.0
        %8459 = vmatprep.subr.mxu0 0.0
        %8460 = vmatpush1.msra.mxu0 0.0
        %8461 = vmatprep.subr.mxu0 0.0
        %8462 = vmatpush1.msra.mxu0 0.0
        %8463 = vmatprep.subr.mxu0 0.0
        %8464 = vmatpush1.msra.mxu0 0.0
        %8465 = vmatprep.subr.mxu0 0.0
        %8466 = vmatpush1.msra.mxu0 0.0
        %8467 = vmatprep.subr.mxu0 0.0
        %8468 = vmatpush1.msra.mxu0 0.0
        %8469 = vmatprep.subr.mxu0 0.0
        %8470 = vmatpush1.msra.mxu0 0.0
        %8471 = vmatprep.subr.mxu0 0.0
        %8472 = vmatpush1.msra.mxu0 0.0
        %8473 = vmatprep.subr.mxu0 0.0
        %8474 = vmatpush1.msra.mxu0 0.0
        %8475 = vmatprep.subr.mxu0 0.0
        %8476 = vmatpush1.msra.mxu0 0.0
        %8477 = vmatprep.subr.mxu0 0.0
        %8478 = vmatpush1.msra.mxu0 0.0
        %8479 = vmatprep.subr.mxu0 0.0
        %8480 = vmatpush1.msra.mxu0 0.0
        %8481 = vmatprep.subr.mxu0 0.0
        %8482 = vmatpush1.msra.mxu0 0.0
        %8483 = vmatprep.subr.mxu0 0.0
        %8484 = vmatpush1.msra.mxu0 0.0
        %8485 = vmatprep.subr.mxu0 0.0
        %8486 = vmatpush1.msra.mxu0 0.0
        %8487 = vmatprep.subr.mxu0 0.0
        %8488 = vmatpush1.msra.mxu0 0.0
        %8489 = vmatprep.subr.mxu0 0.0
        %8490 = vmatpush1.msra.mxu0 0.0
        %8491 = vmatprep.subr.mxu0 0.0
        %8492 = vmatpush1.msra.mxu0 0.0
        %8493 = vmatprep.subr.mxu0 0.0
        %8494 = vmatpush1.msra.mxu0 0.0
        %8495 = vmatprep.subr.mxu0 0.0
        %8496 = vmatpush1.msra.mxu0 0.0
        %8497 = vmatprep.subr.mxu0 0.0
        %8498 = vmatpush1.msra.mxu0 0.0
        %8499 = vmatprep.subr.mxu0 0.0
        %8500 = vmatpush1.msra.mxu0 0.0
        %8501 = vmatprep.subr.mxu0 0.0
        %8502 = vmatpush1.msra.mxu0 0.0
        %8503 = vmatprep.subr.mxu0 0.0
        %8504 = vmatpush1.msra.mxu0 0.0
        %8505 = vmatprep.subr.mxu0 0.0
        %8506 = vmatpush1.msra.mxu0 0.0
        %8507 = vmatprep.subr.mxu0 0.0
        %8508 = vmatpush1.msra.mxu0 0.0
        %8509 = vmatprep.subr.mxu0 0.0
        %8510 = vmatpush1.msra.mxu0 0.0
        %8511 = vmatprep.subr.mxu0 0.0
        %8512 = vmatpush1.msra.mxu0 0.0
        %8513 = vmatprep.mubr.f32.mxu0 0.0
        %8514 = vmatmul.mubr.f32.gmra.mrb[0].mxu0 %v8447
        %v8515 = vpop.f32.mrb[0].mxu0
        %v8516 = vadd.f32 %v8445, %v8515
        %v8517 = vpop.f32.mrb[0].mxu0
        %8518 = vdwg.mxu0
        %vm8519 = vcmask 73728
        %8520 = vst.msk [vmem:[%s243] sm:$0x1] %vm8519, %v8516
        %s8521 = sand.u32 %s159, 1
        %s8522 = scalar_lea.sflag [#allocation5], %s8521
        %s8523 = sand.u32 %s159, 1
        %s8524 = scalar_lea.vmem [#allocation4], %s8523
        // Predicated region
        $region45: #{cnn_forward.1} parent=43 // pred_check
          %p8525 = pneg %p169
        $region46: #{cnn_forward.1} parent=43 // pred_check_branch
          %8527 = sbr.rel (%p8525) target = $region48
        $region47: #{cnn_forward.1} parent=43 // pred_region
          %s8529 = ssub.s32 16, 16
          %8530 = vsyncadd %s8522, %s8529
          %s8531 = smul.addr %s20, 16
          %s8532 = scalar_lea.hbm %s6, %s8531
          %s8534 = sshll.u32 %s8524, 4
          %s8535 = int_to_ptr.vmem [resolvable:$true] %s8534
          %8537 = dma.vmem_to_hbm [thread:$0]  %s8535, 16, %s8532, %s8522
        $region48: #{cnn_forward.1} parent=43 // pred_fallthru
          _
      $region44: #{cnn_forward.1} parent=5 // pred_fallthru
        _
      %p8538 = scmp.le.s32.totalorder 2, %s15
      // Predicated region
      $region49: #{cnn_forward.1} parent=5 // pred_check
        %p8539 = pneg %p8538
      $region50: #{cnn_forward.1} parent=5 // pred_check_branch
        %8541 = sbr.rel (%p8539) target = $region52
      $region51: #{cnn_forward.1} parent=5 // pred_region
        %s8542 = ssub.s32 %s15, 2
        // Predicated region
        $region53: #{cnn_forward.1} parent=51 // pred_check
          %p8543 = pneg %p175
        $region54: #{cnn_forward.1} parent=51 // pred_check_branch
          %8545 = sbr.rel (%p8543) target = $region56
        $region55: #{cnn_forward.1} parent=51 // pred_region
          %s8546 = sand.u32 %s160, 1
          %s8547 = scalar_lea.sflag [#allocation5], %s8546
          %s8548 = sand.u32 %s160, 1
          %s8549 = scalar_lea.vmem [#allocation4], %s8548
          %8550 = dma.done %s8547, 16
        $region56: #{cnn_forward.1} parent=51 // pred_fallthru
          _
      $region52: #{cnn_forward.1} parent=5 // pred_fallthru
        _
    $region6: #{cnn_forward.1} parent=1 // loop_footer
      %s19 = sadd.s32 1, %s15
    $region7: #{cnn_forward.1} parent=1 // loop_footer_branch
      %14 = sbr.rel target = $region3
    $region8: #{cnn_forward.1} parent=1 // loop_exit
      _
    %8551 = vsyncpa [#allocation5], 1
    %s8552 = scalar_lea.sflag [#allocation5], 1
    %8553 = vsyncpa %s8552, 1

</llo_original>
